<compile_context>
chip_gen: v7x
topology: tpu7x:2x2x1
jax: 0.10.0
libtpu: 0.0.40
codegen_flags: <defaults>
</compile_context>

<pallas_src>
import functools

import jax
import jax.numpy as jnp
from jax.experimental import pallas as pl
from jax.experimental.pallas import tpu as pltpu


# ---------------------------------------------------------------------------
# FC layer kernel:  out = ReLU(BN1d(x @ w + b))   (batch is tiny -> single block)
# ---------------------------------------------------------------------------
def _fc_kernel(x_ref, w_ref, b_ref, g_ref, be_ref, o_ref, *, eps):
    y = jnp.dot(x_ref[...], w_ref[...], preferred_element_type=jnp.float32)
    y = y + b_ref[...]
    mean = jnp.mean(y, axis=0, keepdims=True)
    var = jnp.mean(jnp.square(y - mean), axis=0, keepdims=True)   # biased (torch)
    y = (y - mean) * jax.lax.rsqrt(var + eps)
    y = y * g_ref[...] + be_ref[...]
    o_ref[...] = jnp.maximum(y, 0.0).astype(o_ref.dtype)


def fc_bn_relu(x, w, b, gamma, beta, *, eps=1e-5):
    M, K = x.shape
    C = w.shape[1]
    return pl.pallas_call(
        functools.partial(_fc_kernel, eps=eps),
        out_shape=jax.ShapeDtypeStruct((M, C), jnp.bfloat16),
        grid=(1,),
        in_specs=[
            pl.BlockSpec((M, K), lambda i: (0, 0)),
            pl.BlockSpec((K, C), lambda i: (0, 0)),
            pl.BlockSpec((1, C), lambda i: (0, 0)),
            pl.BlockSpec((1, C), lambda i: (0, 0)),
            pl.BlockSpec((1, C), lambda i: (0, 0)),
        ],
        out_specs=pl.BlockSpec((M, C), lambda i: (0, 0)),
    )(x.astype(jnp.bfloat16), w.astype(jnp.bfloat16),
      b.reshape(1, C).astype(jnp.float32),
      gamma.reshape(1, C).astype(jnp.float32),
      beta.reshape(1, C).astype(jnp.float32))


# ---------------------------------------------------------------------------
# ConvTranspose2d(k=4, s=2, p=1, bias=False) parity decomposition.
#   out[n, 2h+py, 2w+px, :] = sum_{r,s in {0,1}} xpad[n, h+py+r, w+px+s, :]
#                                                @ W[:, :, 3-py-2r, 3-px-2s]
# With the padded image row-flattened, the 4 taps of a parity are 4 static
# contiguous row-slices; stacking them along the channel axis turns the whole
# parity into ONE GEMM with contraction 4*Cin (MXU does the accumulation).
# Rows with (row mod (W+2)) >= W are junk columns; they are masked out of the
# BN statistics in-kernel and dropped by the wrapper interleave.
# ---------------------------------------------------------------------------
def _convt_stats_kernel(lhs_ref, w_ref, m_ref, y_ref, st_ref, *, nimg):
    C = w_ref.shape[-1]
    mask = m_ref[...]                               # (1, R) f32: 1 = real column
    s_acc = jnp.zeros((1, C), jnp.float32)
    ss_acc = jnp.zeros((1, C), jnp.float32)
    for b in range(nimg):                           # static unroll over images
        acc = jnp.dot(lhs_ref[0, b], w_ref[0],
                      preferred_element_type=jnp.float32)           # (R, C)
        y_ref[0, b] = acc.astype(y_ref.dtype)
        # masked per-channel sum / sumsq for two-pass BN (lane-dense MXU matmuls)
        s_acc = s_acc + jnp.dot(mask, acc, preferred_element_type=jnp.float32)
        ss_acc = ss_acc + jnp.dot(mask, acc * acc, preferred_element_type=jnp.float32)
    st_ref[0, 0] = jnp.concatenate([s_acc, ss_acc], axis=0)


def _convt_plain_kernel(lhs_ref, w_ref, y_ref, *, nimg):
    for b in range(nimg):
        y_ref[0, b] = jnp.dot(lhs_ref[0, b], w_ref[0],
                              preferred_element_type=jnp.float32).astype(y_ref.dtype)


def _stack_taps_weights(w_pt, cout_k):
    # w_pt: (Cin, Cout, 4, 4) -> (4 parities, 4*Cin, cout_k) bf16
    Cout = w_pt.shape[1]
    blocks = []
    for py in range(2):
        for px in range(2):
            taps = [w_pt[:, :, 3 - py - 2 * r, 3 - px - 2 * s]
                    for r in range(2) for s in range(2)]          # 4 x (Cin, Cout)
            blocks.append(jnp.concatenate(taps, axis=0))          # (4*Cin, Cout)
    wk = jnp.stack(blocks, axis=0)                                # (4, 4*Cin, Cout)
    return jnp.pad(wk, ((0, 0), (0, 0), (0, cout_k - Cout))).astype(jnp.bfloat16)


def _stack_taps_lhs(x_nhwc, H, W, Cin):
    # (N, H, W, Cin) bf16 -> (4, N, R, 4*Cin) tap-stacked LHS (static slices, XLA-fused)
    N = x_nhwc.shape[0]
    Wp2 = W + 2
    R = H * Wp2
    xp = jnp.pad(x_nhwc, ((0, 0), (1, 1), (1, 1), (0, 0)))
    af = jnp.pad(xp.reshape(N, (H + 2) * Wp2, Cin), ((0, 0), (0, 2), (0, 0)))
    par = []
    for py in range(2):
        for px in range(2):
            cols = [af[:, (py + r) * Wp2 + (px + s):(py + r) * Wp2 + (px + s) + R, :]
                    for r in range(2) for s in range(2)]
            par.append(jnp.concatenate(cols, axis=-1))            # (N, R, 4*Cin)
    return jnp.stack(par, axis=0)                                 # (4, N, R, 4*Cin)


def _interleave_parities(y, N, H, W, Cout):
    # y: (4, N, R=H*(W+2), C') -> (N, 2H, 2W, Cout); drops junk columns / pad channels
    Cp = y.shape[-1]
    y = y.reshape(2, 2, N, H, W + 2, Cp)[:, :, :, :, :W, :Cout]
    y = jnp.transpose(y, (2, 3, 0, 4, 1, 5))                      # (N, H, py, W, px, C)
    return y.reshape(N, 2 * H, 2 * W, Cout)


def _pick_images_per_block(N, R, K4, C, cap_bytes=4 << 20):
    # bf16 LHS + bf16 output + f32 stats per image; keep double-buffered blocks small
    per_img = R * K4 * 2 + R * C * 2 + 2 * C * 4
    best = 1
    for b in range(1, N + 1):
        if N % b == 0 and b * per_img <= cap_bytes:
            best = b
    return best


def conv_transpose_layer(x_nhwc, w_pt, gamma, beta, *, use_bn, eps=1e-5):
    N, H, W, Cin = x_nhwc.shape
    Cout = w_pt.shape[1]
    Cout_k = int(pl.cdiv(Cout, 128)) * 128          # lane-dense output for every layer
    Wp2 = W + 2
    R = H * Wp2
    K4 = 4 * Cin

    wk = _stack_taps_weights(w_pt, Cout_k)                         # (4, K4, Cout_k) bf16
    lhs = _stack_taps_lhs(x_nhwc.astype(jnp.bfloat16), H, W, Cin)  # (4, N, R, K4) bf16

    B = _pick_images_per_block(N, R, K4, Cout_k)
    G = N // B
    grid = (4, G)                                                  # 4*G steps (even -> v7x)
    par2 = pltpu.CompilerParams(dimension_semantics=("parallel", "parallel"))

    if use_bn:
        mask = ((jnp.arange(R) % Wp2) < W).astype(jnp.float32).reshape(1, R)
        y_wide, stats = pl.pallas_call(
            functools.partial(_convt_stats_kernel, nimg=B),
            out_shape=(jax.ShapeDtypeStruct((4, N, R, Cout_k), jnp.bfloat16),
                       jax.ShapeDtypeStruct((4, G, 2, Cout_k), jnp.float32)),
            grid=grid,
            in_specs=[
                pl.BlockSpec((1, B, R, K4), lambda p, g: (p, g, 0, 0)),
                pl.BlockSpec((1, K4, Cout_k), lambda p, g: (p, 0, 0)),
                pl.BlockSpec((1, R), lambda p, g: (0, 0)),
            ],
            out_specs=[
                pl.BlockSpec((1, B, R, Cout_k), lambda p, g: (p, g, 0, 0)),
                pl.BlockSpec((1, 1, 2, Cout_k), lambda p, g: (p, g, 0, 0)),
            ],
            compiler_params=par2,
        )(lhs, wk, mask)

        # global training-mode BatchNorm2d statistics (biased variance)
        count = jnp.float32(N * 4 * H * W)
        s = jnp.sum(stats, axis=(0, 1))                            # (2, Cout_k)
        mean = s[0] / count
        var = jnp.maximum(s[1] / count - mean * mean, 0.0)
        g_pad = jnp.pad(gamma.astype(jnp.float32), (0, Cout_k - Cout))
        b_pad = jnp.pad(beta.astype(jnp.float32), (0, Cout_k - Cout))
        scale = g_pad * jax.lax.rsqrt(var + eps)
        shift = b_pad - mean * scale

        # BN apply + ReLU fused by XLA with the interleave / next layer's tap stacking
        y = _interleave_parities(y_wide, N, H, W, Cout)
        y = jnp.maximum(y.astype(jnp.float32) * scale[:Cout] + shift[:Cout], 0.0)
        return y.astype(jnp.bfloat16)

    y_wide = pl.pallas_call(
        functools.partial(_convt_plain_kernel, nimg=B),
        out_shape=jax.ShapeDtypeStruct((4, N, R, Cout_k), jnp.bfloat16),
        grid=grid,
        in_specs=[
            pl.BlockSpec((1, B, R, K4), lambda p, g: (p, g, 0, 0)),
            pl.BlockSpec((1, K4, Cout_k), lambda p, g: (p, 0, 0)),
        ],
        out_specs=pl.BlockSpec((1, B, R, Cout_k), lambda p, g: (p, g, 0, 0)),
        compiler_params=par2,
    )(lhs, wk)
    # tanh only on the 3 real channels / real columns, after slicing (cheap in XLA)
    y = _interleave_parities(y_wide, N, H, W, Cout)
    return jnp.tanh(y.astype(jnp.float32))


# ---------------------------------------------------------------------------
# Generator parameters (deterministic synthetic init) and forward pass.
# ---------------------------------------------------------------------------
def init_generator_params(key, nz, ngf, nc, embedding_dim):
    ks = jax.random.split(key, 6)
    p = {}
    fc_out = ngf * 8 * 4 * 4
    p["fc_w"] = 0.05 * jax.random.normal(ks[0], (nz + embedding_dim, fc_out), jnp.float32)
    p["fc_b"] = 0.01 * jax.random.normal(ks[1], (fc_out,), jnp.float32)
    p["fc_gamma"] = jnp.ones((fc_out,), jnp.float32)     # BatchNorm1d default init
    p["fc_beta"] = jnp.zeros((fc_out,), jnp.float32)
    chans = [ngf * 8, ngf * 4, ngf * 2, ngf, nc]
    for i in range(4):
        cin, cout = chans[i], chans[i + 1]
        p[f"w{i}"] = 0.05 * jax.random.normal(ks[2 + i], (cin, cout, 4, 4), jnp.float32)
        if i < 3:
            p[f"gamma{i}"] = jnp.ones((cout,), jnp.float32)   # BatchNorm2d default init
            p[f"beta{i}"] = jnp.zeros((cout,), jnp.float32)
    return p


def generator_forward(params, noise, embeddings, ngf):
    N = noise.shape[0]
    x = jnp.concatenate([noise.astype(jnp.float32),
                         embeddings.astype(jnp.float32)], axis=1)       # [N, nz+emb]
    x = fc_bn_relu(x, params["fc_w"], params["fc_b"],
                   params["fc_gamma"], params["fc_beta"])                # [N, ngf*8*16]
    x = x.reshape(N, ngf * 8, 4, 4)                                      # torch .view (NCHW)
    x = jnp.transpose(x, (0, 2, 3, 1))                                   # NHWC internally
    for i in range(4):
        x = conv_transpose_layer(
            x, params[f"w{i}"],
            params.get(f"gamma{i}"), params.get(f"beta{i}"),
            use_bn=(i < 3))
    return jnp.transpose(x, (0, 3, 1, 2)).astype(jnp.float32)            # back to NCHW
# TODO(synk): training-mode BatchNorm running-stat (buffer) updates are a PyTorch side
# effect and are not materialized here; forward outputs are unaffected.


if __name__ == "__main__":
    nz, ngf, nc, embedding_dim = 16, 8, 3, 16
    N = 2
    key = jax.random.PRNGKey(0)
    kp, kn, ke = jax.random.split(key, 3)
    params = init_generator_params(kp, nz, ngf, nc, embedding_dim)
    noise = jax.random.normal(kn, (N, nz), jnp.float32)
    embeddings = jax.random.normal(ke, (N, embedding_dim), jnp.float32)

    fwd = jax.jit(generator_forward, static_argnums=(3,))
    out = jax.block_until_ready(fwd(params, noise, embeddings, ngf))
    assert out.shape == (N, nc, 64, 64), out.shape
    assert bool(jnp.all(jnp.isfinite(out)))
    assert bool(jnp.all(jnp.abs(out) <= 1.0 + 1e-3))   # tanh range sanity check
    print("KERNEL_OK")
</pallas_src>

<mosaic_0001>
module attributes {stable_mosaic.version = 11 : i64} {
  func.func @_fc_kernel(%arg0: i32, %arg1: memref<2x32xbf16, #tpu.memory_space<vmem>>, %arg2: memref<32x1024xbf16, #tpu.memory_space<vmem>>, %arg3: memref<1x1024xf32, #tpu.memory_space<vmem>>, %arg4: memref<1x1024xf32, #tpu.memory_space<vmem>>, %arg5: memref<1x1024xf32, #tpu.memory_space<vmem>>, %arg6: memref<2x1024xbf16, #tpu.memory_space<vmem>>) attributes {dimension_semantics = [#tpu.dimension_semantics<arbitrary>], iteration_bounds = array<i64: 1>, scalar_prefetch = 0 : i64, scratch_operands = 0 : i64, tpu.core_type = #tpu.core_type<tc>, window_params = [{pipeline_mode = #tpu.pipeline_mode<synchronous>, transform_indices = @transform_0, window_bounds = array<i64: 2, 32>}, {pipeline_mode = #tpu.pipeline_mode<synchronous>, transform_indices = @transform_1, window_bounds = array<i64: 32, 1024>}, {pipeline_mode = #tpu.pipeline_mode<synchronous>, transform_indices = @transform_2, window_bounds = array<i64: 1, 1024>}, {pipeline_mode = #tpu.pipeline_mode<synchronous>, transform_indices = @transform_3, window_bounds = array<i64: 1, 1024>}, {pipeline_mode = #tpu.pipeline_mode<synchronous>, transform_indices = @transform_4, window_bounds = array<i64: 1, 1024>}, {pipeline_mode = #tpu.pipeline_mode<synchronous>, transform_indices = @transform_5, window_bounds = array<i64: 2, 1024>}]} {
    %c0 = arith.constant 0 : index
    %c0_0 = arith.constant 0 : index
    %0 = vector.load %arg1[%c0, %c0_0] : memref<2x32xbf16, #tpu.memory_space<vmem>>, vector<2x32xbf16>
    %c0_1 = arith.constant 0 : index
    %c0_2 = arith.constant 0 : index
    %1 = vector.load %arg2[%c0_1, %c0_2] : memref<32x1024xbf16, #tpu.memory_space<vmem>>, vector<32x1024xbf16>
    %cst = arith.constant dense<0.000000e+00> : vector<2x1024xf32>
    %2 = tpu.matmul %0, %1, %cst {dimension_numbers = #tpu.dot_dimension_numbers<[1], [0], [0], [1], [0, 0, 1, 1], [], []>} : vector<2x32xbf16>, vector<32x1024xbf16>, vector<2x1024xf32> -> vector<2x1024xf32>
    %c0_3 = arith.constant 0 : index
    %c0_4 = arith.constant 0 : index
    %3 = vector.load %arg3[%c0_3, %c0_4] : memref<1x1024xf32, #tpu.memory_space<vmem>>, vector<1x1024xf32>
    %4 = vector.broadcast %3 : vector<1x1024xf32> to vector<2x1024xf32>
    %5 = arith.addf %2, %4 : vector<2x1024xf32>
    %cst_5 = arith.constant dense<0.000000e+00> : vector<1024xf32>
    %6 = vector.multi_reduction <add>, %5, %cst_5 [0] : vector<2x1024xf32> to vector<1024xf32>
    %7 = vector.shape_cast %6 : vector<1024xf32> to vector<1x1024xf32>
    %cst_6 = arith.constant 2.000000e+00 : f32
    %8 = vector.broadcast %cst_6 : f32 to vector<1x1024xf32>
    %9 = arith.divf %7, %8 : vector<1x1024xf32>
    %10 = vector.broadcast %9 : vector<1x1024xf32> to vector<2x1024xf32>
    %11 = arith.subf %5, %10 : vector<2x1024xf32>
    %12 = arith.mulf %11, %11 : vector<2x1024xf32>
    %cst_7 = arith.constant dense<0.000000e+00> : vector<1024xf32>
    %13 = vector.multi_reduction <add>, %12, %cst_7 [0] : vector<2x1024xf32> to vector<1024xf32>
    %14 = vector.shape_cast %13 : vector<1024xf32> to vector<1x1024xf32>
    %cst_8 = arith.constant 2.000000e+00 : f32
    %15 = vector.broadcast %cst_8 : f32 to vector<1x1024xf32>
    %16 = arith.divf %14, %15 : vector<1x1024xf32>
    %17 = vector.broadcast %9 : vector<1x1024xf32> to vector<2x1024xf32>
    %18 = arith.subf %5, %17 : vector<2x1024xf32>
    %cst_9 = arith.constant 9.99999974E-6 : f32
    %19 = vector.broadcast %cst_9 : f32 to vector<1x1024xf32>
    %20 = arith.addf %16, %19 : vector<1x1024xf32>
    %21 = math.rsqrt %20 : vector<1x1024xf32>
    %22 = vector.broadcast %21 : vector<1x1024xf32> to vector<2x1024xf32>
    %23 = arith.mulf %18, %22 : vector<2x1024xf32>
    %c0_10 = arith.constant 0 : index
    %c0_11 = arith.constant 0 : index
    %24 = vector.load %arg4[%c0_10, %c0_11] : memref<1x1024xf32, #tpu.memory_space<vmem>>, vector<1x1024xf32>
    %25 = vector.broadcast %24 : vector<1x1024xf32> to vector<2x1024xf32>
    %26 = arith.mulf %23, %25 : vector<2x1024xf32>
    %c0_12 = arith.constant 0 : index
    %c0_13 = arith.constant 0 : index
    %27 = vector.load %arg5[%c0_12, %c0_13] : memref<1x1024xf32, #tpu.memory_space<vmem>>, vector<1x1024xf32>
    %28 = vector.broadcast %27 : vector<1x1024xf32> to vector<2x1024xf32>
    %29 = arith.addf %26, %28 : vector<2x1024xf32>
    %cst_14 = arith.constant 0.000000e+00 : f32
    %30 = vector.broadcast %cst_14 : f32 to vector<2x1024xf32>
    %31 = arith.maximumf %29, %30 : vector<2x1024xf32>
    %32 = arith.truncf %31 : vector<2x1024xf32> to vector<2x1024xbf16>
    %c0_15 = arith.constant 0 : index
    %c0_16 = arith.constant 0 : index
    %33 = vector.load %arg6[%c0_15, %c0_16] : memref<2x1024xbf16, #tpu.memory_space<vmem>>, vector<2x1024xbf16>
    tpu.vector_store %arg6[%c0_15, %c0_16], %32 {strides = array<i32>} : memref<2x1024xbf16, #tpu.memory_space<vmem>>, vector<2x1024xbf16>,
    return
  }
  func.func @transform_0(%arg0: i32) -> (i32, i32) {
    %c0_i32 = arith.constant 0 : i32
    %c0_i32_0 = arith.constant 0 : i32
    %c0_i32_1 = arith.constant 0 : i32
    return %c0_i32, %c0_i32_0 : i32, i32
  }
  func.func @transform_1(%arg0: i32) -> (i32, i32) {
    %c0_i32 = arith.constant 0 : i32
    %c0_i32_0 = arith.constant 0 : i32
    %c0_i32_1 = arith.constant 0 : i32
    return %c0_i32, %c0_i32_0 : i32, i32
  }
  func.func @transform_2(%arg0: i32) -> (i32, i32) {
    %c0_i32 = arith.constant 0 : i32
    %c0_i32_0 = arith.constant 0 : i32
    %c0_i32_1 = arith.constant 0 : i32
    return %c0_i32, %c0_i32_0 : i32, i32
  }
  func.func @transform_3(%arg0: i32) -> (i32, i32) {
    %c0_i32 = arith.constant 0 : i32
    %c0_i32_0 = arith.constant 0 : i32
    %c0_i32_1 = arith.constant 0 : i32
    return %c0_i32, %c0_i32_0 : i32, i32
  }
  func.func @transform_4(%arg0: i32) -> (i32, i32) {
    %c0_i32 = arith.constant 0 : i32
    %c0_i32_0 = arith.constant 0 : i32
    %c0_i32_1 = arith.constant 0 : i32
    return %c0_i32, %c0_i32_0 : i32, i32
  }
  func.func @transform_5(%arg0: i32) -> (i32, i32) {
    %c0_i32 = arith.constant 0 : i32
    %c0_i32_0 = arith.constant 0 : i32
    %c0_i32_1 = arith.constant 0 : i32
    return %c0_i32, %c0_i32_0 : i32, i32
  }
}

module attributes {stable_mosaic.version = 11 : i64} {
  func.func @_convt_stats_kernel(%arg0: i32, %arg1: i32, %arg2: memref<1x2x24x256xbf16, #tpu.memory_space<vmem>>, %arg3: memref<1x256x128xbf16, #tpu.memory_space<vmem>>, %arg4: memref<1x24xf32, #tpu.memory_space<vmem>>, %arg5: memref<1x2x24x128xbf16, #tpu.memory_space<vmem>>, %arg6: memref<1x1x2x128xf32, #tpu.memory_space<vmem>>) attributes {dimension_semantics = [#tpu.dimension_semantics<parallel>, #tpu.dimension_semantics<parallel>], iteration_bounds = array<i64: 4, 1>, scalar_prefetch = 0 : i64, scratch_operands = 0 : i64, tpu.core_type = #tpu.core_type<tc>, window_params = [{transform_indices = @transform_0, window_bounds = array<i64: 1, 2, 24, 256>}, {transform_indices = @transform_1, window_bounds = array<i64: 1, 256, 128>}, {pipeline_mode = #tpu.pipeline_mode<synchronous>, transform_indices = @transform_2, window_bounds = array<i64: 1, 24>}, {transform_indices = @transform_3, window_bounds = array<i64: 1, 2, 24, 128>}, {transform_indices = @transform_4, window_bounds = array<i64: 1, 1, 2, 128>}]} {
    %c0 = arith.constant 0 : index
    %c0_0 = arith.constant 0 : index
    %0 = vector.load %arg4[%c0, %c0_0] : memref<1x24xf32, #tpu.memory_space<vmem>>, vector<1x24xf32>
    %cst = arith.constant 0.000000e+00 : f32
    %1 = vector.broadcast %cst : f32 to vector<1x128xf32>
    %cst_1 = arith.constant 0.000000e+00 : f32
    %2 = vector.broadcast %cst_1 : f32 to vector<1x128xf32>
    %c0_2 = arith.constant 0 : index
    %c0_3 = arith.constant 0 : index
    %c0_4 = arith.constant 0 : index
    %c0_5 = arith.constant 0 : index
    %3 = vector.load %arg2[%c0_2, %c0_3, %c0_4, %c0_5] : memref<1x2x24x256xbf16, #tpu.memory_space<vmem>>, vector<1x1x24x256xbf16>
    %4 = vector.shape_cast %3 : vector<1x1x24x256xbf16> to vector<24x256xbf16>
    %c0_6 = arith.constant 0 : index
    %c0_7 = arith.constant 0 : index
    %c0_8 = arith.constant 0 : index
    %5 = vector.load %arg3[%c0_6, %c0_7, %c0_8] : memref<1x256x128xbf16, #tpu.memory_space<vmem>>, vector<1x256x128xbf16>
    %6 = vector.shape_cast %5 : vector<1x256x128xbf16> to vector<256x128xbf16>
    %cst_9 = arith.constant dense<0.000000e+00> : vector<24x128xf32>
    %7 = tpu.matmul %4, %6, %cst_9 {dimension_numbers = #tpu.dot_dimension_numbers<[1], [0], [0], [1], [0, 0, 1, 1], [], []>} : vector<24x256xbf16>, vector<256x128xbf16>, vector<24x128xf32> -> vector<24x128xf32>
    %8 = arith.truncf %7 : vector<24x128xf32> to vector<24x128xbf16>
    %c0_10 = arith.constant 0 : index
    %c0_11 = arith.constant 0 : index
    %c0_12 = arith.constant 0 : index
    %c0_13 = arith.constant 0 : index
    %9 = vector.load %arg5[%c0_10, %c0_11, %c0_12, %c0_13] : memref<1x2x24x128xbf16, #tpu.memory_space<vmem>>, vector<1x1x24x128xbf16>
    %10 = vector.shape_cast %9 : vector<1x1x24x128xbf16> to vector<24x128xbf16>
    %11 = vector.shape_cast %8 : vector<24x128xbf16> to vector<1x1x24x128xbf16>
    tpu.vector_store %arg5[%c0_10, %c0_11, %c0_12, %c0_13], %11 {strides = array<i32>} : memref<1x2x24x128xbf16, #tpu.memory_space<vmem>>, vector<1x1x24x128xbf16>,
    %cst_14 = arith.constant dense<0.000000e+00> : vector<1x128xf32>
    %12 = tpu.matmul %0, %7, %cst_14 {dimension_numbers = #tpu.dot_dimension_numbers<[1], [0], [0], [1], [0, 0, 1, 1], [], []>} : vector<1x24xf32>, vector<24x128xf32>, vector<1x128xf32> -> vector<1x128xf32>
    %13 = arith.addf %1, %12 : vector<1x128xf32>
    %14 = arith.mulf %7, %7 : vector<24x128xf32>
    %cst_15 = arith.constant dense<0.000000e+00> : vector<1x128xf32>
    %15 = tpu.matmul %0, %14, %cst_15 {dimension_numbers = #tpu.dot_dimension_numbers<[1], [0], [0], [1], [0, 0, 1, 1], [], []>} : vector<1x24xf32>, vector<24x128xf32>, vector<1x128xf32> -> vector<1x128xf32>
    %16 = arith.addf %2, %15 : vector<1x128xf32>
    %c0_16 = arith.constant 0 : index
    %c1 = arith.constant 1 : index
    %c0_17 = arith.constant 0 : index
    %c0_18 = arith.constant 0 : index
    %17 = vector.load %arg2[%c0_16, %c1, %c0_17, %c0_18] : memref<1x2x24x256xbf16, #tpu.memory_space<vmem>>, vector<1x1x24x256xbf16>
    %18 = vector.shape_cast %17 : vector<1x1x24x256xbf16> to vector<24x256xbf16>
    %c0_19 = arith.constant 0 : index
    %c0_20 = arith.constant 0 : index
    %c0_21 = arith.constant 0 : index
    %19 = vector.load %arg3[%c0_19, %c0_20, %c0_21] : memref<1x256x128xbf16, #tpu.memory_space<vmem>>, vector<1x256x128xbf16>
    %20 = vector.shape_cast %19 : vector<1x256x128xbf16> to vector<256x128xbf16>
    %cst_22 = arith.constant dense<0.000000e+00> : vector<24x128xf32>
    %21 = tpu.matmul %18, %20, %cst_22 {dimension_numbers = #tpu.dot_dimension_numbers<[1], [0], [0], [1], [0, 0, 1, 1], [], []>} : vector<24x256xbf16>, vector<256x128xbf16>, vector<24x128xf32> -> vector<24x128xf32>
    %22 = arith.truncf %21 : vector<24x128xf32> to vector<24x128xbf16>
    %c0_23 = arith.constant 0 : index
    %c1_24 = arith.constant 1 : index
    %c0_25 = arith.constant 0 : index
    %c0_26 = arith.constant 0 : index
    %23 = vector.load %arg5[%c0_23, %c1_24, %c0_25, %c0_26] : memref<1x2x24x128xbf16, #tpu.memory_space<vmem>>, vector<1x1x24x128xbf16>
    %24 = vector.shape_cast %23 : vector<1x1x24x128xbf16> to vector<24x128xbf16>
    %25 = vector.shape_cast %22 : vector<24x128xbf16> to vector<1x1x24x128xbf16>
    tpu.vector_store %arg5[%c0_23, %c1_24, %c0_25, %c0_26], %25 {strides = array<i32>} : memref<1x2x24x128xbf16, #tpu.memory_space<vmem>>, vector<1x1x24x128xbf16>,
    %cst_27 = arith.constant dense<0.000000e+00> : vector<1x128xf32>
    %26 = tpu.matmul %0, %21, %cst_27 {dimension_numbers = #tpu.dot_dimension_numbers<[1], [0], [0], [1], [0, 0, 1, 1], [], []>} : vector<1x24xf32>, vector<24x128xf32>, vector<1x128xf32> -> vector<1x128xf32>
    %27 = arith.addf %13, %26 : vector<1x128xf32>
    %28 = arith.mulf %21, %21 : vector<24x128xf32>
    %cst_28 = arith.constant dense<0.000000e+00> : vector<1x128xf32>
    %29 = tpu.matmul %0, %28, %cst_28 {dimension_numbers = #tpu.dot_dimension_numbers<[1], [0], [0], [1], [0, 0, 1, 1], [], []>} : vector<1x24xf32>, vector<24x128xf32>, vector<1x128xf32> -> vector<1x128xf32>
    %30 = arith.addf %16, %29 : vector<1x128xf32>
    %31 = tpu.concatenate %27, %30 in 0 : vector<1x128xf32>, vector<1x128xf32> -> vector<2x128xf32>
    %c0_29 = arith.constant 0 : index
    %c0_30 = arith.constant 0 : index
    %c0_31 = arith.constant 0 : index
    %c0_32 = arith.constant 0 : index
    %32 = vector.load %arg6[%c0_29, %c0_30, %c0_31, %c0_32] : memref<1x1x2x128xf32, #tpu.memory_space<vmem>>, vector<1x1x2x128xf32>
    %33 = vector.shape_cast %32 : vector<1x1x2x128xf32> to vector<2x128xf32>
    %34 = vector.shape_cast %31 : vector<2x128xf32> to vector<1x1x2x128xf32>
    tpu.vector_store %arg6[%c0_29, %c0_30, %c0_31, %c0_32], %34 {strides = array<i32>} : memref<1x1x2x128xf32, #tpu.memory_space<vmem>>, vector<1x1x2x128xf32>,
    return
  }
  func.func @transform_0(%arg0: i32, %arg1: i32) -> (i32, i32, i32, i32) {
    %c0_i32 = arith.constant 0 : i32
    %c0_i32_0 = arith.constant 0 : i32
    %c0_i32_1 = arith.constant 0 : i32
    return %arg0, %arg1, %c0_i32, %c0_i32_0 : i32, i32, i32, i32
  }
  func.func @transform_1(%arg0: i32, %arg1: i32) -> (i32, i32, i32) {
    %c0_i32 = arith.constant 0 : i32
    %c0_i32_0 = arith.constant 0 : i32
    %c0_i32_1 = arith.constant 0 : i32
    return %arg0, %c0_i32, %c0_i32_0 : i32, i32, i32
  }
  func.func @transform_2(%arg0: i32, %arg1: i32) -> (i32, i32) {
    %c0_i32 = arith.constant 0 : i32
    %c0_i32_0 = arith.constant 0 : i32
    %c0_i32_1 = arith.constant 0 : i32
    return %c0_i32, %c0_i32_0 : i32, i32
  }
  func.func @transform_3(%arg0: i32, %arg1: i32) -> (i32, i32, i32, i32) {
    %c0_i32 = arith.constant 0 : i32
    %c0_i32_0 = arith.constant 0 : i32
    %c0_i32_1 = arith.constant 0 : i32
    return %arg0, %arg1, %c0_i32, %c0_i32_0 : i32, i32, i32, i32
  }
  func.func @transform_4(%arg0: i32, %arg1: i32) -> (i32, i32, i32, i32) {
    %c0_i32 = arith.constant 0 : i32
    %c0_i32_0 = arith.constant 0 : i32
    %c0_i32_1 = arith.constant 0 : i32
    return %arg0, %arg1, %c0_i32, %c0_i32_0 : i32, i32, i32, i32
  }
}

module attributes {stable_mosaic.version = 11 : i64} {
  func.func @_convt_stats_kernel(%arg0: i32, %arg1: i32, %arg2: memref<1x2x80x128xbf16, #tpu.memory_space<vmem>>, %arg3: memref<1x128x128xbf16, #tpu.memory_space<vmem>>, %arg4: memref<1x80xf32, #tpu.memory_space<vmem>>, %arg5: memref<1x2x80x128xbf16, #tpu.memory_space<vmem>>, %arg6: memref<1x1x2x128xf32, #tpu.memory_space<vmem>>) attributes {dimension_semantics = [#tpu.dimension_semantics<parallel>, #tpu.dimension_semantics<parallel>], iteration_bounds = array<i64: 4, 1>, scalar_prefetch = 0 : i64, scratch_operands = 0 : i64, tpu.core_type = #tpu.core_type<tc>, window_params = [{transform_indices = @transform_0, window_bounds = array<i64: 1, 2, 80, 128>}, {transform_indices = @transform_1, window_bounds = array<i64: 1, 128, 128>}, {pipeline_mode = #tpu.pipeline_mode<synchronous>, transform_indices = @transform_2, window_bounds = array<i64: 1, 80>}, {transform_indices = @transform_3, window_bounds = array<i64: 1, 2, 80, 128>}, {transform_indices = @transform_4, window_bounds = array<i64: 1, 1, 2, 128>}]} {
    %c0 = arith.constant 0 : index
    %c0_0 = arith.constant 0 : index
    %0 = vector.load %arg4[%c0, %c0_0] : memref<1x80xf32, #tpu.memory_space<vmem>>, vector<1x80xf32>
    %cst = arith.constant 0.000000e+00 : f32
    %1 = vector.broadcast %cst : f32 to vector<1x128xf32>
    %cst_1 = arith.constant 0.000000e+00 : f32
    %2 = vector.broadcast %cst_1 : f32 to vector<1x128xf32>
    %c0_2 = arith.constant 0 : index
    %c0_3 = arith.constant 0 : index
    %c0_4 = arith.constant 0 : index
    %c0_5 = arith.constant 0 : index
    %3 = vector.load %arg2[%c0_2, %c0_3, %c0_4, %c0_5] : memref<1x2x80x128xbf16, #tpu.memory_space<vmem>>, vector<1x1x80x128xbf16>
    %4 = vector.shape_cast %3 : vector<1x1x80x128xbf16> to vector<80x128xbf16>
    %c0_6 = arith.constant 0 : index
    %c0_7 = arith.constant 0 : index
    %c0_8 = arith.constant 0 : index
    %5 = vector.load %arg3[%c0_6, %c0_7, %c0_8] : memref<1x128x128xbf16, #tpu.memory_space<vmem>>, vector<1x128x128xbf16>
    %6 = vector.shape_cast %5 : vector<1x128x128xbf16> to vector<128x128xbf16>
    %cst_9 = arith.constant dense<0.000000e+00> : vector<80x128xf32>
    %7 = tpu.matmul %4, %6, %cst_9 {dimension_numbers = #tpu.dot_dimension_numbers<[1], [0], [0], [1], [0, 0, 1, 1], [], []>} : vector<80x128xbf16>, vector<128x128xbf16>, vector<80x128xf32> -> vector<80x128xf32>
    %8 = arith.truncf %7 : vector<80x128xf32> to vector<80x128xbf16>
    %c0_10 = arith.constant 0 : index
    %c0_11 = arith.constant 0 : index
    %c0_12 = arith.constant 0 : index
    %c0_13 = arith.constant 0 : index
    %9 = vector.load %arg5[%c0_10, %c0_11, %c0_12, %c0_13] : memref<1x2x80x128xbf16, #tpu.memory_space<vmem>>, vector<1x1x80x128xbf16>
    %10 = vector.shape_cast %9 : vector<1x1x80x128xbf16> to vector<80x128xbf16>
    %11 = vector.shape_cast %8 : vector<80x128xbf16> to vector<1x1x80x128xbf16>
    tpu.vector_store %arg5[%c0_10, %c0_11, %c0_12, %c0_13], %11 {strides = array<i32>} : memref<1x2x80x128xbf16, #tpu.memory_space<vmem>>, vector<1x1x80x128xbf16>,
    %cst_14 = arith.constant dense<0.000000e+00> : vector<1x128xf32>
    %12 = tpu.matmul %0, %7, %cst_14 {dimension_numbers = #tpu.dot_dimension_numbers<[1], [0], [0], [1], [0, 0, 1, 1], [], []>} : vector<1x80xf32>, vector<80x128xf32>, vector<1x128xf32> -> vector<1x128xf32>
    %13 = arith.addf %1, %12 : vector<1x128xf32>
    %14 = arith.mulf %7, %7 : vector<80x128xf32>
    %cst_15 = arith.constant dense<0.000000e+00> : vector<1x128xf32>
    %15 = tpu.matmul %0, %14, %cst_15 {dimension_numbers = #tpu.dot_dimension_numbers<[1], [0], [0], [1], [0, 0, 1, 1], [], []>} : vector<1x80xf32>, vector<80x128xf32>, vector<1x128xf32> -> vector<1x128xf32>
    %16 = arith.addf %2, %15 : vector<1x128xf32>
    %c0_16 = arith.constant 0 : index
    %c1 = arith.constant 1 : index
    %c0_17 = arith.constant 0 : index
    %c0_18 = arith.constant 0 : index
    %17 = vector.load %arg2[%c0_16, %c1, %c0_17, %c0_18] : memref<1x2x80x128xbf16, #tpu.memory_space<vmem>>, vector<1x1x80x128xbf16>
    %18 = vector.shape_cast %17 : vector<1x1x80x128xbf16> to vector<80x128xbf16>
    %c0_19 = arith.constant 0 : index
    %c0_20 = arith.constant 0 : index
    %c0_21 = arith.constant 0 : index
    %19 = vector.load %arg3[%c0_19, %c0_20, %c0_21] : memref<1x128x128xbf16, #tpu.memory_space<vmem>>, vector<1x128x128xbf16>
    %20 = vector.shape_cast %19 : vector<1x128x128xbf16> to vector<128x128xbf16>
    %cst_22 = arith.constant dense<0.000000e+00> : vector<80x128xf32>
    %21 = tpu.matmul %18, %20, %cst_22 {dimension_numbers = #tpu.dot_dimension_numbers<[1], [0], [0], [1], [0, 0, 1, 1], [], []>} : vector<80x128xbf16>, vector<128x128xbf16>, vector<80x128xf32> -> vector<80x128xf32>
    %22 = arith.truncf %21 : vector<80x128xf32> to vector<80x128xbf16>
    %c0_23 = arith.constant 0 : index
    %c1_24 = arith.constant 1 : index
    %c0_25 = arith.constant 0 : index
    %c0_26 = arith.constant 0 : index
    %23 = vector.load %arg5[%c0_23, %c1_24, %c0_25, %c0_26] : memref<1x2x80x128xbf16, #tpu.memory_space<vmem>>, vector<1x1x80x128xbf16>
    %24 = vector.shape_cast %23 : vector<1x1x80x128xbf16> to vector<80x128xbf16>
    %25 = vector.shape_cast %22 : vector<80x128xbf16> to vector<1x1x80x128xbf16>
    tpu.vector_store %arg5[%c0_23, %c1_24, %c0_25, %c0_26], %25 {strides = array<i32>} : memref<1x2x80x128xbf16, #tpu.memory_space<vmem>>, vector<1x1x80x128xbf16>,
    %cst_27 = arith.constant dense<0.000000e+00> : vector<1x128xf32>
    %26 = tpu.matmul %0, %21, %cst_27 {dimension_numbers = #tpu.dot_dimension_numbers<[1], [0], [0], [1], [0, 0, 1, 1], [], []>} : vector<1x80xf32>, vector<80x128xf32>, vector<1x128xf32> -> vector<1x128xf32>
    %27 = arith.addf %13, %26 : vector<1x128xf32>
    %28 = arith.mulf %21, %21 : vector<80x128xf32>
    %cst_28 = arith.constant dense<0.000000e+00> : vector<1x128xf32>
    %29 = tpu.matmul %0, %28, %cst_28 {dimension_numbers = #tpu.dot_dimension_numbers<[1], [0], [0], [1], [0, 0, 1, 1], [], []>} : vector<1x80xf32>, vector<80x128xf32>, vector<1x128xf32> -> vector<1x128xf32>
    %30 = arith.addf %16, %29 : vector<1x128xf32>
    %31 = tpu.concatenate %27, %30 in 0 : vector<1x128xf32>, vector<1x128xf32> -> vector<2x128xf32>
    %c0_29 = arith.constant 0 : index
    %c0_30 = arith.constant 0 : index
    %c0_31 = arith.constant 0 : index
    %c0_32 = arith.constant 0 : index
    %32 = vector.load %arg6[%c0_29, %c0_30, %c0_31, %c0_32] : memref<1x1x2x128xf32, #tpu.memory_space<vmem>>, vector<1x1x2x128xf32>
    %33 = vector.shape_cast %32 : vector<1x1x2x128xf32> to vector<2x128xf32>
    %34 = vector.shape_cast %31 : vector<2x128xf32> to vector<1x1x2x128xf32>
    tpu.vector_store %arg6[%c0_29, %c0_30, %c0_31, %c0_32], %34 {strides = array<i32>} : memref<1x1x2x128xf32, #tpu.memory_space<vmem>>, vector<1x1x2x128xf32>,
    return
  }
  func.func @transform_0(%arg0: i32, %arg1: i32) -> (i32, i32, i32, i32) {
    %c0_i32 = arith.constant 0 : i32
    %c0_i32_0 = arith.constant 0 : i32
    %c0_i32_1 = arith.constant 0 : i32
    return %arg0, %arg1, %c0_i32, %c0_i32_0 : i32, i32, i32, i32
  }
  func.func @transform_1(%arg0: i32, %arg1: i32) -> (i32, i32, i32) {
    %c0_i32 = arith.constant 0 : i32
    %c0_i32_0 = arith.constant 0 : i32
    %c0_i32_1 = arith.constant 0 : i32
    return %arg0, %c0_i32, %c0_i32_0 : i32, i32, i32
  }
  func.func @transform_2(%arg0: i32, %arg1: i32) -> (i32, i32) {
    %c0_i32 = arith.constant 0 : i32
    %c0_i32_0 = arith.constant 0 : i32
    %c0_i32_1 = arith.constant 0 : i32
    return %c0_i32, %c0_i32_0 : i32, i32
  }
  func.func @transform_3(%arg0: i32, %arg1: i32) -> (i32, i32, i32, i32) {
    %c0_i32 = arith.constant 0 : i32
    %c0_i32_0 = arith.constant 0 : i32
    %c0_i32_1 = arith.constant 0 : i32
    return %arg0, %arg1, %c0_i32, %c0_i32_0 : i32, i32, i32, i32
  }
  func.func @transform_4(%arg0: i32, %arg1: i32) -> (i32, i32, i32, i32) {
    %c0_i32 = arith.constant 0 : i32
    %c0_i32_0 = arith.constant 0 : i32
    %c0_i32_1 = arith.constant 0 : i32
    return %arg0, %arg1, %c0_i32, %c0_i32_0 : i32, i32, i32, i32
  }
}

module attributes {stable_mosaic.version = 11 : i64} {
  func.func @_convt_stats_kernel(%arg0: i32, %arg1: i32, %arg2: memref<1x2x288x64xbf16, #tpu.memory_space<vmem>>, %arg3: memref<1x64x128xbf16, #tpu.memory_space<vmem>>, %arg4: memref<1x288xf32, #tpu.memory_space<vmem>>, %arg5: memref<1x2x288x128xbf16, #tpu.memory_space<vmem>>, %arg6: memref<1x1x2x128xf32, #tpu.memory_space<vmem>>) attributes {dimension_semantics = [#tpu.dimension_semantics<parallel>, #tpu.dimension_semantics<parallel>], iteration_bounds = array<i64: 4, 1>, scalar_prefetch = 0 : i64, scratch_operands = 0 : i64, tpu.core_type = #tpu.core_type<tc>, window_params = [{transform_indices = @transform_0, window_bounds = array<i64: 1, 2, 288, 64>}, {transform_indices = @transform_1, window_bounds = array<i64: 1, 64, 128>}, {pipeline_mode = #tpu.pipeline_mode<synchronous>, transform_indices = @transform_2, window_bounds = array<i64: 1, 288>}, {transform_indices = @transform_3, window_bounds = array<i64: 1, 2, 288, 128>}, {transform_indices = @transform_4, window_bounds = array<i64: 1, 1, 2, 128>}]} {
    %c0 = arith.constant 0 : index
    %c0_0 = arith.constant 0 : index
    %0 = vector.load %arg4[%c0, %c0_0] : memref<1x288xf32, #tpu.memory_space<vmem>>, vector<1x288xf32>
    %cst = arith.constant 0.000000e+00 : f32
    %1 = vector.broadcast %cst : f32 to vector<1x128xf32>
    %cst_1 = arith.constant 0.000000e+00 : f32
    %2 = vector.broadcast %cst_1 : f32 to vector<1x128xf32>
    %c0_2 = arith.constant 0 : index
    %c0_3 = arith.constant 0 : index
    %c0_4 = arith.constant 0 : index
    %c0_5 = arith.constant 0 : index
    %3 = vector.load %arg2[%c0_2, %c0_3, %c0_4, %c0_5] : memref<1x2x288x64xbf16, #tpu.memory_space<vmem>>, vector<1x1x288x64xbf16>
    %4 = vector.shape_cast %3 : vector<1x1x288x64xbf16> to vector<288x64xbf16>
    %c0_6 = arith.constant 0 : index
    %c0_7 = arith.constant 0 : index
    %c0_8 = arith.constant 0 : index
    %5 = vector.load %arg3[%c0_6, %c0_7, %c0_8] : memref<1x64x128xbf16, #tpu.memory_space<vmem>>, vector<1x64x128xbf16>
    %6 = vector.shape_cast %5 : vector<1x64x128xbf16> to vector<64x128xbf16>
    %cst_9 = arith.constant dense<0.000000e+00> : vector<288x128xf32>
    %7 = tpu.matmul %4, %6, %cst_9 {dimension_numbers = #tpu.dot_dimension_numbers<[1], [0], [0], [1], [0, 0, 1, 1], [], []>} : vector<288x64xbf16>, vector<64x128xbf16>, vector<288x128xf32> -> vector<288x128xf32>
    %8 = arith.truncf %7 : vector<288x128xf32> to vector<288x128xbf16>
    %c0_10 = arith.constant 0 : index
    %c0_11 = arith.constant 0 : index
    %c0_12 = arith.constant 0 : index
    %c0_13 = arith.constant 0 : index
    %9 = vector.load %arg5[%c0_10, %c0_11, %c0_12, %c0_13] : memref<1x2x288x128xbf16, #tpu.memory_space<vmem>>, vector<1x1x288x128xbf16>
    %10 = vector.shape_cast %9 : vector<1x1x288x128xbf16> to vector<288x128xbf16>
    %11 = vector.shape_cast %8 : vector<288x128xbf16> to vector<1x1x288x128xbf16>
    tpu.vector_store %arg5[%c0_10, %c0_11, %c0_12, %c0_13], %11 {strides = array<i32>} : memref<1x2x288x128xbf16, #tpu.memory_space<vmem>>, vector<1x1x288x128xbf16>,
    %cst_14 = arith.constant dense<0.000000e+00> : vector<1x128xf32>
    %12 = tpu.matmul %0, %7, %cst_14 {dimension_numbers = #tpu.dot_dimension_numbers<[1], [0], [0], [1], [0, 0, 1, 1], [], []>} : vector<1x288xf32>, vector<288x128xf32>, vector<1x128xf32> -> vector<1x128xf32>
    %13 = arith.addf %1, %12 : vector<1x128xf32>
    %14 = arith.mulf %7, %7 : vector<288x128xf32>
    %cst_15 = arith.constant dense<0.000000e+00> : vector<1x128xf32>
    %15 = tpu.matmul %0, %14, %cst_15 {dimension_numbers = #tpu.dot_dimension_numbers<[1], [0], [0], [1], [0, 0, 1, 1], [], []>} : vector<1x288xf32>, vector<288x128xf32>, vector<1x128xf32> -> vector<1x128xf32>
    %16 = arith.addf %2, %15 : vector<1x128xf32>
    %c0_16 = arith.constant 0 : index
    %c1 = arith.constant 1 : index
    %c0_17 = arith.constant 0 : index
    %c0_18 = arith.constant 0 : index
    %17 = vector.load %arg2[%c0_16, %c1, %c0_17, %c0_18] : memref<1x2x288x64xbf16, #tpu.memory_space<vmem>>, vector<1x1x288x64xbf16>
    %18 = vector.shape_cast %17 : vector<1x1x288x64xbf16> to vector<288x64xbf16>
    %c0_19 = arith.constant 0 : index
    %c0_20 = arith.constant 0 : index
    %c0_21 = arith.constant 0 : index
    %19 = vector.load %arg3[%c0_19, %c0_20, %c0_21] : memref<1x64x128xbf16, #tpu.memory_space<vmem>>, vector<1x64x128xbf16>
    %20 = vector.shape_cast %19 : vector<1x64x128xbf16> to vector<64x128xbf16>
    %cst_22 = arith.constant dense<0.000000e+00> : vector<288x128xf32>
    %21 = tpu.matmul %18, %20, %cst_22 {dimension_numbers = #tpu.dot_dimension_numbers<[1], [0], [0], [1], [0, 0, 1, 1], [], []>} : vector<288x64xbf16>, vector<64x128xbf16>, vector<288x128xf32> -> vector<288x128xf32>
    %22 = arith.truncf %21 : vector<288x128xf32> to vector<288x128xbf16>
    %c0_23 = arith.constant 0 : index
    %c1_24 = arith.constant 1 : index
    %c0_25 = arith.constant 0 : index
    %c0_26 = arith.constant 0 : index
    %23 = vector.load %arg5[%c0_23, %c1_24, %c0_25, %c0_26] : memref<1x2x288x128xbf16, #tpu.memory_space<vmem>>, vector<1x1x288x128xbf16>
    %24 = vector.shape_cast %23 : vector<1x1x288x128xbf16> to vector<288x128xbf16>
    %25 = vector.shape_cast %22 : vector<288x128xbf16> to vector<1x1x288x128xbf16>
    tpu.vector_store %arg5[%c0_23, %c1_24, %c0_25, %c0_26], %25 {strides = array<i32>} : memref<1x2x288x128xbf16, #tpu.memory_space<vmem>>, vector<1x1x288x128xbf16>,
    %cst_27 = arith.constant dense<0.000000e+00> : vector<1x128xf32>
    %26 = tpu.matmul %0, %21, %cst_27 {dimension_numbers = #tpu.dot_dimension_numbers<[1], [0], [0], [1], [0, 0, 1, 1], [], []>} : vector<1x288xf32>, vector<288x128xf32>, vector<1x128xf32> -> vector<1x128xf32>
    %27 = arith.addf %13, %26 : vector<1x128xf32>
    %28 = arith.mulf %21, %21 : vector<288x128xf32>
    %cst_28 = arith.constant dense<0.000000e+00> : vector<1x128xf32>
    %29 = tpu.matmul %0, %28, %cst_28 {dimension_numbers = #tpu.dot_dimension_numbers<[1], [0], [0], [1], [0, 0, 1, 1], [], []>} : vector<1x288xf32>, vector<288x128xf32>, vector<1x128xf32> -> vector<1x128xf32>
    %30 = arith.addf %16, %29 : vector<1x128xf32>
    %31 = tpu.concatenate %27, %30 in 0 : vector<1x128xf32>, vector<1x128xf32> -> vector<2x128xf32>
    %c0_29 = arith.constant 0 : index
    %c0_30 = arith.constant 0 : index
    %c0_31 = arith.constant 0 : index
    %c0_32 = arith.constant 0 : index
    %32 = vector.load %arg6[%c0_29, %c0_30, %c0_31, %c0_32] : memref<1x1x2x128xf32, #tpu.memory_space<vmem>>, vector<1x1x2x128xf32>
    %33 = vector.shape_cast %32 : vector<1x1x2x128xf32> to vector<2x128xf32>
    %34 = vector.shape_cast %31 : vector<2x128xf32> to vector<1x1x2x128xf32>
    tpu.vector_store %arg6[%c0_29, %c0_30, %c0_31, %c0_32], %34 {strides = array<i32>} : memref<1x1x2x128xf32, #tpu.memory_space<vmem>>, vector<1x1x2x128xf32>,
    return
  }
  func.func @transform_0(%arg0: i32, %arg1: i32) -> (i32, i32, i32, i32) {
    %c0_i32 = arith.constant 0 : i32
    %c0_i32_0 = arith.constant 0 : i32
    %c0_i32_1 = arith.constant 0 : i32
    return %arg0, %arg1, %c0_i32, %c0_i32_0 : i32, i32, i32, i32
  }
  func.func @transform_1(%arg0: i32, %arg1: i32) -> (i32, i32, i32) {
    %c0_i32 = arith.constant 0 : i32
    %c0_i32_0 = arith.constant 0 : i32
    %c0_i32_1 = arith.constant 0 : i32
    return %arg0, %c0_i32, %c0_i32_0 : i32, i32, i32
  }
  func.func @transform_2(%arg0: i32, %arg1: i32) -> (i32, i32) {
    %c0_i32 = arith.constant 0 : i32
    %c0_i32_0 = arith.constant 0 : i32
    %c0_i32_1 = arith.constant 0 : i32
    return %c0_i32, %c0_i32_0 : i32, i32
  }
  func.func @transform_3(%arg0: i32, %arg1: i32) -> (i32, i32, i32, i32) {
    %c0_i32 = arith.constant 0 : i32
    %c0_i32_0 = arith.constant 0 : i32
    %c0_i32_1 = arith.constant 0 : i32
    return %arg0, %arg1, %c0_i32, %c0_i32_0 : i32, i32, i32, i32
  }
  func.func @transform_4(%arg0: i32, %arg1: i32) -> (i32, i32, i32, i32) {
    %c0_i32 = arith.constant 0 : i32
    %c0_i32_0 = arith.constant 0 : i32
    %c0_i32_1 = arith.constant 0 : i32
    return %arg0, %arg1, %c0_i32, %c0_i32_0 : i32, i32, i32, i32
  }
}

module attributes {stable_mosaic.version = 11 : i64} {
  func.func @_convt_plain_kernel(%arg0: i32, %arg1: i32, %arg2: memref<1x2x1088x32xbf16, #tpu.memory_space<vmem>>, %arg3: memref<1x32x128xbf16, #tpu.memory_space<vmem>>, %arg4: memref<1x2x1088x128xbf16, #tpu.memory_space<vmem>>) attributes {dimension_semantics = [#tpu.dimension_semantics<parallel>, #tpu.dimension_semantics<parallel>], iteration_bounds = array<i64: 4, 1>, scalar_prefetch = 0 : i64, scratch_operands = 0 : i64, tpu.core_type = #tpu.core_type<tc>, window_params = [{transform_indices = @transform_0, window_bounds = array<i64: 1, 2, 1088, 32>}, {transform_indices = @transform_1, window_bounds = array<i64: 1, 32, 128>}, {transform_indices = @transform_2, window_bounds = array<i64: 1, 2, 1088, 128>}]} {
    %c0 = arith.constant 0 : index
    %c0_0 = arith.constant 0 : index
    %c0_1 = arith.constant 0 : index
    %c0_2 = arith.constant 0 : index
    %0 = vector.load %arg2[%c0, %c0_0, %c0_1, %c0_2] : memref<1x2x1088x32xbf16, #tpu.memory_space<vmem>>, vector<1x1x1088x32xbf16>
    %1 = vector.shape_cast %0 : vector<1x1x1088x32xbf16> to vector<1088x32xbf16>
    %c0_3 = arith.constant 0 : index
    %c0_4 = arith.constant 0 : index
    %c0_5 = arith.constant 0 : index
    %2 = vector.load %arg3[%c0_3, %c0_4, %c0_5] : memref<1x32x128xbf16, #tpu.memory_space<vmem>>, vector<1x32x128xbf16>
    %3 = vector.shape_cast %2 : vector<1x32x128xbf16> to vector<32x128xbf16>
    %cst = arith.constant dense<0.000000e+00> : vector<1088x128xf32>
    %4 = tpu.matmul %1, %3, %cst {dimension_numbers = #tpu.dot_dimension_numbers<[1], [0], [0], [1], [0, 0, 1, 1], [], []>} : vector<1088x32xbf16>, vector<32x128xbf16>, vector<1088x128xf32> -> vector<1088x128xf32>
    %5 = arith.truncf %4 : vector<1088x128xf32> to vector<1088x128xbf16>
    %c0_6 = arith.constant 0 : index
    %c0_7 = arith.constant 0 : index
    %c0_8 = arith.constant 0 : index
    %c0_9 = arith.constant 0 : index
    %6 = vector.load %arg4[%c0_6, %c0_7, %c0_8, %c0_9] : memref<1x2x1088x128xbf16, #tpu.memory_space<vmem>>, vector<1x1x1088x128xbf16>
    %7 = vector.shape_cast %6 : vector<1x1x1088x128xbf16> to vector<1088x128xbf16>
    %8 = vector.shape_cast %5 : vector<1088x128xbf16> to vector<1x1x1088x128xbf16>
    tpu.vector_store %arg4[%c0_6, %c0_7, %c0_8, %c0_9], %8 {strides = array<i32>} : memref<1x2x1088x128xbf16, #tpu.memory_space<vmem>>, vector<1x1x1088x128xbf16>,
    %c0_10 = arith.constant 0 : index
    %c1 = arith.constant 1 : index
    %c0_11 = arith.constant 0 : index
    %c0_12 = arith.constant 0 : index
    %9 = vector.load %arg2[%c0_10, %c1, %c0_11, %c0_12] : memref<1x2x1088x32xbf16, #tpu.memory_space<vmem>>, vector<1x1x1088x32xbf16>
    %10 = vector.shape_cast %9 : vector<1x1x1088x32xbf16> to vector<1088x32xbf16>
    %c0_13 = arith.constant 0 : index
    %c0_14 = arith.constant 0 : index
    %c0_15 = arith.constant 0 : index
    %11 = vector.load %arg3[%c0_13, %c0_14, %c0_15] : memref<1x32x128xbf16, #tpu.memory_space<vmem>>, vector<1x32x128xbf16>
    %12 = vector.shape_cast %11 : vector<1x32x128xbf16> to vector<32x128xbf16>
    %cst_16 = arith.constant dense<0.000000e+00> : vector<1088x128xf32>
    %13 = tpu.matmul %10, %12, %cst_16 {dimension_numbers = #tpu.dot_dimension_numbers<[1], [0], [0], [1], [0, 0, 1, 1], [], []>} : vector<1088x32xbf16>, vector<32x128xbf16>, vector<1088x128xf32> -> vector<1088x128xf32>
    %14 = arith.truncf %13 : vector<1088x128xf32> to vector<1088x128xbf16>
    %c0_17 = arith.constant 0 : index
    %c1_18 = arith.constant 1 : index
    %c0_19 = arith.constant 0 : index
    %c0_20 = arith.constant 0 : index
    %15 = vector.load %arg4[%c0_17, %c1_18, %c0_19, %c0_20] : memref<1x2x1088x128xbf16, #tpu.memory_space<vmem>>, vector<1x1x1088x128xbf16>
    %16 = vector.shape_cast %15 : vector<1x1x1088x128xbf16> to vector<1088x128xbf16>
    %17 = vector.shape_cast %14 : vector<1088x128xbf16> to vector<1x1x1088x128xbf16>
    tpu.vector_store %arg4[%c0_17, %c1_18, %c0_19, %c0_20], %17 {strides = array<i32>} : memref<1x2x1088x128xbf16, #tpu.memory_space<vmem>>, vector<1x1x1088x128xbf16>,
    return
  }
  func.func @transform_0(%arg0: i32, %arg1: i32) -> (i32, i32, i32, i32) {
    %c0_i32 = arith.constant 0 : i32
    %c0_i32_0 = arith.constant 0 : i32
    %c0_i32_1 = arith.constant 0 : i32
    return %arg0, %arg1, %c0_i32, %c0_i32_0 : i32, i32, i32, i32
  }
  func.func @transform_1(%arg0: i32, %arg1: i32) -> (i32, i32, i32) {
    %c0_i32 = arith.constant 0 : i32
    %c0_i32_0 = arith.constant 0 : i32
    %c0_i32_1 = arith.constant 0 : i32
    return %arg0, %c0_i32, %c0_i32_0 : i32, i32, i32
  }
  func.func @transform_2(%arg0: i32, %arg1: i32) -> (i32, i32, i32, i32) {
    %c0_i32 = arith.constant 0 : i32
    %c0_i32_0 = arith.constant 0 : i32
    %c0_i32_1 = arith.constant 0 : i32
    return %arg0, %arg1, %c0_i32, %c0_i32_0 : i32, i32, i32, i32
  }
}

</mosaic_0001>

<llo_original>
// kernel: generator_forward.5
$region0: #{generator_forward.5}
  #allocation0 [shape = 'u32[]', space=smem, size = 0x4, offset = 0x4, fixed_abs, tag = 'smem constant byte address 0x4 - core index']
  #allocation1 [shape = 'u32[144,128]{1,0:T(1,128)}', space=vmem, size = 0x12000, scoped, tag = 'internal scratch']
  %s0 = inlined_call_operand.vmem [shape: bf16[2,32], index: 0, kind: input, shape index: {}]
  %s1 = inlined_call_operand.vmem [shape: bf16[32,1024], index: 1, kind: input, shape index: {}]
  %s2 = inlined_call_operand.hbm [shape: f32[1,1024], index: 2, kind: input, shape index: {}]
  %s3 = inlined_call_operand.hbm [shape: f32[1,1024], index: 3, kind: input, shape index: {}]
  %s4 = inlined_call_operand.hbm [shape: f32[1,1024], index: 4, kind: input, shape index: {}]
  %s5 = inlined_call_operand.vmem [shape: bf16[2,1024], index: 5, kind: output, shape index: {}]
  %s6 = sld [smem:[#allocation0]]
  $region42: #{generator_forward.5} parent=0
    _
  %s8 = ssub.s32 1, %s6
  %s9 = scalar_select 0, %s8, %s6
  $region1: #{generator_forward.5} parent=0
    #allocation2 [shape = 'u8[4096]{0}', space=vmem, size = 0x1000, scoped, tag = 'input window, operand 2, single buffered']
    #allocation3 [shape = 's32[1]{0}', space=sflag, size = 0x4, scoped, tag = 'scoped memory for generator_forward.5']
    #allocation4 [shape = 'u8[4096]{0}', space=vmem, size = 0x1000, scoped, tag = 'input window, operand 3, single buffered']
    #allocation5 [shape = 's32[1]{0}', space=sflag, size = 0x4, scoped, tag = 'scoped memory for generator_forward.5']
    #allocation6 [shape = 'u8[4096]{0}', space=vmem, size = 0x1000, scoped, tag = 'input window, operand 4, single buffered']
    %10 = vsyncpa [#allocation3], 0
    %11 = vsyncpa [#allocation5], 0
    // Predicated region
    $region2: #{generator_forward.5} parent=1 // pred_check
      _
    $region3: #{generator_forward.5} parent=1 // pred_check_branch
      %13 = sbr.rel (0) target = $region5
    $region4: #{generator_forward.5} parent=1 // pred_region
      _
    $region5: #{generator_forward.5} parent=1 // pred_fallthru
      _
    // Predicated region
    $region6: #{generator_forward.5} parent=1 // pred_check
      _
    $region7: #{generator_forward.5} parent=1 // pred_check_branch
      %15 = sbr.rel (0) target = $region9
    $region8: #{generator_forward.5} parent=1 // pred_region
      _
    $region9: #{generator_forward.5} parent=1 // pred_fallthru
      _
    // Predicated region
    $region10: #{generator_forward.5} parent=1 // pred_check
      _
    $region11: #{generator_forward.5} parent=1 // pred_check_branch
      %17 = sbr.rel (0) target = $region13
    $region12: #{generator_forward.5} parent=1 // pred_region
      %s19 = ssub.s32 128, 128
      %20 = vsyncadd [#allocation3], %s19
      %s22 = sshll.u32 [#allocation2], 4
      %s23 = int_to_ptr.vmem [resolvable:$true] %s22
      %25 = dma.hbm_to_vmem [thread:$0]  %s2, 128, %s23, [#allocation3]
    $region13: #{generator_forward.5} parent=1 // pred_fallthru
      _
    // Predicated region
    $region14: #{generator_forward.5} parent=1 // pred_check
      _
    $region15: #{generator_forward.5} parent=1 // pred_check_branch
      %27 = sbr.rel (0) target = $region17
    $region16: #{generator_forward.5} parent=1 // pred_region
      %s29 = ssub.s32 128, 128
      %30 = vsyncadd [#allocation5], %s29
      %s32 = sshll.u32 [#allocation4], 4
      %s33 = int_to_ptr.vmem [resolvable:$true] %s32
      %35 = dma.hbm_to_vmem [thread:$0]  %s3, 128, %s33, [#allocation5]
    $region17: #{generator_forward.5} parent=1 // pred_fallthru
      _
    // Predicated region
    $region18: #{generator_forward.5} parent=1 // pred_check
      _
    $region19: #{generator_forward.5} parent=1 // pred_check_branch
      %37 = sbr.rel (0) target = $region21
    $region20: #{generator_forward.5} parent=1 // pred_region
      %s39 = ssub.s32 128, 128
      %40 = vsyncadd [#allocation5], %s39
      %s42 = sshll.u32 [#allocation6], 4
      %s43 = int_to_ptr.vmem [resolvable:$true] %s42
      %45 = dma.hbm_to_vmem [thread:$0]  %s4, 128, %s43, [#allocation5]
    $region21: #{generator_forward.5} parent=1 // pred_fallthru
      _
    // Predicated region
    $region22: #{generator_forward.5} parent=1 // pred_check
      _
    $region23: #{generator_forward.5} parent=1 // pred_check_branch
      %47 = sbr.rel (0) target = $region25
    $region24: #{generator_forward.5} parent=1 // pred_region
      %48 = dma.done [#allocation3], 128
    $region25: #{generator_forward.5} parent=1 // pred_fallthru
      _
    // Predicated region
    $region26: #{generator_forward.5} parent=1 // pred_check
      _
    $region27: #{generator_forward.5} parent=1 // pred_check_branch
      %50 = sbr.rel (0) target = $region29
    $region28: #{generator_forward.5} parent=1 // pred_region
      %51 = dma.done [#allocation5], 128
    $region29: #{generator_forward.5} parent=1 // pred_fallthru
      _
    // Predicated region
    $region30: #{generator_forward.5} parent=1 // pred_check
      _
    $region31: #{generator_forward.5} parent=1 // pred_check_branch
      %53 = sbr.rel (0) target = $region33
    $region32: #{generator_forward.5} parent=1 // pred_region
      %54 = dma.done [#allocation5], 128
    $region33: #{generator_forward.5} parent=1 // pred_fallthru
      _
    %v56 = vld [vmem:[%s0] sm:$0x1]
    %v57 = vld [vmem:[%s1] sm:$0xff]
    %v58 = vld [vmem:[%s1 + $0x8] sm:$0xff]
    %v59 = vld [vmem:[%s1 + $0x10] sm:$0xff]
    %v60 = vld [vmem:[%s1 + $0x18] sm:$0xff]
    %v61 = vld [vmem:[%s1 + $0x20] sm:$0xff]
    %v62 = vld [vmem:[%s1 + $0x28] sm:$0xff]
    %v63 = vld [vmem:[%s1 + $0x30] sm:$0xff]
    %v64 = vld [vmem:[%s1 + $0x38] sm:$0xff]
    %v65 = vld [vmem:[%s1 + $0x40] sm:$0xff]
    %v66 = vld [vmem:[%s1 + $0x48] sm:$0xff]
    %v67 = vld [vmem:[%s1 + $0x50] sm:$0xff]
    %v68 = vld [vmem:[%s1 + $0x58] sm:$0xff]
    %v69 = vld [vmem:[%s1 + $0x60] sm:$0xff]
    %v70 = vld [vmem:[%s1 + $0x68] sm:$0xff]
    %v71 = vld [vmem:[%s1 + $0x70] sm:$0xff]
    %v72 = vld [vmem:[%s1 + $0x78] sm:$0xff]
    %v73 = vld [vmem:[#allocation2] sm:$0xff]
    %v75 = vlaneseq
    %v76 = vshrl.u32 %v75, 7
    %v77 = vsub.s32 0, %v76
    %v78 = vrot.slane %v73, %v77
    %v79 = vlaneseq
    %v80 = vshrl.u32 %v79, 7
    %v81 = vsub.s32 1, %v80
    %v82 = vrot.slane %v73, %v81
    %v83 = vlaneseq
    %v84 = vshrl.u32 %v83, 7
    %v85 = vsub.s32 2, %v84
    %v86 = vrot.slane %v73, %v85
    %v87 = vlaneseq
    %v88 = vshrl.u32 %v87, 7
    %v89 = vsub.s32 3, %v88
    %v90 = vrot.slane %v73, %v89
    %v91 = vlaneseq
    %v92 = vshrl.u32 %v91, 7
    %v93 = vsub.s32 4, %v92
    %v94 = vrot.slane %v73, %v93
    %v95 = vlaneseq
    %v96 = vshrl.u32 %v95, 7
    %v97 = vsub.s32 5, %v96
    %v98 = vrot.slane %v73, %v97
    %v99 = vlaneseq
    %v100 = vshrl.u32 %v99, 7
    %v101 = vsub.s32 6, %v100
    %v102 = vrot.slane %v73, %v101
    %v103 = vlaneseq
    %v104 = vshrl.u32 %v103, 7
    %v105 = vsub.s32 7, %v104
    %v106 = vrot.slane %v73, %v105
    %v131 = vunpack.c.l.b16 %v57
    %v132 = vunpack.c.h.b16 %v57
    %v133 = vunpack.c.l.b16 %v58
    %v134 = vunpack.c.h.b16 %v58
    %v135 = vunpack.c.l.b16 %v59
    %v136 = vunpack.c.h.b16 %v59
    %v137 = vunpack.c.l.b16 %v60
    %v138 = vunpack.c.h.b16 %v60
    %v139 = vunpack.c.l.b16 %v61
    %v140 = vunpack.c.h.b16 %v61
    %v141 = vunpack.c.l.b16 %v62
    %v142 = vunpack.c.h.b16 %v62
    %v143 = vunpack.c.l.b16 %v63
    %v144 = vunpack.c.h.b16 %v63
    %v145 = vunpack.c.l.b16 %v64
    %v146 = vunpack.c.h.b16 %v64
    %v147 = vunpack.c.l.b16 %v65
    %v148 = vunpack.c.h.b16 %v65
    %v149 = vunpack.c.l.b16 %v66
    %v150 = vunpack.c.h.b16 %v66
    %v151 = vunpack.c.l.b16 %v67
    %v152 = vunpack.c.h.b16 %v67
    %v153 = vunpack.c.l.b16 %v68
    %v154 = vunpack.c.h.b16 %v68
    %v155 = vunpack.c.l.b16 %v69
    %v156 = vunpack.c.h.b16 %v69
    %v157 = vunpack.c.l.b16 %v70
    %v158 = vunpack.c.h.b16 %v70
    %v159 = vunpack.c.l.b16 %v71
    %v160 = vunpack.c.h.b16 %v71
    %v161 = vunpack.c.l.b16 %v72
    %v162 = vunpack.c.h.b16 %v72
    %v163 = vpack.c.b16 %v139, %v131
    %v164 = vpack.c.b16 %v140, %v132
    %v165 = vpack.c.b16 %v141, %v133
    %v166 = vpack.c.b16 %v142, %v134
    %v167 = vpack.c.b16 %v143, %v135
    %v168 = vpack.c.b16 %v144, %v136
    %v169 = vpack.c.b16 %v145, %v137
    %v170 = vpack.c.b16 %v146, %v138
    %v171 = vpack.c.b16 %v155, %v147
    %v172 = vpack.c.b16 %v156, %v148
    %v173 = vpack.c.b16 %v157, %v149
    %v174 = vpack.c.b16 %v158, %v150
    %v175 = vpack.c.b16 %v159, %v151
    %v176 = vpack.c.b16 %v160, %v152
    %v177 = vpack.c.b16 %v161, %v153
    %v178 = vpack.c.b16 %v162, %v154
    %vm195 = vcmask 261120
    %v197 = vsel %vm195, %v56, 0
    %199 = vmatprep.subr.bf16.mxu0 %v164
    %200 = vmatpush1.bf16.msra.mxu0 %v163
    %201 = vmatprep.subr.bf16.mxu0 %v172
    %202 = vmatpush1.bf16.msra.mxu0 %v171
    %203 = vmatprep.subr.bf16.mxu0 0
    %204 = vmatpush1.bf16.msra.mxu0 0
    %205 = vmatprep.subr.bf16.mxu0 0
    %206 = vmatpush1.bf16.msra.mxu0 0
    %207 = vmatprep.subr.bf16.mxu0 0
    %208 = vmatpush1.bf16.msra.mxu0 0
    %209 = vmatprep.subr.bf16.mxu0 0
    %210 = vmatpush1.bf16.msra.mxu0 0
    %211 = vmatprep.subr.bf16.mxu0 0
    %212 = vmatpush1.bf16.msra.mxu0 0
    %213 = vmatprep.subr.bf16.mxu0 0
    %214 = vmatpush1.bf16.msra.mxu0 0
    %215 = vmatprep.subr.bf16.mxu0 0
    %216 = vmatpush1.bf16.msra.mxu0 0
    %217 = vmatprep.subr.bf16.mxu0 0
    %218 = vmatpush1.bf16.msra.mxu0 0
    %219 = vmatprep.subr.bf16.mxu0 0
    %220 = vmatpush1.bf16.msra.mxu0 0
    %221 = vmatprep.subr.bf16.mxu0 0
    %222 = vmatpush1.bf16.msra.mxu0 0
    %223 = vmatprep.subr.bf16.mxu0 0
    %224 = vmatpush1.bf16.msra.mxu0 0
    %225 = vmatprep.subr.bf16.mxu0 0
    %226 = vmatpush1.bf16.msra.mxu0 0
    %227 = vmatprep.subr.bf16.mxu0 0
    %228 = vmatpush1.bf16.msra.mxu0 0
    %229 = vmatprep.subr.bf16.mxu0 0
    %230 = vmatpush1.bf16.msra.mxu0 0
    %231 = vmatprep.mubr.bf16.mxu0 0
    %232 = vmatmul.mubr.bf16.gmra.mrb[0].mxu0 %v197
    %v233 = vpop.f32.mrb[0].mxu0
    %v234 = vadd.f32 %v78, %v233
    %v235 = vpop.f32.mrb[0].mxu0
    %v236 = vadd.f32 %v82, %v235
    %v237 = vpop.f32.mrb[0].mxu0
    %v238 = vpop.f32.mrb[0].mxu0
    %239 = vdwg.mxu0
    %240 = vmatprep.subr.bf16.mxu0 %v166
    %241 = vmatpush1.bf16.msra.mxu0 %v165
    %242 = vmatprep.subr.bf16.mxu0 %v174
    %243 = vmatpush1.bf16.msra.mxu0 %v173
    %244 = vmatprep.subr.bf16.mxu0 0
    %245 = vmatpush1.bf16.msra.mxu0 0
    %246 = vmatprep.subr.bf16.mxu0 0
    %247 = vmatpush1.bf16.msra.mxu0 0
    %248 = vmatprep.subr.bf16.mxu0 0
    %249 = vmatpush1.bf16.msra.mxu0 0
    %250 = vmatprep.subr.bf16.mxu0 0
    %251 = vmatpush1.bf16.msra.mxu0 0
    %252 = vmatprep.subr.bf16.mxu0 0
    %253 = vmatpush1.bf16.msra.mxu0 0
    %254 = vmatprep.subr.bf16.mxu0 0
    %255 = vmatpush1.bf16.msra.mxu0 0
    %256 = vmatprep.subr.bf16.mxu0 0
    %257 = vmatpush1.bf16.msra.mxu0 0
    %258 = vmatprep.subr.bf16.mxu0 0
    %259 = vmatpush1.bf16.msra.mxu0 0
    %260 = vmatprep.subr.bf16.mxu0 0
    %261 = vmatpush1.bf16.msra.mxu0 0
    %262 = vmatprep.subr.bf16.mxu0 0
    %263 = vmatpush1.bf16.msra.mxu0 0
    %264 = vmatprep.subr.bf16.mxu0 0
    %265 = vmatpush1.bf16.msra.mxu0 0
    %266 = vmatprep.subr.bf16.mxu0 0
    %267 = vmatpush1.bf16.msra.mxu0 0
    %268 = vmatprep.subr.bf16.mxu0 0
    %269 = vmatpush1.bf16.msra.mxu0 0
    %270 = vmatprep.subr.bf16.mxu0 0
    %271 = vmatpush1.bf16.msra.mxu0 0
    %272 = vmatprep.mubr.bf16.mxu0 0
    %273 = vmatmul.mubr.bf16.gmra.mrb[0].mxu0 %v197
    %v274 = vpop.f32.mrb[0].mxu0
    %v275 = vadd.f32 %v86, %v274
    %v276 = vpop.f32.mrb[0].mxu0
    %v277 = vadd.f32 %v90, %v276
    %v278 = vpop.f32.mrb[0].mxu0
    %v279 = vpop.f32.mrb[0].mxu0
    %280 = vdwg.mxu0
    %281 = vmatprep.subr.bf16.mxu0 %v168
    %282 = vmatpush1.bf16.msra.mxu0 %v167
    %283 = vmatprep.subr.bf16.mxu0 %v176
    %284 = vmatpush1.bf16.msra.mxu0 %v175
    %285 = vmatprep.subr.bf16.mxu0 0
    %286 = vmatpush1.bf16.msra.mxu0 0
    %287 = vmatprep.subr.bf16.mxu0 0
    %288 = vmatpush1.bf16.msra.mxu0 0
    %289 = vmatprep.subr.bf16.mxu0 0
    %290 = vmatpush1.bf16.msra.mxu0 0
    %291 = vmatprep.subr.bf16.mxu0 0
    %292 = vmatpush1.bf16.msra.mxu0 0
    %293 = vmatprep.subr.bf16.mxu0 0
    %294 = vmatpush1.bf16.msra.mxu0 0
    %295 = vmatprep.subr.bf16.mxu0 0
    %296 = vmatpush1.bf16.msra.mxu0 0
    %297 = vmatprep.subr.bf16.mxu0 0
    %298 = vmatpush1.bf16.msra.mxu0 0
    %299 = vmatprep.subr.bf16.mxu0 0
    %300 = vmatpush1.bf16.msra.mxu0 0
    %301 = vmatprep.subr.bf16.mxu0 0
    %302 = vmatpush1.bf16.msra.mxu0 0
    %303 = vmatprep.subr.bf16.mxu0 0
    %304 = vmatpush1.bf16.msra.mxu0 0
    %305 = vmatprep.subr.bf16.mxu0 0
    %306 = vmatpush1.bf16.msra.mxu0 0
    %307 = vmatprep.subr.bf16.mxu0 0
    %308 = vmatpush1.bf16.msra.mxu0 0
    %309 = vmatprep.subr.bf16.mxu0 0
    %310 = vmatpush1.bf16.msra.mxu0 0
    %311 = vmatprep.subr.bf16.mxu0 0
    %312 = vmatpush1.bf16.msra.mxu0 0
    %313 = vmatprep.mubr.bf16.mxu0 0
    %314 = vmatmul.mubr.bf16.gmra.mrb[0].mxu0 %v197
    %v315 = vpop.f32.mrb[0].mxu0
    %v316 = vadd.f32 %v94, %v315
    %v317 = vpop.f32.mrb[0].mxu0
    %v318 = vadd.f32 %v98, %v317
    %v319 = vpop.f32.mrb[0].mxu0
    %v320 = vpop.f32.mrb[0].mxu0
    %321 = vdwg.mxu0
    %322 = vmatprep.subr.bf16.mxu0 %v170
    %323 = vmatpush1.bf16.msra.mxu0 %v169
    %324 = vmatprep.subr.bf16.mxu0 %v178
    %325 = vmatpush1.bf16.msra.mxu0 %v177
    %326 = vmatprep.subr.bf16.mxu0 0
    %327 = vmatpush1.bf16.msra.mxu0 0
    %328 = vmatprep.subr.bf16.mxu0 0
    %329 = vmatpush1.bf16.msra.mxu0 0
    %330 = vmatprep.subr.bf16.mxu0 0
    %331 = vmatpush1.bf16.msra.mxu0 0
    %332 = vmatprep.subr.bf16.mxu0 0
    %333 = vmatpush1.bf16.msra.mxu0 0
    %334 = vmatprep.subr.bf16.mxu0 0
    %335 = vmatpush1.bf16.msra.mxu0 0
    %336 = vmatprep.subr.bf16.mxu0 0
    %337 = vmatpush1.bf16.msra.mxu0 0
    %338 = vmatprep.subr.bf16.mxu0 0
    %339 = vmatpush1.bf16.msra.mxu0 0
    %340 = vmatprep.subr.bf16.mxu0 0
    %341 = vmatpush1.bf16.msra.mxu0 0
    %342 = vmatprep.subr.bf16.mxu0 0
    %343 = vmatpush1.bf16.msra.mxu0 0
    %344 = vmatprep.subr.bf16.mxu0 0
    %345 = vmatpush1.bf16.msra.mxu0 0
    %346 = vmatprep.subr.bf16.mxu0 0
    %347 = vmatpush1.bf16.msra.mxu0 0
    %348 = vmatprep.subr.bf16.mxu0 0
    %349 = vmatpush1.bf16.msra.mxu0 0
    %350 = vmatprep.subr.bf16.mxu0 0
    %351 = vmatpush1.bf16.msra.mxu0 0
    %352 = vmatprep.subr.bf16.mxu0 0
    %353 = vmatpush1.bf16.msra.mxu0 0
    %354 = vmatprep.mubr.bf16.mxu0 0
    %355 = vmatmul.mubr.bf16.gmra.mrb[0].mxu0 %v197
    %v356 = vpop.f32.mrb[0].mxu0
    %v357 = vadd.f32 %v102, %v356
    %v358 = vpop.f32.mrb[0].mxu0
    %v359 = vadd.f32 %v106, %v358
    %v360 = vpop.f32.mrb[0].mxu0
    %v361 = vpop.f32.mrb[0].mxu0
    %362 = vdwg.mxu0
    %vm363 = vcmask 1041408
    %v364 = vsel %vm363, %v234, 0.0
    %v365 = vrot.slane %v364, 4
    %v366 = vadd.f32 %v364, %v365
    %v367 = vrot.slane %v366, 2
    %v368 = vadd.f32 %v366, %v367
    %v369 = vrot.slane %v368, 1
    %v370 = vadd.f32 %v368, %v369
    %v371 = vsel %vm363, %v236, 0.0
    %v372 = vrot.slane %v371, 4
    %v373 = vadd.f32 %v371, %v372
    %v374 = vrot.slane %v373, 2
    %v375 = vadd.f32 %v373, %v374
    %v376 = vrot.slane %v375, 1
    %v377 = vadd.f32 %v375, %v376
    %v378 = vsel %vm363, %v275, 0.0
    %v379 = vrot.slane %v378, 4
    %v380 = vadd.f32 %v378, %v379
    %v381 = vrot.slane %v380, 2
    %v382 = vadd.f32 %v380, %v381
    %v383 = vrot.slane %v382, 1
    %v384 = vadd.f32 %v382, %v383
    %v385 = vsel %vm363, %v277, 0.0
    %v386 = vrot.slane %v385, 4
    %v387 = vadd.f32 %v385, %v386
    %v388 = vrot.slane %v387, 2
    %v389 = vadd.f32 %v387, %v388
    %v390 = vrot.slane %v389, 1
    %v391 = vadd.f32 %v389, %v390
    %v392 = vsel %vm363, %v316, 0.0
    %v393 = vrot.slane %v392, 4
    %v394 = vadd.f32 %v392, %v393
    %v395 = vrot.slane %v394, 2
    %v396 = vadd.f32 %v394, %v395
    %v397 = vrot.slane %v396, 1
    %v398 = vadd.f32 %v396, %v397
    %v399 = vsel %vm363, %v318, 0.0
    %v400 = vrot.slane %v399, 4
    %v401 = vadd.f32 %v399, %v400
    %v402 = vrot.slane %v401, 2
    %v403 = vadd.f32 %v401, %v402
    %v404 = vrot.slane %v403, 1
    %v405 = vadd.f32 %v403, %v404
    %v406 = vsel %vm363, %v357, 0.0
    %v407 = vrot.slane %v406, 4
    %v408 = vadd.f32 %v406, %v407
    %v409 = vrot.slane %v408, 2
    %v410 = vadd.f32 %v408, %v409
    %v411 = vrot.slane %v410, 1
    %v412 = vadd.f32 %v410, %v411
    %v413 = vsel %vm363, %v359, 0.0
    %v414 = vrot.slane %v413, 4
    %v415 = vadd.f32 %v413, %v414
    %v416 = vrot.slane %v415, 2
    %v417 = vadd.f32 %v415, %v416
    %v418 = vrot.slane %v417, 1
    %v419 = vadd.f32 %v417, %v418
    %v420 = vrcp.pop 2.0
    %v421 = vmul.f32 %v370, %v420
    %v422 = vmul.f32 %v377, %v420
    %v423 = vmul.f32 %v384, %v420
    %v424 = vmul.f32 %v391, %v420
    %v425 = vmul.f32 %v398, %v420
    %v426 = vmul.f32 %v405, %v420
    %v427 = vmul.f32 %v412, %v420
    %v428 = vmul.f32 %v419, %v420
    %v429 = vsub.f32 %v234, %v421
    %v430 = vsub.f32 %v236, %v422
    %v431 = vsub.f32 %v275, %v423
    %v432 = vsub.f32 %v277, %v424
    %v433 = vsub.f32 %v316, %v425
    %v434 = vsub.f32 %v318, %v426
    %v435 = vsub.f32 %v357, %v427
    %v436 = vsub.f32 %v359, %v428
    %v437 = vmul.f32 %v429, %v429
    %v438 = vmul.f32 %v430, %v430
    %v439 = vmul.f32 %v431, %v431
    %v440 = vmul.f32 %v432, %v432
    %v441 = vmul.f32 %v433, %v433
    %v442 = vmul.f32 %v434, %v434
    %v443 = vmul.f32 %v435, %v435
    %v444 = vmul.f32 %v436, %v436
    %v445 = vsel %vm363, %v437, 0.0
    %v446 = vrot.slane %v445, 4
    %v447 = vadd.f32 %v445, %v446
    %v448 = vrot.slane %v447, 2
    %v449 = vadd.f32 %v447, %v448
    %v450 = vrot.slane %v449, 1
    %v451 = vadd.f32 %v449, %v450
    %v452 = vsel %vm363, %v438, 0.0
    %v453 = vrot.slane %v452, 4
    %v454 = vadd.f32 %v452, %v453
    %v455 = vrot.slane %v454, 2
    %v456 = vadd.f32 %v454, %v455
    %v457 = vrot.slane %v456, 1
    %v458 = vadd.f32 %v456, %v457
    %v459 = vsel %vm363, %v439, 0.0
    %v460 = vrot.slane %v459, 4
    %v461 = vadd.f32 %v459, %v460
    %v462 = vrot.slane %v461, 2
    %v463 = vadd.f32 %v461, %v462
    %v464 = vrot.slane %v463, 1
    %v465 = vadd.f32 %v463, %v464
    %v466 = vsel %vm363, %v440, 0.0
    %v467 = vrot.slane %v466, 4
    %v468 = vadd.f32 %v466, %v467
    %v469 = vrot.slane %v468, 2
    %v470 = vadd.f32 %v468, %v469
    %v471 = vrot.slane %v470, 1
    %v472 = vadd.f32 %v470, %v471
    %v473 = vsel %vm363, %v441, 0.0
    %v474 = vrot.slane %v473, 4
    %v475 = vadd.f32 %v473, %v474
    %v476 = vrot.slane %v475, 2
    %v477 = vadd.f32 %v475, %v476
    %v478 = vrot.slane %v477, 1
    %v479 = vadd.f32 %v477, %v478
    %v480 = vsel %vm363, %v442, 0.0
    %v481 = vrot.slane %v480, 4
    %v482 = vadd.f32 %v480, %v481
    %v483 = vrot.slane %v482, 2
    %v484 = vadd.f32 %v482, %v483
    %v485 = vrot.slane %v484, 1
    %v486 = vadd.f32 %v484, %v485
    %v487 = vsel %vm363, %v443, 0.0
    %v488 = vrot.slane %v487, 4
    %v489 = vadd.f32 %v487, %v488
    %v490 = vrot.slane %v489, 2
    %v491 = vadd.f32 %v489, %v490
    %v492 = vrot.slane %v491, 1
    %v493 = vadd.f32 %v491, %v492
    %v494 = vsel %vm363, %v444, 0.0
    %v495 = vrot.slane %v494, 4
    %v496 = vadd.f32 %v494, %v495
    %v497 = vrot.slane %v496, 2
    %v498 = vadd.f32 %v496, %v497
    %v499 = vrot.slane %v498, 1
    %v500 = vadd.f32 %v498, %v499
    %v501 = vmul.f32 %v451, %v420
    %v502 = vmul.f32 %v458, %v420
    %v503 = vmul.f32 %v465, %v420
    %v504 = vmul.f32 %v472, %v420
    %v505 = vmul.f32 %v479, %v420
    %v506 = vmul.f32 %v486, %v420
    %v507 = vmul.f32 %v493, %v420
    %v508 = vmul.f32 %v500, %v420
    %v509 = vadd.f32 %v501, 1e-05
    %v510 = vadd.f32 %v502, 1e-05
    %v511 = vadd.f32 %v503, 1e-05
    %v512 = vadd.f32 %v504, 1e-05
    %v513 = vadd.f32 %v505, 1e-05
    %v514 = vadd.f32 %v506, 1e-05
    %v515 = vadd.f32 %v507, 1e-05
    %v516 = vadd.f32 %v508, 1e-05
    %v517 = vrsqrt.pop %v509
    %v518 = vrsqrt.pop %v510
    %v519 = vrsqrt.pop %v511
    %v520 = vrsqrt.pop %v512
    %v521 = vrsqrt.pop %v513
    %v522 = vrsqrt.pop %v514
    %v523 = vrsqrt.pop %v515
    %v524 = vrsqrt.pop %v516
    %v525 = vmul.f32 %v429, %v517
    %v526 = vmul.f32 %v430, %v518
    %v527 = vmul.f32 %v431, %v519
    %v528 = vmul.f32 %v432, %v520
    %v529 = vmul.f32 %v433, %v521
    %v530 = vmul.f32 %v434, %v522
    %v531 = vmul.f32 %v435, %v523
    %v532 = vmul.f32 %v436, %v524
    %v533 = vld [vmem:[#allocation4] sm:$0xff]
    %v535 = vlaneseq
    %v536 = vshrl.u32 %v535, 7
    %v537 = vsub.s32 0, %v536
    %v538 = vrot.slane %v533, %v537
    %v539 = vlaneseq
    %v540 = vshrl.u32 %v539, 7
    %v541 = vsub.s32 1, %v540
    %v542 = vrot.slane %v533, %v541
    %v543 = vlaneseq
    %v544 = vshrl.u32 %v543, 7
    %v545 = vsub.s32 2, %v544
    %v546 = vrot.slane %v533, %v545
    %v547 = vlaneseq
    %v548 = vshrl.u32 %v547, 7
    %v549 = vsub.s32 3, %v548
    %v550 = vrot.slane %v533, %v549
    %v551 = vlaneseq
    %v552 = vshrl.u32 %v551, 7
    %v553 = vsub.s32 4, %v552
    %v554 = vrot.slane %v533, %v553
    %v555 = vlaneseq
    %v556 = vshrl.u32 %v555, 7
    %v557 = vsub.s32 5, %v556
    %v558 = vrot.slane %v533, %v557
    %v559 = vlaneseq
    %v560 = vshrl.u32 %v559, 7
    %v561 = vsub.s32 6, %v560
    %v562 = vrot.slane %v533, %v561
    %v563 = vlaneseq
    %v564 = vshrl.u32 %v563, 7
    %v565 = vsub.s32 7, %v564
    %v566 = vrot.slane %v533, %v565
    %v575 = vmul.f32 %v525, %v538
    %v576 = vmul.f32 %v526, %v542
    %v577 = vmul.f32 %v527, %v546
    %v578 = vmul.f32 %v528, %v550
    %v579 = vmul.f32 %v529, %v554
    %v580 = vmul.f32 %v530, %v558
    %v581 = vmul.f32 %v531, %v562
    %v582 = vmul.f32 %v532, %v566
    %v583 = vld [vmem:[#allocation6] sm:$0xff]
    %v585 = vlaneseq
    %v586 = vshrl.u32 %v585, 7
    %v587 = vsub.s32 0, %v586
    %v588 = vrot.slane %v583, %v587
    %v589 = vlaneseq
    %v590 = vshrl.u32 %v589, 7
    %v591 = vsub.s32 1, %v590
    %v592 = vrot.slane %v583, %v591
    %v593 = vlaneseq
    %v594 = vshrl.u32 %v593, 7
    %v595 = vsub.s32 2, %v594
    %v596 = vrot.slane %v583, %v595
    %v597 = vlaneseq
    %v598 = vshrl.u32 %v597, 7
    %v599 = vsub.s32 3, %v598
    %v600 = vrot.slane %v583, %v599
    %v601 = vlaneseq
    %v602 = vshrl.u32 %v601, 7
    %v603 = vsub.s32 4, %v602
    %v604 = vrot.slane %v583, %v603
    %v605 = vlaneseq
    %v606 = vshrl.u32 %v605, 7
    %v607 = vsub.s32 5, %v606
    %v608 = vrot.slane %v583, %v607
    %v609 = vlaneseq
    %v610 = vshrl.u32 %v609, 7
    %v611 = vsub.s32 6, %v610
    %v612 = vrot.slane %v583, %v611
    %v613 = vlaneseq
    %v614 = vshrl.u32 %v613, 7
    %v615 = vsub.s32 7, %v614
    %v616 = vrot.slane %v583, %v615
    %v625 = vadd.f32 %v575, %v588
    %v626 = vadd.f32 %v576, %v592
    %v627 = vadd.f32 %v577, %v596
    %v628 = vadd.f32 %v578, %v600
    %v629 = vadd.f32 %v579, %v604
    %v630 = vadd.f32 %v580, %v608
    %v631 = vadd.f32 %v581, %v612
    %v632 = vadd.f32 %v582, %v616
    %v633 = vmax.f32 %v625, 0.0
    %v634 = vmax.f32 %v626, 0.0
    %v635 = vmax.f32 %v627, 0.0
    %v636 = vmax.f32 %v628, 0.0
    %v637 = vmax.f32 %v629, 0.0
    %v638 = vmax.f32 %v630, 0.0
    %v639 = vmax.f32 %v631, 0.0
    %v640 = vmax.f32 %v632, 0.0
    %v641 = vpack.c.bf16 %v633, %v633
    %v642 = vpack.c.bf16 %v634, %v634
    %v643 = vpack.c.bf16 %v635, %v635
    %v644 = vpack.c.bf16 %v636, %v636
    %v645 = vpack.c.bf16 %v637, %v637
    %v646 = vpack.c.bf16 %v638, %v638
    %v647 = vpack.c.bf16 %v639, %v639
    %v648 = vpack.c.bf16 %v640, %v640
    %v657 = vcombine.low %v641, %v642
    %v658 = vcombine.low %v643, %v644
    %v659 = vcombine.low %v645, %v646
    %v660 = vcombine.low %v647, %v648
    %v662 = vunpack.c.l.s4 1966171168
    %v663 = vunpack.c.0.s8 %v662
    %v664 = vlaneseq
    %v665 = vshrl.u32 %v664, 7
    %v666 = vsub.s32 %v663, %v665
    %v667 = vrot.slane %v657, %v666
    %v669 = vunpack.c.l.s4 1966171168
    %v670 = vunpack.c.0.s8 %v669
    %v671 = vlaneseq
    %v672 = vshrl.u32 %v671, 7
    %v673 = vsub.s32 %v670, %v672
    %v674 = vrot.slane %v658, %v673
    %v676 = vunpack.c.l.s4 1966171168
    %v677 = vunpack.c.0.s8 %v676
    %v678 = vlaneseq
    %v679 = vshrl.u32 %v678, 7
    %v680 = vsub.s32 %v677, %v679
    %v681 = vrot.slane %v659, %v680
    %v683 = vunpack.c.l.s4 1966171168
    %v684 = vunpack.c.0.s8 %v683
    %v685 = vlaneseq
    %v686 = vshrl.u32 %v685, 7
    %v687 = vsub.s32 %v684, %v686
    %v688 = vrot.slane %v660, %v687
    %v689 = vcombine.low %v667, %v674
    %v690 = vcombine.low %v681, %v688
    %v692 = vunpack.c.l.s4 1966171168
    %v693 = vunpack.c.0.s8 %v692
    %v694 = vlaneseq
    %v695 = vshrl.u32 %v694, 7
    %v696 = vsub.s32 %v693, %v695
    %v697 = vrot.slane %v689, %v696
    %v699 = vunpack.c.l.s4 1966171168
    %v700 = vunpack.c.0.s8 %v699
    %v701 = vlaneseq
    %v702 = vshrl.u32 %v701, 7
    %v703 = vsub.s32 %v700, %v702
    %v704 = vrot.slane %v690, %v703
    %v705 = vcombine.low %v697, %v704
    %707 = vst [vmem:[%s5] sm:$0xff] %v705
    // Predicated region
    $region34: #{generator_forward.5} parent=1 // pred_check
      _
    $region35: #{generator_forward.5} parent=1 // pred_check_branch
      %709 = sbr.rel (0) target = $region37
    $region36: #{generator_forward.5} parent=1 // pred_region
      _
    $region37: #{generator_forward.5} parent=1 // pred_fallthru
      _
    // Predicated region
    $region38: #{generator_forward.5} parent=1 // pred_check
      _
    $region39: #{generator_forward.5} parent=1 // pred_check_branch
      %711 = sbr.rel (0) target = $region41
    $region40: #{generator_forward.5} parent=1 // pred_region
      _
    $region41: #{generator_forward.5} parent=1 // pred_fallthru
      _
    %712 = vsyncpa [#allocation3], 1
    %713 = vsyncpa [#allocation5], 1

// kernel: generator_forward.6
$region0: #{generator_forward.6}
  #allocation0 [shape = 'u32[]', space=smem, size = 0x4, offset = 0x4, fixed_abs, tag = 'smem constant byte address 0x4 - core index']
  #allocation1 [shape = 'u32[144,128]{1,0:T(1,128)}', space=vmem, size = 0x12000, scoped, tag = 'internal scratch']
  %s0 = inlined_call_operand.vmem [shape: bf16[4,2,24,256], index: 0, kind: input, shape index: {}]
  %s1 = inlined_call_operand.vmem [shape: bf16[4,256,128], index: 1, kind: input, shape index: {}]
  %s2 = inlined_call_operand.vmem [shape: f32[1,24], index: 2, kind: input, shape index: {}]
  %s3 = inlined_call_operand.vmem [shape: bf16[4,2,24,128], index: 3, kind: output, shape index: {0}]
  %s4 = inlined_call_operand.vmem [shape: f32[4,1,2,128], index: 4, kind: output, shape index: {1}]
  %5 = xla_tuple %s3, %s4
  %s6 = sld [smem:[#allocation0]]
  $region53: #{generator_forward.6} parent=0
    _
  %s8 = ssub.s32 1, %s6
  %s9 = scalar_select 0, %s8, %s6
  loop: start=0, step=1, limit=6
  $region2: #{generator_forward.6} parent=0 // loop_pre_header
    _
  $region3: #{generator_forward.6} parent=0 // loop_header
    %s11 = sphi 0, %s15
    %p12 = scmp.ge.s32.totalorder %s11, 6
    %s18 = sphi 0, %s30
    %s19 = sphi 0, %s26
    %s20 = sphi 0, %s18
    %s21 = sphi 0, %s19
    %s22 = sphi 0, %s20
    %s23 = sphi 0, %s21
    %s35 = sphi 0, %s37
    %s38 = sphi 0, %s35
    %s39 = sphi 0, %s38
    %s55 = sphi 0, %s39
    %s61 = sphi 0, %s63
    %s64 = sphi 0, %s61
    %s65 = sphi 0, %s64
    %s81 = sphi 0, %s65
    %s85 = sphi 0, %s85
    %s87 = sphi 0, %s85
    %s88 = sphi 0, %s87
    %s102 = sphi 0, %s88
    %s110 = sphi 0, %s112
    %s113 = sphi 0, %s110
    %s114 = sphi 0, %s113
    %s130 = sphi 0, %s114
    %s138 = sphi 0, %s140
    %s141 = sphi 0, %s138
    %s142 = sphi 0, %s141
    %s158 = sphi 0, %s142
  $region4: #{generator_forward.6} parent=0 // loop_header_branch
    %14 = sbr.rel (%p12) target = $region8
  $region5: #{generator_forward.6} parent=0 // loop_body
    %s16 = ssub.s32 %s11, 1
    %s17 = ssub.s32 %s11, 2
    %s24 = sadd.s32 1, %s19
    %p25 = scmp.ge.s32.totalorder %s24, 1
    %s26 = scalar_select %p25, 0, %s24
    %s27 = sadd.s32 1, %s18
    %s28 = scalar_select %p25, %s27, %s18
    %p29 = scmp.ge.s32.totalorder %s28, 4
    %s30 = scalar_select %p29, 0, %s28
    %s31 = ssub.s32 %s18, %s30
    %s32 = ssub.s32 %s19, %s26
    %s33 = sor.u32 %s31, %s32
    %p34 = scmp.eq.s32.totalorder %s33, 0
    %s36 = sadd.s32 %s35, 1
    %s37 = scalar_select %p34, %s35, %s36
    %p40 = pneg %p34
    %p41 = scmp.eq.s32.totalorder %s11, 3
    %p42 = por %p40, %p41
    %p43 = scmp.ne.s32.totalorder %s35, %s38
    %p44 = scmp.eq.s32.totalorder %s11, 0
    %p45 = por %p43, %p44
    %p46 = scmp.ne.s32.totalorder %s35, %s38
    %p47 = scmp.eq.s32.totalorder %s16, 3
    %p48 = por %p46, %p47
    %p49 = scmp.ne.s32.totalorder %s38, %s39
    %p50 = scmp.eq.s32.totalorder %s16, 0
    %p51 = por %p49, %p50
    %p52 = scmp.ne.s32.totalorder %s38, %s39
    %p53 = scmp.eq.s32.totalorder %s17, 3
    %p54 = por %p52, %p53
    %p56 = scmp.ne.s32.totalorder %s39, %s55
    %p57 = scmp.eq.s32.totalorder %s17, 0
    %p58 = por %p56, %p57
    %s59 = ssub.s32 %s18, %s30
    %p60 = scmp.eq.s32.totalorder %s59, 0
    %s62 = sadd.s32 %s61, 1
    %s63 = scalar_select %p60, %s61, %s62
    %p66 = pneg %p60
    %p67 = scmp.eq.s32.totalorder %s11, 3
    %p68 = por %p66, %p67
    %p69 = scmp.ne.s32.totalorder %s61, %s64
    %p70 = scmp.eq.s32.totalorder %s11, 0
    %p71 = por %p69, %p70
    %p72 = scmp.ne.s32.totalorder %s61, %s64
    %p73 = scmp.eq.s32.totalorder %s16, 3
    %p74 = por %p72, %p73
    %p75 = scmp.ne.s32.totalorder %s64, %s65
    %p76 = scmp.eq.s32.totalorder %s16, 0
    %p77 = por %p75, %p76
    %p78 = scmp.ne.s32.totalorder %s64, %s65
    %p79 = scmp.eq.s32.totalorder %s17, 3
    %p80 = por %p78, %p79
    %p82 = scmp.ne.s32.totalorder %s65, %s81
    %p83 = scmp.eq.s32.totalorder %s17, 0
    %p84 = por %p82, %p83
    %s86 = sadd.s32 %s85, 1
    %p89 = scmp.eq.s32.totalorder %s11, 3
    %p90 = scmp.ne.s32.totalorder %s85, %s87
    %p91 = scmp.eq.s32.totalorder %s11, 0
    %p92 = por %p90, %p91
    %p93 = scmp.ne.s32.totalorder %s85, %s87
    %p94 = scmp.eq.s32.totalorder %s16, 3
    %p95 = por %p93, %p94
    %p96 = scmp.ne.s32.totalorder %s87, %s88
    %p97 = scmp.eq.s32.totalorder %s16, 0
    %p98 = por %p96, %p97
    %p99 = scmp.ne.s32.totalorder %s87, %s88
    %p100 = scmp.eq.s32.totalorder %s17, 3
    %p101 = por %p99, %p100
    %p103 = scmp.ne.s32.totalorder %s88, %s102
    %p104 = scmp.eq.s32.totalorder %s17, 0
    %p105 = por %p103, %p104
    %s106 = ssub.s32 %s18, %s30
    %s107 = ssub.s32 %s19, %s26
    %s108 = sor.u32 %s106, %s107
    %p109 = scmp.eq.s32.totalorder %s108, 0
    %s111 = sadd.s32 %s110, 1
    %s112 = scalar_select %p109, %s110, %s111
    %p115 = pneg %p109
    %p116 = scmp.eq.s32.totalorder %s11, 3
    %p117 = por %p115, %p116
    %p118 = scmp.ne.s32.totalorder %s110, %s113
    %p119 = scmp.eq.s32.totalorder %s11, 0
    %p120 = por %p118, %p119
    %p121 = scmp.ne.s32.totalorder %s110, %s113
    %p122 = scmp.eq.s32.totalorder %s16, 3
    %p123 = por %p121, %p122
    %p124 = scmp.ne.s32.totalorder %s113, %s114
    %p125 = scmp.eq.s32.totalorder %s16, 0
    %p126 = por %p124, %p125
    %p127 = scmp.ne.s32.totalorder %s113, %s114
    %p128 = scmp.eq.s32.totalorder %s17, 3
    %p129 = por %p127, %p128
    %p131 = scmp.ne.s32.totalorder %s114, %s130
    %p132 = scmp.eq.s32.totalorder %s17, 0
    %p133 = por %p131, %p132
    %s134 = ssub.s32 %s18, %s30
    %s135 = ssub.s32 %s19, %s26
    %s136 = sor.u32 %s134, %s135
    %p137 = scmp.eq.s32.totalorder %s136, 0
    %s139 = sadd.s32 %s138, 1
    %s140 = scalar_select %p137, %s138, %s139
    %p143 = pneg %p137
    %p144 = scmp.eq.s32.totalorder %s11, 3
    %p145 = por %p143, %p144
    %p146 = scmp.ne.s32.totalorder %s138, %s141
    %p147 = scmp.eq.s32.totalorder %s11, 0
    %p148 = por %p146, %p147
    %p149 = scmp.ne.s32.totalorder %s138, %s141
    %p150 = scmp.eq.s32.totalorder %s16, 3
    %p151 = por %p149, %p150
    %p152 = scmp.ne.s32.totalorder %s141, %s142
    %p153 = scmp.eq.s32.totalorder %s16, 0
    %p154 = por %p152, %p153
    %p155 = scmp.ne.s32.totalorder %s141, %s142
    %p156 = scmp.eq.s32.totalorder %s17, 3
    %p157 = por %p155, %p156
    %p159 = scmp.ne.s32.totalorder %s142, %s158
    %p160 = scmp.eq.s32.totalorder %s17, 0
    %p161 = por %p159, %p160
    %p162 = scmp.le.s32.totalorder 1, %s11
    %p163 = scmp.lt.s32.totalorder %s11, 5
    %p164 = pnand %p162, %p163
    %p165 = pneg %p164
    // Predicated region
    $region9: #{generator_forward.6} parent=5 // pred_check
      _
    $region10: #{generator_forward.6} parent=5 // pred_check_branch
      %167 = sbr.rel (%p164) target = $region12
    $region11: #{generator_forward.6} parent=5 // pred_region
      %s168 = ssub.s32 %s11, 1
      // Predicated region
      $region13: #{generator_forward.6} parent=11 // pred_check
        %p169 = pneg %p98
      $region14: #{generator_forward.6} parent=11 // pred_check_branch
        %171 = sbr.rel (%p169) target = $region16
      $region15: #{generator_forward.6} parent=11 // pred_region
        _
      $region16: #{generator_forward.6} parent=11 // pred_fallthru
        _
    $region12: #{generator_forward.6} parent=5 // pred_fallthru
      _
    %p172 = scmp.lt.s32.totalorder %s11, 4
    // Predicated region
    $region17: #{generator_forward.6} parent=5 // pred_check
      %p173 = pneg %p172
    $region18: #{generator_forward.6} parent=5 // pred_check_branch
      %175 = sbr.rel (%p173) target = $region20
    $region19: #{generator_forward.6} parent=5 // pred_region
      // Predicated region
      $region21: #{generator_forward.6} parent=19 // pred_check
        %p176 = pneg %p45
      $region22: #{generator_forward.6} parent=19 // pred_check_branch
        %178 = sbr.rel (%p176) target = $region24
      $region23: #{generator_forward.6} parent=19 // pred_region
        %s179 = smul.u32 2, %s19
        %p180 = scmp.lt.s32.totalorder %s18, 3
        %s181 = scalar_select %p180, %s18, 3
        %p182 = scmp.lt.s32.totalorder %s179, 1
        %s183 = scalar_select %p182, %s179, 1
        %s184 = smul.addr %s183, 6
        %s185 = smul.addr %s181, 12
        %s186 = sadd.s32 %s184, %s185
        %s187 = smul.addr %s186, 4
        %s188 = scalar_lea.vmem %s0, %s187
        %s189 = smul.u32 2, %s19
      $region24: #{generator_forward.6} parent=19 // pred_fallthru
        _
      // Predicated region
      $region25: #{generator_forward.6} parent=19 // pred_check
        %p190 = pneg %p71
      $region26: #{generator_forward.6} parent=19 // pred_check_branch
        %192 = sbr.rel (%p190) target = $region28
      $region27: #{generator_forward.6} parent=19 // pred_region
        %p193 = scmp.lt.s32.totalorder %s18, 3
        %s194 = scalar_select %p193, %s18, 3
        %s195 = smul.addr %s194, 32
        %s196 = smul.addr %s195, 4
        %s197 = scalar_lea.vmem %s1, %s196
      $region28: #{generator_forward.6} parent=19 // pred_fallthru
        _
    $region20: #{generator_forward.6} parent=5 // pred_fallthru
      _
    %p198 = scmp.le.s32.totalorder 1, %s11
    %p199 = scmp.lt.s32.totalorder %s11, 5
    %p200 = pnand %p198, %p199
    %p201 = pneg %p200
    // Predicated region
    $region29: #{generator_forward.6} parent=5 // pred_check
      _
    $region30: #{generator_forward.6} parent=5 // pred_check_branch
      %203 = sbr.rel (%p200) target = $region32
    $region31: #{generator_forward.6} parent=5 // pred_region
      %s204 = ssub.s32 %s11, 1
      %s205 = smul.u32 2, %s21
      %p206 = scmp.lt.s32.totalorder %s20, 3
      %s207 = scalar_select %p206, %s20, 3
      %p208 = scmp.lt.s32.totalorder %s205, 1
      %s209 = scalar_select %p208, %s205, 1
      %s210 = smul.addr %s209, 6
      %s211 = smul.addr %s207, 12
      %s212 = sadd.s32 %s210, %s211
      %s213 = smul.addr %s212, 4
      %s214 = scalar_lea.vmem %s0, %s213
      %p215 = pneg %p51
      %p216 = pneg %p48
      %p217 = scmp.lt.s32.totalorder %s20, 3
      %s218 = scalar_select %p217, %s20, 3
      %s219 = smul.addr %s218, 32
      %s220 = smul.addr %s219, 4
      %s221 = scalar_lea.vmem %s1, %s220
      %p222 = pneg %p77
      %p223 = pneg %p74
      %p224 = pneg %p98
      %p225 = pneg %p95
      %p226 = pneg %p126
      %p227 = pneg %p123
      %s228 = smul.u32 2, %s21
      %p229 = scmp.lt.s32.totalorder %s20, 3
      %s230 = scalar_select %p229, %s20, 3
      %p231 = scmp.lt.s32.totalorder %s228, 1
      %s232 = scalar_select %p231, %s228, 1
      %s233 = smul.addr %s232, 3
      %s234 = smul.addr %s230, 6
      %s235 = sadd.s32 %s233, %s234
      %s236 = smul.addr %s235, 4
      %s237 = scalar_lea.vmem %s3, %s236
      %p238 = pneg %p154
      %p239 = pneg %p151
      %p240 = scmp.lt.s32.totalorder %s20, 3
      %s241 = scalar_select %p240, %s20, 3
      %p242 = scmp.lt.s32.totalorder %s21, 0
      %s243 = scalar_select %p242, %s21, 0
      %s244 = sadd.s32 %s243, %s241
      %s245 = smul.addr %s244, 2
      %s246 = scalar_lea.vmem %s4, %s245
      %s247 = smul.u32 2, %s21
      %p248 = scmp.lt.s32.totalorder %s20, 3
      %s249 = scalar_select %p248, %s20, 3
      %p250 = scmp.lt.s32.totalorder %s247, 1
      %s251 = scalar_select %p250, %s247, 1
      %s252 = smul.addr %s251, 6
      %s253 = smul.addr %s249, 12
      %s254 = sadd.s32 %s252, %s253
      %s255 = smul.addr %s254, 4
      %s256 = scalar_lea.vmem %s0, %s255
      %s257 = smul.u32 2, %s21
      %p258 = scmp.lt.s32.totalorder %s20, 3
      %s259 = scalar_select %p258, %s20, 3
      %s260 = smul.addr %s259, 32
      %s261 = smul.addr %s260, 4
      %s262 = scalar_lea.vmem %s1, %s261
      %s263 = smul.u32 2, %s21
      %p264 = scmp.lt.s32.totalorder %s20, 3
      %s265 = scalar_select %p264, %s20, 3
      %p266 = scmp.lt.s32.totalorder %s263, 1
      %s267 = scalar_select %p266, %s263, 1
      %s268 = smul.addr %s267, 3
      %s269 = smul.addr %s265, 6
      %s270 = sadd.s32 %s268, %s269
      %s271 = smul.addr %s270, 4
      %s272 = scalar_lea.vmem %s3, %s271
      %s273 = smul.u32 2, %s21
      %p274 = scmp.lt.s32.totalorder %s20, 3
      %s275 = scalar_select %p274, %s20, 3
      %p276 = scmp.lt.s32.totalorder %s21, 0
      %s277 = scalar_select %p276, %s21, 0
      %s278 = sadd.s32 %s277, %s275
      %s279 = smul.addr %s278, 2
      %s280 = scalar_lea.vmem %s4, %s279
      %v282 = vld [vmem:[%s2] sm:$0x1]
      %v283 = vld [vmem:[%s256] sm:$0xff]
      %v284 = vld [vmem:[%s256 + $0x8] sm:$0xff]
      %v285 = vld [vmem:[%s256 + $0x10] sm:$0xff]
      %v286 = vld [vmem:[%s262] sm:$0xf]
      %v287 = vld [vmem:[%s262 + $0x4] sm:$0xf]
      %v288 = vld [vmem:[%s262 + $0x8] sm:$0xf]
      %v289 = vld [vmem:[%s262 + $0xc] sm:$0xf]
      %v290 = vld [vmem:[%s262 + $0x10] sm:$0xf]
      %v291 = vld [vmem:[%s262 + $0x14] sm:$0xf]
      %v292 = vld [vmem:[%s262 + $0x18] sm:$0xf]
      %v293 = vld [vmem:[%s262 + $0x1c] sm:$0xf]
      %v294 = vld [vmem:[%s262 + $0x20] sm:$0xf]
      %v295 = vld [vmem:[%s262 + $0x24] sm:$0xf]
      %v296 = vld [vmem:[%s262 + $0x28] sm:$0xf]
      %v297 = vld [vmem:[%s262 + $0x2c] sm:$0xf]
      %v298 = vld [vmem:[%s262 + $0x30] sm:$0xf]
      %v299 = vld [vmem:[%s262 + $0x34] sm:$0xf]
      %v300 = vld [vmem:[%s262 + $0x38] sm:$0xf]
      %v301 = vld [vmem:[%s262 + $0x3c] sm:$0xf]
      %v302 = vld [vmem:[%s262 + $0x40] sm:$0xf]
      %v303 = vld [vmem:[%s262 + $0x44] sm:$0xf]
      %v304 = vld [vmem:[%s262 + $0x48] sm:$0xf]
      %v305 = vld [vmem:[%s262 + $0x4c] sm:$0xf]
      %v306 = vld [vmem:[%s262 + $0x50] sm:$0xf]
      %v307 = vld [vmem:[%s262 + $0x54] sm:$0xf]
      %v308 = vld [vmem:[%s262 + $0x58] sm:$0xf]
      %v309 = vld [vmem:[%s262 + $0x5c] sm:$0xf]
      %v310 = vld [vmem:[%s262 + $0x60] sm:$0xf]
      %v311 = vld [vmem:[%s262 + $0x64] sm:$0xf]
      %v312 = vld [vmem:[%s262 + $0x68] sm:$0xf]
      %v313 = vld [vmem:[%s262 + $0x6c] sm:$0xf]
      %v314 = vld [vmem:[%s262 + $0x70] sm:$0xf]
      %v315 = vld [vmem:[%s262 + $0x74] sm:$0xf]
      %v316 = vld [vmem:[%s262 + $0x78] sm:$0xf]
      %v317 = vld [vmem:[%s262 + $0x7c] sm:$0xf]
      %v321 = vunpack.c.l.b16 %v283
      %v322 = vunpack.c.h.b16 %v283
      %v323 = vunpack.c.l.b16 %v284
      %v324 = vunpack.c.h.b16 %v284
      %v325 = vunpack.c.l.b16 %v285
      %v326 = vunpack.c.h.b16 %v285
      %v327 = vpack.c.b16 %v323, %v321
      %v328 = vpack.c.b16 %v324, %v322
      %v329 = vpack.c.b16 %v325, %v325
      %v330 = vpack.c.b16 %v326, %v326
      %v367 = vunpack.c.l.b16 %v286
      %v368 = vunpack.c.l.b16 %v287
      %v369 = vunpack.c.l.b16 %v288
      %v370 = vunpack.c.l.b16 %v289
      %v371 = vunpack.c.l.b16 %v290
      %v372 = vunpack.c.l.b16 %v291
      %v373 = vunpack.c.l.b16 %v292
      %v374 = vunpack.c.l.b16 %v293
      %v375 = vunpack.c.l.b16 %v294
      %v376 = vunpack.c.l.b16 %v295
      %v377 = vunpack.c.l.b16 %v296
      %v378 = vunpack.c.l.b16 %v297
      %v379 = vunpack.c.l.b16 %v298
      %v380 = vunpack.c.l.b16 %v299
      %v381 = vunpack.c.l.b16 %v300
      %v382 = vunpack.c.l.b16 %v301
      %v383 = vunpack.c.l.b16 %v302
      %v384 = vunpack.c.l.b16 %v303
      %v385 = vunpack.c.l.b16 %v304
      %v386 = vunpack.c.l.b16 %v305
      %v387 = vunpack.c.l.b16 %v306
      %v388 = vunpack.c.l.b16 %v307
      %v389 = vunpack.c.l.b16 %v308
      %v390 = vunpack.c.l.b16 %v309
      %v391 = vunpack.c.l.b16 %v310
      %v392 = vunpack.c.l.b16 %v311
      %v393 = vunpack.c.l.b16 %v312
      %v394 = vunpack.c.l.b16 %v313
      %v395 = vunpack.c.l.b16 %v314
      %v396 = vunpack.c.l.b16 %v315
      %v397 = vunpack.c.l.b16 %v316
      %v398 = vunpack.c.l.b16 %v317
      %v399 = vpack.c.b16 %v368, %v367
      %v400 = vpack.c.b16 %v370, %v369
      %v401 = vpack.c.b16 %v372, %v371
      %v402 = vpack.c.b16 %v374, %v373
      %v403 = vpack.c.b16 %v376, %v375
      %v404 = vpack.c.b16 %v378, %v377
      %v405 = vpack.c.b16 %v380, %v379
      %v406 = vpack.c.b16 %v382, %v381
      %v407 = vpack.c.b16 %v384, %v383
      %v408 = vpack.c.b16 %v386, %v385
      %v409 = vpack.c.b16 %v388, %v387
      %v410 = vpack.c.b16 %v390, %v389
      %v411 = vpack.c.b16 %v392, %v391
      %v412 = vpack.c.b16 %v394, %v393
      %v413 = vpack.c.b16 %v396, %v395
      %v414 = vpack.c.b16 %v398, %v397
      %431 = vmatprep.subr.bf16.mxu0 0
      %432 = vmatpush1.bf16.msra.mxu0 %v399
      %433 = vmatprep.subr.bf16.mxu0 0
      %434 = vmatpush1.bf16.msra.mxu0 %v400
      %435 = vmatprep.subr.bf16.mxu0 0
      %436 = vmatpush1.bf16.msra.mxu0 %v401
      %437 = vmatprep.subr.bf16.mxu0 0
      %438 = vmatpush1.bf16.msra.mxu0 %v402
      %439 = vmatprep.subr.bf16.mxu0 0
      %440 = vmatpush1.bf16.msra.mxu0 %v403
      %441 = vmatprep.subr.bf16.mxu0 0
      %442 = vmatpush1.bf16.msra.mxu0 %v404
      %443 = vmatprep.subr.bf16.mxu0 0
      %444 = vmatpush1.bf16.msra.mxu0 %v405
      %445 = vmatprep.subr.bf16.mxu0 0
      %446 = vmatpush1.bf16.msra.mxu0 %v406
      %447 = vmatprep.subr.bf16.mxu0 0
      %448 = vmatpush1.bf16.msra.mxu0 %v407
      %449 = vmatprep.subr.bf16.mxu0 0
      %450 = vmatpush1.bf16.msra.mxu0 %v408
      %451 = vmatprep.subr.bf16.mxu0 0
      %452 = vmatpush1.bf16.msra.mxu0 %v409
      %453 = vmatprep.subr.bf16.mxu0 0
      %454 = vmatpush1.bf16.msra.mxu0 %v410
      %455 = vmatprep.subr.bf16.mxu0 0
      %456 = vmatpush1.bf16.msra.mxu0 %v411
      %457 = vmatprep.subr.bf16.mxu0 0
      %458 = vmatpush1.bf16.msra.mxu0 %v412
      %459 = vmatprep.subr.bf16.mxu0 0
      %460 = vmatpush1.bf16.msra.mxu0 %v413
      %461 = vmatprep.subr.bf16.mxu0 0
      %462 = vmatpush1.bf16.msra.mxu0 %v414
      %463 = vmatprep.mubr.bf16.mxu0 %v328
      %464 = vmatmul.mubr.bf16.gmra.mrb[0].mxu0 %v327
      %v465 = vpop.f32.mrb[0].mxu0
      %v466 = vadd.f32 0.0, %v465
      %v467 = vpop.f32.mrb[0].mxu0
      %v468 = vpop.f32.mrb[0].mxu0
      %v469 = vadd.f32 0.0, %v468
      %v470 = vpop.f32.mrb[0].mxu0
      %471 = vmatprep.mubr.bf16.mxu0 %v330
      %472 = vmatmul.mubr.bf16.gmra.mrb[0].mxu0 %v329
      %v473 = vpop.f32.mrb[0].mxu0
      %v474 = vadd.f32 0.0, %v473
      %v475 = vpop.f32.mrb[0].mxu0
      %v476 = vpop.f32.mrb[0].mxu0
      %v477 = vpop.f32.mrb[0].mxu0
      %478 = vdwg.mxu0
      %v479 = vpack.c.bf16 %v469, %v466
      %v480 = vpack.c.bf16 %v474, %v474
      %v483 = vunpack.c.l.b16 %v479
      %v484 = vunpack.c.h.b16 %v479
      %v485 = vunpack.c.l.b16 %v480
      %v486 = vpack.c.b16 %v483, %v483
      %v487 = vpack.c.b16 %v484, %v484
      %v488 = vpack.c.b16 %v485, %v485
      %492 = vst [vmem:[%s272] sm:$0xf] %v486
      %493 = vst [vmem:[%s272 + $0x4] sm:$0xf] %v487
      %494 = vst [vmem:[%s272 + $0x8] sm:$0xf] %v488
      %v495 = vmul.f32 %v466, %v466
      %v496 = vmul.f32 %v469, %v469
      %v497 = vmul.f32 %v474, %v474
      %s498 = scalar_lea.vmem %s256, 24
      %v499 = vld [vmem:[%s498] sm:$0xff]
      %v500 = vld [vmem:[%s498 + $0x8] sm:$0xff]
      %v501 = vld [vmem:[%s498 + $0x10] sm:$0xff]
      %v502 = vld [vmem:[%s262] sm:$0xf]
      %v503 = vld [vmem:[%s262 + $0x4] sm:$0xf]
      %v504 = vld [vmem:[%s262 + $0x8] sm:$0xf]
      %v505 = vld [vmem:[%s262 + $0xc] sm:$0xf]
      %v506 = vld [vmem:[%s262 + $0x10] sm:$0xf]
      %v507 = vld [vmem:[%s262 + $0x14] sm:$0xf]
      %v508 = vld [vmem:[%s262 + $0x18] sm:$0xf]
      %v509 = vld [vmem:[%s262 + $0x1c] sm:$0xf]
      %v510 = vld [vmem:[%s262 + $0x20] sm:$0xf]
      %v511 = vld [vmem:[%s262 + $0x24] sm:$0xf]
      %v512 = vld [vmem:[%s262 + $0x28] sm:$0xf]
      %v513 = vld [vmem:[%s262 + $0x2c] sm:$0xf]
      %v514 = vld [vmem:[%s262 + $0x30] sm:$0xf]
      %v515 = vld [vmem:[%s262 + $0x34] sm:$0xf]
      %v516 = vld [vmem:[%s262 + $0x38] sm:$0xf]
      %v517 = vld [vmem:[%s262 + $0x3c] sm:$0xf]
      %v518 = vld [vmem:[%s262 + $0x40] sm:$0xf]
      %v519 = vld [vmem:[%s262 + $0x44] sm:$0xf]
      %v520 = vld [vmem:[%s262 + $0x48] sm:$0xf]
      %v521 = vld [vmem:[%s262 + $0x4c] sm:$0xf]
      %v522 = vld [vmem:[%s262 + $0x50] sm:$0xf]
      %v523 = vld [vmem:[%s262 + $0x54] sm:$0xf]
      %v524 = vld [vmem:[%s262 + $0x58] sm:$0xf]
      %v525 = vld [vmem:[%s262 + $0x5c] sm:$0xf]
      %v526 = vld [vmem:[%s262 + $0x60] sm:$0xf]
      %v527 = vld [vmem:[%s262 + $0x64] sm:$0xf]
      %v528 = vld [vmem:[%s262 + $0x68] sm:$0xf]
      %v529 = vld [vmem:[%s262 + $0x6c] sm:$0xf]
      %v530 = vld [vmem:[%s262 + $0x70] sm:$0xf]
      %v531 = vld [vmem:[%s262 + $0x74] sm:$0xf]
      %v532 = vld [vmem:[%s262 + $0x78] sm:$0xf]
      %v533 = vld [vmem:[%s262 + $0x7c] sm:$0xf]
      %v537 = vunpack.c.l.b16 %v499
      %v538 = vunpack.c.h.b16 %v499
      %v539 = vunpack.c.l.b16 %v500
      %v540 = vunpack.c.h.b16 %v500
      %v541 = vunpack.c.l.b16 %v501
      %v542 = vunpack.c.h.b16 %v501
      %v543 = vpack.c.b16 %v539, %v537
      %v544 = vpack.c.b16 %v540, %v538
      %v545 = vpack.c.b16 %v541, %v541
      %v546 = vpack.c.b16 %v542, %v542
      %v583 = vunpack.c.l.b16 %v502
      %v584 = vunpack.c.l.b16 %v503
      %v585 = vunpack.c.l.b16 %v504
      %v586 = vunpack.c.l.b16 %v505
      %v587 = vunpack.c.l.b16 %v506
      %v588 = vunpack.c.l.b16 %v507
      %v589 = vunpack.c.l.b16 %v508
      %v590 = vunpack.c.l.b16 %v509
      %v591 = vunpack.c.l.b16 %v510
      %v592 = vunpack.c.l.b16 %v511
      %v593 = vunpack.c.l.b16 %v512
      %v594 = vunpack.c.l.b16 %v513
      %v595 = vunpack.c.l.b16 %v514
      %v596 = vunpack.c.l.b16 %v515
      %v597 = vunpack.c.l.b16 %v516
      %v598 = vunpack.c.l.b16 %v517
      %v599 = vunpack.c.l.b16 %v518
      %v600 = vunpack.c.l.b16 %v519
      %v601 = vunpack.c.l.b16 %v520
      %v602 = vunpack.c.l.b16 %v521
      %v603 = vunpack.c.l.b16 %v522
      %v604 = vunpack.c.l.b16 %v523
      %v605 = vunpack.c.l.b16 %v524
      %v606 = vunpack.c.l.b16 %v525
      %v607 = vunpack.c.l.b16 %v526
      %v608 = vunpack.c.l.b16 %v527
      %v609 = vunpack.c.l.b16 %v528
      %v610 = vunpack.c.l.b16 %v529
      %v611 = vunpack.c.l.b16 %v530
      %v612 = vunpack.c.l.b16 %v531
      %v613 = vunpack.c.l.b16 %v532
      %v614 = vunpack.c.l.b16 %v533
      %v615 = vpack.c.b16 %v584, %v583
      %v616 = vpack.c.b16 %v586, %v585
      %v617 = vpack.c.b16 %v588, %v587
      %v618 = vpack.c.b16 %v590, %v589
      %v619 = vpack.c.b16 %v592, %v591
      %v620 = vpack.c.b16 %v594, %v593
      %v621 = vpack.c.b16 %v596, %v595
      %v622 = vpack.c.b16 %v598, %v597
      %v623 = vpack.c.b16 %v600, %v599
      %v624 = vpack.c.b16 %v602, %v601
      %v625 = vpack.c.b16 %v604, %v603
      %v626 = vpack.c.b16 %v606, %v605
      %v627 = vpack.c.b16 %v608, %v607
      %v628 = vpack.c.b16 %v610, %v609
      %v629 = vpack.c.b16 %v612, %v611
      %v630 = vpack.c.b16 %v614, %v613
      %647 = vmatprep.subr.bf16.mxu0 0
      %648 = vmatpush1.bf16.msra.mxu0 %v615
      %649 = vmatprep.subr.bf16.mxu0 0
      %650 = vmatpush1.bf16.msra.mxu0 %v616
      %651 = vmatprep.subr.bf16.mxu0 0
      %652 = vmatpush1.bf16.msra.mxu0 %v617
      %653 = vmatprep.subr.bf16.mxu0 0
      %654 = vmatpush1.bf16.msra.mxu0 %v618
      %655 = vmatprep.subr.bf16.mxu0 0
      %656 = vmatpush1.bf16.msra.mxu0 %v619
      %657 = vmatprep.subr.bf16.mxu0 0
      %658 = vmatpush1.bf16.msra.mxu0 %v620
      %659 = vmatprep.subr.bf16.mxu0 0
      %660 = vmatpush1.bf16.msra.mxu0 %v621
      %661 = vmatprep.subr.bf16.mxu0 0
      %662 = vmatpush1.bf16.msra.mxu0 %v622
      %663 = vmatprep.subr.bf16.mxu0 0
      %664 = vmatpush1.bf16.msra.mxu0 %v623
      %665 = vmatprep.subr.bf16.mxu0 0
      %666 = vmatpush1.bf16.msra.mxu0 %v624
      %667 = vmatprep.subr.bf16.mxu0 0
      %668 = vmatpush1.bf16.msra.mxu0 %v625
      %669 = vmatprep.subr.bf16.mxu0 0
      %670 = vmatpush1.bf16.msra.mxu0 %v626
      %671 = vmatprep.subr.bf16.mxu0 0
      %672 = vmatpush1.bf16.msra.mxu0 %v627
      %673 = vmatprep.subr.bf16.mxu0 0
      %674 = vmatpush1.bf16.msra.mxu0 %v628
      %675 = vmatprep.subr.bf16.mxu0 0
      %676 = vmatpush1.bf16.msra.mxu0 %v629
      %677 = vmatprep.subr.bf16.mxu0 0
      %678 = vmatpush1.bf16.msra.mxu0 %v630
      %679 = vmatprep.mubr.bf16.mxu0 %v544
      %680 = vmatmul.mubr.bf16.gmra.mrb[0].mxu0 %v543
      %v681 = vpop.f32.mrb[0].mxu0
      %v682 = vadd.f32 0.0, %v681
      %v683 = vpop.f32.mrb[0].mxu0
      %v684 = vpop.f32.mrb[0].mxu0
      %v685 = vadd.f32 0.0, %v684
      %v686 = vpop.f32.mrb[0].mxu0
      %687 = vmatprep.mubr.bf16.mxu0 %v546
      %688 = vmatmul.mubr.bf16.gmra.mrb[0].mxu0 %v545
      %v689 = vpop.f32.mrb[0].mxu0
      %v690 = vadd.f32 0.0, %v689
      %v691 = vpop.f32.mrb[0].mxu0
      %v692 = vpop.f32.mrb[0].mxu0
      %v693 = vpop.f32.mrb[0].mxu0
      %694 = vdwg.mxu0
      %v695 = vpack.c.bf16 %v685, %v682
      %v696 = vpack.c.bf16 %v690, %v690
      %v699 = vunpack.c.l.b16 %v695
      %v700 = vunpack.c.h.b16 %v695
      %v701 = vunpack.c.l.b16 %v696
      %v702 = vpack.c.b16 %v699, %v699
      %v703 = vpack.c.b16 %v700, %v700
      %v704 = vpack.c.b16 %v701, %v701
      %s708 = scalar_lea.vmem %s272, 12
      %709 = vst [vmem:[%s708] sm:$0xf] %v702
      %710 = vst [vmem:[%s708 + $0x4] sm:$0xf] %v703
      %711 = vst [vmem:[%s708 + $0x8] sm:$0xf] %v704
      %vm712 = vcmask 195584
      %v714 = vsel %vm712, %v282, 0
      %716 = vmatprep.subr.mxu0 0.0
      %717 = vmatpush1.msra.mxu0 %v682
      %718 = vmatprep.subr.mxu0 0.0
      %719 = vmatpush1.msra.mxu0 %v685
      %720 = vmatprep.subr.mxu0 0.0
      %721 = vmatpush1.msra.mxu0 %v690
      %722 = vmatprep.subr.mxu0 0.0
      %723 = vmatpush1.msra.mxu0 0.0
      %724 = vmatprep.subr.mxu0 0.0
      %725 = vmatpush1.msra.mxu0 0.0
      %726 = vmatprep.subr.mxu0 0.0
      %727 = vmatpush1.msra.mxu0 0.0
      %728 = vmatprep.subr.mxu0 0.0
      %729 = vmatpush1.msra.mxu0 0.0
      %730 = vmatprep.subr.mxu0 0.0
      %731 = vmatpush1.msra.mxu0 0.0
      %732 = vmatprep.subr.mxu0 0.0
      %733 = vmatpush1.msra.mxu0 0.0
      %734 = vmatprep.subr.mxu0 0.0
      %735 = vmatpush1.msra.mxu0 0.0
      %736 = vmatprep.subr.mxu0 0.0
      %737 = vmatpush1.msra.mxu0 0.0
      %738 = vmatprep.subr.mxu0 0.0
      %739 = vmatpush1.msra.mxu0 0.0
      %740 = vmatprep.subr.mxu0 0.0
      %741 = vmatpush1.msra.mxu0 0.0
      %742 = vmatprep.subr.mxu0 0.0
      %743 = vmatpush1.msra.mxu0 0.0
      %744 = vmatprep.subr.mxu0 0.0
      %745 = vmatpush1.msra.mxu0 0.0
      %746 = vmatprep.subr.mxu0 0.0
      %747 = vmatpush1.msra.mxu0 0.0
      %748 = vmatprep.subr.mxu0 0.0
      %749 = vmatpush1.msra.mxu0 0.0
      %750 = vmatprep.subr.mxu0 0.0
      %751 = vmatpush1.msra.mxu0 0.0
      %752 = vmatprep.subr.mxu0 0.0
      %753 = vmatpush1.msra.mxu0 0.0
      %754 = vmatprep.subr.mxu0 0.0
      %755 = vmatpush1.msra.mxu0 0.0
      %756 = vmatprep.subr.mxu0 0.0
      %757 = vmatpush1.msra.mxu0 0.0
      %758 = vmatprep.subr.mxu0 0.0
      %759 = vmatpush1.msra.mxu0 0.0
      %760 = vmatprep.subr.mxu0 0.0
      %761 = vmatpush1.msra.mxu0 0.0
      %762 = vmatprep.subr.mxu0 0.0
      %763 = vmatpush1.msra.mxu0 0.0
      %764 = vmatprep.subr.mxu0 0.0
      %765 = vmatpush1.msra.mxu0 0.0
      %766 = vmatprep.subr.mxu0 0.0
      %767 = vmatpush1.msra.mxu0 0.0
      %768 = vmatprep.subr.mxu0 0.0
      %769 = vmatpush1.msra.mxu0 0.0
      %770 = vmatprep.subr.mxu0 0.0
      %771 = vmatpush1.msra.mxu0 0.0
      %772 = vmatprep.subr.mxu0 0.0
      %773 = vmatpush1.msra.mxu0 0.0
      %774 = vmatprep.subr.mxu0 0.0
      %775 = vmatpush1.msra.mxu0 0.0
      %776 = vmatprep.subr.mxu0 0.0
      %777 = vmatpush1.msra.mxu0 0.0
      %778 = vmatprep.subr.mxu0 0.0
      %779 = vmatpush1.msra.mxu0 0.0
      %780 = vmatprep.mubr.f32.mxu0 0.0
      %781 = vmatmul.mubr.f32.gmra.mrb[0].mxu0 %v714
      %v782 = vpop.f32.mrb[0].mxu0
      %v783 = vadd.f32 0.0, %v782
      %v784 = vpop.f32.mrb[0].mxu0
      %785 = vdwg.mxu0
      %786 = vmatprep.subr.mxu0 0.0
      %787 = vmatpush1.msra.mxu0 %v466
      %788 = vmatprep.subr.mxu0 0.0
      %789 = vmatpush1.msra.mxu0 %v469
      %790 = vmatprep.subr.mxu0 0.0
      %791 = vmatpush1.msra.mxu0 %v474
      %792 = vmatprep.subr.mxu0 0.0
      %793 = vmatpush1.msra.mxu0 0.0
      %794 = vmatprep.subr.mxu0 0.0
      %795 = vmatpush1.msra.mxu0 0.0
      %796 = vmatprep.subr.mxu0 0.0
      %797 = vmatpush1.msra.mxu0 0.0
      %798 = vmatprep.subr.mxu0 0.0
      %799 = vmatpush1.msra.mxu0 0.0
      %800 = vmatprep.subr.mxu0 0.0
      %801 = vmatpush1.msra.mxu0 0.0
      %802 = vmatprep.subr.mxu0 0.0
      %803 = vmatpush1.msra.mxu0 0.0
      %804 = vmatprep.subr.mxu0 0.0
      %805 = vmatpush1.msra.mxu0 0.0
      %806 = vmatprep.subr.mxu0 0.0
      %807 = vmatpush1.msra.mxu0 0.0
      %808 = vmatprep.subr.mxu0 0.0
      %809 = vmatpush1.msra.mxu0 0.0
      %810 = vmatprep.subr.mxu0 0.0
      %811 = vmatpush1.msra.mxu0 0.0
      %812 = vmatprep.subr.mxu0 0.0
      %813 = vmatpush1.msra.mxu0 0.0
      %814 = vmatprep.subr.mxu0 0.0
      %815 = vmatpush1.msra.mxu0 0.0
      %816 = vmatprep.subr.mxu0 0.0
      %817 = vmatpush1.msra.mxu0 0.0
      %818 = vmatprep.subr.mxu0 0.0
      %819 = vmatpush1.msra.mxu0 0.0
      %820 = vmatprep.subr.mxu0 0.0
      %821 = vmatpush1.msra.mxu0 0.0
      %822 = vmatprep.subr.mxu0 0.0
      %823 = vmatpush1.msra.mxu0 0.0
      %824 = vmatprep.subr.mxu0 0.0
      %825 = vmatpush1.msra.mxu0 0.0
      %826 = vmatprep.subr.mxu0 0.0
      %827 = vmatpush1.msra.mxu0 0.0
      %828 = vmatprep.subr.mxu0 0.0
      %829 = vmatpush1.msra.mxu0 0.0
      %830 = vmatprep.subr.mxu0 0.0
      %831 = vmatpush1.msra.mxu0 0.0
      %832 = vmatprep.subr.mxu0 0.0
      %833 = vmatpush1.msra.mxu0 0.0
      %834 = vmatprep.subr.mxu0 0.0
      %835 = vmatpush1.msra.mxu0 0.0
      %836 = vmatprep.subr.mxu0 0.0
      %837 = vmatpush1.msra.mxu0 0.0
      %838 = vmatprep.subr.mxu0 0.0
      %839 = vmatpush1.msra.mxu0 0.0
      %840 = vmatprep.subr.mxu0 0.0
      %841 = vmatpush1.msra.mxu0 0.0
      %842 = vmatprep.subr.mxu0 0.0
      %843 = vmatpush1.msra.mxu0 0.0
      %844 = vmatprep.subr.mxu0 0.0
      %845 = vmatpush1.msra.mxu0 0.0
      %846 = vmatprep.subr.mxu0 0.0
      %847 = vmatpush1.msra.mxu0 0.0
      %848 = vmatprep.subr.mxu0 0.0
      %849 = vmatpush1.msra.mxu0 0.0
      %850 = vmatprep.mubr.f32.mxu0 0.0
      %851 = vmatmul.mubr.f32.gmra.mrb[0].mxu0 %v714
      %v852 = vpop.f32.mrb[0].mxu0
      %v853 = vadd.f32 %v783, %v852
      %v854 = vpop.f32.mrb[0].mxu0
      %855 = vdwg.mxu0
      %v856 = vmul.f32 %v682, %v682
      %v857 = vmul.f32 %v685, %v685
      %v858 = vmul.f32 %v690, %v690
      %859 = vmatprep.subr.mxu0 0.0
      %860 = vmatpush1.msra.mxu0 %v856
      %861 = vmatprep.subr.mxu0 0.0
      %862 = vmatpush1.msra.mxu0 %v857
      %863 = vmatprep.subr.mxu0 0.0
      %864 = vmatpush1.msra.mxu0 %v858
      %865 = vmatprep.subr.mxu0 0.0
      %866 = vmatpush1.msra.mxu0 0.0
      %867 = vmatprep.subr.mxu0 0.0
      %868 = vmatpush1.msra.mxu0 0.0
      %869 = vmatprep.subr.mxu0 0.0
      %870 = vmatpush1.msra.mxu0 0.0
      %871 = vmatprep.subr.mxu0 0.0
      %872 = vmatpush1.msra.mxu0 0.0
      %873 = vmatprep.subr.mxu0 0.0
      %874 = vmatpush1.msra.mxu0 0.0
      %875 = vmatprep.subr.mxu0 0.0
      %876 = vmatpush1.msra.mxu0 0.0
      %877 = vmatprep.subr.mxu0 0.0
      %878 = vmatpush1.msra.mxu0 0.0
      %879 = vmatprep.subr.mxu0 0.0
      %880 = vmatpush1.msra.mxu0 0.0
      %881 = vmatprep.subr.mxu0 0.0
      %882 = vmatpush1.msra.mxu0 0.0
      %883 = vmatprep.subr.mxu0 0.0
      %884 = vmatpush1.msra.mxu0 0.0
      %885 = vmatprep.subr.mxu0 0.0
      %886 = vmatpush1.msra.mxu0 0.0
      %887 = vmatprep.subr.mxu0 0.0
      %888 = vmatpush1.msra.mxu0 0.0
      %889 = vmatprep.subr.mxu0 0.0
      %890 = vmatpush1.msra.mxu0 0.0
      %891 = vmatprep.subr.mxu0 0.0
      %892 = vmatpush1.msra.mxu0 0.0
      %893 = vmatprep.subr.mxu0 0.0
      %894 = vmatpush1.msra.mxu0 0.0
      %895 = vmatprep.subr.mxu0 0.0
      %896 = vmatpush1.msra.mxu0 0.0
      %897 = vmatprep.subr.mxu0 0.0
      %898 = vmatpush1.msra.mxu0 0.0
      %899 = vmatprep.subr.mxu0 0.0
      %900 = vmatpush1.msra.mxu0 0.0
      %901 = vmatprep.subr.mxu0 0.0
      %902 = vmatpush1.msra.mxu0 0.0
      %903 = vmatprep.subr.mxu0 0.0
      %904 = vmatpush1.msra.mxu0 0.0
      %905 = vmatprep.subr.mxu0 0.0
      %906 = vmatpush1.msra.mxu0 0.0
      %907 = vmatprep.subr.mxu0 0.0
      %908 = vmatpush1.msra.mxu0 0.0
      %909 = vmatprep.subr.mxu0 0.0
      %910 = vmatpush1.msra.mxu0 0.0
      %911 = vmatprep.subr.mxu0 0.0
      %912 = vmatpush1.msra.mxu0 0.0
      %913 = vmatprep.subr.mxu0 0.0
      %914 = vmatpush1.msra.mxu0 0.0
      %915 = vmatprep.subr.mxu0 0.0
      %916 = vmatpush1.msra.mxu0 0.0
      %917 = vmatprep.subr.mxu0 0.0
      %918 = vmatpush1.msra.mxu0 0.0
      %919 = vmatprep.subr.mxu0 0.0
      %920 = vmatpush1.msra.mxu0 0.0
      %921 = vmatprep.subr.mxu0 0.0
      %922 = vmatpush1.msra.mxu0 0.0
      %923 = vmatprep.mubr.f32.mxu0 0.0
      %924 = vmatmul.mubr.f32.gmra.mrb[0].mxu0 %v714
      %v925 = vpop.f32.mrb[0].mxu0
      %v926 = vadd.f32 0.0, %v925
      %v927 = vpop.f32.mrb[0].mxu0
      %928 = vdwg.mxu0
      %929 = vmatprep.subr.mxu0 0.0
      %930 = vmatpush1.msra.mxu0 %v495
      %931 = vmatprep.subr.mxu0 0.0
      %932 = vmatpush1.msra.mxu0 %v496
      %933 = vmatprep.subr.mxu0 0.0
      %934 = vmatpush1.msra.mxu0 %v497
      %935 = vmatprep.subr.mxu0 0.0
      %936 = vmatpush1.msra.mxu0 0.0
      %937 = vmatprep.subr.mxu0 0.0
      %938 = vmatpush1.msra.mxu0 0.0
      %939 = vmatprep.subr.mxu0 0.0
      %940 = vmatpush1.msra.mxu0 0.0
      %941 = vmatprep.subr.mxu0 0.0
      %942 = vmatpush1.msra.mxu0 0.0
      %943 = vmatprep.subr.mxu0 0.0
      %944 = vmatpush1.msra.mxu0 0.0
      %945 = vmatprep.subr.mxu0 0.0
      %946 = vmatpush1.msra.mxu0 0.0
      %947 = vmatprep.subr.mxu0 0.0
      %948 = vmatpush1.msra.mxu0 0.0
      %949 = vmatprep.subr.mxu0 0.0
      %950 = vmatpush1.msra.mxu0 0.0
      %951 = vmatprep.subr.mxu0 0.0
      %952 = vmatpush1.msra.mxu0 0.0
      %953 = vmatprep.subr.mxu0 0.0
      %954 = vmatpush1.msra.mxu0 0.0
      %955 = vmatprep.subr.mxu0 0.0
      %956 = vmatpush1.msra.mxu0 0.0
      %957 = vmatprep.subr.mxu0 0.0
      %958 = vmatpush1.msra.mxu0 0.0
      %959 = vmatprep.subr.mxu0 0.0
      %960 = vmatpush1.msra.mxu0 0.0
      %961 = vmatprep.subr.mxu0 0.0
      %962 = vmatpush1.msra.mxu0 0.0
      %963 = vmatprep.subr.mxu0 0.0
      %964 = vmatpush1.msra.mxu0 0.0
      %965 = vmatprep.subr.mxu0 0.0
      %966 = vmatpush1.msra.mxu0 0.0
      %967 = vmatprep.subr.mxu0 0.0
      %968 = vmatpush1.msra.mxu0 0.0
      %969 = vmatprep.subr.mxu0 0.0
      %970 = vmatpush1.msra.mxu0 0.0
      %971 = vmatprep.subr.mxu0 0.0
      %972 = vmatpush1.msra.mxu0 0.0
      %973 = vmatprep.subr.mxu0 0.0
      %974 = vmatpush1.msra.mxu0 0.0
      %975 = vmatprep.subr.mxu0 0.0
      %976 = vmatpush1.msra.mxu0 0.0
      %977 = vmatprep.subr.mxu0 0.0
      %978 = vmatpush1.msra.mxu0 0.0
      %979 = vmatprep.subr.mxu0 0.0
      %980 = vmatpush1.msra.mxu0 0.0
      %981 = vmatprep.subr.mxu0 0.0
      %982 = vmatpush1.msra.mxu0 0.0
      %983 = vmatprep.subr.mxu0 0.0
      %984 = vmatpush1.msra.mxu0 0.0
      %985 = vmatprep.subr.mxu0 0.0
      %986 = vmatpush1.msra.mxu0 0.0
      %987 = vmatprep.subr.mxu0 0.0
      %988 = vmatpush1.msra.mxu0 0.0
      %989 = vmatprep.subr.mxu0 0.0
      %990 = vmatpush1.msra.mxu0 0.0
      %991 = vmatprep.subr.mxu0 0.0
      %992 = vmatpush1.msra.mxu0 0.0
      %993 = vmatprep.mubr.f32.mxu0 0.0
      %994 = vmatmul.mubr.f32.gmra.mrb[0].mxu0 %v714
      %v995 = vpop.f32.mrb[0].mxu0
      %v996 = vadd.f32 %v926, %v995
      %v997 = vpop.f32.mrb[0].mxu0
      %998 = vdwg.mxu0
      %v1000 = vrot.slane %v996, 7
      %vm1002 = vcmask 1040384
      %v1003 = vsel %vm1002, %v853, %v1000
      %1004 = vst [vmem:[%s280] sm:$0x3] %v1003
      %s1005 = smul.u32 2, %s21
      %p1006 = scmp.lt.s32.totalorder %s20, 3
      %s1007 = scalar_select %p1006, %s20, 3
      %p1008 = scmp.lt.s32.totalorder %s1005, 1
      %s1009 = scalar_select %p1008, %s1005, 1
      %s1010 = smul.addr %s1009, 3
      %s1011 = smul.addr %s1007, 6
      %s1012 = sadd.s32 %s1010, %s1011
      %s1013 = smul.addr %s1012, 4
      %s1014 = scalar_lea.vmem %s3, %s1013
      %p1015 = scmp.lt.s32.totalorder %s20, 3
      %s1016 = scalar_select %p1015, %s20, 3
      %p1017 = scmp.lt.s32.totalorder %s21, 0
      %s1018 = scalar_select %p1017, %s21, 0
      %s1019 = sadd.s32 %s1018, %s1016
      %s1020 = smul.addr %s1019, 2
      %s1021 = scalar_lea.vmem %s4, %s1020
      // Predicated region
      $region33: #{generator_forward.6} parent=31 // pred_check
        %p1022 = pneg %p123
      $region34: #{generator_forward.6} parent=31 // pred_check_branch
        %1024 = sbr.rel (%p1022) target = $region36
      $region35: #{generator_forward.6} parent=31 // pred_region
        %s1025 = smul.u32 2, %s21
      $region36: #{generator_forward.6} parent=31 // pred_fallthru
        _
      // Predicated region
      $region37: #{generator_forward.6} parent=31 // pred_check
        %p1026 = pneg %p151
      $region38: #{generator_forward.6} parent=31 // pred_check_branch
        %1028 = sbr.rel (%p1026) target = $region40
      $region39: #{generator_forward.6} parent=31 // pred_region
        _
      $region40: #{generator_forward.6} parent=31 // pred_fallthru
        _
    $region32: #{generator_forward.6} parent=5 // pred_fallthru
      _
    %p1029 = scmp.le.s32.totalorder 2, %s11
    // Predicated region
    $region41: #{generator_forward.6} parent=5 // pred_check
      %p1030 = pneg %p1029
    $region42: #{generator_forward.6} parent=5 // pred_check_branch
      %1032 = sbr.rel (%p1030) target = $region44
    $region43: #{generator_forward.6} parent=5 // pred_region
      %s1033 = ssub.s32 %s11, 2
      // Predicated region
      $region45: #{generator_forward.6} parent=43 // pred_check
        %p1034 = pneg %p129
      $region46: #{generator_forward.6} parent=43 // pred_check_branch
        %1036 = sbr.rel (%p1034) target = $region48
      $region47: #{generator_forward.6} parent=43 // pred_region
        %s1037 = smul.u32 2, %s23
        %p1038 = scmp.lt.s32.totalorder %s22, 3
        %s1039 = scalar_select %p1038, %s22, 3
        %p1040 = scmp.lt.s32.totalorder %s1037, 1
        %s1041 = scalar_select %p1040, %s1037, 1
        %s1042 = smul.addr %s1041, 3
        %s1043 = smul.addr %s1039, 6
        %s1044 = sadd.s32 %s1042, %s1043
        %s1045 = smul.addr %s1044, 4
        %s1046 = scalar_lea.vmem %s3, %s1045
      $region48: #{generator_forward.6} parent=43 // pred_fallthru
        _
      // Predicated region
      $region49: #{generator_forward.6} parent=43 // pred_check
        %p1047 = pneg %p157
      $region50: #{generator_forward.6} parent=43 // pred_check_branch
        %1049 = sbr.rel (%p1047) target = $region52
      $region51: #{generator_forward.6} parent=43 // pred_region
        %p1050 = scmp.lt.s32.totalorder %s22, 3
        %s1051 = scalar_select %p1050, %s22, 3
        %p1052 = scmp.lt.s32.totalorder %s23, 0
        %s1053 = scalar_select %p1052, %s23, 0
        %s1054 = sadd.s32 %s1053, %s1051
        %s1055 = smul.addr %s1054, 2
        %s1056 = scalar_lea.vmem %s4, %s1055
      $region52: #{generator_forward.6} parent=43 // pred_fallthru
        _
    $region44: #{generator_forward.6} parent=5 // pred_fallthru
      _
  $region6: #{generator_forward.6} parent=0 // loop_footer
    %s15 = sadd.s32 1, %s11
  $region7: #{generator_forward.6} parent=0 // loop_footer_branch
    %10 = sbr.rel target = $region3
  $region8: #{generator_forward.6} parent=0 // loop_exit
    _

// kernel: generator_forward.7
$region0: #{generator_forward.7}
  #allocation0 [shape = 'u32[]', space=smem, size = 0x4, offset = 0x4, fixed_abs, tag = 'smem constant byte address 0x4 - core index']
  #allocation1 [shape = 'u32[144,128]{1,0:T(1,128)}', space=vmem, size = 0x12000, scoped, tag = 'internal scratch']
  %s0 = inlined_call_operand.vmem [shape: bf16[4,2,80,128], index: 0, kind: input, shape index: {}]
  %s1 = inlined_call_operand.vmem [shape: bf16[4,128,128], index: 1, kind: input, shape index: {}]
  %s2 = inlined_call_operand.vmem [shape: f32[1,80], index: 2, kind: input, shape index: {}]
  %s3 = inlined_call_operand.vmem [shape: bf16[4,2,80,128], index: 3, kind: output, shape index: {0}]
  %s4 = inlined_call_operand.vmem [shape: f32[4,1,2,128], index: 4, kind: output, shape index: {1}]
  %5 = xla_tuple %s3, %s4
  %s6 = sld [smem:[#allocation0]]
  $region53: #{generator_forward.7} parent=0
    _
  %s8 = ssub.s32 1, %s6
  %s9 = scalar_select 0, %s8, %s6
  loop: start=0, step=1, limit=6
  $region2: #{generator_forward.7} parent=0 // loop_pre_header
    _
  $region3: #{generator_forward.7} parent=0 // loop_header
    %s11 = sphi 0, %s15
    %p12 = scmp.ge.s32.totalorder %s11, 6
    %s18 = sphi 0, %s30
    %s19 = sphi 0, %s26
    %s20 = sphi 0, %s18
    %s21 = sphi 0, %s19
    %s22 = sphi 0, %s20
    %s23 = sphi 0, %s21
    %s35 = sphi 0, %s37
    %s38 = sphi 0, %s35
    %s39 = sphi 0, %s38
    %s55 = sphi 0, %s39
    %s61 = sphi 0, %s63
    %s64 = sphi 0, %s61
    %s65 = sphi 0, %s64
    %s81 = sphi 0, %s65
    %s85 = sphi 0, %s85
    %s87 = sphi 0, %s85
    %s88 = sphi 0, %s87
    %s102 = sphi 0, %s88
    %s110 = sphi 0, %s112
    %s113 = sphi 0, %s110
    %s114 = sphi 0, %s113
    %s130 = sphi 0, %s114
    %s138 = sphi 0, %s140
    %s141 = sphi 0, %s138
    %s142 = sphi 0, %s141
    %s158 = sphi 0, %s142
  $region4: #{generator_forward.7} parent=0 // loop_header_branch
    %14 = sbr.rel (%p12) target = $region8
  $region5: #{generator_forward.7} parent=0 // loop_body
    %s16 = ssub.s32 %s11, 1
    %s17 = ssub.s32 %s11, 2
    %s24 = sadd.s32 1, %s19
    %p25 = scmp.ge.s32.totalorder %s24, 1
    %s26 = scalar_select %p25, 0, %s24
    %s27 = sadd.s32 1, %s18
    %s28 = scalar_select %p25, %s27, %s18
    %p29 = scmp.ge.s32.totalorder %s28, 4
    %s30 = scalar_select %p29, 0, %s28
    %s31 = ssub.s32 %s18, %s30
    %s32 = ssub.s32 %s19, %s26
    %s33 = sor.u32 %s31, %s32
    %p34 = scmp.eq.s32.totalorder %s33, 0
    %s36 = sadd.s32 %s35, 1
    %s37 = scalar_select %p34, %s35, %s36
    %p40 = pneg %p34
    %p41 = scmp.eq.s32.totalorder %s11, 3
    %p42 = por %p40, %p41
    %p43 = scmp.ne.s32.totalorder %s35, %s38
    %p44 = scmp.eq.s32.totalorder %s11, 0
    %p45 = por %p43, %p44
    %p46 = scmp.ne.s32.totalorder %s35, %s38
    %p47 = scmp.eq.s32.totalorder %s16, 3
    %p48 = por %p46, %p47
    %p49 = scmp.ne.s32.totalorder %s38, %s39
    %p50 = scmp.eq.s32.totalorder %s16, 0
    %p51 = por %p49, %p50
    %p52 = scmp.ne.s32.totalorder %s38, %s39
    %p53 = scmp.eq.s32.totalorder %s17, 3
    %p54 = por %p52, %p53
    %p56 = scmp.ne.s32.totalorder %s39, %s55
    %p57 = scmp.eq.s32.totalorder %s17, 0
    %p58 = por %p56, %p57
    %s59 = ssub.s32 %s18, %s30
    %p60 = scmp.eq.s32.totalorder %s59, 0
    %s62 = sadd.s32 %s61, 1
    %s63 = scalar_select %p60, %s61, %s62
    %p66 = pneg %p60
    %p67 = scmp.eq.s32.totalorder %s11, 3
    %p68 = por %p66, %p67
    %p69 = scmp.ne.s32.totalorder %s61, %s64
    %p70 = scmp.eq.s32.totalorder %s11, 0
    %p71 = por %p69, %p70
    %p72 = scmp.ne.s32.totalorder %s61, %s64
    %p73 = scmp.eq.s32.totalorder %s16, 3
    %p74 = por %p72, %p73
    %p75 = scmp.ne.s32.totalorder %s64, %s65
    %p76 = scmp.eq.s32.totalorder %s16, 0
    %p77 = por %p75, %p76
    %p78 = scmp.ne.s32.totalorder %s64, %s65
    %p79 = scmp.eq.s32.totalorder %s17, 3
    %p80 = por %p78, %p79
    %p82 = scmp.ne.s32.totalorder %s65, %s81
    %p83 = scmp.eq.s32.totalorder %s17, 0
    %p84 = por %p82, %p83
    %s86 = sadd.s32 %s85, 1
    %p89 = scmp.eq.s32.totalorder %s11, 3
    %p90 = scmp.ne.s32.totalorder %s85, %s87
    %p91 = scmp.eq.s32.totalorder %s11, 0
    %p92 = por %p90, %p91
    %p93 = scmp.ne.s32.totalorder %s85, %s87
    %p94 = scmp.eq.s32.totalorder %s16, 3
    %p95 = por %p93, %p94
    %p96 = scmp.ne.s32.totalorder %s87, %s88
    %p97 = scmp.eq.s32.totalorder %s16, 0
    %p98 = por %p96, %p97
    %p99 = scmp.ne.s32.totalorder %s87, %s88
    %p100 = scmp.eq.s32.totalorder %s17, 3
    %p101 = por %p99, %p100
    %p103 = scmp.ne.s32.totalorder %s88, %s102
    %p104 = scmp.eq.s32.totalorder %s17, 0
    %p105 = por %p103, %p104
    %s106 = ssub.s32 %s18, %s30
    %s107 = ssub.s32 %s19, %s26
    %s108 = sor.u32 %s106, %s107
    %p109 = scmp.eq.s32.totalorder %s108, 0
    %s111 = sadd.s32 %s110, 1
    %s112 = scalar_select %p109, %s110, %s111
    %p115 = pneg %p109
    %p116 = scmp.eq.s32.totalorder %s11, 3
    %p117 = por %p115, %p116
    %p118 = scmp.ne.s32.totalorder %s110, %s113
    %p119 = scmp.eq.s32.totalorder %s11, 0
    %p120 = por %p118, %p119
    %p121 = scmp.ne.s32.totalorder %s110, %s113
    %p122 = scmp.eq.s32.totalorder %s16, 3
    %p123 = por %p121, %p122
    %p124 = scmp.ne.s32.totalorder %s113, %s114
    %p125 = scmp.eq.s32.totalorder %s16, 0
    %p126 = por %p124, %p125
    %p127 = scmp.ne.s32.totalorder %s113, %s114
    %p128 = scmp.eq.s32.totalorder %s17, 3
    %p129 = por %p127, %p128
    %p131 = scmp.ne.s32.totalorder %s114, %s130
    %p132 = scmp.eq.s32.totalorder %s17, 0
    %p133 = por %p131, %p132
    %s134 = ssub.s32 %s18, %s30
    %s135 = ssub.s32 %s19, %s26
    %s136 = sor.u32 %s134, %s135
    %p137 = scmp.eq.s32.totalorder %s136, 0
    %s139 = sadd.s32 %s138, 1
    %s140 = scalar_select %p137, %s138, %s139
    %p143 = pneg %p137
    %p144 = scmp.eq.s32.totalorder %s11, 3
    %p145 = por %p143, %p144
    %p146 = scmp.ne.s32.totalorder %s138, %s141
    %p147 = scmp.eq.s32.totalorder %s11, 0
    %p148 = por %p146, %p147
    %p149 = scmp.ne.s32.totalorder %s138, %s141
    %p150 = scmp.eq.s32.totalorder %s16, 3
    %p151 = por %p149, %p150
    %p152 = scmp.ne.s32.totalorder %s141, %s142
    %p153 = scmp.eq.s32.totalorder %s16, 0
    %p154 = por %p152, %p153
    %p155 = scmp.ne.s32.totalorder %s141, %s142
    %p156 = scmp.eq.s32.totalorder %s17, 3
    %p157 = por %p155, %p156
    %p159 = scmp.ne.s32.totalorder %s142, %s158
    %p160 = scmp.eq.s32.totalorder %s17, 0
    %p161 = por %p159, %p160
    %p162 = scmp.le.s32.totalorder 1, %s11
    %p163 = scmp.lt.s32.totalorder %s11, 5
    %p164 = pnand %p162, %p163
    %p165 = pneg %p164
    // Predicated region
    $region9: #{generator_forward.7} parent=5 // pred_check
      _
    $region10: #{generator_forward.7} parent=5 // pred_check_branch
      %167 = sbr.rel (%p164) target = $region12
    $region11: #{generator_forward.7} parent=5 // pred_region
      %s168 = ssub.s32 %s11, 1
      // Predicated region
      $region13: #{generator_forward.7} parent=11 // pred_check
        %p169 = pneg %p98
      $region14: #{generator_forward.7} parent=11 // pred_check_branch
        %171 = sbr.rel (%p169) target = $region16
      $region15: #{generator_forward.7} parent=11 // pred_region
        _
      $region16: #{generator_forward.7} parent=11 // pred_fallthru
        _
    $region12: #{generator_forward.7} parent=5 // pred_fallthru
      _
    %p172 = scmp.lt.s32.totalorder %s11, 4
    // Predicated region
    $region17: #{generator_forward.7} parent=5 // pred_check
      %p173 = pneg %p172
    $region18: #{generator_forward.7} parent=5 // pred_check_branch
      %175 = sbr.rel (%p173) target = $region20
    $region19: #{generator_forward.7} parent=5 // pred_region
      // Predicated region
      $region21: #{generator_forward.7} parent=19 // pred_check
        %p176 = pneg %p45
      $region22: #{generator_forward.7} parent=19 // pred_check_branch
        %178 = sbr.rel (%p176) target = $region24
      $region23: #{generator_forward.7} parent=19 // pred_region
        %s179 = smul.u32 2, %s19
        %p180 = scmp.lt.s32.totalorder %s18, 3
        %s181 = scalar_select %p180, %s18, 3
        %p182 = scmp.lt.s32.totalorder %s179, 1
        %s183 = scalar_select %p182, %s179, 1
        %s184 = smul.addr %s183, 10
        %s185 = smul.addr %s181, 20
        %s186 = sadd.s32 %s184, %s185
        %s187 = smul.addr %s186, 4
        %s188 = scalar_lea.vmem %s0, %s187
        %s189 = smul.u32 2, %s19
      $region24: #{generator_forward.7} parent=19 // pred_fallthru
        _
      // Predicated region
      $region25: #{generator_forward.7} parent=19 // pred_check
        %p190 = pneg %p71
      $region26: #{generator_forward.7} parent=19 // pred_check_branch
        %192 = sbr.rel (%p190) target = $region28
      $region27: #{generator_forward.7} parent=19 // pred_region
        %p193 = scmp.lt.s32.totalorder %s18, 3
        %s194 = scalar_select %p193, %s18, 3
        %s195 = smul.addr %s194, 16
        %s196 = smul.addr %s195, 4
        %s197 = scalar_lea.vmem %s1, %s196
      $region28: #{generator_forward.7} parent=19 // pred_fallthru
        _
    $region20: #{generator_forward.7} parent=5 // pred_fallthru
      _
    %p198 = scmp.le.s32.totalorder 1, %s11
    %p199 = scmp.lt.s32.totalorder %s11, 5
    %p200 = pnand %p198, %p199
    %p201 = pneg %p200
    // Predicated region
    $region29: #{generator_forward.7} parent=5 // pred_check
      _
    $region30: #{generator_forward.7} parent=5 // pred_check_branch
      %203 = sbr.rel (%p200) target = $region32
    $region31: #{generator_forward.7} parent=5 // pred_region
      %s204 = ssub.s32 %s11, 1
      %s205 = smul.u32 2, %s21
      %p206 = scmp.lt.s32.totalorder %s20, 3
      %s207 = scalar_select %p206, %s20, 3
      %p208 = scmp.lt.s32.totalorder %s205, 1
      %s209 = scalar_select %p208, %s205, 1
      %s210 = smul.addr %s209, 10
      %s211 = smul.addr %s207, 20
      %s212 = sadd.s32 %s210, %s211
      %s213 = smul.addr %s212, 4
      %s214 = scalar_lea.vmem %s0, %s213
      %p215 = pneg %p51
      %p216 = pneg %p48
      %p217 = scmp.lt.s32.totalorder %s20, 3
      %s218 = scalar_select %p217, %s20, 3
      %s219 = smul.addr %s218, 16
      %s220 = smul.addr %s219, 4
      %s221 = scalar_lea.vmem %s1, %s220
      %p222 = pneg %p77
      %p223 = pneg %p74
      %p224 = pneg %p98
      %p225 = pneg %p95
      %p226 = pneg %p126
      %p227 = pneg %p123
      %s228 = smul.u32 2, %s21
      %p229 = scmp.lt.s32.totalorder %s20, 3
      %s230 = scalar_select %p229, %s20, 3
      %p231 = scmp.lt.s32.totalorder %s228, 1
      %s232 = scalar_select %p231, %s228, 1
      %s233 = smul.addr %s232, 10
      %s234 = smul.addr %s230, 20
      %s235 = sadd.s32 %s233, %s234
      %s236 = smul.addr %s235, 4
      %s237 = scalar_lea.vmem %s3, %s236
      %p238 = pneg %p154
      %p239 = pneg %p151
      %p240 = scmp.lt.s32.totalorder %s20, 3
      %s241 = scalar_select %p240, %s20, 3
      %p242 = scmp.lt.s32.totalorder %s21, 0
      %s243 = scalar_select %p242, %s21, 0
      %s244 = sadd.s32 %s243, %s241
      %s245 = smul.addr %s244, 2
      %s246 = scalar_lea.vmem %s4, %s245
      %s247 = smul.u32 2, %s21
      %p248 = scmp.lt.s32.totalorder %s20, 3
      %s249 = scalar_select %p248, %s20, 3
      %p250 = scmp.lt.s32.totalorder %s247, 1
      %s251 = scalar_select %p250, %s247, 1
      %s252 = smul.addr %s251, 10
      %s253 = smul.addr %s249, 20
      %s254 = sadd.s32 %s252, %s253
      %s255 = smul.addr %s254, 4
      %s256 = scalar_lea.vmem %s0, %s255
      %s257 = smul.u32 2, %s21
      %p258 = scmp.lt.s32.totalorder %s20, 3
      %s259 = scalar_select %p258, %s20, 3
      %s260 = smul.addr %s259, 16
      %s261 = smul.addr %s260, 4
      %s262 = scalar_lea.vmem %s1, %s261
      %s263 = smul.u32 2, %s21
      %p264 = scmp.lt.s32.totalorder %s20, 3
      %s265 = scalar_select %p264, %s20, 3
      %p266 = scmp.lt.s32.totalorder %s263, 1
      %s267 = scalar_select %p266, %s263, 1
      %s268 = smul.addr %s267, 10
      %s269 = smul.addr %s265, 20
      %s270 = sadd.s32 %s268, %s269
      %s271 = smul.addr %s270, 4
      %s272 = scalar_lea.vmem %s3, %s271
      %s273 = smul.u32 2, %s21
      %p274 = scmp.lt.s32.totalorder %s20, 3
      %s275 = scalar_select %p274, %s20, 3
      %p276 = scmp.lt.s32.totalorder %s21, 0
      %s277 = scalar_select %p276, %s21, 0
      %s278 = sadd.s32 %s277, %s275
      %s279 = smul.addr %s278, 2
      %s280 = scalar_lea.vmem %s4, %s279
      %v282 = vld [vmem:[%s2] sm:$0x1]
      %v283 = vld [vmem:[%s256] sm:$0xf]
      %v284 = vld [vmem:[%s256 + $0x4] sm:$0xf]
      %v285 = vld [vmem:[%s256 + $0x8] sm:$0xf]
      %v286 = vld [vmem:[%s256 + $0xc] sm:$0xf]
      %v287 = vld [vmem:[%s256 + $0x10] sm:$0xf]
      %v288 = vld [vmem:[%s256 + $0x14] sm:$0xf]
      %v289 = vld [vmem:[%s256 + $0x18] sm:$0xf]
      %v290 = vld [vmem:[%s256 + $0x1c] sm:$0xf]
      %v291 = vld [vmem:[%s256 + $0x20] sm:$0xf]
      %v292 = vld [vmem:[%s256 + $0x24] sm:$0xf]
      %v293 = vld [vmem:[%s262] sm:$0xf]
      %v294 = vld [vmem:[%s262 + $0x4] sm:$0xf]
      %v295 = vld [vmem:[%s262 + $0x8] sm:$0xf]
      %v296 = vld [vmem:[%s262 + $0xc] sm:$0xf]
      %v297 = vld [vmem:[%s262 + $0x10] sm:$0xf]
      %v298 = vld [vmem:[%s262 + $0x14] sm:$0xf]
      %v299 = vld [vmem:[%s262 + $0x18] sm:$0xf]
      %v300 = vld [vmem:[%s262 + $0x1c] sm:$0xf]
      %v301 = vld [vmem:[%s262 + $0x20] sm:$0xf]
      %v302 = vld [vmem:[%s262 + $0x24] sm:$0xf]
      %v303 = vld [vmem:[%s262 + $0x28] sm:$0xf]
      %v304 = vld [vmem:[%s262 + $0x2c] sm:$0xf]
      %v305 = vld [vmem:[%s262 + $0x30] sm:$0xf]
      %v306 = vld [vmem:[%s262 + $0x34] sm:$0xf]
      %v307 = vld [vmem:[%s262 + $0x38] sm:$0xf]
      %v308 = vld [vmem:[%s262 + $0x3c] sm:$0xf]
      %v319 = vunpack.c.l.b16 %v283
      %v320 = vunpack.c.l.b16 %v284
      %v321 = vunpack.c.l.b16 %v285
      %v322 = vunpack.c.l.b16 %v286
      %v323 = vunpack.c.l.b16 %v287
      %v324 = vunpack.c.l.b16 %v288
      %v325 = vunpack.c.l.b16 %v289
      %v326 = vunpack.c.l.b16 %v290
      %v327 = vunpack.c.l.b16 %v291
      %v328 = vunpack.c.l.b16 %v292
      %v329 = vpack.c.b16 %v320, %v319
      %v330 = vpack.c.b16 %v322, %v321
      %v331 = vpack.c.b16 %v324, %v323
      %v332 = vpack.c.b16 %v326, %v325
      %v333 = vpack.c.b16 %v328, %v327
      %v355 = vunpack.c.l.b16 %v293
      %v356 = vunpack.c.l.b16 %v294
      %v357 = vunpack.c.l.b16 %v295
      %v358 = vunpack.c.l.b16 %v296
      %v359 = vunpack.c.l.b16 %v297
      %v360 = vunpack.c.l.b16 %v298
      %v361 = vunpack.c.l.b16 %v299
      %v362 = vunpack.c.l.b16 %v300
      %v363 = vunpack.c.l.b16 %v301
      %v364 = vunpack.c.l.b16 %v302
      %v365 = vunpack.c.l.b16 %v303
      %v366 = vunpack.c.l.b16 %v304
      %v367 = vunpack.c.l.b16 %v305
      %v368 = vunpack.c.l.b16 %v306
      %v369 = vunpack.c.l.b16 %v307
      %v370 = vunpack.c.l.b16 %v308
      %v371 = vpack.c.b16 %v356, %v355
      %v372 = vpack.c.b16 %v358, %v357
      %v373 = vpack.c.b16 %v360, %v359
      %v374 = vpack.c.b16 %v362, %v361
      %v375 = vpack.c.b16 %v364, %v363
      %v376 = vpack.c.b16 %v366, %v365
      %v377 = vpack.c.b16 %v368, %v367
      %v378 = vpack.c.b16 %v370, %v369
      %387 = vmatprep.subr.bf16.mxu0 0
      %388 = vmatpush1.bf16.msra.mxu0 %v371
      %389 = vmatprep.subr.bf16.mxu0 0
      %390 = vmatpush1.bf16.msra.mxu0 %v372
      %391 = vmatprep.subr.bf16.mxu0 0
      %392 = vmatpush1.bf16.msra.mxu0 %v373
      %393 = vmatprep.subr.bf16.mxu0 0
      %394 = vmatpush1.bf16.msra.mxu0 %v374
      %395 = vmatprep.subr.bf16.mxu0 0
      %396 = vmatpush1.bf16.msra.mxu0 %v375
      %397 = vmatprep.subr.bf16.mxu0 0
      %398 = vmatpush1.bf16.msra.mxu0 %v376
      %399 = vmatprep.subr.bf16.mxu0 0
      %400 = vmatpush1.bf16.msra.mxu0 %v377
      %401 = vmatprep.subr.bf16.mxu0 0
      %402 = vmatpush1.bf16.msra.mxu0 %v378
      %403 = vmatprep.subr.bf16.mxu0 0
      %404 = vmatpush1.bf16.msra.mxu0 0
      %405 = vmatprep.subr.bf16.mxu0 0
      %406 = vmatpush1.bf16.msra.mxu0 0
      %407 = vmatprep.subr.bf16.mxu0 0
      %408 = vmatpush1.bf16.msra.mxu0 0
      %409 = vmatprep.subr.bf16.mxu0 0
      %410 = vmatpush1.bf16.msra.mxu0 0
      %411 = vmatprep.subr.bf16.mxu0 0
      %412 = vmatpush1.bf16.msra.mxu0 0
      %413 = vmatprep.subr.bf16.mxu0 0
      %414 = vmatpush1.bf16.msra.mxu0 0
      %415 = vmatprep.subr.bf16.mxu0 0
      %416 = vmatpush1.bf16.msra.mxu0 0
      %417 = vmatprep.subr.bf16.mxu0 0
      %418 = vmatpush1.bf16.msra.mxu0 0
      %419 = vmatprep.mubr.bf16.mxu0 0
      %420 = vmatmul.mubr.bf16.gmra.mrb[0].mxu0 %v329
      %v421 = vpop.f32.mrb[0].mxu0
      %v422 = vadd.f32 0.0, %v421
      %v423 = vpop.f32.mrb[0].mxu0
      %v424 = vpop.f32.mrb[0].mxu0
      %v425 = vadd.f32 0.0, %v424
      %v426 = vpop.f32.mrb[0].mxu0
      %427 = vmatprep.mubr.bf16.mxu0 0
      %428 = vmatmul.mubr.bf16.gmra.mrb[0].mxu0 %v330
      %v429 = vpop.f32.mrb[0].mxu0
      %v430 = vadd.f32 0.0, %v429
      %v431 = vpop.f32.mrb[0].mxu0
      %v432 = vpop.f32.mrb[0].mxu0
      %v433 = vadd.f32 0.0, %v432
      %v434 = vpop.f32.mrb[0].mxu0
      %435 = vmatprep.mubr.bf16.mxu0 0
      %436 = vmatmul.mubr.bf16.gmra.mrb[0].mxu0 %v331
      %v437 = vpop.f32.mrb[0].mxu0
      %v438 = vadd.f32 0.0, %v437
      %v439 = vpop.f32.mrb[0].mxu0
      %v440 = vpop.f32.mrb[0].mxu0
      %v441 = vadd.f32 0.0, %v440
      %v442 = vpop.f32.mrb[0].mxu0
      %443 = vmatprep.mubr.bf16.mxu0 0
      %444 = vmatmul.mubr.bf16.gmra.mrb[0].mxu0 %v332
      %v445 = vpop.f32.mrb[0].mxu0
      %v446 = vadd.f32 0.0, %v445
      %v447 = vpop.f32.mrb[0].mxu0
      %v448 = vpop.f32.mrb[0].mxu0
      %v449 = vadd.f32 0.0, %v448
      %v450 = vpop.f32.mrb[0].mxu0
      %451 = vmatprep.mubr.bf16.mxu0 0
      %452 = vmatmul.mubr.bf16.gmra.mrb[0].mxu0 %v333
      %v453 = vpop.f32.mrb[0].mxu0
      %v454 = vadd.f32 0.0, %v453
      %v455 = vpop.f32.mrb[0].mxu0
      %v456 = vpop.f32.mrb[0].mxu0
      %v457 = vadd.f32 0.0, %v456
      %v458 = vpop.f32.mrb[0].mxu0
      %459 = vdwg.mxu0
      %v460 = vpack.c.bf16 %v425, %v422
      %v461 = vpack.c.bf16 %v433, %v430
      %v462 = vpack.c.bf16 %v441, %v438
      %v463 = vpack.c.bf16 %v449, %v446
      %v464 = vpack.c.bf16 %v457, %v454
      %v470 = vunpack.c.l.b16 %v460
      %v471 = vunpack.c.h.b16 %v460
      %v472 = vunpack.c.l.b16 %v461
      %v473 = vunpack.c.h.b16 %v461
      %v474 = vunpack.c.l.b16 %v462
      %v475 = vunpack.c.h.b16 %v462
      %v476 = vunpack.c.l.b16 %v463
      %v477 = vunpack.c.h.b16 %v463
      %v478 = vunpack.c.l.b16 %v464
      %v479 = vunpack.c.h.b16 %v464
      %v480 = vpack.c.b16 %v470, %v470
      %v481 = vpack.c.b16 %v471, %v471
      %v482 = vpack.c.b16 %v472, %v472
      %v483 = vpack.c.b16 %v473, %v473
      %v484 = vpack.c.b16 %v474, %v474
      %v485 = vpack.c.b16 %v475, %v475
      %v486 = vpack.c.b16 %v476, %v476
      %v487 = vpack.c.b16 %v477, %v477
      %v488 = vpack.c.b16 %v478, %v478
      %v489 = vpack.c.b16 %v479, %v479
      %500 = vst [vmem:[%s272] sm:$0xf] %v480
      %501 = vst [vmem:[%s272 + $0x4] sm:$0xf] %v481
      %502 = vst [vmem:[%s272 + $0x8] sm:$0xf] %v482
      %503 = vst [vmem:[%s272 + $0xc] sm:$0xf] %v483
      %504 = vst [vmem:[%s272 + $0x10] sm:$0xf] %v484
      %505 = vst [vmem:[%s272 + $0x14] sm:$0xf] %v485
      %506 = vst [vmem:[%s272 + $0x18] sm:$0xf] %v486
      %507 = vst [vmem:[%s272 + $0x1c] sm:$0xf] %v487
      %508 = vst [vmem:[%s272 + $0x20] sm:$0xf] %v488
      %509 = vst [vmem:[%s272 + $0x24] sm:$0xf] %v489
      %v510 = vmul.f32 %v422, %v422
      %v511 = vmul.f32 %v425, %v425
      %v512 = vmul.f32 %v430, %v430
      %v513 = vmul.f32 %v433, %v433
      %v514 = vmul.f32 %v438, %v438
      %v515 = vmul.f32 %v441, %v441
      %v516 = vmul.f32 %v446, %v446
      %v517 = vmul.f32 %v449, %v449
      %v518 = vmul.f32 %v454, %v454
      %v519 = vmul.f32 %v457, %v457
      %s520 = scalar_lea.vmem %s256, 40
      %v521 = vld [vmem:[%s520] sm:$0xf]
      %v522 = vld [vmem:[%s520 + $0x4] sm:$0xf]
      %v523 = vld [vmem:[%s520 + $0x8] sm:$0xf]
      %v524 = vld [vmem:[%s520 + $0xc] sm:$0xf]
      %v525 = vld [vmem:[%s520 + $0x10] sm:$0xf]
      %v526 = vld [vmem:[%s520 + $0x14] sm:$0xf]
      %v527 = vld [vmem:[%s520 + $0x18] sm:$0xf]
      %v528 = vld [vmem:[%s520 + $0x1c] sm:$0xf]
      %v529 = vld [vmem:[%s520 + $0x20] sm:$0xf]
      %v530 = vld [vmem:[%s520 + $0x24] sm:$0xf]
      %v531 = vld [vmem:[%s262] sm:$0xf]
      %v532 = vld [vmem:[%s262 + $0x4] sm:$0xf]
      %v533 = vld [vmem:[%s262 + $0x8] sm:$0xf]
      %v534 = vld [vmem:[%s262 + $0xc] sm:$0xf]
      %v535 = vld [vmem:[%s262 + $0x10] sm:$0xf]
      %v536 = vld [vmem:[%s262 + $0x14] sm:$0xf]
      %v537 = vld [vmem:[%s262 + $0x18] sm:$0xf]
      %v538 = vld [vmem:[%s262 + $0x1c] sm:$0xf]
      %v539 = vld [vmem:[%s262 + $0x20] sm:$0xf]
      %v540 = vld [vmem:[%s262 + $0x24] sm:$0xf]
      %v541 = vld [vmem:[%s262 + $0x28] sm:$0xf]
      %v542 = vld [vmem:[%s262 + $0x2c] sm:$0xf]
      %v543 = vld [vmem:[%s262 + $0x30] sm:$0xf]
      %v544 = vld [vmem:[%s262 + $0x34] sm:$0xf]
      %v545 = vld [vmem:[%s262 + $0x38] sm:$0xf]
      %v546 = vld [vmem:[%s262 + $0x3c] sm:$0xf]
      %v557 = vunpack.c.l.b16 %v521
      %v558 = vunpack.c.l.b16 %v522
      %v559 = vunpack.c.l.b16 %v523
      %v560 = vunpack.c.l.b16 %v524
      %v561 = vunpack.c.l.b16 %v525
      %v562 = vunpack.c.l.b16 %v526
      %v563 = vunpack.c.l.b16 %v527
      %v564 = vunpack.c.l.b16 %v528
      %v565 = vunpack.c.l.b16 %v529
      %v566 = vunpack.c.l.b16 %v530
      %v567 = vpack.c.b16 %v558, %v557
      %v568 = vpack.c.b16 %v560, %v559
      %v569 = vpack.c.b16 %v562, %v561
      %v570 = vpack.c.b16 %v564, %v563
      %v571 = vpack.c.b16 %v566, %v565
      %v593 = vunpack.c.l.b16 %v531
      %v594 = vunpack.c.l.b16 %v532
      %v595 = vunpack.c.l.b16 %v533
      %v596 = vunpack.c.l.b16 %v534
      %v597 = vunpack.c.l.b16 %v535
      %v598 = vunpack.c.l.b16 %v536
      %v599 = vunpack.c.l.b16 %v537
      %v600 = vunpack.c.l.b16 %v538
      %v601 = vunpack.c.l.b16 %v539
      %v602 = vunpack.c.l.b16 %v540
      %v603 = vunpack.c.l.b16 %v541
      %v604 = vunpack.c.l.b16 %v542
      %v605 = vunpack.c.l.b16 %v543
      %v606 = vunpack.c.l.b16 %v544
      %v607 = vunpack.c.l.b16 %v545
      %v608 = vunpack.c.l.b16 %v546
      %v609 = vpack.c.b16 %v594, %v593
      %v610 = vpack.c.b16 %v596, %v595
      %v611 = vpack.c.b16 %v598, %v597
      %v612 = vpack.c.b16 %v600, %v599
      %v613 = vpack.c.b16 %v602, %v601
      %v614 = vpack.c.b16 %v604, %v603
      %v615 = vpack.c.b16 %v606, %v605
      %v616 = vpack.c.b16 %v608, %v607
      %625 = vmatprep.subr.bf16.mxu0 0
      %626 = vmatpush1.bf16.msra.mxu0 %v609
      %627 = vmatprep.subr.bf16.mxu0 0
      %628 = vmatpush1.bf16.msra.mxu0 %v610
      %629 = vmatprep.subr.bf16.mxu0 0
      %630 = vmatpush1.bf16.msra.mxu0 %v611
      %631 = vmatprep.subr.bf16.mxu0 0
      %632 = vmatpush1.bf16.msra.mxu0 %v612
      %633 = vmatprep.subr.bf16.mxu0 0
      %634 = vmatpush1.bf16.msra.mxu0 %v613
      %635 = vmatprep.subr.bf16.mxu0 0
      %636 = vmatpush1.bf16.msra.mxu0 %v614
      %637 = vmatprep.subr.bf16.mxu0 0
      %638 = vmatpush1.bf16.msra.mxu0 %v615
      %639 = vmatprep.subr.bf16.mxu0 0
      %640 = vmatpush1.bf16.msra.mxu0 %v616
      %641 = vmatprep.subr.bf16.mxu0 0
      %642 = vmatpush1.bf16.msra.mxu0 0
      %643 = vmatprep.subr.bf16.mxu0 0
      %644 = vmatpush1.bf16.msra.mxu0 0
      %645 = vmatprep.subr.bf16.mxu0 0
      %646 = vmatpush1.bf16.msra.mxu0 0
      %647 = vmatprep.subr.bf16.mxu0 0
      %648 = vmatpush1.bf16.msra.mxu0 0
      %649 = vmatprep.subr.bf16.mxu0 0
      %650 = vmatpush1.bf16.msra.mxu0 0
      %651 = vmatprep.subr.bf16.mxu0 0
      %652 = vmatpush1.bf16.msra.mxu0 0
      %653 = vmatprep.subr.bf16.mxu0 0
      %654 = vmatpush1.bf16.msra.mxu0 0
      %655 = vmatprep.subr.bf16.mxu0 0
      %656 = vmatpush1.bf16.msra.mxu0 0
      %657 = vmatprep.mubr.bf16.mxu0 0
      %658 = vmatmul.mubr.bf16.gmra.mrb[0].mxu0 %v567
      %v659 = vpop.f32.mrb[0].mxu0
      %v660 = vadd.f32 0.0, %v659
      %v661 = vpop.f32.mrb[0].mxu0
      %v662 = vpop.f32.mrb[0].mxu0
      %v663 = vadd.f32 0.0, %v662
      %v664 = vpop.f32.mrb[0].mxu0
      %665 = vmatprep.mubr.bf16.mxu0 0
      %666 = vmatmul.mubr.bf16.gmra.mrb[0].mxu0 %v568
      %v667 = vpop.f32.mrb[0].mxu0
      %v668 = vadd.f32 0.0, %v667
      %v669 = vpop.f32.mrb[0].mxu0
      %v670 = vpop.f32.mrb[0].mxu0
      %v671 = vadd.f32 0.0, %v670
      %v672 = vpop.f32.mrb[0].mxu0
      %673 = vmatprep.mubr.bf16.mxu0 0
      %674 = vmatmul.mubr.bf16.gmra.mrb[0].mxu0 %v569
      %v675 = vpop.f32.mrb[0].mxu0
      %v676 = vadd.f32 0.0, %v675
      %v677 = vpop.f32.mrb[0].mxu0
      %v678 = vpop.f32.mrb[0].mxu0
      %v679 = vadd.f32 0.0, %v678
      %v680 = vpop.f32.mrb[0].mxu0
      %681 = vmatprep.mubr.bf16.mxu0 0
      %682 = vmatmul.mubr.bf16.gmra.mrb[0].mxu0 %v570
      %v683 = vpop.f32.mrb[0].mxu0
      %v684 = vadd.f32 0.0, %v683
      %v685 = vpop.f32.mrb[0].mxu0
      %v686 = vpop.f32.mrb[0].mxu0
      %v687 = vadd.f32 0.0, %v686
      %v688 = vpop.f32.mrb[0].mxu0
      %689 = vmatprep.mubr.bf16.mxu0 0
      %690 = vmatmul.mubr.bf16.gmra.mrb[0].mxu0 %v571
      %v691 = vpop.f32.mrb[0].mxu0
      %v692 = vadd.f32 0.0, %v691
      %v693 = vpop.f32.mrb[0].mxu0
      %v694 = vpop.f32.mrb[0].mxu0
      %v695 = vadd.f32 0.0, %v694
      %v696 = vpop.f32.mrb[0].mxu0
      %697 = vdwg.mxu0
      %v698 = vpack.c.bf16 %v663, %v660
      %v699 = vpack.c.bf16 %v671, %v668
      %v700 = vpack.c.bf16 %v679, %v676
      %v701 = vpack.c.bf16 %v687, %v684
      %v702 = vpack.c.bf16 %v695, %v692
      %v708 = vunpack.c.l.b16 %v698
      %v709 = vunpack.c.h.b16 %v698
      %v710 = vunpack.c.l.b16 %v699
      %v711 = vunpack.c.h.b16 %v699
      %v712 = vunpack.c.l.b16 %v700
      %v713 = vunpack.c.h.b16 %v700
      %v714 = vunpack.c.l.b16 %v701
      %v715 = vunpack.c.h.b16 %v701
      %v716 = vunpack.c.l.b16 %v702
      %v717 = vunpack.c.h.b16 %v702
      %v718 = vpack.c.b16 %v708, %v708
      %v719 = vpack.c.b16 %v709, %v709
      %v720 = vpack.c.b16 %v710, %v710
      %v721 = vpack.c.b16 %v711, %v711
      %v722 = vpack.c.b16 %v712, %v712
      %v723 = vpack.c.b16 %v713, %v713
      %v724 = vpack.c.b16 %v714, %v714
      %v725 = vpack.c.b16 %v715, %v715
      %v726 = vpack.c.b16 %v716, %v716
      %v727 = vpack.c.b16 %v717, %v717
      %s738 = scalar_lea.vmem %s272, 40
      %739 = vst [vmem:[%s738] sm:$0xf] %v718
      %740 = vst [vmem:[%s738 + $0x4] sm:$0xf] %v719
      %741 = vst [vmem:[%s738 + $0x8] sm:$0xf] %v720
      %742 = vst [vmem:[%s738 + $0xc] sm:$0xf] %v721
      %743 = vst [vmem:[%s738 + $0x10] sm:$0xf] %v722
      %744 = vst [vmem:[%s738 + $0x14] sm:$0xf] %v723
      %745 = vst [vmem:[%s738 + $0x18] sm:$0xf] %v724
      %746 = vst [vmem:[%s738 + $0x1c] sm:$0xf] %v725
      %747 = vst [vmem:[%s738 + $0x20] sm:$0xf] %v726
      %748 = vst [vmem:[%s738 + $0x24] sm:$0xf] %v727
      %vm749 = vcmask 654336
      %v751 = vsel %vm749, %v282, 0
      %753 = vmatprep.subr.mxu0 0.0
      %754 = vmatpush1.msra.mxu0 %v660
      %755 = vmatprep.subr.mxu0 0.0
      %756 = vmatpush1.msra.mxu0 %v663
      %757 = vmatprep.subr.mxu0 0.0
      %758 = vmatpush1.msra.mxu0 %v668
      %759 = vmatprep.subr.mxu0 0.0
      %760 = vmatpush1.msra.mxu0 %v671
      %761 = vmatprep.subr.mxu0 0.0
      %762 = vmatpush1.msra.mxu0 %v676
      %763 = vmatprep.subr.mxu0 0.0
      %764 = vmatpush1.msra.mxu0 %v679
      %765 = vmatprep.subr.mxu0 0.0
      %766 = vmatpush1.msra.mxu0 %v684
      %767 = vmatprep.subr.mxu0 0.0
      %768 = vmatpush1.msra.mxu0 %v687
      %769 = vmatprep.subr.mxu0 0.0
      %770 = vmatpush1.msra.mxu0 %v692
      %771 = vmatprep.subr.mxu0 0.0
      %772 = vmatpush1.msra.mxu0 %v695
      %773 = vmatprep.subr.mxu0 0.0
      %774 = vmatpush1.msra.mxu0 0.0
      %775 = vmatprep.subr.mxu0 0.0
      %776 = vmatpush1.msra.mxu0 0.0
      %777 = vmatprep.subr.mxu0 0.0
      %778 = vmatpush1.msra.mxu0 0.0
      %779 = vmatprep.subr.mxu0 0.0
      %780 = vmatpush1.msra.mxu0 0.0
      %781 = vmatprep.subr.mxu0 0.0
      %782 = vmatpush1.msra.mxu0 0.0
      %783 = vmatprep.subr.mxu0 0.0
      %784 = vmatpush1.msra.mxu0 0.0
      %785 = vmatprep.subr.mxu0 0.0
      %786 = vmatpush1.msra.mxu0 0.0
      %787 = vmatprep.subr.mxu0 0.0
      %788 = vmatpush1.msra.mxu0 0.0
      %789 = vmatprep.subr.mxu0 0.0
      %790 = vmatpush1.msra.mxu0 0.0
      %791 = vmatprep.subr.mxu0 0.0
      %792 = vmatpush1.msra.mxu0 0.0
      %793 = vmatprep.subr.mxu0 0.0
      %794 = vmatpush1.msra.mxu0 0.0
      %795 = vmatprep.subr.mxu0 0.0
      %796 = vmatpush1.msra.mxu0 0.0
      %797 = vmatprep.subr.mxu0 0.0
      %798 = vmatpush1.msra.mxu0 0.0
      %799 = vmatprep.subr.mxu0 0.0
      %800 = vmatpush1.msra.mxu0 0.0
      %801 = vmatprep.subr.mxu0 0.0
      %802 = vmatpush1.msra.mxu0 0.0
      %803 = vmatprep.subr.mxu0 0.0
      %804 = vmatpush1.msra.mxu0 0.0
      %805 = vmatprep.subr.mxu0 0.0
      %806 = vmatpush1.msra.mxu0 0.0
      %807 = vmatprep.subr.mxu0 0.0
      %808 = vmatpush1.msra.mxu0 0.0
      %809 = vmatprep.subr.mxu0 0.0
      %810 = vmatpush1.msra.mxu0 0.0
      %811 = vmatprep.subr.mxu0 0.0
      %812 = vmatpush1.msra.mxu0 0.0
      %813 = vmatprep.subr.mxu0 0.0
      %814 = vmatpush1.msra.mxu0 0.0
      %815 = vmatprep.subr.mxu0 0.0
      %816 = vmatpush1.msra.mxu0 0.0
      %817 = vmatprep.mubr.f32.mxu0 0.0
      %818 = vmatmul.mubr.f32.gmra.mrb[0].mxu0 %v751
      %v819 = vpop.f32.mrb[0].mxu0
      %v820 = vadd.f32 0.0, %v819
      %v821 = vpop.f32.mrb[0].mxu0
      %822 = vdwg.mxu0
      %823 = vmatprep.subr.mxu0 0.0
      %824 = vmatpush1.msra.mxu0 %v422
      %825 = vmatprep.subr.mxu0 0.0
      %826 = vmatpush1.msra.mxu0 %v425
      %827 = vmatprep.subr.mxu0 0.0
      %828 = vmatpush1.msra.mxu0 %v430
      %829 = vmatprep.subr.mxu0 0.0
      %830 = vmatpush1.msra.mxu0 %v433
      %831 = vmatprep.subr.mxu0 0.0
      %832 = vmatpush1.msra.mxu0 %v438
      %833 = vmatprep.subr.mxu0 0.0
      %834 = vmatpush1.msra.mxu0 %v441
      %835 = vmatprep.subr.mxu0 0.0
      %836 = vmatpush1.msra.mxu0 %v446
      %837 = vmatprep.subr.mxu0 0.0
      %838 = vmatpush1.msra.mxu0 %v449
      %839 = vmatprep.subr.mxu0 0.0
      %840 = vmatpush1.msra.mxu0 %v454
      %841 = vmatprep.subr.mxu0 0.0
      %842 = vmatpush1.msra.mxu0 %v457
      %843 = vmatprep.subr.mxu0 0.0
      %844 = vmatpush1.msra.mxu0 0.0
      %845 = vmatprep.subr.mxu0 0.0
      %846 = vmatpush1.msra.mxu0 0.0
      %847 = vmatprep.subr.mxu0 0.0
      %848 = vmatpush1.msra.mxu0 0.0
      %849 = vmatprep.subr.mxu0 0.0
      %850 = vmatpush1.msra.mxu0 0.0
      %851 = vmatprep.subr.mxu0 0.0
      %852 = vmatpush1.msra.mxu0 0.0
      %853 = vmatprep.subr.mxu0 0.0
      %854 = vmatpush1.msra.mxu0 0.0
      %855 = vmatprep.subr.mxu0 0.0
      %856 = vmatpush1.msra.mxu0 0.0
      %857 = vmatprep.subr.mxu0 0.0
      %858 = vmatpush1.msra.mxu0 0.0
      %859 = vmatprep.subr.mxu0 0.0
      %860 = vmatpush1.msra.mxu0 0.0
      %861 = vmatprep.subr.mxu0 0.0
      %862 = vmatpush1.msra.mxu0 0.0
      %863 = vmatprep.subr.mxu0 0.0
      %864 = vmatpush1.msra.mxu0 0.0
      %865 = vmatprep.subr.mxu0 0.0
      %866 = vmatpush1.msra.mxu0 0.0
      %867 = vmatprep.subr.mxu0 0.0
      %868 = vmatpush1.msra.mxu0 0.0
      %869 = vmatprep.subr.mxu0 0.0
      %870 = vmatpush1.msra.mxu0 0.0
      %871 = vmatprep.subr.mxu0 0.0
      %872 = vmatpush1.msra.mxu0 0.0
      %873 = vmatprep.subr.mxu0 0.0
      %874 = vmatpush1.msra.mxu0 0.0
      %875 = vmatprep.subr.mxu0 0.0
      %876 = vmatpush1.msra.mxu0 0.0
      %877 = vmatprep.subr.mxu0 0.0
      %878 = vmatpush1.msra.mxu0 0.0
      %879 = vmatprep.subr.mxu0 0.0
      %880 = vmatpush1.msra.mxu0 0.0
      %881 = vmatprep.subr.mxu0 0.0
      %882 = vmatpush1.msra.mxu0 0.0
      %883 = vmatprep.subr.mxu0 0.0
      %884 = vmatpush1.msra.mxu0 0.0
      %885 = vmatprep.subr.mxu0 0.0
      %886 = vmatpush1.msra.mxu0 0.0
      %887 = vmatprep.mubr.f32.mxu0 0.0
      %888 = vmatmul.mubr.f32.gmra.mrb[0].mxu0 %v751
      %v889 = vpop.f32.mrb[0].mxu0
      %v890 = vadd.f32 %v820, %v889
      %v891 = vpop.f32.mrb[0].mxu0
      %892 = vdwg.mxu0
      %v893 = vmul.f32 %v660, %v660
      %v894 = vmul.f32 %v663, %v663
      %v895 = vmul.f32 %v668, %v668
      %v896 = vmul.f32 %v671, %v671
      %v897 = vmul.f32 %v676, %v676
      %v898 = vmul.f32 %v679, %v679
      %v899 = vmul.f32 %v684, %v684
      %v900 = vmul.f32 %v687, %v687
      %v901 = vmul.f32 %v692, %v692
      %v902 = vmul.f32 %v695, %v695
      %903 = vmatprep.subr.mxu0 0.0
      %904 = vmatpush1.msra.mxu0 %v893
      %905 = vmatprep.subr.mxu0 0.0
      %906 = vmatpush1.msra.mxu0 %v894
      %907 = vmatprep.subr.mxu0 0.0
      %908 = vmatpush1.msra.mxu0 %v895
      %909 = vmatprep.subr.mxu0 0.0
      %910 = vmatpush1.msra.mxu0 %v896
      %911 = vmatprep.subr.mxu0 0.0
      %912 = vmatpush1.msra.mxu0 %v897
      %913 = vmatprep.subr.mxu0 0.0
      %914 = vmatpush1.msra.mxu0 %v898
      %915 = vmatprep.subr.mxu0 0.0
      %916 = vmatpush1.msra.mxu0 %v899
      %917 = vmatprep.subr.mxu0 0.0
      %918 = vmatpush1.msra.mxu0 %v900
      %919 = vmatprep.subr.mxu0 0.0
      %920 = vmatpush1.msra.mxu0 %v901
      %921 = vmatprep.subr.mxu0 0.0
      %922 = vmatpush1.msra.mxu0 %v902
      %923 = vmatprep.subr.mxu0 0.0
      %924 = vmatpush1.msra.mxu0 0.0
      %925 = vmatprep.subr.mxu0 0.0
      %926 = vmatpush1.msra.mxu0 0.0
      %927 = vmatprep.subr.mxu0 0.0
      %928 = vmatpush1.msra.mxu0 0.0
      %929 = vmatprep.subr.mxu0 0.0
      %930 = vmatpush1.msra.mxu0 0.0
      %931 = vmatprep.subr.mxu0 0.0
      %932 = vmatpush1.msra.mxu0 0.0
      %933 = vmatprep.subr.mxu0 0.0
      %934 = vmatpush1.msra.mxu0 0.0
      %935 = vmatprep.subr.mxu0 0.0
      %936 = vmatpush1.msra.mxu0 0.0
      %937 = vmatprep.subr.mxu0 0.0
      %938 = vmatpush1.msra.mxu0 0.0
      %939 = vmatprep.subr.mxu0 0.0
      %940 = vmatpush1.msra.mxu0 0.0
      %941 = vmatprep.subr.mxu0 0.0
      %942 = vmatpush1.msra.mxu0 0.0
      %943 = vmatprep.subr.mxu0 0.0
      %944 = vmatpush1.msra.mxu0 0.0
      %945 = vmatprep.subr.mxu0 0.0
      %946 = vmatpush1.msra.mxu0 0.0
      %947 = vmatprep.subr.mxu0 0.0
      %948 = vmatpush1.msra.mxu0 0.0
      %949 = vmatprep.subr.mxu0 0.0
      %950 = vmatpush1.msra.mxu0 0.0
      %951 = vmatprep.subr.mxu0 0.0
      %952 = vmatpush1.msra.mxu0 0.0
      %953 = vmatprep.subr.mxu0 0.0
      %954 = vmatpush1.msra.mxu0 0.0
      %955 = vmatprep.subr.mxu0 0.0
      %956 = vmatpush1.msra.mxu0 0.0
      %957 = vmatprep.subr.mxu0 0.0
      %958 = vmatpush1.msra.mxu0 0.0
      %959 = vmatprep.subr.mxu0 0.0
      %960 = vmatpush1.msra.mxu0 0.0
      %961 = vmatprep.subr.mxu0 0.0
      %962 = vmatpush1.msra.mxu0 0.0
      %963 = vmatprep.subr.mxu0 0.0
      %964 = vmatpush1.msra.mxu0 0.0
      %965 = vmatprep.subr.mxu0 0.0
      %966 = vmatpush1.msra.mxu0 0.0
      %967 = vmatprep.mubr.f32.mxu0 0.0
      %968 = vmatmul.mubr.f32.gmra.mrb[0].mxu0 %v751
      %v969 = vpop.f32.mrb[0].mxu0
      %v970 = vadd.f32 0.0, %v969
      %v971 = vpop.f32.mrb[0].mxu0
      %972 = vdwg.mxu0
      %973 = vmatprep.subr.mxu0 0.0
      %974 = vmatpush1.msra.mxu0 %v510
      %975 = vmatprep.subr.mxu0 0.0
      %976 = vmatpush1.msra.mxu0 %v511
      %977 = vmatprep.subr.mxu0 0.0
      %978 = vmatpush1.msra.mxu0 %v512
      %979 = vmatprep.subr.mxu0 0.0
      %980 = vmatpush1.msra.mxu0 %v513
      %981 = vmatprep.subr.mxu0 0.0
      %982 = vmatpush1.msra.mxu0 %v514
      %983 = vmatprep.subr.mxu0 0.0
      %984 = vmatpush1.msra.mxu0 %v515
      %985 = vmatprep.subr.mxu0 0.0
      %986 = vmatpush1.msra.mxu0 %v516
      %987 = vmatprep.subr.mxu0 0.0
      %988 = vmatpush1.msra.mxu0 %v517
      %989 = vmatprep.subr.mxu0 0.0
      %990 = vmatpush1.msra.mxu0 %v518
      %991 = vmatprep.subr.mxu0 0.0
      %992 = vmatpush1.msra.mxu0 %v519
      %993 = vmatprep.subr.mxu0 0.0
      %994 = vmatpush1.msra.mxu0 0.0
      %995 = vmatprep.subr.mxu0 0.0
      %996 = vmatpush1.msra.mxu0 0.0
      %997 = vmatprep.subr.mxu0 0.0
      %998 = vmatpush1.msra.mxu0 0.0
      %999 = vmatprep.subr.mxu0 0.0
      %1000 = vmatpush1.msra.mxu0 0.0
      %1001 = vmatprep.subr.mxu0 0.0
      %1002 = vmatpush1.msra.mxu0 0.0
      %1003 = vmatprep.subr.mxu0 0.0
      %1004 = vmatpush1.msra.mxu0 0.0
      %1005 = vmatprep.subr.mxu0 0.0
      %1006 = vmatpush1.msra.mxu0 0.0
      %1007 = vmatprep.subr.mxu0 0.0
      %1008 = vmatpush1.msra.mxu0 0.0
      %1009 = vmatprep.subr.mxu0 0.0
      %1010 = vmatpush1.msra.mxu0 0.0
      %1011 = vmatprep.subr.mxu0 0.0
      %1012 = vmatpush1.msra.mxu0 0.0
      %1013 = vmatprep.subr.mxu0 0.0
      %1014 = vmatpush1.msra.mxu0 0.0
      %1015 = vmatprep.subr.mxu0 0.0
      %1016 = vmatpush1.msra.mxu0 0.0
      %1017 = vmatprep.subr.mxu0 0.0
      %1018 = vmatpush1.msra.mxu0 0.0
      %1019 = vmatprep.subr.mxu0 0.0
      %1020 = vmatpush1.msra.mxu0 0.0
      %1021 = vmatprep.subr.mxu0 0.0
      %1022 = vmatpush1.msra.mxu0 0.0
      %1023 = vmatprep.subr.mxu0 0.0
      %1024 = vmatpush1.msra.mxu0 0.0
      %1025 = vmatprep.subr.mxu0 0.0
      %1026 = vmatpush1.msra.mxu0 0.0
      %1027 = vmatprep.subr.mxu0 0.0
      %1028 = vmatpush1.msra.mxu0 0.0
      %1029 = vmatprep.subr.mxu0 0.0
      %1030 = vmatpush1.msra.mxu0 0.0
      %1031 = vmatprep.subr.mxu0 0.0
      %1032 = vmatpush1.msra.mxu0 0.0
      %1033 = vmatprep.subr.mxu0 0.0
      %1034 = vmatpush1.msra.mxu0 0.0
      %1035 = vmatprep.subr.mxu0 0.0
      %1036 = vmatpush1.msra.mxu0 0.0
      %1037 = vmatprep.mubr.f32.mxu0 0.0
      %1038 = vmatmul.mubr.f32.gmra.mrb[0].mxu0 %v751
      %v1039 = vpop.f32.mrb[0].mxu0
      %v1040 = vadd.f32 %v970, %v1039
      %v1041 = vpop.f32.mrb[0].mxu0
      %1042 = vdwg.mxu0
      %v1044 = vrot.slane %v1040, 7
      %vm1046 = vcmask 1040384
      %v1047 = vsel %vm1046, %v890, %v1044
      %1048 = vst [vmem:[%s280] sm:$0x3] %v1047
      %s1049 = smul.u32 2, %s21
      %p1050 = scmp.lt.s32.totalorder %s20, 3
      %s1051 = scalar_select %p1050, %s20, 3
      %p1052 = scmp.lt.s32.totalorder %s1049, 1
      %s1053 = scalar_select %p1052, %s1049, 1
      %s1054 = smul.addr %s1053, 10
      %s1055 = smul.addr %s1051, 20
      %s1056 = sadd.s32 %s1054, %s1055
      %s1057 = smul.addr %s1056, 4
      %s1058 = scalar_lea.vmem %s3, %s1057
      %p1059 = scmp.lt.s32.totalorder %s20, 3
      %s1060 = scalar_select %p1059, %s20, 3
      %p1061 = scmp.lt.s32.totalorder %s21, 0
      %s1062 = scalar_select %p1061, %s21, 0
      %s1063 = sadd.s32 %s1062, %s1060
      %s1064 = smul.addr %s1063, 2
      %s1065 = scalar_lea.vmem %s4, %s1064
      // Predicated region
      $region33: #{generator_forward.7} parent=31 // pred_check
        %p1066 = pneg %p123
      $region34: #{generator_forward.7} parent=31 // pred_check_branch
        %1068 = sbr.rel (%p1066) target = $region36
      $region35: #{generator_forward.7} parent=31 // pred_region
        %s1069 = smul.u32 2, %s21
      $region36: #{generator_forward.7} parent=31 // pred_fallthru
        _
      // Predicated region
      $region37: #{generator_forward.7} parent=31 // pred_check
        %p1070 = pneg %p151
      $region38: #{generator_forward.7} parent=31 // pred_check_branch
        %1072 = sbr.rel (%p1070) target = $region40
      $region39: #{generator_forward.7} parent=31 // pred_region
        _
      $region40: #{generator_forward.7} parent=31 // pred_fallthru
        _
    $region32: #{generator_forward.7} parent=5 // pred_fallthru
      _
    %p1073 = scmp.le.s32.totalorder 2, %s11
    // Predicated region
    $region41: #{generator_forward.7} parent=5 // pred_check
      %p1074 = pneg %p1073
    $region42: #{generator_forward.7} parent=5 // pred_check_branch
      %1076 = sbr.rel (%p1074) target = $region44
    $region43: #{generator_forward.7} parent=5 // pred_region
      %s1077 = ssub.s32 %s11, 2
      // Predicated region
      $region45: #{generator_forward.7} parent=43 // pred_check
        %p1078 = pneg %p129
      $region46: #{generator_forward.7} parent=43 // pred_check_branch
        %1080 = sbr.rel (%p1078) target = $region48
      $region47: #{generator_forward.7} parent=43 // pred_region
        %s1081 = smul.u32 2, %s23
        %p1082 = scmp.lt.s32.totalorder %s22, 3
        %s1083 = scalar_select %p1082, %s22, 3
        %p1084 = scmp.lt.s32.totalorder %s1081, 1
        %s1085 = scalar_select %p1084, %s1081, 1
        %s1086 = smul.addr %s1085, 10
        %s1087 = smul.addr %s1083, 20
        %s1088 = sadd.s32 %s1086, %s1087
        %s1089 = smul.addr %s1088, 4
        %s1090 = scalar_lea.vmem %s3, %s1089
      $region48: #{generator_forward.7} parent=43 // pred_fallthru
        _
      // Predicated region
      $region49: #{generator_forward.7} parent=43 // pred_check
        %p1091 = pneg %p157
      $region50: #{generator_forward.7} parent=43 // pred_check_branch
        %1093 = sbr.rel (%p1091) target = $region52
      $region51: #{generator_forward.7} parent=43 // pred_region
        %p1094 = scmp.lt.s32.totalorder %s22, 3
        %s1095 = scalar_select %p1094, %s22, 3
        %p1096 = scmp.lt.s32.totalorder %s23, 0
        %s1097 = scalar_select %p1096, %s23, 0
        %s1098 = sadd.s32 %s1097, %s1095
        %s1099 = smul.addr %s1098, 2
        %s1100 = scalar_lea.vmem %s4, %s1099
      $region52: #{generator_forward.7} parent=43 // pred_fallthru
        _
    $region44: #{generator_forward.7} parent=5 // pred_fallthru
      _
  $region6: #{generator_forward.7} parent=0 // loop_footer
    %s15 = sadd.s32 1, %s11
  $region7: #{generator_forward.7} parent=0 // loop_footer_branch
    %10 = sbr.rel target = $region3
  $region8: #{generator_forward.7} parent=0 // loop_exit
    _

// kernel: generator_forward.8
$region0: #{generator_forward.8}
  #allocation0 [shape = 'u32[]', space=smem, size = 0x4, offset = 0x4, fixed_abs, tag = 'smem constant byte address 0x4 - core index']
  #allocation1 [shape = 'u32[144,128]{1,0:T(1,128)}', space=vmem, size = 0x12000, scoped, tag = 'internal scratch']
  %s0 = inlined_call_operand.vmem [shape: bf16[4,2,288,64], index: 0, kind: input, shape index: {}]
  %s1 = inlined_call_operand.vmem [shape: bf16[4,64,128], index: 1, kind: input, shape index: {}]
  %s2 = inlined_call_operand.vmem [shape: f32[1,288], index: 2, kind: input, shape index: {}]
  %s3 = inlined_call_operand.vmem [shape: bf16[4,2,288,128], index: 3, kind: output, shape index: {0}]
  %s4 = inlined_call_operand.vmem [shape: f32[4,1,2,128], index: 4, kind: output, shape index: {1}]
  %5 = xla_tuple %s3, %s4
  %s6 = sld [smem:[#allocation0]]
  $region53: #{generator_forward.8} parent=0
    _
  %s8 = ssub.s32 1, %s6
  %s9 = scalar_select 0, %s8, %s6
  loop: start=0, step=1, limit=6
  $region2: #{generator_forward.8} parent=0 // loop_pre_header
    _
  $region3: #{generator_forward.8} parent=0 // loop_header
    %s11 = sphi 0, %s15
    %p12 = scmp.ge.s32.totalorder %s11, 6
    %s18 = sphi 0, %s30
    %s19 = sphi 0, %s26
    %s20 = sphi 0, %s18
    %s21 = sphi 0, %s19
    %s22 = sphi 0, %s20
    %s23 = sphi 0, %s21
    %s35 = sphi 0, %s37
    %s38 = sphi 0, %s35
    %s39 = sphi 0, %s38
    %s55 = sphi 0, %s39
    %s61 = sphi 0, %s63
    %s64 = sphi 0, %s61
    %s65 = sphi 0, %s64
    %s81 = sphi 0, %s65
    %s85 = sphi 0, %s85
    %s87 = sphi 0, %s85
    %s88 = sphi 0, %s87
    %s102 = sphi 0, %s88
    %s110 = sphi 0, %s112
    %s113 = sphi 0, %s110
    %s114 = sphi 0, %s113
    %s130 = sphi 0, %s114
    %s138 = sphi 0, %s140
    %s141 = sphi 0, %s138
    %s142 = sphi 0, %s141
    %s158 = sphi 0, %s142
  $region4: #{generator_forward.8} parent=0 // loop_header_branch
    %14 = sbr.rel (%p12) target = $region8
  $region5: #{generator_forward.8} parent=0 // loop_body
    %s16 = ssub.s32 %s11, 1
    %s17 = ssub.s32 %s11, 2
    %s24 = sadd.s32 1, %s19
    %p25 = scmp.ge.s32.totalorder %s24, 1
    %s26 = scalar_select %p25, 0, %s24
    %s27 = sadd.s32 1, %s18
    %s28 = scalar_select %p25, %s27, %s18
    %p29 = scmp.ge.s32.totalorder %s28, 4
    %s30 = scalar_select %p29, 0, %s28
    %s31 = ssub.s32 %s18, %s30
    %s32 = ssub.s32 %s19, %s26
    %s33 = sor.u32 %s31, %s32
    %p34 = scmp.eq.s32.totalorder %s33, 0
    %s36 = sadd.s32 %s35, 1
    %s37 = scalar_select %p34, %s35, %s36
    %p40 = pneg %p34
    %p41 = scmp.eq.s32.totalorder %s11, 3
    %p42 = por %p40, %p41
    %p43 = scmp.ne.s32.totalorder %s35, %s38
    %p44 = scmp.eq.s32.totalorder %s11, 0
    %p45 = por %p43, %p44
    %p46 = scmp.ne.s32.totalorder %s35, %s38
    %p47 = scmp.eq.s32.totalorder %s16, 3
    %p48 = por %p46, %p47
    %p49 = scmp.ne.s32.totalorder %s38, %s39
    %p50 = scmp.eq.s32.totalorder %s16, 0
    %p51 = por %p49, %p50
    %p52 = scmp.ne.s32.totalorder %s38, %s39
    %p53 = scmp.eq.s32.totalorder %s17, 3
    %p54 = por %p52, %p53
    %p56 = scmp.ne.s32.totalorder %s39, %s55
    %p57 = scmp.eq.s32.totalorder %s17, 0
    %p58 = por %p56, %p57
    %s59 = ssub.s32 %s18, %s30
    %p60 = scmp.eq.s32.totalorder %s59, 0
    %s62 = sadd.s32 %s61, 1
    %s63 = scalar_select %p60, %s61, %s62
    %p66 = pneg %p60
    %p67 = scmp.eq.s32.totalorder %s11, 3
    %p68 = por %p66, %p67
    %p69 = scmp.ne.s32.totalorder %s61, %s64
    %p70 = scmp.eq.s32.totalorder %s11, 0
    %p71 = por %p69, %p70
    %p72 = scmp.ne.s32.totalorder %s61, %s64
    %p73 = scmp.eq.s32.totalorder %s16, 3
    %p74 = por %p72, %p73
    %p75 = scmp.ne.s32.totalorder %s64, %s65
    %p76 = scmp.eq.s32.totalorder %s16, 0
    %p77 = por %p75, %p76
    %p78 = scmp.ne.s32.totalorder %s64, %s65
    %p79 = scmp.eq.s32.totalorder %s17, 3
    %p80 = por %p78, %p79
    %p82 = scmp.ne.s32.totalorder %s65, %s81
    %p83 = scmp.eq.s32.totalorder %s17, 0
    %p84 = por %p82, %p83
    %s86 = sadd.s32 %s85, 1
    %p89 = scmp.eq.s32.totalorder %s11, 3
    %p90 = scmp.ne.s32.totalorder %s85, %s87
    %p91 = scmp.eq.s32.totalorder %s11, 0
    %p92 = por %p90, %p91
    %p93 = scmp.ne.s32.totalorder %s85, %s87
    %p94 = scmp.eq.s32.totalorder %s16, 3
    %p95 = por %p93, %p94
    %p96 = scmp.ne.s32.totalorder %s87, %s88
    %p97 = scmp.eq.s32.totalorder %s16, 0
    %p98 = por %p96, %p97
    %p99 = scmp.ne.s32.totalorder %s87, %s88
    %p100 = scmp.eq.s32.totalorder %s17, 3
    %p101 = por %p99, %p100
    %p103 = scmp.ne.s32.totalorder %s88, %s102
    %p104 = scmp.eq.s32.totalorder %s17, 0
    %p105 = por %p103, %p104
    %s106 = ssub.s32 %s18, %s30
    %s107 = ssub.s32 %s19, %s26
    %s108 = sor.u32 %s106, %s107
    %p109 = scmp.eq.s32.totalorder %s108, 0
    %s111 = sadd.s32 %s110, 1
    %s112 = scalar_select %p109, %s110, %s111
    %p115 = pneg %p109
    %p116 = scmp.eq.s32.totalorder %s11, 3
    %p117 = por %p115, %p116
    %p118 = scmp.ne.s32.totalorder %s110, %s113
    %p119 = scmp.eq.s32.totalorder %s11, 0
    %p120 = por %p118, %p119
    %p121 = scmp.ne.s32.totalorder %s110, %s113
    %p122 = scmp.eq.s32.totalorder %s16, 3
    %p123 = por %p121, %p122
    %p124 = scmp.ne.s32.totalorder %s113, %s114
    %p125 = scmp.eq.s32.totalorder %s16, 0
    %p126 = por %p124, %p125
    %p127 = scmp.ne.s32.totalorder %s113, %s114
    %p128 = scmp.eq.s32.totalorder %s17, 3
    %p129 = por %p127, %p128
    %p131 = scmp.ne.s32.totalorder %s114, %s130
    %p132 = scmp.eq.s32.totalorder %s17, 0
    %p133 = por %p131, %p132
    %s134 = ssub.s32 %s18, %s30
    %s135 = ssub.s32 %s19, %s26
    %s136 = sor.u32 %s134, %s135
    %p137 = scmp.eq.s32.totalorder %s136, 0
    %s139 = sadd.s32 %s138, 1
    %s140 = scalar_select %p137, %s138, %s139
    %p143 = pneg %p137
    %p144 = scmp.eq.s32.totalorder %s11, 3
    %p145 = por %p143, %p144
    %p146 = scmp.ne.s32.totalorder %s138, %s141
    %p147 = scmp.eq.s32.totalorder %s11, 0
    %p148 = por %p146, %p147
    %p149 = scmp.ne.s32.totalorder %s138, %s141
    %p150 = scmp.eq.s32.totalorder %s16, 3
    %p151 = por %p149, %p150
    %p152 = scmp.ne.s32.totalorder %s141, %s142
    %p153 = scmp.eq.s32.totalorder %s16, 0
    %p154 = por %p152, %p153
    %p155 = scmp.ne.s32.totalorder %s141, %s142
    %p156 = scmp.eq.s32.totalorder %s17, 3
    %p157 = por %p155, %p156
    %p159 = scmp.ne.s32.totalorder %s142, %s158
    %p160 = scmp.eq.s32.totalorder %s17, 0
    %p161 = por %p159, %p160
    %p162 = scmp.le.s32.totalorder 1, %s11
    %p163 = scmp.lt.s32.totalorder %s11, 5
    %p164 = pnand %p162, %p163
    %p165 = pneg %p164
    // Predicated region
    $region9: #{generator_forward.8} parent=5 // pred_check
      _
    $region10: #{generator_forward.8} parent=5 // pred_check_branch
      %167 = sbr.rel (%p164) target = $region12
    $region11: #{generator_forward.8} parent=5 // pred_region
      %s168 = ssub.s32 %s11, 1
      // Predicated region
      $region13: #{generator_forward.8} parent=11 // pred_check
        %p169 = pneg %p98
      $region14: #{generator_forward.8} parent=11 // pred_check_branch
        %171 = sbr.rel (%p169) target = $region16
      $region15: #{generator_forward.8} parent=11 // pred_region
        _
      $region16: #{generator_forward.8} parent=11 // pred_fallthru
        _
    $region12: #{generator_forward.8} parent=5 // pred_fallthru
      _
    %p172 = scmp.lt.s32.totalorder %s11, 4
    // Predicated region
    $region17: #{generator_forward.8} parent=5 // pred_check
      %p173 = pneg %p172
    $region18: #{generator_forward.8} parent=5 // pred_check_branch
      %175 = sbr.rel (%p173) target = $region20
    $region19: #{generator_forward.8} parent=5 // pred_region
      // Predicated region
      $region21: #{generator_forward.8} parent=19 // pred_check
        %p176 = pneg %p45
      $region22: #{generator_forward.8} parent=19 // pred_check_branch
        %178 = sbr.rel (%p176) target = $region24
      $region23: #{generator_forward.8} parent=19 // pred_region
        %s179 = smul.u32 2, %s19
        %p180 = scmp.lt.s32.totalorder %s18, 3
        %s181 = scalar_select %p180, %s18, 3
        %p182 = scmp.lt.s32.totalorder %s179, 1
        %s183 = scalar_select %p182, %s179, 1
        %s184 = smul.addr %s183, 36
        %s185 = smul.addr %s181, 72
        %s186 = sadd.s32 %s184, %s185
        %s187 = smul.addr %s186, 4
        %s188 = scalar_lea.vmem %s0, %s187
        %s189 = smul.u32 2, %s19
      $region24: #{generator_forward.8} parent=19 // pred_fallthru
        _
      // Predicated region
      $region25: #{generator_forward.8} parent=19 // pred_check
        %p190 = pneg %p71
      $region26: #{generator_forward.8} parent=19 // pred_check_branch
        %192 = sbr.rel (%p190) target = $region28
      $region27: #{generator_forward.8} parent=19 // pred_region
        %p193 = scmp.lt.s32.totalorder %s18, 3
        %s194 = scalar_select %p193, %s18, 3
        %s195 = smul.addr %s194, 8
        %s196 = smul.addr %s195, 4
        %s197 = scalar_lea.vmem %s1, %s196
      $region28: #{generator_forward.8} parent=19 // pred_fallthru
        _
    $region20: #{generator_forward.8} parent=5 // pred_fallthru
      _
    %p198 = scmp.le.s32.totalorder 1, %s11
    %p199 = scmp.lt.s32.totalorder %s11, 5
    %p200 = pnand %p198, %p199
    %p201 = pneg %p200
    // Predicated region
    $region29: #{generator_forward.8} parent=5 // pred_check
      _
    $region30: #{generator_forward.8} parent=5 // pred_check_branch
      %203 = sbr.rel (%p200) target = $region32
    $region31: #{generator_forward.8} parent=5 // pred_region
      %s204 = ssub.s32 %s11, 1
      %s205 = smul.u32 2, %s21
      %p206 = scmp.lt.s32.totalorder %s20, 3
      %s207 = scalar_select %p206, %s20, 3
      %p208 = scmp.lt.s32.totalorder %s205, 1
      %s209 = scalar_select %p208, %s205, 1
      %s210 = smul.addr %s209, 36
      %s211 = smul.addr %s207, 72
      %s212 = sadd.s32 %s210, %s211
      %s213 = smul.addr %s212, 4
      %s214 = scalar_lea.vmem %s0, %s213
      %p215 = pneg %p51
      %p216 = pneg %p48
      %p217 = scmp.lt.s32.totalorder %s20, 3
      %s218 = scalar_select %p217, %s20, 3
      %s219 = smul.addr %s218, 8
      %s220 = smul.addr %s219, 4
      %s221 = scalar_lea.vmem %s1, %s220
      %p222 = pneg %p77
      %p223 = pneg %p74
      %p224 = pneg %p98
      %p225 = pneg %p95
      %p226 = pneg %p126
      %p227 = pneg %p123
      %s228 = smul.u32 2, %s21
      %p229 = scmp.lt.s32.totalorder %s20, 3
      %s230 = scalar_select %p229, %s20, 3
      %p231 = scmp.lt.s32.totalorder %s228, 1
      %s232 = scalar_select %p231, %s228, 1
      %s233 = smul.addr %s232, 36
      %s234 = smul.addr %s230, 72
      %s235 = sadd.s32 %s233, %s234
      %s236 = smul.addr %s235, 4
      %s237 = scalar_lea.vmem %s3, %s236
      %p238 = pneg %p154
      %p239 = pneg %p151
      %p240 = scmp.lt.s32.totalorder %s20, 3
      %s241 = scalar_select %p240, %s20, 3
      %p242 = scmp.lt.s32.totalorder %s21, 0
      %s243 = scalar_select %p242, %s21, 0
      %s244 = sadd.s32 %s243, %s241
      %s245 = smul.addr %s244, 2
      %s246 = scalar_lea.vmem %s4, %s245
      %s247 = smul.u32 2, %s21
      %p248 = scmp.lt.s32.totalorder %s20, 3
      %s249 = scalar_select %p248, %s20, 3
      %p250 = scmp.lt.s32.totalorder %s247, 1
      %s251 = scalar_select %p250, %s247, 1
      %s252 = smul.addr %s251, 36
      %s253 = smul.addr %s249, 72
      %s254 = sadd.s32 %s252, %s253
      %s255 = smul.addr %s254, 4
      %s256 = scalar_lea.vmem %s0, %s255
      %s257 = smul.u32 2, %s21
      %p258 = scmp.lt.s32.totalorder %s20, 3
      %s259 = scalar_select %p258, %s20, 3
      %s260 = smul.addr %s259, 8
      %s261 = smul.addr %s260, 4
      %s262 = scalar_lea.vmem %s1, %s261
      %s263 = smul.u32 2, %s21
      %p264 = scmp.lt.s32.totalorder %s20, 3
      %s265 = scalar_select %p264, %s20, 3
      %p266 = scmp.lt.s32.totalorder %s263, 1
      %s267 = scalar_select %p266, %s263, 1
      %s268 = smul.addr %s267, 36
      %s269 = smul.addr %s265, 72
      %s270 = sadd.s32 %s268, %s269
      %s271 = smul.addr %s270, 4
      %s272 = scalar_lea.vmem %s3, %s271
      %s273 = smul.u32 2, %s21
      %p274 = scmp.lt.s32.totalorder %s20, 3
      %s275 = scalar_select %p274, %s20, 3
      %p276 = scmp.lt.s32.totalorder %s21, 0
      %s277 = scalar_select %p276, %s21, 0
      %s278 = sadd.s32 %s277, %s275
      %s279 = smul.addr %s278, 2
      %s280 = scalar_lea.vmem %s4, %s279
      %v282 = vld [vmem:[%s2] sm:$0x7]
      %v283 = vld [vmem:[%s256] sm:$0xf]
      %v284 = vld [vmem:[%s256 + $0x4] sm:$0xf]
      %v285 = vld [vmem:[%s256 + $0x8] sm:$0xf]
      %v286 = vld [vmem:[%s256 + $0xc] sm:$0xf]
      %v287 = vld [vmem:[%s256 + $0x10] sm:$0xf]
      %v288 = vld [vmem:[%s256 + $0x14] sm:$0xf]
      %v289 = vld [vmem:[%s256 + $0x18] sm:$0xf]
      %v290 = vld [vmem:[%s256 + $0x1c] sm:$0xf]
      %v291 = vld [vmem:[%s256 + $0x20] sm:$0xf]
      %v292 = vld [vmem:[%s256 + $0x24] sm:$0xf]
      %v293 = vld [vmem:[%s256 + $0x28] sm:$0xf]
      %v294 = vld [vmem:[%s256 + $0x2c] sm:$0xf]
      %v295 = vld [vmem:[%s256 + $0x30] sm:$0xf]
      %v296 = vld [vmem:[%s256 + $0x34] sm:$0xf]
      %v297 = vld [vmem:[%s256 + $0x38] sm:$0xf]
      %v298 = vld [vmem:[%s256 + $0x3c] sm:$0xf]
      %v299 = vld [vmem:[%s256 + $0x40] sm:$0xf]
      %v300 = vld [vmem:[%s256 + $0x44] sm:$0xf]
      %v301 = vld [vmem:[%s256 + $0x48] sm:$0xf]
      %v302 = vld [vmem:[%s256 + $0x4c] sm:$0xf]
      %v303 = vld [vmem:[%s256 + $0x50] sm:$0xf]
      %v304 = vld [vmem:[%s256 + $0x54] sm:$0xf]
      %v305 = vld [vmem:[%s256 + $0x58] sm:$0xf]
      %v306 = vld [vmem:[%s256 + $0x5c] sm:$0xf]
      %v307 = vld [vmem:[%s256 + $0x60] sm:$0xf]
      %v308 = vld [vmem:[%s256 + $0x64] sm:$0xf]
      %v309 = vld [vmem:[%s256 + $0x68] sm:$0xf]
      %v310 = vld [vmem:[%s256 + $0x6c] sm:$0xf]
      %v311 = vld [vmem:[%s256 + $0x70] sm:$0xf]
      %v312 = vld [vmem:[%s256 + $0x74] sm:$0xf]
      %v313 = vld [vmem:[%s256 + $0x78] sm:$0xf]
      %v314 = vld [vmem:[%s256 + $0x7c] sm:$0xf]
      %v315 = vld [vmem:[%s256 + $0x80] sm:$0xf]
      %v316 = vld [vmem:[%s256 + $0x84] sm:$0xf]
      %v317 = vld [vmem:[%s256 + $0x88] sm:$0xf]
      %v318 = vld [vmem:[%s256 + $0x8c] sm:$0xf]
      %v319 = vld [vmem:[%s262] sm:$0xf]
      %v320 = vld [vmem:[%s262 + $0x4] sm:$0xf]
      %v321 = vld [vmem:[%s262 + $0x8] sm:$0xf]
      %v322 = vld [vmem:[%s262 + $0xc] sm:$0xf]
      %v323 = vld [vmem:[%s262 + $0x10] sm:$0xf]
      %v324 = vld [vmem:[%s262 + $0x14] sm:$0xf]
      %v325 = vld [vmem:[%s262 + $0x18] sm:$0xf]
      %v326 = vld [vmem:[%s262 + $0x1c] sm:$0xf]
      %v363 = vunpack.c.l.b16 %v283
      %v364 = vunpack.c.l.b16 %v284
      %v365 = vunpack.c.l.b16 %v285
      %v366 = vunpack.c.l.b16 %v286
      %v367 = vunpack.c.l.b16 %v287
      %v368 = vunpack.c.l.b16 %v288
      %v369 = vunpack.c.l.b16 %v289
      %v370 = vunpack.c.l.b16 %v290
      %v371 = vunpack.c.l.b16 %v291
      %v372 = vunpack.c.l.b16 %v292
      %v373 = vunpack.c.l.b16 %v293
      %v374 = vunpack.c.l.b16 %v294
      %v375 = vunpack.c.l.b16 %v295
      %v376 = vunpack.c.l.b16 %v296
      %v377 = vunpack.c.l.b16 %v297
      %v378 = vunpack.c.l.b16 %v298
      %v379 = vunpack.c.l.b16 %v299
      %v380 = vunpack.c.l.b16 %v300
      %v381 = vunpack.c.l.b16 %v301
      %v382 = vunpack.c.l.b16 %v302
      %v383 = vunpack.c.l.b16 %v303
      %v384 = vunpack.c.l.b16 %v304
      %v385 = vunpack.c.l.b16 %v305
      %v386 = vunpack.c.l.b16 %v306
      %v387 = vunpack.c.l.b16 %v307
      %v388 = vunpack.c.l.b16 %v308
      %v389 = vunpack.c.l.b16 %v309
      %v390 = vunpack.c.l.b16 %v310
      %v391 = vunpack.c.l.b16 %v311
      %v392 = vunpack.c.l.b16 %v312
      %v393 = vunpack.c.l.b16 %v313
      %v394 = vunpack.c.l.b16 %v314
      %v395 = vunpack.c.l.b16 %v315
      %v396 = vunpack.c.l.b16 %v316
      %v397 = vunpack.c.l.b16 %v317
      %v398 = vunpack.c.l.b16 %v318
      %v399 = vpack.c.b16 %v364, %v363
      %v400 = vpack.c.b16 %v366, %v365
      %v401 = vpack.c.b16 %v368, %v367
      %v402 = vpack.c.b16 %v370, %v369
      %v403 = vpack.c.b16 %v372, %v371
      %v404 = vpack.c.b16 %v374, %v373
      %v405 = vpack.c.b16 %v376, %v375
      %v406 = vpack.c.b16 %v378, %v377
      %v407 = vpack.c.b16 %v380, %v379
      %v408 = vpack.c.b16 %v382, %v381
      %v409 = vpack.c.b16 %v384, %v383
      %v410 = vpack.c.b16 %v386, %v385
      %v411 = vpack.c.b16 %v388, %v387
      %v412 = vpack.c.b16 %v390, %v389
      %v413 = vpack.c.b16 %v392, %v391
      %v414 = vpack.c.b16 %v394, %v393
      %v415 = vpack.c.b16 %v396, %v395
      %v416 = vpack.c.b16 %v398, %v397
      %v425 = vunpack.c.l.b16 %v319
      %v426 = vunpack.c.l.b16 %v320
      %v427 = vunpack.c.l.b16 %v321
      %v428 = vunpack.c.l.b16 %v322
      %v429 = vunpack.c.l.b16 %v323
      %v430 = vunpack.c.l.b16 %v324
      %v431 = vunpack.c.l.b16 %v325
      %v432 = vunpack.c.l.b16 %v326
      %v433 = vpack.c.b16 %v426, %v425
      %v434 = vpack.c.b16 %v428, %v427
      %v435 = vpack.c.b16 %v430, %v429
      %v436 = vpack.c.b16 %v432, %v431
      %vm441 = vcmask 523264
      %v443 = vsel %vm441, %v399, 0
      %v446 = vsel %vm441, %v400, 0
      %v449 = vsel %vm441, %v401, 0
      %v452 = vsel %vm441, %v402, 0
      %v455 = vsel %vm441, %v403, 0
      %v458 = vsel %vm441, %v404, 0
      %v461 = vsel %vm441, %v405, 0
      %v464 = vsel %vm441, %v406, 0
      %v467 = vsel %vm441, %v407, 0
      %v470 = vsel %vm441, %v408, 0
      %v473 = vsel %vm441, %v409, 0
      %v476 = vsel %vm441, %v410, 0
      %v479 = vsel %vm441, %v411, 0
      %v482 = vsel %vm441, %v412, 0
      %v485 = vsel %vm441, %v413, 0
      %v488 = vsel %vm441, %v414, 0
      %v491 = vsel %vm441, %v415, 0
      %v494 = vsel %vm441, %v416, 0
      %496 = vmatprep.subr.bf16.mxu0 0
      %497 = vmatpush1.bf16.msra.mxu0 %v433
      %498 = vmatprep.subr.bf16.mxu0 0
      %499 = vmatpush1.bf16.msra.mxu0 %v434
      %500 = vmatprep.subr.bf16.mxu0 0
      %501 = vmatpush1.bf16.msra.mxu0 %v435
      %502 = vmatprep.subr.bf16.mxu0 0
      %503 = vmatpush1.bf16.msra.mxu0 %v436
      %504 = vmatprep.subr.bf16.mxu0 0
      %505 = vmatpush1.bf16.msra.mxu0 0
      %506 = vmatprep.subr.bf16.mxu0 0
      %507 = vmatpush1.bf16.msra.mxu0 0
      %508 = vmatprep.subr.bf16.mxu0 0
      %509 = vmatpush1.bf16.msra.mxu0 0
      %510 = vmatprep.subr.bf16.mxu0 0
      %511 = vmatpush1.bf16.msra.mxu0 0
      %512 = vmatprep.subr.bf16.mxu0 0
      %513 = vmatpush1.bf16.msra.mxu0 0
      %514 = vmatprep.subr.bf16.mxu0 0
      %515 = vmatpush1.bf16.msra.mxu0 0
      %516 = vmatprep.subr.bf16.mxu0 0
      %517 = vmatpush1.bf16.msra.mxu0 0
      %518 = vmatprep.subr.bf16.mxu0 0
      %519 = vmatpush1.bf16.msra.mxu0 0
      %520 = vmatprep.subr.bf16.mxu0 0
      %521 = vmatpush1.bf16.msra.mxu0 0
      %522 = vmatprep.subr.bf16.mxu0 0
      %523 = vmatpush1.bf16.msra.mxu0 0
      %524 = vmatprep.subr.bf16.mxu0 0
      %525 = vmatpush1.bf16.msra.mxu0 0
      %526 = vmatprep.subr.bf16.mxu0 0
      %527 = vmatpush1.bf16.msra.mxu0 0
      %528 = vmatprep.mubr.bf16.mxu0 0
      %529 = vmatmul.mubr.bf16.gmra.mrb[0].mxu0 %v443
      %v530 = vpop.f32.mrb[0].mxu0
      %v531 = vadd.f32 0.0, %v530
      %v532 = vpop.f32.mrb[0].mxu0
      %v533 = vpop.f32.mrb[0].mxu0
      %v534 = vadd.f32 0.0, %v533
      %v535 = vpop.f32.mrb[0].mxu0
      %536 = vmatprep.mubr.bf16.mxu0 0
      %537 = vmatmul.mubr.bf16.gmra.mrb[0].mxu0 %v446
      %v538 = vpop.f32.mrb[0].mxu0
      %v539 = vadd.f32 0.0, %v538
      %v540 = vpop.f32.mrb[0].mxu0
      %v541 = vpop.f32.mrb[0].mxu0
      %v542 = vadd.f32 0.0, %v541
      %v543 = vpop.f32.mrb[0].mxu0
      %544 = vmatprep.mubr.bf16.mxu0 0
      %545 = vmatmul.mubr.bf16.gmra.mrb[0].mxu0 %v449
      %v546 = vpop.f32.mrb[0].mxu0
      %v547 = vadd.f32 0.0, %v546
      %v548 = vpop.f32.mrb[0].mxu0
      %v549 = vpop.f32.mrb[0].mxu0
      %v550 = vadd.f32 0.0, %v549
      %v551 = vpop.f32.mrb[0].mxu0
      %552 = vmatprep.mubr.bf16.mxu0 0
      %553 = vmatmul.mubr.bf16.gmra.mrb[0].mxu0 %v452
      %v554 = vpop.f32.mrb[0].mxu0
      %v555 = vadd.f32 0.0, %v554
      %v556 = vpop.f32.mrb[0].mxu0
      %v557 = vpop.f32.mrb[0].mxu0
      %v558 = vadd.f32 0.0, %v557
      %v559 = vpop.f32.mrb[0].mxu0
      %560 = vmatprep.mubr.bf16.mxu0 0
      %561 = vmatmul.mubr.bf16.gmra.mrb[0].mxu0 %v455
      %v562 = vpop.f32.mrb[0].mxu0
      %v563 = vadd.f32 0.0, %v562
      %v564 = vpop.f32.mrb[0].mxu0
      %v565 = vpop.f32.mrb[0].mxu0
      %v566 = vadd.f32 0.0, %v565
      %v567 = vpop.f32.mrb[0].mxu0
      %568 = vmatprep.mubr.bf16.mxu0 0
      %569 = vmatmul.mubr.bf16.gmra.mrb[0].mxu0 %v458
      %v570 = vpop.f32.mrb[0].mxu0
      %v571 = vadd.f32 0.0, %v570
      %v572 = vpop.f32.mrb[0].mxu0
      %v573 = vpop.f32.mrb[0].mxu0
      %v574 = vadd.f32 0.0, %v573
      %v575 = vpop.f32.mrb[0].mxu0
      %576 = vmatprep.mubr.bf16.mxu0 0
      %577 = vmatmul.mubr.bf16.gmra.mrb[0].mxu0 %v461
      %v578 = vpop.f32.mrb[0].mxu0
      %v579 = vadd.f32 0.0, %v578
      %v580 = vpop.f32.mrb[0].mxu0
      %v581 = vpop.f32.mrb[0].mxu0
      %v582 = vadd.f32 0.0, %v581
      %v583 = vpop.f32.mrb[0].mxu0
      %584 = vmatprep.mubr.bf16.mxu0 0
      %585 = vmatmul.mubr.bf16.gmra.mrb[0].mxu0 %v464
      %v586 = vpop.f32.mrb[0].mxu0
      %v587 = vadd.f32 0.0, %v586
      %v588 = vpop.f32.mrb[0].mxu0
      %v589 = vpop.f32.mrb[0].mxu0
      %v590 = vadd.f32 0.0, %v589
      %v591 = vpop.f32.mrb[0].mxu0
      %592 = vmatprep.mubr.bf16.mxu0 0
      %593 = vmatmul.mubr.bf16.gmra.mrb[0].mxu0 %v467
      %v594 = vpop.f32.mrb[0].mxu0
      %v595 = vadd.f32 0.0, %v594
      %v596 = vpop.f32.mrb[0].mxu0
      %v597 = vpop.f32.mrb[0].mxu0
      %v598 = vadd.f32 0.0, %v597
      %v599 = vpop.f32.mrb[0].mxu0
      %600 = vmatprep.mubr.bf16.mxu0 0
      %601 = vmatmul.mubr.bf16.gmra.mrb[0].mxu0 %v470
      %v602 = vpop.f32.mrb[0].mxu0
      %v603 = vadd.f32 0.0, %v602
      %v604 = vpop.f32.mrb[0].mxu0
      %v605 = vpop.f32.mrb[0].mxu0
      %v606 = vadd.f32 0.0, %v605
      %v607 = vpop.f32.mrb[0].mxu0
      %608 = vmatprep.mubr.bf16.mxu0 0
      %609 = vmatmul.mubr.bf16.gmra.mrb[0].mxu0 %v473
      %v610 = vpop.f32.mrb[0].mxu0
      %v611 = vadd.f32 0.0, %v610
      %v612 = vpop.f32.mrb[0].mxu0
      %v613 = vpop.f32.mrb[0].mxu0
      %v614 = vadd.f32 0.0, %v613
      %v615 = vpop.f32.mrb[0].mxu0
      %616 = vmatprep.mubr.bf16.mxu0 0
      %617 = vmatmul.mubr.bf16.gmra.mrb[0].mxu0 %v476
      %v618 = vpop.f32.mrb[0].mxu0
      %v619 = vadd.f32 0.0, %v618
      %v620 = vpop.f32.mrb[0].mxu0
      %v621 = vpop.f32.mrb[0].mxu0
      %v622 = vadd.f32 0.0, %v621
      %v623 = vpop.f32.mrb[0].mxu0
      %624 = vmatprep.mubr.bf16.mxu0 0
      %625 = vmatmul.mubr.bf16.gmra.mrb[0].mxu0 %v479
      %v626 = vpop.f32.mrb[0].mxu0
      %v627 = vadd.f32 0.0, %v626
      %v628 = vpop.f32.mrb[0].mxu0
      %v629 = vpop.f32.mrb[0].mxu0
      %v630 = vadd.f32 0.0, %v629
      %v631 = vpop.f32.mrb[0].mxu0
      %632 = vmatprep.mubr.bf16.mxu0 0
      %633 = vmatmul.mubr.bf16.gmra.mrb[0].mxu0 %v482
      %v634 = vpop.f32.mrb[0].mxu0
      %v635 = vadd.f32 0.0, %v634
      %v636 = vpop.f32.mrb[0].mxu0
      %v637 = vpop.f32.mrb[0].mxu0
      %v638 = vadd.f32 0.0, %v637
      %v639 = vpop.f32.mrb[0].mxu0
      %640 = vmatprep.mubr.bf16.mxu0 0
      %641 = vmatmul.mubr.bf16.gmra.mrb[0].mxu0 %v485
      %v642 = vpop.f32.mrb[0].mxu0
      %v643 = vadd.f32 0.0, %v642
      %v644 = vpop.f32.mrb[0].mxu0
      %v645 = vpop.f32.mrb[0].mxu0
      %v646 = vadd.f32 0.0, %v645
      %v647 = vpop.f32.mrb[0].mxu0
      %648 = vmatprep.mubr.bf16.mxu0 0
      %649 = vmatmul.mubr.bf16.gmra.mrb[0].mxu0 %v488
      %v650 = vpop.f32.mrb[0].mxu0
      %v651 = vadd.f32 0.0, %v650
      %v652 = vpop.f32.mrb[0].mxu0
      %v653 = vpop.f32.mrb[0].mxu0
      %v654 = vadd.f32 0.0, %v653
      %v655 = vpop.f32.mrb[0].mxu0
      %656 = vmatprep.mubr.bf16.mxu0 0
      %657 = vmatmul.mubr.bf16.gmra.mrb[0].mxu0 %v491
      %v658 = vpop.f32.mrb[0].mxu0
      %v659 = vadd.f32 0.0, %v658
      %v660 = vpop.f32.mrb[0].mxu0
      %v661 = vpop.f32.mrb[0].mxu0
      %v662 = vadd.f32 0.0, %v661
      %v663 = vpop.f32.mrb[0].mxu0
      %664 = vmatprep.mubr.bf16.mxu0 0
      %665 = vmatmul.mubr.bf16.gmra.mrb[0].mxu0 %v494
      %v666 = vpop.f32.mrb[0].mxu0
      %v667 = vadd.f32 0.0, %v666
      %v668 = vpop.f32.mrb[0].mxu0
      %v669 = vpop.f32.mrb[0].mxu0
      %v670 = vadd.f32 0.0, %v669
      %v671 = vpop.f32.mrb[0].mxu0
      %672 = vdwg.mxu0
      %v673 = vpack.c.bf16 %v534, %v531
      %v674 = vpack.c.bf16 %v542, %v539
      %v675 = vpack.c.bf16 %v550, %v547
      %v676 = vpack.c.bf16 %v558, %v555
      %v677 = vpack.c.bf16 %v566, %v563
      %v678 = vpack.c.bf16 %v574, %v571
      %v679 = vpack.c.bf16 %v582, %v579
      %v680 = vpack.c.bf16 %v590, %v587
      %v681 = vpack.c.bf16 %v598, %v595
      %v682 = vpack.c.bf16 %v606, %v603
      %v683 = vpack.c.bf16 %v614, %v611
      %v684 = vpack.c.bf16 %v622, %v619
      %v685 = vpack.c.bf16 %v630, %v627
      %v686 = vpack.c.bf16 %v638, %v635
      %v687 = vpack.c.bf16 %v646, %v643
      %v688 = vpack.c.bf16 %v654, %v651
      %v689 = vpack.c.bf16 %v662, %v659
      %v690 = vpack.c.bf16 %v670, %v667
      %v709 = vunpack.c.l.b16 %v673
      %v710 = vunpack.c.h.b16 %v673
      %v711 = vunpack.c.l.b16 %v674
      %v712 = vunpack.c.h.b16 %v674
      %v713 = vunpack.c.l.b16 %v675
      %v714 = vunpack.c.h.b16 %v675
      %v715 = vunpack.c.l.b16 %v676
      %v716 = vunpack.c.h.b16 %v676
      %v717 = vunpack.c.l.b16 %v677
      %v718 = vunpack.c.h.b16 %v677
      %v719 = vunpack.c.l.b16 %v678
      %v720 = vunpack.c.h.b16 %v678
      %v721 = vunpack.c.l.b16 %v679
      %v722 = vunpack.c.h.b16 %v679
      %v723 = vunpack.c.l.b16 %v680
      %v724 = vunpack.c.h.b16 %v680
      %v725 = vunpack.c.l.b16 %v681
      %v726 = vunpack.c.h.b16 %v681
      %v727 = vunpack.c.l.b16 %v682
      %v728 = vunpack.c.h.b16 %v682
      %v729 = vunpack.c.l.b16 %v683
      %v730 = vunpack.c.h.b16 %v683
      %v731 = vunpack.c.l.b16 %v684
      %v732 = vunpack.c.h.b16 %v684
      %v733 = vunpack.c.l.b16 %v685
      %v734 = vunpack.c.h.b16 %v685
      %v735 = vunpack.c.l.b16 %v686
      %v736 = vunpack.c.h.b16 %v686
      %v737 = vunpack.c.l.b16 %v687
      %v738 = vunpack.c.h.b16 %v687
      %v739 = vunpack.c.l.b16 %v688
      %v740 = vunpack.c.h.b16 %v688
      %v741 = vunpack.c.l.b16 %v689
      %v742 = vunpack.c.h.b16 %v689
      %v743 = vunpack.c.l.b16 %v690
      %v744 = vunpack.c.h.b16 %v690
      %v745 = vpack.c.b16 %v709, %v709
      %v746 = vpack.c.b16 %v710, %v710
      %v747 = vpack.c.b16 %v711, %v711
      %v748 = vpack.c.b16 %v712, %v712
      %v749 = vpack.c.b16 %v713, %v713
      %v750 = vpack.c.b16 %v714, %v714
      %v751 = vpack.c.b16 %v715, %v715
      %v752 = vpack.c.b16 %v716, %v716
      %v753 = vpack.c.b16 %v717, %v717
      %v754 = vpack.c.b16 %v718, %v718
      %v755 = vpack.c.b16 %v719, %v719
      %v756 = vpack.c.b16 %v720, %v720
      %v757 = vpack.c.b16 %v721, %v721
      %v758 = vpack.c.b16 %v722, %v722
      %v759 = vpack.c.b16 %v723, %v723
      %v760 = vpack.c.b16 %v724, %v724
      %v761 = vpack.c.b16 %v725, %v725
      %v762 = vpack.c.b16 %v726, %v726
      %v763 = vpack.c.b16 %v727, %v727
      %v764 = vpack.c.b16 %v728, %v728
      %v765 = vpack.c.b16 %v729, %v729
      %v766 = vpack.c.b16 %v730, %v730
      %v767 = vpack.c.b16 %v731, %v731
      %v768 = vpack.c.b16 %v732, %v732
      %v769 = vpack.c.b16 %v733, %v733
      %v770 = vpack.c.b16 %v734, %v734
      %v771 = vpack.c.b16 %v735, %v735
      %v772 = vpack.c.b16 %v736, %v736
      %v773 = vpack.c.b16 %v737, %v737
      %v774 = vpack.c.b16 %v738, %v738
      %v775 = vpack.c.b16 %v739, %v739
      %v776 = vpack.c.b16 %v740, %v740
      %v777 = vpack.c.b16 %v741, %v741
      %v778 = vpack.c.b16 %v742, %v742
      %v779 = vpack.c.b16 %v743, %v743
      %v780 = vpack.c.b16 %v744, %v744
      %817 = vst [vmem:[%s272] sm:$0xf] %v745
      %818 = vst [vmem:[%s272 + $0x4] sm:$0xf] %v746
      %819 = vst [vmem:[%s272 + $0x8] sm:$0xf] %v747
      %820 = vst [vmem:[%s272 + $0xc] sm:$0xf] %v748
      %821 = vst [vmem:[%s272 + $0x10] sm:$0xf] %v749
      %822 = vst [vmem:[%s272 + $0x14] sm:$0xf] %v750
      %823 = vst [vmem:[%s272 + $0x18] sm:$0xf] %v751
      %824 = vst [vmem:[%s272 + $0x1c] sm:$0xf] %v752
      %825 = vst [vmem:[%s272 + $0x20] sm:$0xf] %v753
      %826 = vst [vmem:[%s272 + $0x24] sm:$0xf] %v754
      %827 = vst [vmem:[%s272 + $0x28] sm:$0xf] %v755
      %828 = vst [vmem:[%s272 + $0x2c] sm:$0xf] %v756
      %829 = vst [vmem:[%s272 + $0x30] sm:$0xf] %v757
      %830 = vst [vmem:[%s272 + $0x34] sm:$0xf] %v758
      %831 = vst [vmem:[%s272 + $0x38] sm:$0xf] %v759
      %832 = vst [vmem:[%s272 + $0x3c] sm:$0xf] %v760
      %833 = vst [vmem:[%s272 + $0x40] sm:$0xf] %v761
      %834 = vst [vmem:[%s272 + $0x44] sm:$0xf] %v762
      %835 = vst [vmem:[%s272 + $0x48] sm:$0xf] %v763
      %836 = vst [vmem:[%s272 + $0x4c] sm:$0xf] %v764
      %837 = vst [vmem:[%s272 + $0x50] sm:$0xf] %v765
      %838 = vst [vmem:[%s272 + $0x54] sm:$0xf] %v766
      %839 = vst [vmem:[%s272 + $0x58] sm:$0xf] %v767
      %840 = vst [vmem:[%s272 + $0x5c] sm:$0xf] %v768
      %841 = vst [vmem:[%s272 + $0x60] sm:$0xf] %v769
      %842 = vst [vmem:[%s272 + $0x64] sm:$0xf] %v770
      %843 = vst [vmem:[%s272 + $0x68] sm:$0xf] %v771
      %844 = vst [vmem:[%s272 + $0x6c] sm:$0xf] %v772
      %845 = vst [vmem:[%s272 + $0x70] sm:$0xf] %v773
      %846 = vst [vmem:[%s272 + $0x74] sm:$0xf] %v774
      %847 = vst [vmem:[%s272 + $0x78] sm:$0xf] %v775
      %848 = vst [vmem:[%s272 + $0x7c] sm:$0xf] %v776
      %849 = vst [vmem:[%s272 + $0x80] sm:$0xf] %v777
      %850 = vst [vmem:[%s272 + $0x84] sm:$0xf] %v778
      %851 = vst [vmem:[%s272 + $0x88] sm:$0xf] %v779
      %852 = vst [vmem:[%s272 + $0x8c] sm:$0xf] %v780
      %v853 = vmul.f32 %v531, %v531
      %v854 = vmul.f32 %v534, %v534
      %v855 = vmul.f32 %v539, %v539
      %v856 = vmul.f32 %v542, %v542
      %v857 = vmul.f32 %v547, %v547
      %v858 = vmul.f32 %v550, %v550
      %v859 = vmul.f32 %v555, %v555
      %v860 = vmul.f32 %v558, %v558
      %v861 = vmul.f32 %v563, %v563
      %v862 = vmul.f32 %v566, %v566
      %v863 = vmul.f32 %v571, %v571
      %v864 = vmul.f32 %v574, %v574
      %v865 = vmul.f32 %v579, %v579
      %v866 = vmul.f32 %v582, %v582
      %v867 = vmul.f32 %v587, %v587
      %v868 = vmul.f32 %v590, %v590
      %v869 = vmul.f32 %v595, %v595
      %v870 = vmul.f32 %v598, %v598
      %v871 = vmul.f32 %v603, %v603
      %v872 = vmul.f32 %v606, %v606
      %v873 = vmul.f32 %v611, %v611
      %v874 = vmul.f32 %v614, %v614
      %v875 = vmul.f32 %v619, %v619
      %v876 = vmul.f32 %v622, %v622
      %v877 = vmul.f32 %v627, %v627
      %v878 = vmul.f32 %v630, %v630
      %v879 = vmul.f32 %v635, %v635
      %v880 = vmul.f32 %v638, %v638
      %v881 = vmul.f32 %v643, %v643
      %v882 = vmul.f32 %v646, %v646
      %v883 = vmul.f32 %v651, %v651
      %v884 = vmul.f32 %v654, %v654
      %v885 = vmul.f32 %v659, %v659
      %v886 = vmul.f32 %v662, %v662
      %v887 = vmul.f32 %v667, %v667
      %v888 = vmul.f32 %v670, %v670
      %s889 = scalar_lea.vmem %s256, 144
      %v890 = vld [vmem:[%s889] sm:$0xf]
      %v891 = vld [vmem:[%s889 + $0x4] sm:$0xf]
      %v892 = vld [vmem:[%s889 + $0x8] sm:$0xf]
      %v893 = vld [vmem:[%s889 + $0xc] sm:$0xf]
      %v894 = vld [vmem:[%s889 + $0x10] sm:$0xf]
      %v895 = vld [vmem:[%s889 + $0x14] sm:$0xf]
      %v896 = vld [vmem:[%s889 + $0x18] sm:$0xf]
      %v897 = vld [vmem:[%s889 + $0x1c] sm:$0xf]
      %v898 = vld [vmem:[%s889 + $0x20] sm:$0xf]
      %v899 = vld [vmem:[%s889 + $0x24] sm:$0xf]
      %v900 = vld [vmem:[%s889 + $0x28] sm:$0xf]
      %v901 = vld [vmem:[%s889 + $0x2c] sm:$0xf]
      %v902 = vld [vmem:[%s889 + $0x30] sm:$0xf]
      %v903 = vld [vmem:[%s889 + $0x34] sm:$0xf]
      %v904 = vld [vmem:[%s889 + $0x38] sm:$0xf]
      %v905 = vld [vmem:[%s889 + $0x3c] sm:$0xf]
      %v906 = vld [vmem:[%s889 + $0x40] sm:$0xf]
      %v907 = vld [vmem:[%s889 + $0x44] sm:$0xf]
      %v908 = vld [vmem:[%s889 + $0x48] sm:$0xf]
      %v909 = vld [vmem:[%s889 + $0x4c] sm:$0xf]
      %v910 = vld [vmem:[%s889 + $0x50] sm:$0xf]
      %v911 = vld [vmem:[%s889 + $0x54] sm:$0xf]
      %v912 = vld [vmem:[%s889 + $0x58] sm:$0xf]
      %v913 = vld [vmem:[%s889 + $0x5c] sm:$0xf]
      %v914 = vld [vmem:[%s889 + $0x60] sm:$0xf]
      %v915 = vld [vmem:[%s889 + $0x64] sm:$0xf]
      %v916 = vld [vmem:[%s889 + $0x68] sm:$0xf]
      %v917 = vld [vmem:[%s889 + $0x6c] sm:$0xf]
      %v918 = vld [vmem:[%s889 + $0x70] sm:$0xf]
      %v919 = vld [vmem:[%s889 + $0x74] sm:$0xf]
      %v920 = vld [vmem:[%s889 + $0x78] sm:$0xf]
      %v921 = vld [vmem:[%s889 + $0x7c] sm:$0xf]
      %v922 = vld [vmem:[%s889 + $0x80] sm:$0xf]
      %v923 = vld [vmem:[%s889 + $0x84] sm:$0xf]
      %v924 = vld [vmem:[%s889 + $0x88] sm:$0xf]
      %v925 = vld [vmem:[%s889 + $0x8c] sm:$0xf]
      %v926 = vld [vmem:[%s262] sm:$0xf]
      %v927 = vld [vmem:[%s262 + $0x4] sm:$0xf]
      %v928 = vld [vmem:[%s262 + $0x8] sm:$0xf]
      %v929 = vld [vmem:[%s262 + $0xc] sm:$0xf]
      %v930 = vld [vmem:[%s262 + $0x10] sm:$0xf]
      %v931 = vld [vmem:[%s262 + $0x14] sm:$0xf]
      %v932 = vld [vmem:[%s262 + $0x18] sm:$0xf]
      %v933 = vld [vmem:[%s262 + $0x1c] sm:$0xf]
      %v970 = vunpack.c.l.b16 %v890
      %v971 = vunpack.c.l.b16 %v891
      %v972 = vunpack.c.l.b16 %v892
      %v973 = vunpack.c.l.b16 %v893
      %v974 = vunpack.c.l.b16 %v894
      %v975 = vunpack.c.l.b16 %v895
      %v976 = vunpack.c.l.b16 %v896
      %v977 = vunpack.c.l.b16 %v897
      %v978 = vunpack.c.l.b16 %v898
      %v979 = vunpack.c.l.b16 %v899
      %v980 = vunpack.c.l.b16 %v900
      %v981 = vunpack.c.l.b16 %v901
      %v982 = vunpack.c.l.b16 %v902
      %v983 = vunpack.c.l.b16 %v903
      %v984 = vunpack.c.l.b16 %v904
      %v985 = vunpack.c.l.b16 %v905
      %v986 = vunpack.c.l.b16 %v906
      %v987 = vunpack.c.l.b16 %v907
      %v988 = vunpack.c.l.b16 %v908
      %v989 = vunpack.c.l.b16 %v909
      %v990 = vunpack.c.l.b16 %v910
      %v991 = vunpack.c.l.b16 %v911
      %v992 = vunpack.c.l.b16 %v912
      %v993 = vunpack.c.l.b16 %v913
      %v994 = vunpack.c.l.b16 %v914
      %v995 = vunpack.c.l.b16 %v915
      %v996 = vunpack.c.l.b16 %v916
      %v997 = vunpack.c.l.b16 %v917
      %v998 = vunpack.c.l.b16 %v918
      %v999 = vunpack.c.l.b16 %v919
      %v1000 = vunpack.c.l.b16 %v920
      %v1001 = vunpack.c.l.b16 %v921
      %v1002 = vunpack.c.l.b16 %v922
      %v1003 = vunpack.c.l.b16 %v923
      %v1004 = vunpack.c.l.b16 %v924
      %v1005 = vunpack.c.l.b16 %v925
      %v1006 = vpack.c.b16 %v971, %v970
      %v1007 = vpack.c.b16 %v973, %v972
      %v1008 = vpack.c.b16 %v975, %v974
      %v1009 = vpack.c.b16 %v977, %v976
      %v1010 = vpack.c.b16 %v979, %v978
      %v1011 = vpack.c.b16 %v981, %v980
      %v1012 = vpack.c.b16 %v983, %v982
      %v1013 = vpack.c.b16 %v985, %v984
      %v1014 = vpack.c.b16 %v987, %v986
      %v1015 = vpack.c.b16 %v989, %v988
      %v1016 = vpack.c.b16 %v991, %v990
      %v1017 = vpack.c.b16 %v993, %v992
      %v1018 = vpack.c.b16 %v995, %v994
      %v1019 = vpack.c.b16 %v997, %v996
      %v1020 = vpack.c.b16 %v999, %v998
      %v1021 = vpack.c.b16 %v1001, %v1000
      %v1022 = vpack.c.b16 %v1003, %v1002
      %v1023 = vpack.c.b16 %v1005, %v1004
      %v1032 = vunpack.c.l.b16 %v926
      %v1033 = vunpack.c.l.b16 %v927
      %v1034 = vunpack.c.l.b16 %v928
      %v1035 = vunpack.c.l.b16 %v929
      %v1036 = vunpack.c.l.b16 %v930
      %v1037 = vunpack.c.l.b16 %v931
      %v1038 = vunpack.c.l.b16 %v932
      %v1039 = vunpack.c.l.b16 %v933
      %v1040 = vpack.c.b16 %v1033, %v1032
      %v1041 = vpack.c.b16 %v1035, %v1034
      %v1042 = vpack.c.b16 %v1037, %v1036
      %v1043 = vpack.c.b16 %v1039, %v1038
      %v1049 = vsel %vm441, %v1006, 0
      %v1052 = vsel %vm441, %v1007, 0
      %v1055 = vsel %vm441, %v1008, 0
      %v1058 = vsel %vm441, %v1009, 0
      %v1061 = vsel %vm441, %v1010, 0
      %v1064 = vsel %vm441, %v1011, 0
      %v1067 = vsel %vm441, %v1012, 0
      %v1070 = vsel %vm441, %v1013, 0
      %v1073 = vsel %vm441, %v1014, 0
      %v1076 = vsel %vm441, %v1015, 0
      %v1079 = vsel %vm441, %v1016, 0
      %v1082 = vsel %vm441, %v1017, 0
      %v1085 = vsel %vm441, %v1018, 0
      %v1088 = vsel %vm441, %v1019, 0
      %v1091 = vsel %vm441, %v1020, 0
      %v1094 = vsel %vm441, %v1021, 0
      %v1097 = vsel %vm441, %v1022, 0
      %v1100 = vsel %vm441, %v1023, 0
      %1102 = vmatprep.subr.bf16.mxu0 0
      %1103 = vmatpush1.bf16.msra.mxu0 %v1040
      %1104 = vmatprep.subr.bf16.mxu0 0
      %1105 = vmatpush1.bf16.msra.mxu0 %v1041
      %1106 = vmatprep.subr.bf16.mxu0 0
      %1107 = vmatpush1.bf16.msra.mxu0 %v1042
      %1108 = vmatprep.subr.bf16.mxu0 0
      %1109 = vmatpush1.bf16.msra.mxu0 %v1043
      %1110 = vmatprep.subr.bf16.mxu0 0
      %1111 = vmatpush1.bf16.msra.mxu0 0
      %1112 = vmatprep.subr.bf16.mxu0 0
      %1113 = vmatpush1.bf16.msra.mxu0 0
      %1114 = vmatprep.subr.bf16.mxu0 0
      %1115 = vmatpush1.bf16.msra.mxu0 0
      %1116 = vmatprep.subr.bf16.mxu0 0
      %1117 = vmatpush1.bf16.msra.mxu0 0
      %1118 = vmatprep.subr.bf16.mxu0 0
      %1119 = vmatpush1.bf16.msra.mxu0 0
      %1120 = vmatprep.subr.bf16.mxu0 0
      %1121 = vmatpush1.bf16.msra.mxu0 0
      %1122 = vmatprep.subr.bf16.mxu0 0
      %1123 = vmatpush1.bf16.msra.mxu0 0
      %1124 = vmatprep.subr.bf16.mxu0 0
      %1125 = vmatpush1.bf16.msra.mxu0 0
      %1126 = vmatprep.subr.bf16.mxu0 0
      %1127 = vmatpush1.bf16.msra.mxu0 0
      %1128 = vmatprep.subr.bf16.mxu0 0
      %1129 = vmatpush1.bf16.msra.mxu0 0
      %1130 = vmatprep.subr.bf16.mxu0 0
      %1131 = vmatpush1.bf16.msra.mxu0 0
      %1132 = vmatprep.subr.bf16.mxu0 0
      %1133 = vmatpush1.bf16.msra.mxu0 0
      %1134 = vmatprep.mubr.bf16.mxu0 0
      %1135 = vmatmul.mubr.bf16.gmra.mrb[0].mxu0 %v1049
      %v1136 = vpop.f32.mrb[0].mxu0
      %v1137 = vadd.f32 0.0, %v1136
      %v1138 = vpop.f32.mrb[0].mxu0
      %v1139 = vpop.f32.mrb[0].mxu0
      %v1140 = vadd.f32 0.0, %v1139
      %v1141 = vpop.f32.mrb[0].mxu0
      %1142 = vmatprep.mubr.bf16.mxu0 0
      %1143 = vmatmul.mubr.bf16.gmra.mrb[0].mxu0 %v1052
      %v1144 = vpop.f32.mrb[0].mxu0
      %v1145 = vadd.f32 0.0, %v1144
      %v1146 = vpop.f32.mrb[0].mxu0
      %v1147 = vpop.f32.mrb[0].mxu0
      %v1148 = vadd.f32 0.0, %v1147
      %v1149 = vpop.f32.mrb[0].mxu0
      %1150 = vmatprep.mubr.bf16.mxu0 0
      %1151 = vmatmul.mubr.bf16.gmra.mrb[0].mxu0 %v1055
      %v1152 = vpop.f32.mrb[0].mxu0
      %v1153 = vadd.f32 0.0, %v1152
      %v1154 = vpop.f32.mrb[0].mxu0
      %v1155 = vpop.f32.mrb[0].mxu0
      %v1156 = vadd.f32 0.0, %v1155
      %v1157 = vpop.f32.mrb[0].mxu0
      %1158 = vmatprep.mubr.bf16.mxu0 0
      %1159 = vmatmul.mubr.bf16.gmra.mrb[0].mxu0 %v1058
      %v1160 = vpop.f32.mrb[0].mxu0
      %v1161 = vadd.f32 0.0, %v1160
      %v1162 = vpop.f32.mrb[0].mxu0
      %v1163 = vpop.f32.mrb[0].mxu0
      %v1164 = vadd.f32 0.0, %v1163
      %v1165 = vpop.f32.mrb[0].mxu0
      %1166 = vmatprep.mubr.bf16.mxu0 0
      %1167 = vmatmul.mubr.bf16.gmra.mrb[0].mxu0 %v1061
      %v1168 = vpop.f32.mrb[0].mxu0
      %v1169 = vadd.f32 0.0, %v1168
      %v1170 = vpop.f32.mrb[0].mxu0
      %v1171 = vpop.f32.mrb[0].mxu0
      %v1172 = vadd.f32 0.0, %v1171
      %v1173 = vpop.f32.mrb[0].mxu0
      %1174 = vmatprep.mubr.bf16.mxu0 0
      %1175 = vmatmul.mubr.bf16.gmra.mrb[0].mxu0 %v1064
      %v1176 = vpop.f32.mrb[0].mxu0
      %v1177 = vadd.f32 0.0, %v1176
      %v1178 = vpop.f32.mrb[0].mxu0
      %v1179 = vpop.f32.mrb[0].mxu0
      %v1180 = vadd.f32 0.0, %v1179
      %v1181 = vpop.f32.mrb[0].mxu0
      %1182 = vmatprep.mubr.bf16.mxu0 0
      %1183 = vmatmul.mubr.bf16.gmra.mrb[0].mxu0 %v1067
      %v1184 = vpop.f32.mrb[0].mxu0
      %v1185 = vadd.f32 0.0, %v1184
      %v1186 = vpop.f32.mrb[0].mxu0
      %v1187 = vpop.f32.mrb[0].mxu0
      %v1188 = vadd.f32 0.0, %v1187
      %v1189 = vpop.f32.mrb[0].mxu0
      %1190 = vmatprep.mubr.bf16.mxu0 0
      %1191 = vmatmul.mubr.bf16.gmra.mrb[0].mxu0 %v1070
      %v1192 = vpop.f32.mrb[0].mxu0
      %v1193 = vadd.f32 0.0, %v1192
      %v1194 = vpop.f32.mrb[0].mxu0
      %v1195 = vpop.f32.mrb[0].mxu0
      %v1196 = vadd.f32 0.0, %v1195
      %v1197 = vpop.f32.mrb[0].mxu0
      %1198 = vmatprep.mubr.bf16.mxu0 0
      %1199 = vmatmul.mubr.bf16.gmra.mrb[0].mxu0 %v1073
      %v1200 = vpop.f32.mrb[0].mxu0
      %v1201 = vadd.f32 0.0, %v1200
      %v1202 = vpop.f32.mrb[0].mxu0
      %v1203 = vpop.f32.mrb[0].mxu0
      %v1204 = vadd.f32 0.0, %v1203
      %v1205 = vpop.f32.mrb[0].mxu0
      %1206 = vmatprep.mubr.bf16.mxu0 0
      %1207 = vmatmul.mubr.bf16.gmra.mrb[0].mxu0 %v1076
      %v1208 = vpop.f32.mrb[0].mxu0
      %v1209 = vadd.f32 0.0, %v1208
      %v1210 = vpop.f32.mrb[0].mxu0
      %v1211 = vpop.f32.mrb[0].mxu0
      %v1212 = vadd.f32 0.0, %v1211
      %v1213 = vpop.f32.mrb[0].mxu0
      %1214 = vmatprep.mubr.bf16.mxu0 0
      %1215 = vmatmul.mubr.bf16.gmra.mrb[0].mxu0 %v1079
      %v1216 = vpop.f32.mrb[0].mxu0
      %v1217 = vadd.f32 0.0, %v1216
      %v1218 = vpop.f32.mrb[0].mxu0
      %v1219 = vpop.f32.mrb[0].mxu0
      %v1220 = vadd.f32 0.0, %v1219
      %v1221 = vpop.f32.mrb[0].mxu0
      %1222 = vmatprep.mubr.bf16.mxu0 0
      %1223 = vmatmul.mubr.bf16.gmra.mrb[0].mxu0 %v1082
      %v1224 = vpop.f32.mrb[0].mxu0
      %v1225 = vadd.f32 0.0, %v1224
      %v1226 = vpop.f32.mrb[0].mxu0
      %v1227 = vpop.f32.mrb[0].mxu0
      %v1228 = vadd.f32 0.0, %v1227
      %v1229 = vpop.f32.mrb[0].mxu0
      %1230 = vmatprep.mubr.bf16.mxu0 0
      %1231 = vmatmul.mubr.bf16.gmra.mrb[0].mxu0 %v1085
      %v1232 = vpop.f32.mrb[0].mxu0
      %v1233 = vadd.f32 0.0, %v1232
      %v1234 = vpop.f32.mrb[0].mxu0
      %v1235 = vpop.f32.mrb[0].mxu0
      %v1236 = vadd.f32 0.0, %v1235
      %v1237 = vpop.f32.mrb[0].mxu0
      %1238 = vmatprep.mubr.bf16.mxu0 0
      %1239 = vmatmul.mubr.bf16.gmra.mrb[0].mxu0 %v1088
      %v1240 = vpop.f32.mrb[0].mxu0
      %v1241 = vadd.f32 0.0, %v1240
      %v1242 = vpop.f32.mrb[0].mxu0
      %v1243 = vpop.f32.mrb[0].mxu0
      %v1244 = vadd.f32 0.0, %v1243
      %v1245 = vpop.f32.mrb[0].mxu0
      %1246 = vmatprep.mubr.bf16.mxu0 0
      %1247 = vmatmul.mubr.bf16.gmra.mrb[0].mxu0 %v1091
      %v1248 = vpop.f32.mrb[0].mxu0
      %v1249 = vadd.f32 0.0, %v1248
      %v1250 = vpop.f32.mrb[0].mxu0
      %v1251 = vpop.f32.mrb[0].mxu0
      %v1252 = vadd.f32 0.0, %v1251
      %v1253 = vpop.f32.mrb[0].mxu0
      %1254 = vmatprep.mubr.bf16.mxu0 0
      %1255 = vmatmul.mubr.bf16.gmra.mrb[0].mxu0 %v1094
      %v1256 = vpop.f32.mrb[0].mxu0
      %v1257 = vadd.f32 0.0, %v1256
      %v1258 = vpop.f32.mrb[0].mxu0
      %v1259 = vpop.f32.mrb[0].mxu0
      %v1260 = vadd.f32 0.0, %v1259
      %v1261 = vpop.f32.mrb[0].mxu0
      %1262 = vmatprep.mubr.bf16.mxu0 0
      %1263 = vmatmul.mubr.bf16.gmra.mrb[0].mxu0 %v1097
      %v1264 = vpop.f32.mrb[0].mxu0
      %v1265 = vadd.f32 0.0, %v1264
      %v1266 = vpop.f32.mrb[0].mxu0
      %v1267 = vpop.f32.mrb[0].mxu0
      %v1268 = vadd.f32 0.0, %v1267
      %v1269 = vpop.f32.mrb[0].mxu0
      %1270 = vmatprep.mubr.bf16.mxu0 0
      %1271 = vmatmul.mubr.bf16.gmra.mrb[0].mxu0 %v1100
      %v1272 = vpop.f32.mrb[0].mxu0
      %v1273 = vadd.f32 0.0, %v1272
      %v1274 = vpop.f32.mrb[0].mxu0
      %v1275 = vpop.f32.mrb[0].mxu0
      %v1276 = vadd.f32 0.0, %v1275
      %v1277 = vpop.f32.mrb[0].mxu0
      %1278 = vdwg.mxu0
      %v1279 = vpack.c.bf16 %v1140, %v1137
      %v1280 = vpack.c.bf16 %v1148, %v1145
      %v1281 = vpack.c.bf16 %v1156, %v1153
      %v1282 = vpack.c.bf16 %v1164, %v1161
      %v1283 = vpack.c.bf16 %v1172, %v1169
      %v1284 = vpack.c.bf16 %v1180, %v1177
      %v1285 = vpack.c.bf16 %v1188, %v1185
      %v1286 = vpack.c.bf16 %v1196, %v1193
      %v1287 = vpack.c.bf16 %v1204, %v1201
      %v1288 = vpack.c.bf16 %v1212, %v1209
      %v1289 = vpack.c.bf16 %v1220, %v1217
      %v1290 = vpack.c.bf16 %v1228, %v1225
      %v1291 = vpack.c.bf16 %v1236, %v1233
      %v1292 = vpack.c.bf16 %v1244, %v1241
      %v1293 = vpack.c.bf16 %v1252, %v1249
      %v1294 = vpack.c.bf16 %v1260, %v1257
      %v1295 = vpack.c.bf16 %v1268, %v1265
      %v1296 = vpack.c.bf16 %v1276, %v1273
      %v1315 = vunpack.c.l.b16 %v1279
      %v1316 = vunpack.c.h.b16 %v1279
      %v1317 = vunpack.c.l.b16 %v1280
      %v1318 = vunpack.c.h.b16 %v1280
      %v1319 = vunpack.c.l.b16 %v1281
      %v1320 = vunpack.c.h.b16 %v1281
      %v1321 = vunpack.c.l.b16 %v1282
      %v1322 = vunpack.c.h.b16 %v1282
      %v1323 = vunpack.c.l.b16 %v1283
      %v1324 = vunpack.c.h.b16 %v1283
      %v1325 = vunpack.c.l.b16 %v1284
      %v1326 = vunpack.c.h.b16 %v1284
      %v1327 = vunpack.c.l.b16 %v1285
      %v1328 = vunpack.c.h.b16 %v1285
      %v1329 = vunpack.c.l.b16 %v1286
      %v1330 = vunpack.c.h.b16 %v1286
      %v1331 = vunpack.c.l.b16 %v1287
      %v1332 = vunpack.c.h.b16 %v1287
      %v1333 = vunpack.c.l.b16 %v1288
      %v1334 = vunpack.c.h.b16 %v1288
      %v1335 = vunpack.c.l.b16 %v1289
      %v1336 = vunpack.c.h.b16 %v1289
      %v1337 = vunpack.c.l.b16 %v1290
      %v1338 = vunpack.c.h.b16 %v1290
      %v1339 = vunpack.c.l.b16 %v1291
      %v1340 = vunpack.c.h.b16 %v1291
      %v1341 = vunpack.c.l.b16 %v1292
      %v1342 = vunpack.c.h.b16 %v1292
      %v1343 = vunpack.c.l.b16 %v1293
      %v1344 = vunpack.c.h.b16 %v1293
      %v1345 = vunpack.c.l.b16 %v1294
      %v1346 = vunpack.c.h.b16 %v1294
      %v1347 = vunpack.c.l.b16 %v1295
      %v1348 = vunpack.c.h.b16 %v1295
      %v1349 = vunpack.c.l.b16 %v1296
      %v1350 = vunpack.c.h.b16 %v1296
      %v1351 = vpack.c.b16 %v1315, %v1315
      %v1352 = vpack.c.b16 %v1316, %v1316
      %v1353 = vpack.c.b16 %v1317, %v1317
      %v1354 = vpack.c.b16 %v1318, %v1318
      %v1355 = vpack.c.b16 %v1319, %v1319
      %v1356 = vpack.c.b16 %v1320, %v1320
      %v1357 = vpack.c.b16 %v1321, %v1321
      %v1358 = vpack.c.b16 %v1322, %v1322
      %v1359 = vpack.c.b16 %v1323, %v1323
      %v1360 = vpack.c.b16 %v1324, %v1324
      %v1361 = vpack.c.b16 %v1325, %v1325
      %v1362 = vpack.c.b16 %v1326, %v1326
      %v1363 = vpack.c.b16 %v1327, %v1327
      %v1364 = vpack.c.b16 %v1328, %v1328
      %v1365 = vpack.c.b16 %v1329, %v1329
      %v1366 = vpack.c.b16 %v1330, %v1330
      %v1367 = vpack.c.b16 %v1331, %v1331
      %v1368 = vpack.c.b16 %v1332, %v1332
      %v1369 = vpack.c.b16 %v1333, %v1333
      %v1370 = vpack.c.b16 %v1334, %v1334
      %v1371 = vpack.c.b16 %v1335, %v1335
      %v1372 = vpack.c.b16 %v1336, %v1336
      %v1373 = vpack.c.b16 %v1337, %v1337
      %v1374 = vpack.c.b16 %v1338, %v1338
      %v1375 = vpack.c.b16 %v1339, %v1339
      %v1376 = vpack.c.b16 %v1340, %v1340
      %v1377 = vpack.c.b16 %v1341, %v1341
      %v1378 = vpack.c.b16 %v1342, %v1342
      %v1379 = vpack.c.b16 %v1343, %v1343
      %v1380 = vpack.c.b16 %v1344, %v1344
      %v1381 = vpack.c.b16 %v1345, %v1345
      %v1382 = vpack.c.b16 %v1346, %v1346
      %v1383 = vpack.c.b16 %v1347, %v1347
      %v1384 = vpack.c.b16 %v1348, %v1348
      %v1385 = vpack.c.b16 %v1349, %v1349
      %v1386 = vpack.c.b16 %v1350, %v1350
      %s1423 = scalar_lea.vmem %s272, 144
      %1424 = vst [vmem:[%s1423] sm:$0xf] %v1351
      %1425 = vst [vmem:[%s1423 + $0x4] sm:$0xf] %v1352
      %1426 = vst [vmem:[%s1423 + $0x8] sm:$0xf] %v1353
      %1427 = vst [vmem:[%s1423 + $0xc] sm:$0xf] %v1354
      %1428 = vst [vmem:[%s1423 + $0x10] sm:$0xf] %v1355
      %1429 = vst [vmem:[%s1423 + $0x14] sm:$0xf] %v1356
      %1430 = vst [vmem:[%s1423 + $0x18] sm:$0xf] %v1357
      %1431 = vst [vmem:[%s1423 + $0x1c] sm:$0xf] %v1358
      %1432 = vst [vmem:[%s1423 + $0x20] sm:$0xf] %v1359
      %1433 = vst [vmem:[%s1423 + $0x24] sm:$0xf] %v1360
      %1434 = vst [vmem:[%s1423 + $0x28] sm:$0xf] %v1361
      %1435 = vst [vmem:[%s1423 + $0x2c] sm:$0xf] %v1362
      %1436 = vst [vmem:[%s1423 + $0x30] sm:$0xf] %v1363
      %1437 = vst [vmem:[%s1423 + $0x34] sm:$0xf] %v1364
      %1438 = vst [vmem:[%s1423 + $0x38] sm:$0xf] %v1365
      %1439 = vst [vmem:[%s1423 + $0x3c] sm:$0xf] %v1366
      %1440 = vst [vmem:[%s1423 + $0x40] sm:$0xf] %v1367
      %1441 = vst [vmem:[%s1423 + $0x44] sm:$0xf] %v1368
      %1442 = vst [vmem:[%s1423 + $0x48] sm:$0xf] %v1369
      %1443 = vst [vmem:[%s1423 + $0x4c] sm:$0xf] %v1370
      %1444 = vst [vmem:[%s1423 + $0x50] sm:$0xf] %v1371
      %1445 = vst [vmem:[%s1423 + $0x54] sm:$0xf] %v1372
      %1446 = vst [vmem:[%s1423 + $0x58] sm:$0xf] %v1373
      %1447 = vst [vmem:[%s1423 + $0x5c] sm:$0xf] %v1374
      %1448 = vst [vmem:[%s1423 + $0x60] sm:$0xf] %v1375
      %1449 = vst [vmem:[%s1423 + $0x64] sm:$0xf] %v1376
      %1450 = vst [vmem:[%s1423 + $0x68] sm:$0xf] %v1377
      %1451 = vst [vmem:[%s1423 + $0x6c] sm:$0xf] %v1378
      %1452 = vst [vmem:[%s1423 + $0x70] sm:$0xf] %v1379
      %1453 = vst [vmem:[%s1423 + $0x74] sm:$0xf] %v1380
      %1454 = vst [vmem:[%s1423 + $0x78] sm:$0xf] %v1381
      %1455 = vst [vmem:[%s1423 + $0x7c] sm:$0xf] %v1382
      %1456 = vst [vmem:[%s1423 + $0x80] sm:$0xf] %v1383
      %1457 = vst [vmem:[%s1423 + $0x84] sm:$0xf] %v1384
      %1458 = vst [vmem:[%s1423 + $0x88] sm:$0xf] %v1385
      %1459 = vst [vmem:[%s1423 + $0x8c] sm:$0xf] %v1386
      %v1461 = vlaneseq
      %v1462 = vshrl.u32 %v1461, 7
      %v1463 = vsub.s32 0, %v1462
      %v1464 = vrot.slane %v282, %v1463
      %v1465 = vlaneseq
      %v1466 = vshrl.u32 %v1465, 7
      %v1467 = vsub.s32 1, %v1466
      %v1468 = vrot.slane %v282, %v1467
      %v1469 = vlaneseq
      %v1470 = vshrl.u32 %v1469, 7
      %v1471 = vsub.s32 2, %v1470
      %v1472 = vrot.slane %v282, %v1471
      %vm1475 = vcmask 261120
      %v1476 = vsel %vm1475, %v1472, 0
      %1478 = vmatprep.subr.mxu0 0.0
      %1479 = vmatpush1.msra.mxu0 %v1137
      %1480 = vmatprep.subr.mxu0 0.0
      %1481 = vmatpush1.msra.mxu0 %v1140
      %1482 = vmatprep.subr.mxu0 0.0
      %1483 = vmatpush1.msra.mxu0 %v1145
      %1484 = vmatprep.subr.mxu0 0.0
      %1485 = vmatpush1.msra.mxu0 %v1148
      %1486 = vmatprep.subr.mxu0 0.0
      %1487 = vmatpush1.msra.mxu0 %v1153
      %1488 = vmatprep.subr.mxu0 0.0
      %1489 = vmatpush1.msra.mxu0 %v1156
      %1490 = vmatprep.subr.mxu0 0.0
      %1491 = vmatpush1.msra.mxu0 %v1161
      %1492 = vmatprep.subr.mxu0 0.0
      %1493 = vmatpush1.msra.mxu0 %v1164
      %1494 = vmatprep.subr.mxu0 0.0
      %1495 = vmatpush1.msra.mxu0 %v1169
      %1496 = vmatprep.subr.mxu0 0.0
      %1497 = vmatpush1.msra.mxu0 %v1172
      %1498 = vmatprep.subr.mxu0 0.0
      %1499 = vmatpush1.msra.mxu0 %v1177
      %1500 = vmatprep.subr.mxu0 0.0
      %1501 = vmatpush1.msra.mxu0 %v1180
      %1502 = vmatprep.subr.mxu0 0.0
      %1503 = vmatpush1.msra.mxu0 %v1185
      %1504 = vmatprep.subr.mxu0 0.0
      %1505 = vmatpush1.msra.mxu0 %v1188
      %1506 = vmatprep.subr.mxu0 0.0
      %1507 = vmatpush1.msra.mxu0 %v1193
      %1508 = vmatprep.subr.mxu0 0.0
      %1509 = vmatpush1.msra.mxu0 %v1196
      %1510 = vmatprep.subr.mxu0 0.0
      %1511 = vmatpush1.msra.mxu0 %v1201
      %1512 = vmatprep.subr.mxu0 0.0
      %1513 = vmatpush1.msra.mxu0 %v1204
      %1514 = vmatprep.subr.mxu0 0.0
      %1515 = vmatpush1.msra.mxu0 %v1209
      %1516 = vmatprep.subr.mxu0 0.0
      %1517 = vmatpush1.msra.mxu0 %v1212
      %1518 = vmatprep.subr.mxu0 0.0
      %1519 = vmatpush1.msra.mxu0 %v1217
      %1520 = vmatprep.subr.mxu0 0.0
      %1521 = vmatpush1.msra.mxu0 %v1220
      %1522 = vmatprep.subr.mxu0 0.0
      %1523 = vmatpush1.msra.mxu0 %v1225
      %1524 = vmatprep.subr.mxu0 0.0
      %1525 = vmatpush1.msra.mxu0 %v1228
      %1526 = vmatprep.subr.mxu0 0.0
      %1527 = vmatpush1.msra.mxu0 %v1233
      %1528 = vmatprep.subr.mxu0 0.0
      %1529 = vmatpush1.msra.mxu0 %v1236
      %1530 = vmatprep.subr.mxu0 0.0
      %1531 = vmatpush1.msra.mxu0 %v1241
      %1532 = vmatprep.subr.mxu0 0.0
      %1533 = vmatpush1.msra.mxu0 %v1244
      %1534 = vmatprep.subr.mxu0 0.0
      %1535 = vmatpush1.msra.mxu0 %v1249
      %1536 = vmatprep.subr.mxu0 0.0
      %1537 = vmatpush1.msra.mxu0 %v1252
      %1538 = vmatprep.subr.mxu0 0.0
      %1539 = vmatpush1.msra.mxu0 %v1257
      %1540 = vmatprep.subr.mxu0 0.0
      %1541 = vmatpush1.msra.mxu0 %v1260
      %1542 = vmatprep.mubr.f32.mxu0 %v1468
      %1543 = vmatmul.mubr.f32.gmra.mrb[0].mxu0 %v1464
      %v1544 = vpop.f32.mrb[0].mxu0
      %v1545 = vadd.f32 0.0, %v1544
      %v1546 = vpop.f32.mrb[0].mxu0
      %1547 = vdwg.mxu0
      %1548 = vmatprep.subr.mxu0 0.0
      %1549 = vmatpush1.msra.mxu0 %v1265
      %1550 = vmatprep.subr.mxu0 0.0
      %1551 = vmatpush1.msra.mxu0 %v1268
      %1552 = vmatprep.subr.mxu0 0.0
      %1553 = vmatpush1.msra.mxu0 %v1273
      %1554 = vmatprep.subr.mxu0 0.0
      %1555 = vmatpush1.msra.mxu0 %v1276
      %1556 = vmatprep.subr.mxu0 0.0
      %1557 = vmatpush1.msra.mxu0 0.0
      %1558 = vmatprep.subr.mxu0 0.0
      %1559 = vmatpush1.msra.mxu0 0.0
      %1560 = vmatprep.subr.mxu0 0.0
      %1561 = vmatpush1.msra.mxu0 0.0
      %1562 = vmatprep.subr.mxu0 0.0
      %1563 = vmatpush1.msra.mxu0 0.0
      %1564 = vmatprep.subr.mxu0 0.0
      %1565 = vmatpush1.msra.mxu0 0.0
      %1566 = vmatprep.subr.mxu0 0.0
      %1567 = vmatpush1.msra.mxu0 0.0
      %1568 = vmatprep.subr.mxu0 0.0
      %1569 = vmatpush1.msra.mxu0 0.0
      %1570 = vmatprep.subr.mxu0 0.0
      %1571 = vmatpush1.msra.mxu0 0.0
      %1572 = vmatprep.subr.mxu0 0.0
      %1573 = vmatpush1.msra.mxu0 0.0
      %1574 = vmatprep.subr.mxu0 0.0
      %1575 = vmatpush1.msra.mxu0 0.0
      %1576 = vmatprep.subr.mxu0 0.0
      %1577 = vmatpush1.msra.mxu0 0.0
      %1578 = vmatprep.subr.mxu0 0.0
      %1579 = vmatpush1.msra.mxu0 0.0
      %1580 = vmatprep.subr.mxu0 0.0
      %1581 = vmatpush1.msra.mxu0 0.0
      %1582 = vmatprep.subr.mxu0 0.0
      %1583 = vmatpush1.msra.mxu0 0.0
      %1584 = vmatprep.subr.mxu0 0.0
      %1585 = vmatpush1.msra.mxu0 0.0
      %1586 = vmatprep.subr.mxu0 0.0
      %1587 = vmatpush1.msra.mxu0 0.0
      %1588 = vmatprep.subr.mxu0 0.0
      %1589 = vmatpush1.msra.mxu0 0.0
      %1590 = vmatprep.subr.mxu0 0.0
      %1591 = vmatpush1.msra.mxu0 0.0
      %1592 = vmatprep.subr.mxu0 0.0
      %1593 = vmatpush1.msra.mxu0 0.0
      %1594 = vmatprep.subr.mxu0 0.0
      %1595 = vmatpush1.msra.mxu0 0.0
      %1596 = vmatprep.subr.mxu0 0.0
      %1597 = vmatpush1.msra.mxu0 0.0
      %1598 = vmatprep.subr.mxu0 0.0
      %1599 = vmatpush1.msra.mxu0 0.0
      %1600 = vmatprep.subr.mxu0 0.0
      %1601 = vmatpush1.msra.mxu0 0.0
      %1602 = vmatprep.subr.mxu0 0.0
      %1603 = vmatpush1.msra.mxu0 0.0
      %1604 = vmatprep.subr.mxu0 0.0
      %1605 = vmatpush1.msra.mxu0 0.0
      %1606 = vmatprep.subr.mxu0 0.0
      %1607 = vmatpush1.msra.mxu0 0.0
      %1608 = vmatprep.subr.mxu0 0.0
      %1609 = vmatpush1.msra.mxu0 0.0
      %1610 = vmatprep.subr.mxu0 0.0
      %1611 = vmatpush1.msra.mxu0 0.0
      %1612 = vmatprep.mubr.f32.mxu0 0.0
      %1613 = vmatmul.mubr.f32.gmra.mrb[0].mxu0 %v1476
      %v1614 = vpop.f32.mrb[0].mxu0
      %v1615 = vadd.f32 %v1545, %v1614
      %v1616 = vpop.f32.mrb[0].mxu0
      %1617 = vdwg.mxu0
      %1618 = vmatprep.subr.mxu0 0.0
      %1619 = vmatpush1.msra.mxu0 %v531
      %1620 = vmatprep.subr.mxu0 0.0
      %1621 = vmatpush1.msra.mxu0 %v534
      %1622 = vmatprep.subr.mxu0 0.0
      %1623 = vmatpush1.msra.mxu0 %v539
      %1624 = vmatprep.subr.mxu0 0.0
      %1625 = vmatpush1.msra.mxu0 %v542
      %1626 = vmatprep.subr.mxu0 0.0
      %1627 = vmatpush1.msra.mxu0 %v547
      %1628 = vmatprep.subr.mxu0 0.0
      %1629 = vmatpush1.msra.mxu0 %v550
      %1630 = vmatprep.subr.mxu0 0.0
      %1631 = vmatpush1.msra.mxu0 %v555
      %1632 = vmatprep.subr.mxu0 0.0
      %1633 = vmatpush1.msra.mxu0 %v558
      %1634 = vmatprep.subr.mxu0 0.0
      %1635 = vmatpush1.msra.mxu0 %v563
      %1636 = vmatprep.subr.mxu0 0.0
      %1637 = vmatpush1.msra.mxu0 %v566
      %1638 = vmatprep.subr.mxu0 0.0
      %1639 = vmatpush1.msra.mxu0 %v571
      %1640 = vmatprep.subr.mxu0 0.0
      %1641 = vmatpush1.msra.mxu0 %v574
      %1642 = vmatprep.subr.mxu0 0.0
      %1643 = vmatpush1.msra.mxu0 %v579
      %1644 = vmatprep.subr.mxu0 0.0
      %1645 = vmatpush1.msra.mxu0 %v582
      %1646 = vmatprep.subr.mxu0 0.0
      %1647 = vmatpush1.msra.mxu0 %v587
      %1648 = vmatprep.subr.mxu0 0.0
      %1649 = vmatpush1.msra.mxu0 %v590
      %1650 = vmatprep.subr.mxu0 0.0
      %1651 = vmatpush1.msra.mxu0 %v595
      %1652 = vmatprep.subr.mxu0 0.0
      %1653 = vmatpush1.msra.mxu0 %v598
      %1654 = vmatprep.subr.mxu0 0.0
      %1655 = vmatpush1.msra.mxu0 %v603
      %1656 = vmatprep.subr.mxu0 0.0
      %1657 = vmatpush1.msra.mxu0 %v606
      %1658 = vmatprep.subr.mxu0 0.0
      %1659 = vmatpush1.msra.mxu0 %v611
      %1660 = vmatprep.subr.mxu0 0.0
      %1661 = vmatpush1.msra.mxu0 %v614
      %1662 = vmatprep.subr.mxu0 0.0
      %1663 = vmatpush1.msra.mxu0 %v619
      %1664 = vmatprep.subr.mxu0 0.0
      %1665 = vmatpush1.msra.mxu0 %v622
      %1666 = vmatprep.subr.mxu0 0.0
      %1667 = vmatpush1.msra.mxu0 %v627
      %1668 = vmatprep.subr.mxu0 0.0
      %1669 = vmatpush1.msra.mxu0 %v630
      %1670 = vmatprep.subr.mxu0 0.0
      %1671 = vmatpush1.msra.mxu0 %v635
      %1672 = vmatprep.subr.mxu0 0.0
      %1673 = vmatpush1.msra.mxu0 %v638
      %1674 = vmatprep.subr.mxu0 0.0
      %1675 = vmatpush1.msra.mxu0 %v643
      %1676 = vmatprep.subr.mxu0 0.0
      %1677 = vmatpush1.msra.mxu0 %v646
      %1678 = vmatprep.subr.mxu0 0.0
      %1679 = vmatpush1.msra.mxu0 %v651
      %1680 = vmatprep.subr.mxu0 0.0
      %1681 = vmatpush1.msra.mxu0 %v654
      %1682 = vmatprep.mubr.f32.mxu0 %v1468
      %1683 = vmatmul.mubr.f32.gmra.mrb[0].mxu0 %v1464
      %v1684 = vpop.f32.mrb[0].mxu0
      %v1685 = vadd.f32 %v1615, %v1684
      %v1686 = vpop.f32.mrb[0].mxu0
      %1687 = vdwg.mxu0
      %1688 = vmatprep.subr.mxu0 0.0
      %1689 = vmatpush1.msra.mxu0 %v659
      %1690 = vmatprep.subr.mxu0 0.0
      %1691 = vmatpush1.msra.mxu0 %v662
      %1692 = vmatprep.subr.mxu0 0.0
      %1693 = vmatpush1.msra.mxu0 %v667
      %1694 = vmatprep.subr.mxu0 0.0
      %1695 = vmatpush1.msra.mxu0 %v670
      %1696 = vmatprep.subr.mxu0 0.0
      %1697 = vmatpush1.msra.mxu0 0.0
      %1698 = vmatprep.subr.mxu0 0.0
      %1699 = vmatpush1.msra.mxu0 0.0
      %1700 = vmatprep.subr.mxu0 0.0
      %1701 = vmatpush1.msra.mxu0 0.0
      %1702 = vmatprep.subr.mxu0 0.0
      %1703 = vmatpush1.msra.mxu0 0.0
      %1704 = vmatprep.subr.mxu0 0.0
      %1705 = vmatpush1.msra.mxu0 0.0
      %1706 = vmatprep.subr.mxu0 0.0
      %1707 = vmatpush1.msra.mxu0 0.0
      %1708 = vmatprep.subr.mxu0 0.0
      %1709 = vmatpush1.msra.mxu0 0.0
      %1710 = vmatprep.subr.mxu0 0.0
      %1711 = vmatpush1.msra.mxu0 0.0
      %1712 = vmatprep.subr.mxu0 0.0
      %1713 = vmatpush1.msra.mxu0 0.0
      %1714 = vmatprep.subr.mxu0 0.0
      %1715 = vmatpush1.msra.mxu0 0.0
      %1716 = vmatprep.subr.mxu0 0.0
      %1717 = vmatpush1.msra.mxu0 0.0
      %1718 = vmatprep.subr.mxu0 0.0
      %1719 = vmatpush1.msra.mxu0 0.0
      %1720 = vmatprep.subr.mxu0 0.0
      %1721 = vmatpush1.msra.mxu0 0.0
      %1722 = vmatprep.subr.mxu0 0.0
      %1723 = vmatpush1.msra.mxu0 0.0
      %1724 = vmatprep.subr.mxu0 0.0
      %1725 = vmatpush1.msra.mxu0 0.0
      %1726 = vmatprep.subr.mxu0 0.0
      %1727 = vmatpush1.msra.mxu0 0.0
      %1728 = vmatprep.subr.mxu0 0.0
      %1729 = vmatpush1.msra.mxu0 0.0
      %1730 = vmatprep.subr.mxu0 0.0
      %1731 = vmatpush1.msra.mxu0 0.0
      %1732 = vmatprep.subr.mxu0 0.0
      %1733 = vmatpush1.msra.mxu0 0.0
      %1734 = vmatprep.subr.mxu0 0.0
      %1735 = vmatpush1.msra.mxu0 0.0
      %1736 = vmatprep.subr.mxu0 0.0
      %1737 = vmatpush1.msra.mxu0 0.0
      %1738 = vmatprep.subr.mxu0 0.0
      %1739 = vmatpush1.msra.mxu0 0.0
      %1740 = vmatprep.subr.mxu0 0.0
      %1741 = vmatpush1.msra.mxu0 0.0
      %1742 = vmatprep.subr.mxu0 0.0
      %1743 = vmatpush1.msra.mxu0 0.0
      %1744 = vmatprep.subr.mxu0 0.0
      %1745 = vmatpush1.msra.mxu0 0.0
      %1746 = vmatprep.subr.mxu0 0.0
      %1747 = vmatpush1.msra.mxu0 0.0
      %1748 = vmatprep.subr.mxu0 0.0
      %1749 = vmatpush1.msra.mxu0 0.0
      %1750 = vmatprep.subr.mxu0 0.0
      %1751 = vmatpush1.msra.mxu0 0.0
      %1752 = vmatprep.mubr.f32.mxu0 0.0
      %1753 = vmatmul.mubr.f32.gmra.mrb[0].mxu0 %v1476
      %v1754 = vpop.f32.mrb[0].mxu0
      %v1755 = vadd.f32 %v1685, %v1754
      %v1756 = vpop.f32.mrb[0].mxu0
      %1757 = vdwg.mxu0
      %v1758 = vmul.f32 %v1137, %v1137
      %v1759 = vmul.f32 %v1140, %v1140
      %v1760 = vmul.f32 %v1145, %v1145
      %v1761 = vmul.f32 %v1148, %v1148
      %v1762 = vmul.f32 %v1153, %v1153
      %v1763 = vmul.f32 %v1156, %v1156
      %v1764 = vmul.f32 %v1161, %v1161
      %v1765 = vmul.f32 %v1164, %v1164
      %v1766 = vmul.f32 %v1169, %v1169
      %v1767 = vmul.f32 %v1172, %v1172
      %v1768 = vmul.f32 %v1177, %v1177
      %v1769 = vmul.f32 %v1180, %v1180
      %v1770 = vmul.f32 %v1185, %v1185
      %v1771 = vmul.f32 %v1188, %v1188
      %v1772 = vmul.f32 %v1193, %v1193
      %v1773 = vmul.f32 %v1196, %v1196
      %v1774 = vmul.f32 %v1201, %v1201
      %v1775 = vmul.f32 %v1204, %v1204
      %v1776 = vmul.f32 %v1209, %v1209
      %v1777 = vmul.f32 %v1212, %v1212
      %v1778 = vmul.f32 %v1217, %v1217
      %v1779 = vmul.f32 %v1220, %v1220
      %v1780 = vmul.f32 %v1225, %v1225
      %v1781 = vmul.f32 %v1228, %v1228
      %v1782 = vmul.f32 %v1233, %v1233
      %v1783 = vmul.f32 %v1236, %v1236
      %v1784 = vmul.f32 %v1241, %v1241
      %v1785 = vmul.f32 %v1244, %v1244
      %v1786 = vmul.f32 %v1249, %v1249
      %v1787 = vmul.f32 %v1252, %v1252
      %v1788 = vmul.f32 %v1257, %v1257
      %v1789 = vmul.f32 %v1260, %v1260
      %v1790 = vmul.f32 %v1265, %v1265
      %v1791 = vmul.f32 %v1268, %v1268
      %v1792 = vmul.f32 %v1273, %v1273
      %v1793 = vmul.f32 %v1276, %v1276
      %1794 = vmatprep.subr.mxu0 0.0
      %1795 = vmatpush1.msra.mxu0 %v1758
      %1796 = vmatprep.subr.mxu0 0.0
      %1797 = vmatpush1.msra.mxu0 %v1759
      %1798 = vmatprep.subr.mxu0 0.0
      %1799 = vmatpush1.msra.mxu0 %v1760
      %1800 = vmatprep.subr.mxu0 0.0
      %1801 = vmatpush1.msra.mxu0 %v1761
      %1802 = vmatprep.subr.mxu0 0.0
      %1803 = vmatpush1.msra.mxu0 %v1762
      %1804 = vmatprep.subr.mxu0 0.0
      %1805 = vmatpush1.msra.mxu0 %v1763
      %1806 = vmatprep.subr.mxu0 0.0
      %1807 = vmatpush1.msra.mxu0 %v1764
      %1808 = vmatprep.subr.mxu0 0.0
      %1809 = vmatpush1.msra.mxu0 %v1765
      %1810 = vmatprep.subr.mxu0 0.0
      %1811 = vmatpush1.msra.mxu0 %v1766
      %1812 = vmatprep.subr.mxu0 0.0
      %1813 = vmatpush1.msra.mxu0 %v1767
      %1814 = vmatprep.subr.mxu0 0.0
      %1815 = vmatpush1.msra.mxu0 %v1768
      %1816 = vmatprep.subr.mxu0 0.0
      %1817 = vmatpush1.msra.mxu0 %v1769
      %1818 = vmatprep.subr.mxu0 0.0
      %1819 = vmatpush1.msra.mxu0 %v1770
      %1820 = vmatprep.subr.mxu0 0.0
      %1821 = vmatpush1.msra.mxu0 %v1771
      %1822 = vmatprep.subr.mxu0 0.0
      %1823 = vmatpush1.msra.mxu0 %v1772
      %1824 = vmatprep.subr.mxu0 0.0
      %1825 = vmatpush1.msra.mxu0 %v1773
      %1826 = vmatprep.subr.mxu0 0.0
      %1827 = vmatpush1.msra.mxu0 %v1774
      %1828 = vmatprep.subr.mxu0 0.0
      %1829 = vmatpush1.msra.mxu0 %v1775
      %1830 = vmatprep.subr.mxu0 0.0
      %1831 = vmatpush1.msra.mxu0 %v1776
      %1832 = vmatprep.subr.mxu0 0.0
      %1833 = vmatpush1.msra.mxu0 %v1777
      %1834 = vmatprep.subr.mxu0 0.0
      %1835 = vmatpush1.msra.mxu0 %v1778
      %1836 = vmatprep.subr.mxu0 0.0
      %1837 = vmatpush1.msra.mxu0 %v1779
      %1838 = vmatprep.subr.mxu0 0.0
      %1839 = vmatpush1.msra.mxu0 %v1780
      %1840 = vmatprep.subr.mxu0 0.0
      %1841 = vmatpush1.msra.mxu0 %v1781
      %1842 = vmatprep.subr.mxu0 0.0
      %1843 = vmatpush1.msra.mxu0 %v1782
      %1844 = vmatprep.subr.mxu0 0.0
      %1845 = vmatpush1.msra.mxu0 %v1783
      %1846 = vmatprep.subr.mxu0 0.0
      %1847 = vmatpush1.msra.mxu0 %v1784
      %1848 = vmatprep.subr.mxu0 0.0
      %1849 = vmatpush1.msra.mxu0 %v1785
      %1850 = vmatprep.subr.mxu0 0.0
      %1851 = vmatpush1.msra.mxu0 %v1786
      %1852 = vmatprep.subr.mxu0 0.0
      %1853 = vmatpush1.msra.mxu0 %v1787
      %1854 = vmatprep.subr.mxu0 0.0
      %1855 = vmatpush1.msra.mxu0 %v1788
      %1856 = vmatprep.subr.mxu0 0.0
      %1857 = vmatpush1.msra.mxu0 %v1789
      %1858 = vmatprep.mubr.f32.mxu0 %v1468
      %1859 = vmatmul.mubr.f32.gmra.mrb[0].mxu0 %v1464
      %v1860 = vpop.f32.mrb[0].mxu0
      %v1861 = vadd.f32 0.0, %v1860
      %v1862 = vpop.f32.mrb[0].mxu0
      %1863 = vdwg.mxu0
      %1864 = vmatprep.subr.mxu0 0.0
      %1865 = vmatpush1.msra.mxu0 %v1790
      %1866 = vmatprep.subr.mxu0 0.0
      %1867 = vmatpush1.msra.mxu0 %v1791
      %1868 = vmatprep.subr.mxu0 0.0
      %1869 = vmatpush1.msra.mxu0 %v1792
      %1870 = vmatprep.subr.mxu0 0.0
      %1871 = vmatpush1.msra.mxu0 %v1793
      %1872 = vmatprep.subr.mxu0 0.0
      %1873 = vmatpush1.msra.mxu0 0.0
      %1874 = vmatprep.subr.mxu0 0.0
      %1875 = vmatpush1.msra.mxu0 0.0
      %1876 = vmatprep.subr.mxu0 0.0
      %1877 = vmatpush1.msra.mxu0 0.0
      %1878 = vmatprep.subr.mxu0 0.0
      %1879 = vmatpush1.msra.mxu0 0.0
      %1880 = vmatprep.subr.mxu0 0.0
      %1881 = vmatpush1.msra.mxu0 0.0
      %1882 = vmatprep.subr.mxu0 0.0
      %1883 = vmatpush1.msra.mxu0 0.0
      %1884 = vmatprep.subr.mxu0 0.0
      %1885 = vmatpush1.msra.mxu0 0.0
      %1886 = vmatprep.subr.mxu0 0.0
      %1887 = vmatpush1.msra.mxu0 0.0
      %1888 = vmatprep.subr.mxu0 0.0
      %1889 = vmatpush1.msra.mxu0 0.0
      %1890 = vmatprep.subr.mxu0 0.0
      %1891 = vmatpush1.msra.mxu0 0.0
      %1892 = vmatprep.subr.mxu0 0.0
      %1893 = vmatpush1.msra.mxu0 0.0
      %1894 = vmatprep.subr.mxu0 0.0
      %1895 = vmatpush1.msra.mxu0 0.0
      %1896 = vmatprep.subr.mxu0 0.0
      %1897 = vmatpush1.msra.mxu0 0.0
      %1898 = vmatprep.subr.mxu0 0.0
      %1899 = vmatpush1.msra.mxu0 0.0
      %1900 = vmatprep.subr.mxu0 0.0
      %1901 = vmatpush1.msra.mxu0 0.0
      %1902 = vmatprep.subr.mxu0 0.0
      %1903 = vmatpush1.msra.mxu0 0.0
      %1904 = vmatprep.subr.mxu0 0.0
      %1905 = vmatpush1.msra.mxu0 0.0
      %1906 = vmatprep.subr.mxu0 0.0
      %1907 = vmatpush1.msra.mxu0 0.0
      %1908 = vmatprep.subr.mxu0 0.0
      %1909 = vmatpush1.msra.mxu0 0.0
      %1910 = vmatprep.subr.mxu0 0.0
      %1911 = vmatpush1.msra.mxu0 0.0
      %1912 = vmatprep.subr.mxu0 0.0
      %1913 = vmatpush1.msra.mxu0 0.0
      %1914 = vmatprep.subr.mxu0 0.0
      %1915 = vmatpush1.msra.mxu0 0.0
      %1916 = vmatprep.subr.mxu0 0.0
      %1917 = vmatpush1.msra.mxu0 0.0
      %1918 = vmatprep.subr.mxu0 0.0
      %1919 = vmatpush1.msra.mxu0 0.0
      %1920 = vmatprep.subr.mxu0 0.0
      %1921 = vmatpush1.msra.mxu0 0.0
      %1922 = vmatprep.subr.mxu0 0.0
      %1923 = vmatpush1.msra.mxu0 0.0
      %1924 = vmatprep.subr.mxu0 0.0
      %1925 = vmatpush1.msra.mxu0 0.0
      %1926 = vmatprep.subr.mxu0 0.0
      %1927 = vmatpush1.msra.mxu0 0.0
      %1928 = vmatprep.mubr.f32.mxu0 0.0
      %1929 = vmatmul.mubr.f32.gmra.mrb[0].mxu0 %v1476
      %v1930 = vpop.f32.mrb[0].mxu0
      %v1931 = vadd.f32 %v1861, %v1930
      %v1932 = vpop.f32.mrb[0].mxu0
      %1933 = vdwg.mxu0
      %1934 = vmatprep.subr.mxu0 0.0
      %1935 = vmatpush1.msra.mxu0 %v853
      %1936 = vmatprep.subr.mxu0 0.0
      %1937 = vmatpush1.msra.mxu0 %v854
      %1938 = vmatprep.subr.mxu0 0.0
      %1939 = vmatpush1.msra.mxu0 %v855
      %1940 = vmatprep.subr.mxu0 0.0
      %1941 = vmatpush1.msra.mxu0 %v856
      %1942 = vmatprep.subr.mxu0 0.0
      %1943 = vmatpush1.msra.mxu0 %v857
      %1944 = vmatprep.subr.mxu0 0.0
      %1945 = vmatpush1.msra.mxu0 %v858
      %1946 = vmatprep.subr.mxu0 0.0
      %1947 = vmatpush1.msra.mxu0 %v859
      %1948 = vmatprep.subr.mxu0 0.0
      %1949 = vmatpush1.msra.mxu0 %v860
      %1950 = vmatprep.subr.mxu0 0.0
      %1951 = vmatpush1.msra.mxu0 %v861
      %1952 = vmatprep.subr.mxu0 0.0
      %1953 = vmatpush1.msra.mxu0 %v862
      %1954 = vmatprep.subr.mxu0 0.0
      %1955 = vmatpush1.msra.mxu0 %v863
      %1956 = vmatprep.subr.mxu0 0.0
      %1957 = vmatpush1.msra.mxu0 %v864
      %1958 = vmatprep.subr.mxu0 0.0
      %1959 = vmatpush1.msra.mxu0 %v865
      %1960 = vmatprep.subr.mxu0 0.0
      %1961 = vmatpush1.msra.mxu0 %v866
      %1962 = vmatprep.subr.mxu0 0.0
      %1963 = vmatpush1.msra.mxu0 %v867
      %1964 = vmatprep.subr.mxu0 0.0
      %1965 = vmatpush1.msra.mxu0 %v868
      %1966 = vmatprep.subr.mxu0 0.0
      %1967 = vmatpush1.msra.mxu0 %v869
      %1968 = vmatprep.subr.mxu0 0.0
      %1969 = vmatpush1.msra.mxu0 %v870
      %1970 = vmatprep.subr.mxu0 0.0
      %1971 = vmatpush1.msra.mxu0 %v871
      %1972 = vmatprep.subr.mxu0 0.0
      %1973 = vmatpush1.msra.mxu0 %v872
      %1974 = vmatprep.subr.mxu0 0.0
      %1975 = vmatpush1.msra.mxu0 %v873
      %1976 = vmatprep.subr.mxu0 0.0
      %1977 = vmatpush1.msra.mxu0 %v874
      %1978 = vmatprep.subr.mxu0 0.0
      %1979 = vmatpush1.msra.mxu0 %v875
      %1980 = vmatprep.subr.mxu0 0.0
      %1981 = vmatpush1.msra.mxu0 %v876
      %1982 = vmatprep.subr.mxu0 0.0
      %1983 = vmatpush1.msra.mxu0 %v877
      %1984 = vmatprep.subr.mxu0 0.0
      %1985 = vmatpush1.msra.mxu0 %v878
      %1986 = vmatprep.subr.mxu0 0.0
      %1987 = vmatpush1.msra.mxu0 %v879
      %1988 = vmatprep.subr.mxu0 0.0
      %1989 = vmatpush1.msra.mxu0 %v880
      %1990 = vmatprep.subr.mxu0 0.0
      %1991 = vmatpush1.msra.mxu0 %v881
      %1992 = vmatprep.subr.mxu0 0.0
      %1993 = vmatpush1.msra.mxu0 %v882
      %1994 = vmatprep.subr.mxu0 0.0
      %1995 = vmatpush1.msra.mxu0 %v883
      %1996 = vmatprep.subr.mxu0 0.0
      %1997 = vmatpush1.msra.mxu0 %v884
      %1998 = vmatprep.mubr.f32.mxu0 %v1468
      %1999 = vmatmul.mubr.f32.gmra.mrb[0].mxu0 %v1464
      %v2000 = vpop.f32.mrb[0].mxu0
      %v2001 = vadd.f32 %v1931, %v2000
      %v2002 = vpop.f32.mrb[0].mxu0
      %2003 = vdwg.mxu0
      %2004 = vmatprep.subr.mxu0 0.0
      %2005 = vmatpush1.msra.mxu0 %v885
      %2006 = vmatprep.subr.mxu0 0.0
      %2007 = vmatpush1.msra.mxu0 %v886
      %2008 = vmatprep.subr.mxu0 0.0
      %2009 = vmatpush1.msra.mxu0 %v887
      %2010 = vmatprep.subr.mxu0 0.0
      %2011 = vmatpush1.msra.mxu0 %v888
      %2012 = vmatprep.subr.mxu0 0.0
      %2013 = vmatpush1.msra.mxu0 0.0
      %2014 = vmatprep.subr.mxu0 0.0
      %2015 = vmatpush1.msra.mxu0 0.0
      %2016 = vmatprep.subr.mxu0 0.0
      %2017 = vmatpush1.msra.mxu0 0.0
      %2018 = vmatprep.subr.mxu0 0.0
      %2019 = vmatpush1.msra.mxu0 0.0
      %2020 = vmatprep.subr.mxu0 0.0
      %2021 = vmatpush1.msra.mxu0 0.0
      %2022 = vmatprep.subr.mxu0 0.0
      %2023 = vmatpush1.msra.mxu0 0.0
      %2024 = vmatprep.subr.mxu0 0.0
      %2025 = vmatpush1.msra.mxu0 0.0
      %2026 = vmatprep.subr.mxu0 0.0
      %2027 = vmatpush1.msra.mxu0 0.0
      %2028 = vmatprep.subr.mxu0 0.0
      %2029 = vmatpush1.msra.mxu0 0.0
      %2030 = vmatprep.subr.mxu0 0.0
      %2031 = vmatpush1.msra.mxu0 0.0
      %2032 = vmatprep.subr.mxu0 0.0
      %2033 = vmatpush1.msra.mxu0 0.0
      %2034 = vmatprep.subr.mxu0 0.0
      %2035 = vmatpush1.msra.mxu0 0.0
      %2036 = vmatprep.subr.mxu0 0.0
      %2037 = vmatpush1.msra.mxu0 0.0
      %2038 = vmatprep.subr.mxu0 0.0
      %2039 = vmatpush1.msra.mxu0 0.0
      %2040 = vmatprep.subr.mxu0 0.0
      %2041 = vmatpush1.msra.mxu0 0.0
      %2042 = vmatprep.subr.mxu0 0.0
      %2043 = vmatpush1.msra.mxu0 0.0
      %2044 = vmatprep.subr.mxu0 0.0
      %2045 = vmatpush1.msra.mxu0 0.0
      %2046 = vmatprep.subr.mxu0 0.0
      %2047 = vmatpush1.msra.mxu0 0.0
      %2048 = vmatprep.subr.mxu0 0.0
      %2049 = vmatpush1.msra.mxu0 0.0
      %2050 = vmatprep.subr.mxu0 0.0
      %2051 = vmatpush1.msra.mxu0 0.0
      %2052 = vmatprep.subr.mxu0 0.0
      %2053 = vmatpush1.msra.mxu0 0.0
      %2054 = vmatprep.subr.mxu0 0.0
      %2055 = vmatpush1.msra.mxu0 0.0
      %2056 = vmatprep.subr.mxu0 0.0
      %2057 = vmatpush1.msra.mxu0 0.0
      %2058 = vmatprep.subr.mxu0 0.0
      %2059 = vmatpush1.msra.mxu0 0.0
      %2060 = vmatprep.subr.mxu0 0.0
      %2061 = vmatpush1.msra.mxu0 0.0
      %2062 = vmatprep.subr.mxu0 0.0
      %2063 = vmatpush1.msra.mxu0 0.0
      %2064 = vmatprep.subr.mxu0 0.0
      %2065 = vmatpush1.msra.mxu0 0.0
      %2066 = vmatprep.subr.mxu0 0.0
      %2067 = vmatpush1.msra.mxu0 0.0
      %2068 = vmatprep.mubr.f32.mxu0 0.0
      %2069 = vmatmul.mubr.f32.gmra.mrb[0].mxu0 %v1476
      %v2070 = vpop.f32.mrb[0].mxu0
      %v2071 = vadd.f32 %v2001, %v2070
      %v2072 = vpop.f32.mrb[0].mxu0
      %2073 = vdwg.mxu0
      %v2075 = vrot.slane %v2071, 7
      %vm2077 = vcmask 1040384
      %v2078 = vsel %vm2077, %v1755, %v2075
      %2079 = vst [vmem:[%s280] sm:$0x3] %v2078
      %s2080 = smul.u32 2, %s21
      %p2081 = scmp.lt.s32.totalorder %s20, 3
      %s2082 = scalar_select %p2081, %s20, 3
      %p2083 = scmp.lt.s32.totalorder %s2080, 1
      %s2084 = scalar_select %p2083, %s2080, 1
      %s2085 = smul.addr %s2084, 36
      %s2086 = smul.addr %s2082, 72
      %s2087 = sadd.s32 %s2085, %s2086
      %s2088 = smul.addr %s2087, 4
      %s2089 = scalar_lea.vmem %s3, %s2088
      %p2090 = scmp.lt.s32.totalorder %s20, 3
      %s2091 = scalar_select %p2090, %s20, 3
      %p2092 = scmp.lt.s32.totalorder %s21, 0
      %s2093 = scalar_select %p2092, %s21, 0
      %s2094 = sadd.s32 %s2093, %s2091
      %s2095 = smul.addr %s2094, 2
      %s2096 = scalar_lea.vmem %s4, %s2095
      // Predicated region
      $region33: #{generator_forward.8} parent=31 // pred_check
        %p2097 = pneg %p123
      $region34: #{generator_forward.8} parent=31 // pred_check_branch
        %2099 = sbr.rel (%p2097) target = $region36
      $region35: #{generator_forward.8} parent=31 // pred_region
        %s2100 = smul.u32 2, %s21
      $region36: #{generator_forward.8} parent=31 // pred_fallthru
        _
      // Predicated region
      $region37: #{generator_forward.8} parent=31 // pred_check
        %p2101 = pneg %p151
      $region38: #{generator_forward.8} parent=31 // pred_check_branch
        %2103 = sbr.rel (%p2101) target = $region40
      $region39: #{generator_forward.8} parent=31 // pred_region
        _
      $region40: #{generator_forward.8} parent=31 // pred_fallthru
        _
    $region32: #{generator_forward.8} parent=5 // pred_fallthru
      _
    %p2104 = scmp.le.s32.totalorder 2, %s11
    // Predicated region
    $region41: #{generator_forward.8} parent=5 // pred_check
      %p2105 = pneg %p2104
    $region42: #{generator_forward.8} parent=5 // pred_check_branch
      %2107 = sbr.rel (%p2105) target = $region44
    $region43: #{generator_forward.8} parent=5 // pred_region
      %s2108 = ssub.s32 %s11, 2
      // Predicated region
      $region45: #{generator_forward.8} parent=43 // pred_check
        %p2109 = pneg %p129
      $region46: #{generator_forward.8} parent=43 // pred_check_branch
        %2111 = sbr.rel (%p2109) target = $region48
      $region47: #{generator_forward.8} parent=43 // pred_region
        %s2112 = smul.u32 2, %s23
        %p2113 = scmp.lt.s32.totalorder %s22, 3
        %s2114 = scalar_select %p2113, %s22, 3
        %p2115 = scmp.lt.s32.totalorder %s2112, 1
        %s2116 = scalar_select %p2115, %s2112, 1
        %s2117 = smul.addr %s2116, 36
        %s2118 = smul.addr %s2114, 72
        %s2119 = sadd.s32 %s2117, %s2118
        %s2120 = smul.addr %s2119, 4
        %s2121 = scalar_lea.vmem %s3, %s2120
      $region48: #{generator_forward.8} parent=43 // pred_fallthru
        _
      // Predicated region
      $region49: #{generator_forward.8} parent=43 // pred_check
        %p2122 = pneg %p157
      $region50: #{generator_forward.8} parent=43 // pred_check_branch
        %2124 = sbr.rel (%p2122) target = $region52
      $region51: #{generator_forward.8} parent=43 // pred_region
        %p2125 = scmp.lt.s32.totalorder %s22, 3
        %s2126 = scalar_select %p2125, %s22, 3
        %p2127 = scmp.lt.s32.totalorder %s23, 0
        %s2128 = scalar_select %p2127, %s23, 0
        %s2129 = sadd.s32 %s2128, %s2126
        %s2130 = smul.addr %s2129, 2
        %s2131 = scalar_lea.vmem %s4, %s2130
      $region52: #{generator_forward.8} parent=43 // pred_fallthru
        _
    $region44: #{generator_forward.8} parent=5 // pred_fallthru
      _
  $region6: #{generator_forward.8} parent=0 // loop_footer
    %s15 = sadd.s32 1, %s11
  $region7: #{generator_forward.8} parent=0 // loop_footer_branch
    %10 = sbr.rel target = $region3
  $region8: #{generator_forward.8} parent=0 // loop_exit
    _

// kernel: generator_forward.9
$region0: #{generator_forward.9}
  #allocation0 [shape = 'u32[]', space=smem, size = 0x4, offset = 0x4, fixed_abs, tag = 'smem constant byte address 0x4 - core index']
  #allocation1 [shape = 'u32[144,128]{1,0:T(1,128)}', space=vmem, size = 0x12000, scoped, tag = 'internal scratch']
  %s0 = inlined_call_operand.vmem [shape: bf16[4,2,1088,32], index: 0, kind: input, shape index: {}]
  %s1 = inlined_call_operand.vmem [shape: bf16[4,32,128], index: 1, kind: input, shape index: {}]
  %s2 = inlined_call_operand.vmem [shape: bf16[4,2,1088,128], index: 2, kind: output, shape index: {}]
  %s3 = sld [smem:[#allocation0]]
  $region41: #{generator_forward.9} parent=0
    _
  %s5 = ssub.s32 1, %s3
  %s6 = scalar_select 0, %s5, %s3
  loop: start=0, step=1, limit=6
  $region2: #{generator_forward.9} parent=0 // loop_pre_header
    _
  $region3: #{generator_forward.9} parent=0 // loop_header
    %s8 = sphi 0, %s12
    %p9 = scmp.ge.s32.totalorder %s8, 6
    %s15 = sphi 0, %s27
    %s16 = sphi 0, %s23
    %s17 = sphi 0, %s15
    %s18 = sphi 0, %s16
    %s19 = sphi 0, %s17
    %s20 = sphi 0, %s18
    %s32 = sphi 0, %s34
    %s35 = sphi 0, %s32
    %s36 = sphi 0, %s35
    %s52 = sphi 0, %s36
    %s58 = sphi 0, %s60
    %s61 = sphi 0, %s58
    %s62 = sphi 0, %s61
    %s78 = sphi 0, %s62
    %s86 = sphi 0, %s88
    %s89 = sphi 0, %s86
    %s90 = sphi 0, %s89
    %s106 = sphi 0, %s90
  $region4: #{generator_forward.9} parent=0 // loop_header_branch
    %11 = sbr.rel (%p9) target = $region8
  $region5: #{generator_forward.9} parent=0 // loop_body
    %s13 = ssub.s32 %s8, 1
    %s14 = ssub.s32 %s8, 2
    %s21 = sadd.s32 1, %s16
    %p22 = scmp.ge.s32.totalorder %s21, 1
    %s23 = scalar_select %p22, 0, %s21
    %s24 = sadd.s32 1, %s15
    %s25 = scalar_select %p22, %s24, %s15
    %p26 = scmp.ge.s32.totalorder %s25, 4
    %s27 = scalar_select %p26, 0, %s25
    %s28 = ssub.s32 %s15, %s27
    %s29 = ssub.s32 %s16, %s23
    %s30 = sor.u32 %s28, %s29
    %p31 = scmp.eq.s32.totalorder %s30, 0
    %s33 = sadd.s32 %s32, 1
    %s34 = scalar_select %p31, %s32, %s33
    %p37 = pneg %p31
    %p38 = scmp.eq.s32.totalorder %s8, 3
    %p39 = por %p37, %p38
    %p40 = scmp.ne.s32.totalorder %s32, %s35
    %p41 = scmp.eq.s32.totalorder %s8, 0
    %p42 = por %p40, %p41
    %p43 = scmp.ne.s32.totalorder %s32, %s35
    %p44 = scmp.eq.s32.totalorder %s13, 3
    %p45 = por %p43, %p44
    %p46 = scmp.ne.s32.totalorder %s35, %s36
    %p47 = scmp.eq.s32.totalorder %s13, 0
    %p48 = por %p46, %p47
    %p49 = scmp.ne.s32.totalorder %s35, %s36
    %p50 = scmp.eq.s32.totalorder %s14, 3
    %p51 = por %p49, %p50
    %p53 = scmp.ne.s32.totalorder %s36, %s52
    %p54 = scmp.eq.s32.totalorder %s14, 0
    %p55 = por %p53, %p54
    %s56 = ssub.s32 %s15, %s27
    %p57 = scmp.eq.s32.totalorder %s56, 0
    %s59 = sadd.s32 %s58, 1
    %s60 = scalar_select %p57, %s58, %s59
    %p63 = pneg %p57
    %p64 = scmp.eq.s32.totalorder %s8, 3
    %p65 = por %p63, %p64
    %p66 = scmp.ne.s32.totalorder %s58, %s61
    %p67 = scmp.eq.s32.totalorder %s8, 0
    %p68 = por %p66, %p67
    %p69 = scmp.ne.s32.totalorder %s58, %s61
    %p70 = scmp.eq.s32.totalorder %s13, 3
    %p71 = por %p69, %p70
    %p72 = scmp.ne.s32.totalorder %s61, %s62
    %p73 = scmp.eq.s32.totalorder %s13, 0
    %p74 = por %p72, %p73
    %p75 = scmp.ne.s32.totalorder %s61, %s62
    %p76 = scmp.eq.s32.totalorder %s14, 3
    %p77 = por %p75, %p76
    %p79 = scmp.ne.s32.totalorder %s62, %s78
    %p80 = scmp.eq.s32.totalorder %s14, 0
    %p81 = por %p79, %p80
    %s82 = ssub.s32 %s15, %s27
    %s83 = ssub.s32 %s16, %s23
    %s84 = sor.u32 %s82, %s83
    %p85 = scmp.eq.s32.totalorder %s84, 0
    %s87 = sadd.s32 %s86, 1
    %s88 = scalar_select %p85, %s86, %s87
    %p91 = pneg %p85
    %p92 = scmp.eq.s32.totalorder %s8, 3
    %p93 = por %p91, %p92
    %p94 = scmp.ne.s32.totalorder %s86, %s89
    %p95 = scmp.eq.s32.totalorder %s8, 0
    %p96 = por %p94, %p95
    %p97 = scmp.ne.s32.totalorder %s86, %s89
    %p98 = scmp.eq.s32.totalorder %s13, 3
    %p99 = por %p97, %p98
    %p100 = scmp.ne.s32.totalorder %s89, %s90
    %p101 = scmp.eq.s32.totalorder %s13, 0
    %p102 = por %p100, %p101
    %p103 = scmp.ne.s32.totalorder %s89, %s90
    %p104 = scmp.eq.s32.totalorder %s14, 3
    %p105 = por %p103, %p104
    %p107 = scmp.ne.s32.totalorder %s90, %s106
    %p108 = scmp.eq.s32.totalorder %s14, 0
    %p109 = por %p107, %p108
    %p110 = scmp.le.s32.totalorder 1, %s8
    %p111 = scmp.lt.s32.totalorder %s8, 5
    %p112 = pnand %p110, %p111
    %p113 = pneg %p112
    // Predicated region
    $region9: #{generator_forward.9} parent=5 // pred_check
      _
    $region10: #{generator_forward.9} parent=5 // pred_check_branch
      %115 = sbr.rel (%p112) target = $region12
    $region11: #{generator_forward.9} parent=5 // pred_region
      %s116 = ssub.s32 %s8, 1
    $region12: #{generator_forward.9} parent=5 // pred_fallthru
      _
    %p117 = scmp.lt.s32.totalorder %s8, 4
    // Predicated region
    $region13: #{generator_forward.9} parent=5 // pred_check
      %p118 = pneg %p117
    $region14: #{generator_forward.9} parent=5 // pred_check_branch
      %120 = sbr.rel (%p118) target = $region16
    $region15: #{generator_forward.9} parent=5 // pred_region
      // Predicated region
      $region17: #{generator_forward.9} parent=15 // pred_check
        %p121 = pneg %p42
      $region18: #{generator_forward.9} parent=15 // pred_check_branch
        %123 = sbr.rel (%p121) target = $region20
      $region19: #{generator_forward.9} parent=15 // pred_region
        %s124 = smul.u32 2, %s16
        %p125 = scmp.lt.s32.totalorder %s15, 3
        %s126 = scalar_select %p125, %s15, 3
        %p127 = scmp.lt.s32.totalorder %s124, 1
        %s128 = scalar_select %p127, %s124, 1
        %s129 = smul.addr %s128, 136
        %s130 = smul.addr %s126, 272
        %s131 = sadd.s32 %s129, %s130
        %s132 = smul.addr %s131, 4
        %s133 = scalar_lea.vmem %s0, %s132
        %s134 = smul.u32 2, %s16
      $region20: #{generator_forward.9} parent=15 // pred_fallthru
        _
      // Predicated region
      $region21: #{generator_forward.9} parent=15 // pred_check
        %p135 = pneg %p68
      $region22: #{generator_forward.9} parent=15 // pred_check_branch
        %137 = sbr.rel (%p135) target = $region24
      $region23: #{generator_forward.9} parent=15 // pred_region
        %p138 = scmp.lt.s32.totalorder %s15, 3
        %s139 = scalar_select %p138, %s15, 3
        %s140 = smul.addr %s139, 4
        %s141 = smul.addr %s140, 4
        %s142 = scalar_lea.vmem %s1, %s141
      $region24: #{generator_forward.9} parent=15 // pred_fallthru
        _
    $region16: #{generator_forward.9} parent=5 // pred_fallthru
      _
    %p143 = scmp.le.s32.totalorder 1, %s8
    %p144 = scmp.lt.s32.totalorder %s8, 5
    %p145 = pnand %p143, %p144
    %p146 = pneg %p145
    // Predicated region
    $region25: #{generator_forward.9} parent=5 // pred_check
      _
    $region26: #{generator_forward.9} parent=5 // pred_check_branch
      %148 = sbr.rel (%p145) target = $region28
    $region27: #{generator_forward.9} parent=5 // pred_region
      %s149 = ssub.s32 %s8, 1
      %s150 = smul.u32 2, %s18
      %p151 = scmp.lt.s32.totalorder %s17, 3
      %s152 = scalar_select %p151, %s17, 3
      %p153 = scmp.lt.s32.totalorder %s150, 1
      %s154 = scalar_select %p153, %s150, 1
      %s155 = smul.addr %s154, 136
      %s156 = smul.addr %s152, 272
      %s157 = sadd.s32 %s155, %s156
      %s158 = smul.addr %s157, 4
      %s159 = scalar_lea.vmem %s0, %s158
      %p160 = pneg %p48
      %p161 = pneg %p45
      %p162 = scmp.lt.s32.totalorder %s17, 3
      %s163 = scalar_select %p162, %s17, 3
      %s164 = smul.addr %s163, 4
      %s165 = smul.addr %s164, 4
      %s166 = scalar_lea.vmem %s1, %s165
      %p167 = pneg %p74
      %p168 = pneg %p71
      %p169 = pneg %p102
      %p170 = pneg %p99
      %s171 = smul.u32 2, %s18
      %p172 = scmp.lt.s32.totalorder %s17, 3
      %s173 = scalar_select %p172, %s17, 3
      %p174 = scmp.lt.s32.totalorder %s171, 1
      %s175 = scalar_select %p174, %s171, 1
      %s176 = smul.addr %s175, 136
      %s177 = smul.addr %s173, 272
      %s178 = sadd.s32 %s176, %s177
      %s179 = smul.addr %s178, 4
      %s180 = scalar_lea.vmem %s2, %s179
      %s181 = smul.u32 2, %s18
      %p182 = scmp.lt.s32.totalorder %s17, 3
      %s183 = scalar_select %p182, %s17, 3
      %p184 = scmp.lt.s32.totalorder %s181, 1
      %s185 = scalar_select %p184, %s181, 1
      %s186 = smul.addr %s185, 136
      %s187 = smul.addr %s183, 272
      %s188 = sadd.s32 %s186, %s187
      %s189 = smul.addr %s188, 4
      %s190 = scalar_lea.vmem %s0, %s189
      %s191 = smul.u32 2, %s18
      %p192 = scmp.lt.s32.totalorder %s17, 3
      %s193 = scalar_select %p192, %s17, 3
      %s194 = smul.addr %s193, 4
      %s195 = smul.addr %s194, 4
      %s196 = scalar_lea.vmem %s1, %s195
      %s197 = smul.u32 2, %s18
      %p198 = scmp.lt.s32.totalorder %s17, 3
      %s199 = scalar_select %p198, %s17, 3
      %p200 = scmp.lt.s32.totalorder %s197, 1
      %s201 = scalar_select %p200, %s197, 1
      %s202 = smul.addr %s201, 136
      %s203 = smul.addr %s199, 272
      %s204 = sadd.s32 %s202, %s203
      %s205 = smul.addr %s204, 4
      %s206 = scalar_lea.vmem %s2, %s205
      %s207 = smul.u32 2, %s18
      %v209 = vld [vmem:[%s190] sm:$0xf]
      %v210 = vld [vmem:[%s190 + $0x4] sm:$0xf]
      %v211 = vld [vmem:[%s190 + $0x8] sm:$0xf]
      %v212 = vld [vmem:[%s190 + $0xc] sm:$0xf]
      %v213 = vld [vmem:[%s190 + $0x10] sm:$0xf]
      %v214 = vld [vmem:[%s190 + $0x14] sm:$0xf]
      %v215 = vld [vmem:[%s190 + $0x18] sm:$0xf]
      %v216 = vld [vmem:[%s190 + $0x1c] sm:$0xf]
      %v217 = vld [vmem:[%s190 + $0x20] sm:$0xf]
      %v218 = vld [vmem:[%s190 + $0x24] sm:$0xf]
      %v219 = vld [vmem:[%s190 + $0x28] sm:$0xf]
      %v220 = vld [vmem:[%s190 + $0x2c] sm:$0xf]
      %v221 = vld [vmem:[%s190 + $0x30] sm:$0xf]
      %v222 = vld [vmem:[%s190 + $0x34] sm:$0xf]
      %v223 = vld [vmem:[%s190 + $0x38] sm:$0xf]
      %v224 = vld [vmem:[%s190 + $0x3c] sm:$0xf]
      %v225 = vld [vmem:[%s190 + $0x40] sm:$0xf]
      %v226 = vld [vmem:[%s190 + $0x44] sm:$0xf]
      %v227 = vld [vmem:[%s190 + $0x48] sm:$0xf]
      %v228 = vld [vmem:[%s190 + $0x4c] sm:$0xf]
      %v229 = vld [vmem:[%s190 + $0x50] sm:$0xf]
      %v230 = vld [vmem:[%s190 + $0x54] sm:$0xf]
      %v231 = vld [vmem:[%s190 + $0x58] sm:$0xf]
      %v232 = vld [vmem:[%s190 + $0x5c] sm:$0xf]
      %v233 = vld [vmem:[%s190 + $0x60] sm:$0xf]
      %v234 = vld [vmem:[%s190 + $0x64] sm:$0xf]
      %v235 = vld [vmem:[%s190 + $0x68] sm:$0xf]
      %v236 = vld [vmem:[%s190 + $0x6c] sm:$0xf]
      %v237 = vld [vmem:[%s190 + $0x70] sm:$0xf]
      %v238 = vld [vmem:[%s190 + $0x74] sm:$0xf]
      %v239 = vld [vmem:[%s190 + $0x78] sm:$0xf]
      %v240 = vld [vmem:[%s190 + $0x7c] sm:$0xf]
      %v241 = vld [vmem:[%s190 + $0x80] sm:$0xf]
      %v242 = vld [vmem:[%s190 + $0x84] sm:$0xf]
      %v243 = vld [vmem:[%s190 + $0x88] sm:$0xf]
      %v244 = vld [vmem:[%s190 + $0x8c] sm:$0xf]
      %v245 = vld [vmem:[%s190 + $0x90] sm:$0xf]
      %v246 = vld [vmem:[%s190 + $0x94] sm:$0xf]
      %v247 = vld [vmem:[%s190 + $0x98] sm:$0xf]
      %v248 = vld [vmem:[%s190 + $0x9c] sm:$0xf]
      %v249 = vld [vmem:[%s190 + $0xa0] sm:$0xf]
      %v250 = vld [vmem:[%s190 + $0xa4] sm:$0xf]
      %v251 = vld [vmem:[%s190 + $0xa8] sm:$0xf]
      %v252 = vld [vmem:[%s190 + $0xac] sm:$0xf]
      %v253 = vld [vmem:[%s190 + $0xb0] sm:$0xf]
      %v254 = vld [vmem:[%s190 + $0xb4] sm:$0xf]
      %v255 = vld [vmem:[%s190 + $0xb8] sm:$0xf]
      %v256 = vld [vmem:[%s190 + $0xbc] sm:$0xf]
      %v257 = vld [vmem:[%s190 + $0xc0] sm:$0xf]
      %v258 = vld [vmem:[%s190 + $0xc4] sm:$0xf]
      %v259 = vld [vmem:[%s190 + $0xc8] sm:$0xf]
      %v260 = vld [vmem:[%s190 + $0xcc] sm:$0xf]
      %v261 = vld [vmem:[%s190 + $0xd0] sm:$0xf]
      %v262 = vld [vmem:[%s190 + $0xd4] sm:$0xf]
      %v263 = vld [vmem:[%s190 + $0xd8] sm:$0xf]
      %v264 = vld [vmem:[%s190 + $0xdc] sm:$0xf]
      %v265 = vld [vmem:[%s190 + $0xe0] sm:$0xf]
      %v266 = vld [vmem:[%s190 + $0xe4] sm:$0xf]
      %v267 = vld [vmem:[%s190 + $0xe8] sm:$0xf]
      %v268 = vld [vmem:[%s190 + $0xec] sm:$0xf]
      %v269 = vld [vmem:[%s190 + $0xf0] sm:$0xf]
      %v270 = vld [vmem:[%s190 + $0xf4] sm:$0xf]
      %v271 = vld [vmem:[%s190 + $0xf8] sm:$0xf]
      %v272 = vld [vmem:[%s190 + $0xfc] sm:$0xf]
      %v273 = vld [vmem:[%s190 + $0x100] sm:$0xf]
      %v274 = vld [vmem:[%s190 + $0x104] sm:$0xf]
      %v275 = vld [vmem:[%s190 + $0x108] sm:$0xf]
      %v276 = vld [vmem:[%s190 + $0x10c] sm:$0xf]
      %v277 = vld [vmem:[%s190 + $0x110] sm:$0xf]
      %v278 = vld [vmem:[%s190 + $0x114] sm:$0xf]
      %v279 = vld [vmem:[%s190 + $0x118] sm:$0xf]
      %v280 = vld [vmem:[%s190 + $0x11c] sm:$0xf]
      %v281 = vld [vmem:[%s190 + $0x120] sm:$0xf]
      %v282 = vld [vmem:[%s190 + $0x124] sm:$0xf]
      %v283 = vld [vmem:[%s190 + $0x128] sm:$0xf]
      %v284 = vld [vmem:[%s190 + $0x12c] sm:$0xf]
      %v285 = vld [vmem:[%s190 + $0x130] sm:$0xf]
      %v286 = vld [vmem:[%s190 + $0x134] sm:$0xf]
      %v287 = vld [vmem:[%s190 + $0x138] sm:$0xf]
      %v288 = vld [vmem:[%s190 + $0x13c] sm:$0xf]
      %v289 = vld [vmem:[%s190 + $0x140] sm:$0xf]
      %v290 = vld [vmem:[%s190 + $0x144] sm:$0xf]
      %v291 = vld [vmem:[%s190 + $0x148] sm:$0xf]
      %v292 = vld [vmem:[%s190 + $0x14c] sm:$0xf]
      %v293 = vld [vmem:[%s190 + $0x150] sm:$0xf]
      %v294 = vld [vmem:[%s190 + $0x154] sm:$0xf]
      %v295 = vld [vmem:[%s190 + $0x158] sm:$0xf]
      %v296 = vld [vmem:[%s190 + $0x15c] sm:$0xf]
      %v297 = vld [vmem:[%s190 + $0x160] sm:$0xf]
      %v298 = vld [vmem:[%s190 + $0x164] sm:$0xf]
      %v299 = vld [vmem:[%s190 + $0x168] sm:$0xf]
      %v300 = vld [vmem:[%s190 + $0x16c] sm:$0xf]
      %v301 = vld [vmem:[%s190 + $0x170] sm:$0xf]
      %v302 = vld [vmem:[%s190 + $0x174] sm:$0xf]
      %v303 = vld [vmem:[%s190 + $0x178] sm:$0xf]
      %v304 = vld [vmem:[%s190 + $0x17c] sm:$0xf]
      %v305 = vld [vmem:[%s190 + $0x180] sm:$0xf]
      %v306 = vld [vmem:[%s190 + $0x184] sm:$0xf]
      %v307 = vld [vmem:[%s190 + $0x188] sm:$0xf]
      %v308 = vld [vmem:[%s190 + $0x18c] sm:$0xf]
      %v309 = vld [vmem:[%s190 + $0x190] sm:$0xf]
      %v310 = vld [vmem:[%s190 + $0x194] sm:$0xf]
      %v311 = vld [vmem:[%s190 + $0x198] sm:$0xf]
      %v312 = vld [vmem:[%s190 + $0x19c] sm:$0xf]
      %v313 = vld [vmem:[%s190 + $0x1a0] sm:$0xf]
      %v314 = vld [vmem:[%s190 + $0x1a4] sm:$0xf]
      %v315 = vld [vmem:[%s190 + $0x1a8] sm:$0xf]
      %v316 = vld [vmem:[%s190 + $0x1ac] sm:$0xf]
      %v317 = vld [vmem:[%s190 + $0x1b0] sm:$0xf]
      %v318 = vld [vmem:[%s190 + $0x1b4] sm:$0xf]
      %v319 = vld [vmem:[%s190 + $0x1b8] sm:$0xf]
      %v320 = vld [vmem:[%s190 + $0x1bc] sm:$0xf]
      %v321 = vld [vmem:[%s190 + $0x1c0] sm:$0xf]
      %v322 = vld [vmem:[%s190 + $0x1c4] sm:$0xf]
      %v323 = vld [vmem:[%s190 + $0x1c8] sm:$0xf]
      %v324 = vld [vmem:[%s190 + $0x1cc] sm:$0xf]
      %v325 = vld [vmem:[%s190 + $0x1d0] sm:$0xf]
      %v326 = vld [vmem:[%s190 + $0x1d4] sm:$0xf]
      %v327 = vld [vmem:[%s190 + $0x1d8] sm:$0xf]
      %v328 = vld [vmem:[%s190 + $0x1dc] sm:$0xf]
      %v329 = vld [vmem:[%s190 + $0x1e0] sm:$0xf]
      %v330 = vld [vmem:[%s190 + $0x1e4] sm:$0xf]
      %v331 = vld [vmem:[%s190 + $0x1e8] sm:$0xf]
      %v332 = vld [vmem:[%s190 + $0x1ec] sm:$0xf]
      %v333 = vld [vmem:[%s190 + $0x1f0] sm:$0xf]
      %v334 = vld [vmem:[%s190 + $0x1f4] sm:$0xf]
      %v335 = vld [vmem:[%s190 + $0x1f8] sm:$0xf]
      %v336 = vld [vmem:[%s190 + $0x1fc] sm:$0xf]
      %v337 = vld [vmem:[%s190 + $0x200] sm:$0xf]
      %v338 = vld [vmem:[%s190 + $0x204] sm:$0xf]
      %v339 = vld [vmem:[%s190 + $0x208] sm:$0xf]
      %v340 = vld [vmem:[%s190 + $0x20c] sm:$0xf]
      %v341 = vld [vmem:[%s190 + $0x210] sm:$0xf]
      %v342 = vld [vmem:[%s190 + $0x214] sm:$0xf]
      %v343 = vld [vmem:[%s190 + $0x218] sm:$0xf]
      %v344 = vld [vmem:[%s190 + $0x21c] sm:$0xf]
      %v345 = vld [vmem:[%s196] sm:$0xf]
      %v346 = vld [vmem:[%s196 + $0x4] sm:$0xf]
      %v347 = vld [vmem:[%s196 + $0x8] sm:$0xf]
      %v348 = vld [vmem:[%s196 + $0xc] sm:$0xf]
      %v485 = vunpack.c.l.b16 %v209
      %v486 = vunpack.c.l.b16 %v210
      %v487 = vunpack.c.l.b16 %v211
      %v488 = vunpack.c.l.b16 %v212
      %v489 = vunpack.c.l.b16 %v213
      %v490 = vunpack.c.l.b16 %v214
      %v491 = vunpack.c.l.b16 %v215
      %v492 = vunpack.c.l.b16 %v216
      %v493 = vunpack.c.l.b16 %v217
      %v494 = vunpack.c.l.b16 %v218
      %v495 = vunpack.c.l.b16 %v219
      %v496 = vunpack.c.l.b16 %v220
      %v497 = vunpack.c.l.b16 %v221
      %v498 = vunpack.c.l.b16 %v222
      %v499 = vunpack.c.l.b16 %v223
      %v500 = vunpack.c.l.b16 %v224
      %v501 = vunpack.c.l.b16 %v225
      %v502 = vunpack.c.l.b16 %v226
      %v503 = vunpack.c.l.b16 %v227
      %v504 = vunpack.c.l.b16 %v228
      %v505 = vunpack.c.l.b16 %v229
      %v506 = vunpack.c.l.b16 %v230
      %v507 = vunpack.c.l.b16 %v231
      %v508 = vunpack.c.l.b16 %v232
      %v509 = vunpack.c.l.b16 %v233
      %v510 = vunpack.c.l.b16 %v234
      %v511 = vunpack.c.l.b16 %v235
      %v512 = vunpack.c.l.b16 %v236
      %v513 = vunpack.c.l.b16 %v237
      %v514 = vunpack.c.l.b16 %v238
      %v515 = vunpack.c.l.b16 %v239
      %v516 = vunpack.c.l.b16 %v240
      %v517 = vunpack.c.l.b16 %v241
      %v518 = vunpack.c.l.b16 %v242
      %v519 = vunpack.c.l.b16 %v243
      %v520 = vunpack.c.l.b16 %v244
      %v521 = vunpack.c.l.b16 %v245
      %v522 = vunpack.c.l.b16 %v246
      %v523 = vunpack.c.l.b16 %v247
      %v524 = vunpack.c.l.b16 %v248
      %v525 = vunpack.c.l.b16 %v249
      %v526 = vunpack.c.l.b16 %v250
      %v527 = vunpack.c.l.b16 %v251
      %v528 = vunpack.c.l.b16 %v252
      %v529 = vunpack.c.l.b16 %v253
      %v530 = vunpack.c.l.b16 %v254
      %v531 = vunpack.c.l.b16 %v255
      %v532 = vunpack.c.l.b16 %v256
      %v533 = vunpack.c.l.b16 %v257
      %v534 = vunpack.c.l.b16 %v258
      %v535 = vunpack.c.l.b16 %v259
      %v536 = vunpack.c.l.b16 %v260
      %v537 = vunpack.c.l.b16 %v261
      %v538 = vunpack.c.l.b16 %v262
      %v539 = vunpack.c.l.b16 %v263
      %v540 = vunpack.c.l.b16 %v264
      %v541 = vunpack.c.l.b16 %v265
      %v542 = vunpack.c.l.b16 %v266
      %v543 = vunpack.c.l.b16 %v267
      %v544 = vunpack.c.l.b16 %v268
      %v545 = vunpack.c.l.b16 %v269
      %v546 = vunpack.c.l.b16 %v270
      %v547 = vunpack.c.l.b16 %v271
      %v548 = vunpack.c.l.b16 %v272
      %v549 = vunpack.c.l.b16 %v273
      %v550 = vunpack.c.l.b16 %v274
      %v551 = vunpack.c.l.b16 %v275
      %v552 = vunpack.c.l.b16 %v276
      %v553 = vunpack.c.l.b16 %v277
      %v554 = vunpack.c.l.b16 %v278
      %v555 = vunpack.c.l.b16 %v279
      %v556 = vunpack.c.l.b16 %v280
      %v557 = vunpack.c.l.b16 %v281
      %v558 = vunpack.c.l.b16 %v282
      %v559 = vunpack.c.l.b16 %v283
      %v560 = vunpack.c.l.b16 %v284
      %v561 = vunpack.c.l.b16 %v285
      %v562 = vunpack.c.l.b16 %v286
      %v563 = vunpack.c.l.b16 %v287
      %v564 = vunpack.c.l.b16 %v288
      %v565 = vunpack.c.l.b16 %v289
      %v566 = vunpack.c.l.b16 %v290
      %v567 = vunpack.c.l.b16 %v291
      %v568 = vunpack.c.l.b16 %v292
      %v569 = vunpack.c.l.b16 %v293
      %v570 = vunpack.c.l.b16 %v294
      %v571 = vunpack.c.l.b16 %v295
      %v572 = vunpack.c.l.b16 %v296
      %v573 = vunpack.c.l.b16 %v297
      %v574 = vunpack.c.l.b16 %v298
      %v575 = vunpack.c.l.b16 %v299
      %v576 = vunpack.c.l.b16 %v300
      %v577 = vunpack.c.l.b16 %v301
      %v578 = vunpack.c.l.b16 %v302
      %v579 = vunpack.c.l.b16 %v303
      %v580 = vunpack.c.l.b16 %v304
      %v581 = vunpack.c.l.b16 %v305
      %v582 = vunpack.c.l.b16 %v306
      %v583 = vunpack.c.l.b16 %v307
      %v584 = vunpack.c.l.b16 %v308
      %v585 = vunpack.c.l.b16 %v309
      %v586 = vunpack.c.l.b16 %v310
      %v587 = vunpack.c.l.b16 %v311
      %v588 = vunpack.c.l.b16 %v312
      %v589 = vunpack.c.l.b16 %v313
      %v590 = vunpack.c.l.b16 %v314
      %v591 = vunpack.c.l.b16 %v315
      %v592 = vunpack.c.l.b16 %v316
      %v593 = vunpack.c.l.b16 %v317
      %v594 = vunpack.c.l.b16 %v318
      %v595 = vunpack.c.l.b16 %v319
      %v596 = vunpack.c.l.b16 %v320
      %v597 = vunpack.c.l.b16 %v321
      %v598 = vunpack.c.l.b16 %v322
      %v599 = vunpack.c.l.b16 %v323
      %v600 = vunpack.c.l.b16 %v324
      %v601 = vunpack.c.l.b16 %v325
      %v602 = vunpack.c.l.b16 %v326
      %v603 = vunpack.c.l.b16 %v327
      %v604 = vunpack.c.l.b16 %v328
      %v605 = vunpack.c.l.b16 %v329
      %v606 = vunpack.c.l.b16 %v330
      %v607 = vunpack.c.l.b16 %v331
      %v608 = vunpack.c.l.b16 %v332
      %v609 = vunpack.c.l.b16 %v333
      %v610 = vunpack.c.l.b16 %v334
      %v611 = vunpack.c.l.b16 %v335
      %v612 = vunpack.c.l.b16 %v336
      %v613 = vunpack.c.l.b16 %v337
      %v614 = vunpack.c.l.b16 %v338
      %v615 = vunpack.c.l.b16 %v339
      %v616 = vunpack.c.l.b16 %v340
      %v617 = vunpack.c.l.b16 %v341
      %v618 = vunpack.c.l.b16 %v342
      %v619 = vunpack.c.l.b16 %v343
      %v620 = vunpack.c.l.b16 %v344
      %v621 = vpack.c.b16 %v486, %v485
      %v622 = vpack.c.b16 %v488, %v487
      %v623 = vpack.c.b16 %v490, %v489
      %v624 = vpack.c.b16 %v492, %v491
      %v625 = vpack.c.b16 %v494, %v493
      %v626 = vpack.c.b16 %v496, %v495
      %v627 = vpack.c.b16 %v498, %v497
      %v628 = vpack.c.b16 %v500, %v499
      %v629 = vpack.c.b16 %v502, %v501
      %v630 = vpack.c.b16 %v504, %v503
      %v631 = vpack.c.b16 %v506, %v505
      %v632 = vpack.c.b16 %v508, %v507
      %v633 = vpack.c.b16 %v510, %v509
      %v634 = vpack.c.b16 %v512, %v511
      %v635 = vpack.c.b16 %v514, %v513
      %v636 = vpack.c.b16 %v516, %v515
      %v637 = vpack.c.b16 %v518, %v517
      %v638 = vpack.c.b16 %v520, %v519
      %v639 = vpack.c.b16 %v522, %v521
      %v640 = vpack.c.b16 %v524, %v523
      %v641 = vpack.c.b16 %v526, %v525
      %v642 = vpack.c.b16 %v528, %v527
      %v643 = vpack.c.b16 %v530, %v529
      %v644 = vpack.c.b16 %v532, %v531
      %v645 = vpack.c.b16 %v534, %v533
      %v646 = vpack.c.b16 %v536, %v535
      %v647 = vpack.c.b16 %v538, %v537
      %v648 = vpack.c.b16 %v540, %v539
      %v649 = vpack.c.b16 %v542, %v541
      %v650 = vpack.c.b16 %v544, %v543
      %v651 = vpack.c.b16 %v546, %v545
      %v652 = vpack.c.b16 %v548, %v547
      %v653 = vpack.c.b16 %v550, %v549
      %v654 = vpack.c.b16 %v552, %v551
      %v655 = vpack.c.b16 %v554, %v553
      %v656 = vpack.c.b16 %v556, %v555
      %v657 = vpack.c.b16 %v558, %v557
      %v658 = vpack.c.b16 %v560, %v559
      %v659 = vpack.c.b16 %v562, %v561
      %v660 = vpack.c.b16 %v564, %v563
      %v661 = vpack.c.b16 %v566, %v565
      %v662 = vpack.c.b16 %v568, %v567
      %v663 = vpack.c.b16 %v570, %v569
      %v664 = vpack.c.b16 %v572, %v571
      %v665 = vpack.c.b16 %v574, %v573
      %v666 = vpack.c.b16 %v576, %v575
      %v667 = vpack.c.b16 %v578, %v577
      %v668 = vpack.c.b16 %v580, %v579
      %v669 = vpack.c.b16 %v582, %v581
      %v670 = vpack.c.b16 %v584, %v583
      %v671 = vpack.c.b16 %v586, %v585
      %v672 = vpack.c.b16 %v588, %v587
      %v673 = vpack.c.b16 %v590, %v589
      %v674 = vpack.c.b16 %v592, %v591
      %v675 = vpack.c.b16 %v594, %v593
      %v676 = vpack.c.b16 %v596, %v595
      %v677 = vpack.c.b16 %v598, %v597
      %v678 = vpack.c.b16 %v600, %v599
      %v679 = vpack.c.b16 %v602, %v601
      %v680 = vpack.c.b16 %v604, %v603
      %v681 = vpack.c.b16 %v606, %v605
      %v682 = vpack.c.b16 %v608, %v607
      %v683 = vpack.c.b16 %v610, %v609
      %v684 = vpack.c.b16 %v612, %v611
      %v685 = vpack.c.b16 %v614, %v613
      %v686 = vpack.c.b16 %v616, %v615
      %v687 = vpack.c.b16 %v618, %v617
      %v688 = vpack.c.b16 %v620, %v619
      %v693 = vunpack.c.l.b16 %v345
      %v694 = vunpack.c.l.b16 %v346
      %v695 = vunpack.c.l.b16 %v347
      %v696 = vunpack.c.l.b16 %v348
      %v697 = vpack.c.b16 %v694, %v693
      %v698 = vpack.c.b16 %v696, %v695
      %vm701 = vcmask 261120
      %v703 = vsel %vm701, %v621, 0
      %v706 = vsel %vm701, %v622, 0
      %v709 = vsel %vm701, %v623, 0
      %v712 = vsel %vm701, %v624, 0
      %v715 = vsel %vm701, %v625, 0
      %v718 = vsel %vm701, %v626, 0
      %v721 = vsel %vm701, %v627, 0
      %v724 = vsel %vm701, %v628, 0
      %v727 = vsel %vm701, %v629, 0
      %v730 = vsel %vm701, %v630, 0
      %v733 = vsel %vm701, %v631, 0
      %v736 = vsel %vm701, %v632, 0
      %v739 = vsel %vm701, %v633, 0
      %v742 = vsel %vm701, %v634, 0
      %v745 = vsel %vm701, %v635, 0
      %v748 = vsel %vm701, %v636, 0
      %v751 = vsel %vm701, %v637, 0
      %v754 = vsel %vm701, %v638, 0
      %v757 = vsel %vm701, %v639, 0
      %v760 = vsel %vm701, %v640, 0
      %v763 = vsel %vm701, %v641, 0
      %v766 = vsel %vm701, %v642, 0
      %v769 = vsel %vm701, %v643, 0
      %v772 = vsel %vm701, %v644, 0
      %v775 = vsel %vm701, %v645, 0
      %v778 = vsel %vm701, %v646, 0
      %v781 = vsel %vm701, %v647, 0
      %v784 = vsel %vm701, %v648, 0
      %v787 = vsel %vm701, %v649, 0
      %v790 = vsel %vm701, %v650, 0
      %v793 = vsel %vm701, %v651, 0
      %v796 = vsel %vm701, %v652, 0
      %v799 = vsel %vm701, %v653, 0
      %v802 = vsel %vm701, %v654, 0
      %v805 = vsel %vm701, %v655, 0
      %v808 = vsel %vm701, %v656, 0
      %v811 = vsel %vm701, %v657, 0
      %v814 = vsel %vm701, %v658, 0
      %v817 = vsel %vm701, %v659, 0
      %v820 = vsel %vm701, %v660, 0
      %v823 = vsel %vm701, %v661, 0
      %v826 = vsel %vm701, %v662, 0
      %v829 = vsel %vm701, %v663, 0
      %v832 = vsel %vm701, %v664, 0
      %v835 = vsel %vm701, %v665, 0
      %v838 = vsel %vm701, %v666, 0
      %v841 = vsel %vm701, %v667, 0
      %v844 = vsel %vm701, %v668, 0
      %v847 = vsel %vm701, %v669, 0
      %v850 = vsel %vm701, %v670, 0
      %v853 = vsel %vm701, %v671, 0
      %v856 = vsel %vm701, %v672, 0
      %v859 = vsel %vm701, %v673, 0
      %v862 = vsel %vm701, %v674, 0
      %v865 = vsel %vm701, %v675, 0
      %v868 = vsel %vm701, %v676, 0
      %v871 = vsel %vm701, %v677, 0
      %v874 = vsel %vm701, %v678, 0
      %v877 = vsel %vm701, %v679, 0
      %v880 = vsel %vm701, %v680, 0
      %v883 = vsel %vm701, %v681, 0
      %v886 = vsel %vm701, %v682, 0
      %v889 = vsel %vm701, %v683, 0
      %v892 = vsel %vm701, %v684, 0
      %v895 = vsel %vm701, %v685, 0
      %v898 = vsel %vm701, %v686, 0
      %v901 = vsel %vm701, %v687, 0
      %v904 = vsel %vm701, %v688, 0
      %906 = vmatprep.subr.bf16.mxu0 0
      %907 = vmatpush1.bf16.msra.mxu0 %v697
      %908 = vmatprep.subr.bf16.mxu0 0
      %909 = vmatpush1.bf16.msra.mxu0 %v698
      %910 = vmatprep.subr.bf16.mxu0 0
      %911 = vmatpush1.bf16.msra.mxu0 0
      %912 = vmatprep.subr.bf16.mxu0 0
      %913 = vmatpush1.bf16.msra.mxu0 0
      %914 = vmatprep.subr.bf16.mxu0 0
      %915 = vmatpush1.bf16.msra.mxu0 0
      %916 = vmatprep.subr.bf16.mxu0 0
      %917 = vmatpush1.bf16.msra.mxu0 0
      %918 = vmatprep.subr.bf16.mxu0 0
      %919 = vmatpush1.bf16.msra.mxu0 0
      %920 = vmatprep.subr.bf16.mxu0 0
      %921 = vmatpush1.bf16.msra.mxu0 0
      %922 = vmatprep.subr.bf16.mxu0 0
      %923 = vmatpush1.bf16.msra.mxu0 0
      %924 = vmatprep.subr.bf16.mxu0 0
      %925 = vmatpush1.bf16.msra.mxu0 0
      %926 = vmatprep.subr.bf16.mxu0 0
      %927 = vmatpush1.bf16.msra.mxu0 0
      %928 = vmatprep.subr.bf16.mxu0 0
      %929 = vmatpush1.bf16.msra.mxu0 0
      %930 = vmatprep.subr.bf16.mxu0 0
      %931 = vmatpush1.bf16.msra.mxu0 0
      %932 = vmatprep.subr.bf16.mxu0 0
      %933 = vmatpush1.bf16.msra.mxu0 0
      %934 = vmatprep.subr.bf16.mxu0 0
      %935 = vmatpush1.bf16.msra.mxu0 0
      %936 = vmatprep.subr.bf16.mxu0 0
      %937 = vmatpush1.bf16.msra.mxu0 0
      %938 = vmatprep.mubr.bf16.mxu0 0
      %939 = vmatmul.mubr.bf16.gmra.mrb[0].mxu0 %v703
      %v940 = vpop.f32.mrb[0].mxu0
      %v941 = vadd.f32 0.0, %v940
      %v942 = vpop.f32.mrb[0].mxu0
      %v943 = vpop.f32.mrb[0].mxu0
      %v944 = vadd.f32 0.0, %v943
      %v945 = vpop.f32.mrb[0].mxu0
      %946 = vmatprep.mubr.bf16.mxu0 0
      %947 = vmatmul.mubr.bf16.gmra.mrb[0].mxu0 %v706
      %v948 = vpop.f32.mrb[0].mxu0
      %v949 = vadd.f32 0.0, %v948
      %v950 = vpop.f32.mrb[0].mxu0
      %v951 = vpop.f32.mrb[0].mxu0
      %v952 = vadd.f32 0.0, %v951
      %v953 = vpop.f32.mrb[0].mxu0
      %954 = vmatprep.mubr.bf16.mxu0 0
      %955 = vmatmul.mubr.bf16.gmra.mrb[0].mxu0 %v709
      %v956 = vpop.f32.mrb[0].mxu0
      %v957 = vadd.f32 0.0, %v956
      %v958 = vpop.f32.mrb[0].mxu0
      %v959 = vpop.f32.mrb[0].mxu0
      %v960 = vadd.f32 0.0, %v959
      %v961 = vpop.f32.mrb[0].mxu0
      %962 = vmatprep.mubr.bf16.mxu0 0
      %963 = vmatmul.mubr.bf16.gmra.mrb[0].mxu0 %v712
      %v964 = vpop.f32.mrb[0].mxu0
      %v965 = vadd.f32 0.0, %v964
      %v966 = vpop.f32.mrb[0].mxu0
      %v967 = vpop.f32.mrb[0].mxu0
      %v968 = vadd.f32 0.0, %v967
      %v969 = vpop.f32.mrb[0].mxu0
      %970 = vmatprep.mubr.bf16.mxu0 0
      %971 = vmatmul.mubr.bf16.gmra.mrb[0].mxu0 %v715
      %v972 = vpop.f32.mrb[0].mxu0
      %v973 = vadd.f32 0.0, %v972
      %v974 = vpop.f32.mrb[0].mxu0
      %v975 = vpop.f32.mrb[0].mxu0
      %v976 = vadd.f32 0.0, %v975
      %v977 = vpop.f32.mrb[0].mxu0
      %978 = vmatprep.mubr.bf16.mxu0 0
      %979 = vmatmul.mubr.bf16.gmra.mrb[0].mxu0 %v718
      %v980 = vpop.f32.mrb[0].mxu0
      %v981 = vadd.f32 0.0, %v980
      %v982 = vpop.f32.mrb[0].mxu0
      %v983 = vpop.f32.mrb[0].mxu0
      %v984 = vadd.f32 0.0, %v983
      %v985 = vpop.f32.mrb[0].mxu0
      %986 = vmatprep.mubr.bf16.mxu0 0
      %987 = vmatmul.mubr.bf16.gmra.mrb[0].mxu0 %v721
      %v988 = vpop.f32.mrb[0].mxu0
      %v989 = vadd.f32 0.0, %v988
      %v990 = vpop.f32.mrb[0].mxu0
      %v991 = vpop.f32.mrb[0].mxu0
      %v992 = vadd.f32 0.0, %v991
      %v993 = vpop.f32.mrb[0].mxu0
      %994 = vmatprep.mubr.bf16.mxu0 0
      %995 = vmatmul.mubr.bf16.gmra.mrb[0].mxu0 %v724
      %v996 = vpop.f32.mrb[0].mxu0
      %v997 = vadd.f32 0.0, %v996
      %v998 = vpop.f32.mrb[0].mxu0
      %v999 = vpop.f32.mrb[0].mxu0
      %v1000 = vadd.f32 0.0, %v999
      %v1001 = vpop.f32.mrb[0].mxu0
      %1002 = vmatprep.mubr.bf16.mxu0 0
      %1003 = vmatmul.mubr.bf16.gmra.mrb[0].mxu0 %v727
      %v1004 = vpop.f32.mrb[0].mxu0
      %v1005 = vadd.f32 0.0, %v1004
      %v1006 = vpop.f32.mrb[0].mxu0
      %v1007 = vpop.f32.mrb[0].mxu0
      %v1008 = vadd.f32 0.0, %v1007
      %v1009 = vpop.f32.mrb[0].mxu0
      %1010 = vmatprep.mubr.bf16.mxu0 0
      %1011 = vmatmul.mubr.bf16.gmra.mrb[0].mxu0 %v730
      %v1012 = vpop.f32.mrb[0].mxu0
      %v1013 = vadd.f32 0.0, %v1012
      %v1014 = vpop.f32.mrb[0].mxu0
      %v1015 = vpop.f32.mrb[0].mxu0
      %v1016 = vadd.f32 0.0, %v1015
      %v1017 = vpop.f32.mrb[0].mxu0
      %1018 = vmatprep.mubr.bf16.mxu0 0
      %1019 = vmatmul.mubr.bf16.gmra.mrb[0].mxu0 %v733
      %v1020 = vpop.f32.mrb[0].mxu0
      %v1021 = vadd.f32 0.0, %v1020
      %v1022 = vpop.f32.mrb[0].mxu0
      %v1023 = vpop.f32.mrb[0].mxu0
      %v1024 = vadd.f32 0.0, %v1023
      %v1025 = vpop.f32.mrb[0].mxu0
      %1026 = vmatprep.mubr.bf16.mxu0 0
      %1027 = vmatmul.mubr.bf16.gmra.mrb[0].mxu0 %v736
      %v1028 = vpop.f32.mrb[0].mxu0
      %v1029 = vadd.f32 0.0, %v1028
      %v1030 = vpop.f32.mrb[0].mxu0
      %v1031 = vpop.f32.mrb[0].mxu0
      %v1032 = vadd.f32 0.0, %v1031
      %v1033 = vpop.f32.mrb[0].mxu0
      %1034 = vmatprep.mubr.bf16.mxu0 0
      %1035 = vmatmul.mubr.bf16.gmra.mrb[0].mxu0 %v739
      %v1036 = vpop.f32.mrb[0].mxu0
      %v1037 = vadd.f32 0.0, %v1036
      %v1038 = vpop.f32.mrb[0].mxu0
      %v1039 = vpop.f32.mrb[0].mxu0
      %v1040 = vadd.f32 0.0, %v1039
      %v1041 = vpop.f32.mrb[0].mxu0
      %1042 = vmatprep.mubr.bf16.mxu0 0
      %1043 = vmatmul.mubr.bf16.gmra.mrb[0].mxu0 %v742
      %v1044 = vpop.f32.mrb[0].mxu0
      %v1045 = vadd.f32 0.0, %v1044
      %v1046 = vpop.f32.mrb[0].mxu0
      %v1047 = vpop.f32.mrb[0].mxu0
      %v1048 = vadd.f32 0.0, %v1047
      %v1049 = vpop.f32.mrb[0].mxu0
      %1050 = vmatprep.mubr.bf16.mxu0 0
      %1051 = vmatmul.mubr.bf16.gmra.mrb[0].mxu0 %v745
      %v1052 = vpop.f32.mrb[0].mxu0
      %v1053 = vadd.f32 0.0, %v1052
      %v1054 = vpop.f32.mrb[0].mxu0
      %v1055 = vpop.f32.mrb[0].mxu0
      %v1056 = vadd.f32 0.0, %v1055
      %v1057 = vpop.f32.mrb[0].mxu0
      %1058 = vmatprep.mubr.bf16.mxu0 0
      %1059 = vmatmul.mubr.bf16.gmra.mrb[0].mxu0 %v748
      %v1060 = vpop.f32.mrb[0].mxu0
      %v1061 = vadd.f32 0.0, %v1060
      %v1062 = vpop.f32.mrb[0].mxu0
      %v1063 = vpop.f32.mrb[0].mxu0
      %v1064 = vadd.f32 0.0, %v1063
      %v1065 = vpop.f32.mrb[0].mxu0
      %1066 = vmatprep.mubr.bf16.mxu0 0
      %1067 = vmatmul.mubr.bf16.gmra.mrb[0].mxu0 %v751
      %v1068 = vpop.f32.mrb[0].mxu0
      %v1069 = vadd.f32 0.0, %v1068
      %v1070 = vpop.f32.mrb[0].mxu0
      %v1071 = vpop.f32.mrb[0].mxu0
      %v1072 = vadd.f32 0.0, %v1071
      %v1073 = vpop.f32.mrb[0].mxu0
      %1074 = vmatprep.mubr.bf16.mxu0 0
      %1075 = vmatmul.mubr.bf16.gmra.mrb[0].mxu0 %v754
      %v1076 = vpop.f32.mrb[0].mxu0
      %v1077 = vadd.f32 0.0, %v1076
      %v1078 = vpop.f32.mrb[0].mxu0
      %v1079 = vpop.f32.mrb[0].mxu0
      %v1080 = vadd.f32 0.0, %v1079
      %v1081 = vpop.f32.mrb[0].mxu0
      %1082 = vmatprep.mubr.bf16.mxu0 0
      %1083 = vmatmul.mubr.bf16.gmra.mrb[0].mxu0 %v757
      %v1084 = vpop.f32.mrb[0].mxu0
      %v1085 = vadd.f32 0.0, %v1084
      %v1086 = vpop.f32.mrb[0].mxu0
      %v1087 = vpop.f32.mrb[0].mxu0
      %v1088 = vadd.f32 0.0, %v1087
      %v1089 = vpop.f32.mrb[0].mxu0
      %1090 = vmatprep.mubr.bf16.mxu0 0
      %1091 = vmatmul.mubr.bf16.gmra.mrb[0].mxu0 %v760
      %v1092 = vpop.f32.mrb[0].mxu0
      %v1093 = vadd.f32 0.0, %v1092
      %v1094 = vpop.f32.mrb[0].mxu0
      %v1095 = vpop.f32.mrb[0].mxu0
      %v1096 = vadd.f32 0.0, %v1095
      %v1097 = vpop.f32.mrb[0].mxu0
      %1098 = vmatprep.mubr.bf16.mxu0 0
      %1099 = vmatmul.mubr.bf16.gmra.mrb[0].mxu0 %v763
      %v1100 = vpop.f32.mrb[0].mxu0
      %v1101 = vadd.f32 0.0, %v1100
      %v1102 = vpop.f32.mrb[0].mxu0
      %v1103 = vpop.f32.mrb[0].mxu0
      %v1104 = vadd.f32 0.0, %v1103
      %v1105 = vpop.f32.mrb[0].mxu0
      %1106 = vmatprep.mubr.bf16.mxu0 0
      %1107 = vmatmul.mubr.bf16.gmra.mrb[0].mxu0 %v766
      %v1108 = vpop.f32.mrb[0].mxu0
      %v1109 = vadd.f32 0.0, %v1108
      %v1110 = vpop.f32.mrb[0].mxu0
      %v1111 = vpop.f32.mrb[0].mxu0
      %v1112 = vadd.f32 0.0, %v1111
      %v1113 = vpop.f32.mrb[0].mxu0
      %1114 = vmatprep.mubr.bf16.mxu0 0
      %1115 = vmatmul.mubr.bf16.gmra.mrb[0].mxu0 %v769
      %v1116 = vpop.f32.mrb[0].mxu0
      %v1117 = vadd.f32 0.0, %v1116
      %v1118 = vpop.f32.mrb[0].mxu0
      %v1119 = vpop.f32.mrb[0].mxu0
      %v1120 = vadd.f32 0.0, %v1119
      %v1121 = vpop.f32.mrb[0].mxu0
      %1122 = vmatprep.mubr.bf16.mxu0 0
      %1123 = vmatmul.mubr.bf16.gmra.mrb[0].mxu0 %v772
      %v1124 = vpop.f32.mrb[0].mxu0
      %v1125 = vadd.f32 0.0, %v1124
      %v1126 = vpop.f32.mrb[0].mxu0
      %v1127 = vpop.f32.mrb[0].mxu0
      %v1128 = vadd.f32 0.0, %v1127
      %v1129 = vpop.f32.mrb[0].mxu0
      %1130 = vmatprep.mubr.bf16.mxu0 0
      %1131 = vmatmul.mubr.bf16.gmra.mrb[0].mxu0 %v775
      %v1132 = vpop.f32.mrb[0].mxu0
      %v1133 = vadd.f32 0.0, %v1132
      %v1134 = vpop.f32.mrb[0].mxu0
      %v1135 = vpop.f32.mrb[0].mxu0
      %v1136 = vadd.f32 0.0, %v1135
      %v1137 = vpop.f32.mrb[0].mxu0
      %1138 = vmatprep.mubr.bf16.mxu0 0
      %1139 = vmatmul.mubr.bf16.gmra.mrb[0].mxu0 %v778
      %v1140 = vpop.f32.mrb[0].mxu0
      %v1141 = vadd.f32 0.0, %v1140
      %v1142 = vpop.f32.mrb[0].mxu0
      %v1143 = vpop.f32.mrb[0].mxu0
      %v1144 = vadd.f32 0.0, %v1143
      %v1145 = vpop.f32.mrb[0].mxu0
      %1146 = vmatprep.mubr.bf16.mxu0 0
      %1147 = vmatmul.mubr.bf16.gmra.mrb[0].mxu0 %v781
      %v1148 = vpop.f32.mrb[0].mxu0
      %v1149 = vadd.f32 0.0, %v1148
      %v1150 = vpop.f32.mrb[0].mxu0
      %v1151 = vpop.f32.mrb[0].mxu0
      %v1152 = vadd.f32 0.0, %v1151
      %v1153 = vpop.f32.mrb[0].mxu0
      %1154 = vmatprep.mubr.bf16.mxu0 0
      %1155 = vmatmul.mubr.bf16.gmra.mrb[0].mxu0 %v784
      %v1156 = vpop.f32.mrb[0].mxu0
      %v1157 = vadd.f32 0.0, %v1156
      %v1158 = vpop.f32.mrb[0].mxu0
      %v1159 = vpop.f32.mrb[0].mxu0
      %v1160 = vadd.f32 0.0, %v1159
      %v1161 = vpop.f32.mrb[0].mxu0
      %1162 = vmatprep.mubr.bf16.mxu0 0
      %1163 = vmatmul.mubr.bf16.gmra.mrb[0].mxu0 %v787
      %v1164 = vpop.f32.mrb[0].mxu0
      %v1165 = vadd.f32 0.0, %v1164
      %v1166 = vpop.f32.mrb[0].mxu0
      %v1167 = vpop.f32.mrb[0].mxu0
      %v1168 = vadd.f32 0.0, %v1167
      %v1169 = vpop.f32.mrb[0].mxu0
      %1170 = vmatprep.mubr.bf16.mxu0 0
      %1171 = vmatmul.mubr.bf16.gmra.mrb[0].mxu0 %v790
      %v1172 = vpop.f32.mrb[0].mxu0
      %v1173 = vadd.f32 0.0, %v1172
      %v1174 = vpop.f32.mrb[0].mxu0
      %v1175 = vpop.f32.mrb[0].mxu0
      %v1176 = vadd.f32 0.0, %v1175
      %v1177 = vpop.f32.mrb[0].mxu0
      %1178 = vmatprep.mubr.bf16.mxu0 0
      %1179 = vmatmul.mubr.bf16.gmra.mrb[0].mxu0 %v793
      %v1180 = vpop.f32.mrb[0].mxu0
      %v1181 = vadd.f32 0.0, %v1180
      %v1182 = vpop.f32.mrb[0].mxu0
      %v1183 = vpop.f32.mrb[0].mxu0
      %v1184 = vadd.f32 0.0, %v1183
      %v1185 = vpop.f32.mrb[0].mxu0
      %1186 = vmatprep.mubr.bf16.mxu0 0
      %1187 = vmatmul.mubr.bf16.gmra.mrb[0].mxu0 %v796
      %v1188 = vpop.f32.mrb[0].mxu0
      %v1189 = vadd.f32 0.0, %v1188
      %v1190 = vpop.f32.mrb[0].mxu0
      %v1191 = vpop.f32.mrb[0].mxu0
      %v1192 = vadd.f32 0.0, %v1191
      %v1193 = vpop.f32.mrb[0].mxu0
      %1194 = vmatprep.mubr.bf16.mxu0 0
      %1195 = vmatmul.mubr.bf16.gmra.mrb[0].mxu0 %v799
      %v1196 = vpop.f32.mrb[0].mxu0
      %v1197 = vadd.f32 0.0, %v1196
      %v1198 = vpop.f32.mrb[0].mxu0
      %v1199 = vpop.f32.mrb[0].mxu0
      %v1200 = vadd.f32 0.0, %v1199
      %v1201 = vpop.f32.mrb[0].mxu0
      %1202 = vmatprep.mubr.bf16.mxu0 0
      %1203 = vmatmul.mubr.bf16.gmra.mrb[0].mxu0 %v802
      %v1204 = vpop.f32.mrb[0].mxu0
      %v1205 = vadd.f32 0.0, %v1204
      %v1206 = vpop.f32.mrb[0].mxu0
      %v1207 = vpop.f32.mrb[0].mxu0
      %v1208 = vadd.f32 0.0, %v1207
      %v1209 = vpop.f32.mrb[0].mxu0
      %1210 = vmatprep.mubr.bf16.mxu0 0
      %1211 = vmatmul.mubr.bf16.gmra.mrb[0].mxu0 %v805
      %v1212 = vpop.f32.mrb[0].mxu0
      %v1213 = vadd.f32 0.0, %v1212
      %v1214 = vpop.f32.mrb[0].mxu0
      %v1215 = vpop.f32.mrb[0].mxu0
      %v1216 = vadd.f32 0.0, %v1215
      %v1217 = vpop.f32.mrb[0].mxu0
      %1218 = vmatprep.mubr.bf16.mxu0 0
      %1219 = vmatmul.mubr.bf16.gmra.mrb[0].mxu0 %v808
      %v1220 = vpop.f32.mrb[0].mxu0
      %v1221 = vadd.f32 0.0, %v1220
      %v1222 = vpop.f32.mrb[0].mxu0
      %v1223 = vpop.f32.mrb[0].mxu0
      %v1224 = vadd.f32 0.0, %v1223
      %v1225 = vpop.f32.mrb[0].mxu0
      %1226 = vmatprep.mubr.bf16.mxu0 0
      %1227 = vmatmul.mubr.bf16.gmra.mrb[0].mxu0 %v811
      %v1228 = vpop.f32.mrb[0].mxu0
      %v1229 = vadd.f32 0.0, %v1228
      %v1230 = vpop.f32.mrb[0].mxu0
      %v1231 = vpop.f32.mrb[0].mxu0
      %v1232 = vadd.f32 0.0, %v1231
      %v1233 = vpop.f32.mrb[0].mxu0
      %1234 = vmatprep.mubr.bf16.mxu0 0
      %1235 = vmatmul.mubr.bf16.gmra.mrb[0].mxu0 %v814
      %v1236 = vpop.f32.mrb[0].mxu0
      %v1237 = vadd.f32 0.0, %v1236
      %v1238 = vpop.f32.mrb[0].mxu0
      %v1239 = vpop.f32.mrb[0].mxu0
      %v1240 = vadd.f32 0.0, %v1239
      %v1241 = vpop.f32.mrb[0].mxu0
      %1242 = vmatprep.mubr.bf16.mxu0 0
      %1243 = vmatmul.mubr.bf16.gmra.mrb[0].mxu0 %v817
      %v1244 = vpop.f32.mrb[0].mxu0
      %v1245 = vadd.f32 0.0, %v1244
      %v1246 = vpop.f32.mrb[0].mxu0
      %v1247 = vpop.f32.mrb[0].mxu0
      %v1248 = vadd.f32 0.0, %v1247
      %v1249 = vpop.f32.mrb[0].mxu0
      %1250 = vmatprep.mubr.bf16.mxu0 0
      %1251 = vmatmul.mubr.bf16.gmra.mrb[0].mxu0 %v820
      %v1252 = vpop.f32.mrb[0].mxu0
      %v1253 = vadd.f32 0.0, %v1252
      %v1254 = vpop.f32.mrb[0].mxu0
      %v1255 = vpop.f32.mrb[0].mxu0
      %v1256 = vadd.f32 0.0, %v1255
      %v1257 = vpop.f32.mrb[0].mxu0
      %1258 = vmatprep.mubr.bf16.mxu0 0
      %1259 = vmatmul.mubr.bf16.gmra.mrb[0].mxu0 %v823
      %v1260 = vpop.f32.mrb[0].mxu0
      %v1261 = vadd.f32 0.0, %v1260
      %v1262 = vpop.f32.mrb[0].mxu0
      %v1263 = vpop.f32.mrb[0].mxu0
      %v1264 = vadd.f32 0.0, %v1263
      %v1265 = vpop.f32.mrb[0].mxu0
      %1266 = vmatprep.mubr.bf16.mxu0 0
      %1267 = vmatmul.mubr.bf16.gmra.mrb[0].mxu0 %v826
      %v1268 = vpop.f32.mrb[0].mxu0
      %v1269 = vadd.f32 0.0, %v1268
      %v1270 = vpop.f32.mrb[0].mxu0
      %v1271 = vpop.f32.mrb[0].mxu0
      %v1272 = vadd.f32 0.0, %v1271
      %v1273 = vpop.f32.mrb[0].mxu0
      %1274 = vmatprep.mubr.bf16.mxu0 0
      %1275 = vmatmul.mubr.bf16.gmra.mrb[0].mxu0 %v829
      %v1276 = vpop.f32.mrb[0].mxu0
      %v1277 = vadd.f32 0.0, %v1276
      %v1278 = vpop.f32.mrb[0].mxu0
      %v1279 = vpop.f32.mrb[0].mxu0
      %v1280 = vadd.f32 0.0, %v1279
      %v1281 = vpop.f32.mrb[0].mxu0
      %1282 = vmatprep.mubr.bf16.mxu0 0
      %1283 = vmatmul.mubr.bf16.gmra.mrb[0].mxu0 %v832
      %v1284 = vpop.f32.mrb[0].mxu0
      %v1285 = vadd.f32 0.0, %v1284
      %v1286 = vpop.f32.mrb[0].mxu0
      %v1287 = vpop.f32.mrb[0].mxu0
      %v1288 = vadd.f32 0.0, %v1287
      %v1289 = vpop.f32.mrb[0].mxu0
      %1290 = vmatprep.mubr.bf16.mxu0 0
      %1291 = vmatmul.mubr.bf16.gmra.mrb[0].mxu0 %v835
      %v1292 = vpop.f32.mrb[0].mxu0
      %v1293 = vadd.f32 0.0, %v1292
      %v1294 = vpop.f32.mrb[0].mxu0
      %v1295 = vpop.f32.mrb[0].mxu0
      %v1296 = vadd.f32 0.0, %v1295
      %v1297 = vpop.f32.mrb[0].mxu0
      %1298 = vmatprep.mubr.bf16.mxu0 0
      %1299 = vmatmul.mubr.bf16.gmra.mrb[0].mxu0 %v838
      %v1300 = vpop.f32.mrb[0].mxu0
      %v1301 = vadd.f32 0.0, %v1300
      %v1302 = vpop.f32.mrb[0].mxu0
      %v1303 = vpop.f32.mrb[0].mxu0
      %v1304 = vadd.f32 0.0, %v1303
      %v1305 = vpop.f32.mrb[0].mxu0
      %1306 = vmatprep.mubr.bf16.mxu0 0
      %1307 = vmatmul.mubr.bf16.gmra.mrb[0].mxu0 %v841
      %v1308 = vpop.f32.mrb[0].mxu0
      %v1309 = vadd.f32 0.0, %v1308
      %v1310 = vpop.f32.mrb[0].mxu0
      %v1311 = vpop.f32.mrb[0].mxu0
      %v1312 = vadd.f32 0.0, %v1311
      %v1313 = vpop.f32.mrb[0].mxu0
      %1314 = vmatprep.mubr.bf16.mxu0 0
      %1315 = vmatmul.mubr.bf16.gmra.mrb[0].mxu0 %v844
      %v1316 = vpop.f32.mrb[0].mxu0
      %v1317 = vadd.f32 0.0, %v1316
      %v1318 = vpop.f32.mrb[0].mxu0
      %v1319 = vpop.f32.mrb[0].mxu0
      %v1320 = vadd.f32 0.0, %v1319
      %v1321 = vpop.f32.mrb[0].mxu0
      %1322 = vmatprep.mubr.bf16.mxu0 0
      %1323 = vmatmul.mubr.bf16.gmra.mrb[0].mxu0 %v847
      %v1324 = vpop.f32.mrb[0].mxu0
      %v1325 = vadd.f32 0.0, %v1324
      %v1326 = vpop.f32.mrb[0].mxu0
      %v1327 = vpop.f32.mrb[0].mxu0
      %v1328 = vadd.f32 0.0, %v1327
      %v1329 = vpop.f32.mrb[0].mxu0
      %1330 = vmatprep.mubr.bf16.mxu0 0
      %1331 = vmatmul.mubr.bf16.gmra.mrb[0].mxu0 %v850
      %v1332 = vpop.f32.mrb[0].mxu0
      %v1333 = vadd.f32 0.0, %v1332
      %v1334 = vpop.f32.mrb[0].mxu0
      %v1335 = vpop.f32.mrb[0].mxu0
      %v1336 = vadd.f32 0.0, %v1335
      %v1337 = vpop.f32.mrb[0].mxu0
      %1338 = vmatprep.mubr.bf16.mxu0 0
      %1339 = vmatmul.mubr.bf16.gmra.mrb[0].mxu0 %v853
      %v1340 = vpop.f32.mrb[0].mxu0
      %v1341 = vadd.f32 0.0, %v1340
      %v1342 = vpop.f32.mrb[0].mxu0
      %v1343 = vpop.f32.mrb[0].mxu0
      %v1344 = vadd.f32 0.0, %v1343
      %v1345 = vpop.f32.mrb[0].mxu0
      %1346 = vmatprep.mubr.bf16.mxu0 0
      %1347 = vmatmul.mubr.bf16.gmra.mrb[0].mxu0 %v856
      %v1348 = vpop.f32.mrb[0].mxu0
      %v1349 = vadd.f32 0.0, %v1348
      %v1350 = vpop.f32.mrb[0].mxu0
      %v1351 = vpop.f32.mrb[0].mxu0
      %v1352 = vadd.f32 0.0, %v1351
      %v1353 = vpop.f32.mrb[0].mxu0
      %1354 = vmatprep.mubr.bf16.mxu0 0
      %1355 = vmatmul.mubr.bf16.gmra.mrb[0].mxu0 %v859
      %v1356 = vpop.f32.mrb[0].mxu0
      %v1357 = vadd.f32 0.0, %v1356
      %v1358 = vpop.f32.mrb[0].mxu0
      %v1359 = vpop.f32.mrb[0].mxu0
      %v1360 = vadd.f32 0.0, %v1359
      %v1361 = vpop.f32.mrb[0].mxu0
      %1362 = vmatprep.mubr.bf16.mxu0 0
      %1363 = vmatmul.mubr.bf16.gmra.mrb[0].mxu0 %v862
      %v1364 = vpop.f32.mrb[0].mxu0
      %v1365 = vadd.f32 0.0, %v1364
      %v1366 = vpop.f32.mrb[0].mxu0
      %v1367 = vpop.f32.mrb[0].mxu0
      %v1368 = vadd.f32 0.0, %v1367
      %v1369 = vpop.f32.mrb[0].mxu0
      %1370 = vmatprep.mubr.bf16.mxu0 0
      %1371 = vmatmul.mubr.bf16.gmra.mrb[0].mxu0 %v865
      %v1372 = vpop.f32.mrb[0].mxu0
      %v1373 = vadd.f32 0.0, %v1372
      %v1374 = vpop.f32.mrb[0].mxu0
      %v1375 = vpop.f32.mrb[0].mxu0
      %v1376 = vadd.f32 0.0, %v1375
      %v1377 = vpop.f32.mrb[0].mxu0
      %1378 = vmatprep.mubr.bf16.mxu0 0
      %1379 = vmatmul.mubr.bf16.gmra.mrb[0].mxu0 %v868
      %v1380 = vpop.f32.mrb[0].mxu0
      %v1381 = vadd.f32 0.0, %v1380
      %v1382 = vpop.f32.mrb[0].mxu0
      %v1383 = vpop.f32.mrb[0].mxu0
      %v1384 = vadd.f32 0.0, %v1383
      %v1385 = vpop.f32.mrb[0].mxu0
      %1386 = vmatprep.mubr.bf16.mxu0 0
      %1387 = vmatmul.mubr.bf16.gmra.mrb[0].mxu0 %v871
      %v1388 = vpop.f32.mrb[0].mxu0
      %v1389 = vadd.f32 0.0, %v1388
      %v1390 = vpop.f32.mrb[0].mxu0
      %v1391 = vpop.f32.mrb[0].mxu0
      %v1392 = vadd.f32 0.0, %v1391
      %v1393 = vpop.f32.mrb[0].mxu0
      %1394 = vmatprep.mubr.bf16.mxu0 0
      %1395 = vmatmul.mubr.bf16.gmra.mrb[0].mxu0 %v874
      %v1396 = vpop.f32.mrb[0].mxu0
      %v1397 = vadd.f32 0.0, %v1396
      %v1398 = vpop.f32.mrb[0].mxu0
      %v1399 = vpop.f32.mrb[0].mxu0
      %v1400 = vadd.f32 0.0, %v1399
      %v1401 = vpop.f32.mrb[0].mxu0
      %1402 = vmatprep.mubr.bf16.mxu0 0
      %1403 = vmatmul.mubr.bf16.gmra.mrb[0].mxu0 %v877
      %v1404 = vpop.f32.mrb[0].mxu0
      %v1405 = vadd.f32 0.0, %v1404
      %v1406 = vpop.f32.mrb[0].mxu0
      %v1407 = vpop.f32.mrb[0].mxu0
      %v1408 = vadd.f32 0.0, %v1407
      %v1409 = vpop.f32.mrb[0].mxu0
      %1410 = vmatprep.mubr.bf16.mxu0 0
      %1411 = vmatmul.mubr.bf16.gmra.mrb[0].mxu0 %v880
      %v1412 = vpop.f32.mrb[0].mxu0
      %v1413 = vadd.f32 0.0, %v1412
      %v1414 = vpop.f32.mrb[0].mxu0
      %v1415 = vpop.f32.mrb[0].mxu0
      %v1416 = vadd.f32 0.0, %v1415
      %v1417 = vpop.f32.mrb[0].mxu0
      %1418 = vmatprep.mubr.bf16.mxu0 0
      %1419 = vmatmul.mubr.bf16.gmra.mrb[0].mxu0 %v883
      %v1420 = vpop.f32.mrb[0].mxu0
      %v1421 = vadd.f32 0.0, %v1420
      %v1422 = vpop.f32.mrb[0].mxu0
      %v1423 = vpop.f32.mrb[0].mxu0
      %v1424 = vadd.f32 0.0, %v1423
      %v1425 = vpop.f32.mrb[0].mxu0
      %1426 = vmatprep.mubr.bf16.mxu0 0
      %1427 = vmatmul.mubr.bf16.gmra.mrb[0].mxu0 %v886
      %v1428 = vpop.f32.mrb[0].mxu0
      %v1429 = vadd.f32 0.0, %v1428
      %v1430 = vpop.f32.mrb[0].mxu0
      %v1431 = vpop.f32.mrb[0].mxu0
      %v1432 = vadd.f32 0.0, %v1431
      %v1433 = vpop.f32.mrb[0].mxu0
      %1434 = vmatprep.mubr.bf16.mxu0 0
      %1435 = vmatmul.mubr.bf16.gmra.mrb[0].mxu0 %v889
      %v1436 = vpop.f32.mrb[0].mxu0
      %v1437 = vadd.f32 0.0, %v1436
      %v1438 = vpop.f32.mrb[0].mxu0
      %v1439 = vpop.f32.mrb[0].mxu0
      %v1440 = vadd.f32 0.0, %v1439
      %v1441 = vpop.f32.mrb[0].mxu0
      %1442 = vmatprep.mubr.bf16.mxu0 0
      %1443 = vmatmul.mubr.bf16.gmra.mrb[0].mxu0 %v892
      %v1444 = vpop.f32.mrb[0].mxu0
      %v1445 = vadd.f32 0.0, %v1444
      %v1446 = vpop.f32.mrb[0].mxu0
      %v1447 = vpop.f32.mrb[0].mxu0
      %v1448 = vadd.f32 0.0, %v1447
      %v1449 = vpop.f32.mrb[0].mxu0
      %1450 = vmatprep.mubr.bf16.mxu0 0
      %1451 = vmatmul.mubr.bf16.gmra.mrb[0].mxu0 %v895
      %v1452 = vpop.f32.mrb[0].mxu0
      %v1453 = vadd.f32 0.0, %v1452
      %v1454 = vpop.f32.mrb[0].mxu0
      %v1455 = vpop.f32.mrb[0].mxu0
      %v1456 = vadd.f32 0.0, %v1455
      %v1457 = vpop.f32.mrb[0].mxu0
      %1458 = vmatprep.mubr.bf16.mxu0 0
      %1459 = vmatmul.mubr.bf16.gmra.mrb[0].mxu0 %v898
      %v1460 = vpop.f32.mrb[0].mxu0
      %v1461 = vadd.f32 0.0, %v1460
      %v1462 = vpop.f32.mrb[0].mxu0
      %v1463 = vpop.f32.mrb[0].mxu0
      %v1464 = vadd.f32 0.0, %v1463
      %v1465 = vpop.f32.mrb[0].mxu0
      %1466 = vmatprep.mubr.bf16.mxu0 0
      %1467 = vmatmul.mubr.bf16.gmra.mrb[0].mxu0 %v901
      %v1468 = vpop.f32.mrb[0].mxu0
      %v1469 = vadd.f32 0.0, %v1468
      %v1470 = vpop.f32.mrb[0].mxu0
      %v1471 = vpop.f32.mrb[0].mxu0
      %v1472 = vadd.f32 0.0, %v1471
      %v1473 = vpop.f32.mrb[0].mxu0
      %1474 = vmatprep.mubr.bf16.mxu0 0
      %1475 = vmatmul.mubr.bf16.gmra.mrb[0].mxu0 %v904
      %v1476 = vpop.f32.mrb[0].mxu0
      %v1477 = vadd.f32 0.0, %v1476
      %v1478 = vpop.f32.mrb[0].mxu0
      %v1479 = vpop.f32.mrb[0].mxu0
      %v1480 = vadd.f32 0.0, %v1479
      %v1481 = vpop.f32.mrb[0].mxu0
      %1482 = vdwg.mxu0
      %v1483 = vpack.c.bf16 %v944, %v941
      %v1484 = vpack.c.bf16 %v952, %v949
      %v1485 = vpack.c.bf16 %v960, %v957
      %v1486 = vpack.c.bf16 %v968, %v965
      %v1487 = vpack.c.bf16 %v976, %v973
      %v1488 = vpack.c.bf16 %v984, %v981
      %v1489 = vpack.c.bf16 %v992, %v989
      %v1490 = vpack.c.bf16 %v1000, %v997
      %v1491 = vpack.c.bf16 %v1008, %v1005
      %v1492 = vpack.c.bf16 %v1016, %v1013
      %v1493 = vpack.c.bf16 %v1024, %v1021
      %v1494 = vpack.c.bf16 %v1032, %v1029
      %v1495 = vpack.c.bf16 %v1040, %v1037
      %v1496 = vpack.c.bf16 %v1048, %v1045
      %v1497 = vpack.c.bf16 %v1056, %v1053
      %v1498 = vpack.c.bf16 %v1064, %v1061
      %v1499 = vpack.c.bf16 %v1072, %v1069
      %v1500 = vpack.c.bf16 %v1080, %v1077
      %v1501 = vpack.c.bf16 %v1088, %v1085
      %v1502 = vpack.c.bf16 %v1096, %v1093
      %v1503 = vpack.c.bf16 %v1104, %v1101
      %v1504 = vpack.c.bf16 %v1112, %v1109
      %v1505 = vpack.c.bf16 %v1120, %v1117
      %v1506 = vpack.c.bf16 %v1128, %v1125
      %v1507 = vpack.c.bf16 %v1136, %v1133
      %v1508 = vpack.c.bf16 %v1144, %v1141
      %v1509 = vpack.c.bf16 %v1152, %v1149
      %v1510 = vpack.c.bf16 %v1160, %v1157
      %v1511 = vpack.c.bf16 %v1168, %v1165
      %v1512 = vpack.c.bf16 %v1176, %v1173
      %v1513 = vpack.c.bf16 %v1184, %v1181
      %v1514 = vpack.c.bf16 %v1192, %v1189
      %v1515 = vpack.c.bf16 %v1200, %v1197
      %v1516 = vpack.c.bf16 %v1208, %v1205
      %v1517 = vpack.c.bf16 %v1216, %v1213
      %v1518 = vpack.c.bf16 %v1224, %v1221
      %v1519 = vpack.c.bf16 %v1232, %v1229
      %v1520 = vpack.c.bf16 %v1240, %v1237
      %v1521 = vpack.c.bf16 %v1248, %v1245
      %v1522 = vpack.c.bf16 %v1256, %v1253
      %v1523 = vpack.c.bf16 %v1264, %v1261
      %v1524 = vpack.c.bf16 %v1272, %v1269
      %v1525 = vpack.c.bf16 %v1280, %v1277
      %v1526 = vpack.c.bf16 %v1288, %v1285
      %v1527 = vpack.c.bf16 %v1296, %v1293
      %v1528 = vpack.c.bf16 %v1304, %v1301
      %v1529 = vpack.c.bf16 %v1312, %v1309
      %v1530 = vpack.c.bf16 %v1320, %v1317
      %v1531 = vpack.c.bf16 %v1328, %v1325
      %v1532 = vpack.c.bf16 %v1336, %v1333
      %v1533 = vpack.c.bf16 %v1344, %v1341
      %v1534 = vpack.c.bf16 %v1352, %v1349
      %v1535 = vpack.c.bf16 %v1360, %v1357
      %v1536 = vpack.c.bf16 %v1368, %v1365
      %v1537 = vpack.c.bf16 %v1376, %v1373
      %v1538 = vpack.c.bf16 %v1384, %v1381
      %v1539 = vpack.c.bf16 %v1392, %v1389
      %v1540 = vpack.c.bf16 %v1400, %v1397
      %v1541 = vpack.c.bf16 %v1408, %v1405
      %v1542 = vpack.c.bf16 %v1416, %v1413
      %v1543 = vpack.c.bf16 %v1424, %v1421
      %v1544 = vpack.c.bf16 %v1432, %v1429
      %v1545 = vpack.c.bf16 %v1440, %v1437
      %v1546 = vpack.c.bf16 %v1448, %v1445
      %v1547 = vpack.c.bf16 %v1456, %v1453
      %v1548 = vpack.c.bf16 %v1464, %v1461
      %v1549 = vpack.c.bf16 %v1472, %v1469
      %v1550 = vpack.c.bf16 %v1480, %v1477
      %v1619 = vunpack.c.l.b16 %v1483
      %v1620 = vunpack.c.h.b16 %v1483
      %v1621 = vunpack.c.l.b16 %v1484
      %v1622 = vunpack.c.h.b16 %v1484
      %v1623 = vunpack.c.l.b16 %v1485
      %v1624 = vunpack.c.h.b16 %v1485
      %v1625 = vunpack.c.l.b16 %v1486
      %v1626 = vunpack.c.h.b16 %v1486
      %v1627 = vunpack.c.l.b16 %v1487
      %v1628 = vunpack.c.h.b16 %v1487
      %v1629 = vunpack.c.l.b16 %v1488
      %v1630 = vunpack.c.h.b16 %v1488
      %v1631 = vunpack.c.l.b16 %v1489
      %v1632 = vunpack.c.h.b16 %v1489
      %v1633 = vunpack.c.l.b16 %v1490
      %v1634 = vunpack.c.h.b16 %v1490
      %v1635 = vunpack.c.l.b16 %v1491
      %v1636 = vunpack.c.h.b16 %v1491
      %v1637 = vunpack.c.l.b16 %v1492
      %v1638 = vunpack.c.h.b16 %v1492
      %v1639 = vunpack.c.l.b16 %v1493
      %v1640 = vunpack.c.h.b16 %v1493
      %v1641 = vunpack.c.l.b16 %v1494
      %v1642 = vunpack.c.h.b16 %v1494
      %v1643 = vunpack.c.l.b16 %v1495
      %v1644 = vunpack.c.h.b16 %v1495
      %v1645 = vunpack.c.l.b16 %v1496
      %v1646 = vunpack.c.h.b16 %v1496
      %v1647 = vunpack.c.l.b16 %v1497
      %v1648 = vunpack.c.h.b16 %v1497
      %v1649 = vunpack.c.l.b16 %v1498
      %v1650 = vunpack.c.h.b16 %v1498
      %v1651 = vunpack.c.l.b16 %v1499
      %v1652 = vunpack.c.h.b16 %v1499
      %v1653 = vunpack.c.l.b16 %v1500
      %v1654 = vunpack.c.h.b16 %v1500
      %v1655 = vunpack.c.l.b16 %v1501
      %v1656 = vunpack.c.h.b16 %v1501
      %v1657 = vunpack.c.l.b16 %v1502
      %v1658 = vunpack.c.h.b16 %v1502
      %v1659 = vunpack.c.l.b16 %v1503
      %v1660 = vunpack.c.h.b16 %v1503
      %v1661 = vunpack.c.l.b16 %v1504
      %v1662 = vunpack.c.h.b16 %v1504
      %v1663 = vunpack.c.l.b16 %v1505
      %v1664 = vunpack.c.h.b16 %v1505
      %v1665 = vunpack.c.l.b16 %v1506
      %v1666 = vunpack.c.h.b16 %v1506
      %v1667 = vunpack.c.l.b16 %v1507
      %v1668 = vunpack.c.h.b16 %v1507
      %v1669 = vunpack.c.l.b16 %v1508
      %v1670 = vunpack.c.h.b16 %v1508
      %v1671 = vunpack.c.l.b16 %v1509
      %v1672 = vunpack.c.h.b16 %v1509
      %v1673 = vunpack.c.l.b16 %v1510
      %v1674 = vunpack.c.h.b16 %v1510
      %v1675 = vunpack.c.l.b16 %v1511
      %v1676 = vunpack.c.h.b16 %v1511
      %v1677 = vunpack.c.l.b16 %v1512
      %v1678 = vunpack.c.h.b16 %v1512
      %v1679 = vunpack.c.l.b16 %v1513
      %v1680 = vunpack.c.h.b16 %v1513
      %v1681 = vunpack.c.l.b16 %v1514
      %v1682 = vunpack.c.h.b16 %v1514
      %v1683 = vunpack.c.l.b16 %v1515
      %v1684 = vunpack.c.h.b16 %v1515
      %v1685 = vunpack.c.l.b16 %v1516
      %v1686 = vunpack.c.h.b16 %v1516
      %v1687 = vunpack.c.l.b16 %v1517
      %v1688 = vunpack.c.h.b16 %v1517
      %v1689 = vunpack.c.l.b16 %v1518
      %v1690 = vunpack.c.h.b16 %v1518
      %v1691 = vunpack.c.l.b16 %v1519
      %v1692 = vunpack.c.h.b16 %v1519
      %v1693 = vunpack.c.l.b16 %v1520
      %v1694 = vunpack.c.h.b16 %v1520
      %v1695 = vunpack.c.l.b16 %v1521
      %v1696 = vunpack.c.h.b16 %v1521
      %v1697 = vunpack.c.l.b16 %v1522
      %v1698 = vunpack.c.h.b16 %v1522
      %v1699 = vunpack.c.l.b16 %v1523
      %v1700 = vunpack.c.h.b16 %v1523
      %v1701 = vunpack.c.l.b16 %v1524
      %v1702 = vunpack.c.h.b16 %v1524
      %v1703 = vunpack.c.l.b16 %v1525
      %v1704 = vunpack.c.h.b16 %v1525
      %v1705 = vunpack.c.l.b16 %v1526
      %v1706 = vunpack.c.h.b16 %v1526
      %v1707 = vunpack.c.l.b16 %v1527
      %v1708 = vunpack.c.h.b16 %v1527
      %v1709 = vunpack.c.l.b16 %v1528
      %v1710 = vunpack.c.h.b16 %v1528
      %v1711 = vunpack.c.l.b16 %v1529
      %v1712 = vunpack.c.h.b16 %v1529
      %v1713 = vunpack.c.l.b16 %v1530
      %v1714 = vunpack.c.h.b16 %v1530
      %v1715 = vunpack.c.l.b16 %v1531
      %v1716 = vunpack.c.h.b16 %v1531
      %v1717 = vunpack.c.l.b16 %v1532
      %v1718 = vunpack.c.h.b16 %v1532
      %v1719 = vunpack.c.l.b16 %v1533
      %v1720 = vunpack.c.h.b16 %v1533
      %v1721 = vunpack.c.l.b16 %v1534
      %v1722 = vunpack.c.h.b16 %v1534
      %v1723 = vunpack.c.l.b16 %v1535
      %v1724 = vunpack.c.h.b16 %v1535
      %v1725 = vunpack.c.l.b16 %v1536
      %v1726 = vunpack.c.h.b16 %v1536
      %v1727 = vunpack.c.l.b16 %v1537
      %v1728 = vunpack.c.h.b16 %v1537
      %v1729 = vunpack.c.l.b16 %v1538
      %v1730 = vunpack.c.h.b16 %v1538
      %v1731 = vunpack.c.l.b16 %v1539
      %v1732 = vunpack.c.h.b16 %v1539
      %v1733 = vunpack.c.l.b16 %v1540
      %v1734 = vunpack.c.h.b16 %v1540
      %v1735 = vunpack.c.l.b16 %v1541
      %v1736 = vunpack.c.h.b16 %v1541
      %v1737 = vunpack.c.l.b16 %v1542
      %v1738 = vunpack.c.h.b16 %v1542
      %v1739 = vunpack.c.l.b16 %v1543
      %v1740 = vunpack.c.h.b16 %v1543
      %v1741 = vunpack.c.l.b16 %v1544
      %v1742 = vunpack.c.h.b16 %v1544
      %v1743 = vunpack.c.l.b16 %v1545
      %v1744 = vunpack.c.h.b16 %v1545
      %v1745 = vunpack.c.l.b16 %v1546
      %v1746 = vunpack.c.h.b16 %v1546
      %v1747 = vunpack.c.l.b16 %v1547
      %v1748 = vunpack.c.h.b16 %v1547
      %v1749 = vunpack.c.l.b16 %v1548
      %v1750 = vunpack.c.h.b16 %v1548
      %v1751 = vunpack.c.l.b16 %v1549
      %v1752 = vunpack.c.h.b16 %v1549
      %v1753 = vunpack.c.l.b16 %v1550
      %v1754 = vunpack.c.h.b16 %v1550
      %v1755 = vpack.c.b16 %v1619, %v1619
      %v1756 = vpack.c.b16 %v1620, %v1620
      %v1757 = vpack.c.b16 %v1621, %v1621
      %v1758 = vpack.c.b16 %v1622, %v1622
      %v1759 = vpack.c.b16 %v1623, %v1623
      %v1760 = vpack.c.b16 %v1624, %v1624
      %v1761 = vpack.c.b16 %v1625, %v1625
      %v1762 = vpack.c.b16 %v1626, %v1626
      %v1763 = vpack.c.b16 %v1627, %v1627
      %v1764 = vpack.c.b16 %v1628, %v1628
      %v1765 = vpack.c.b16 %v1629, %v1629
      %v1766 = vpack.c.b16 %v1630, %v1630
      %v1767 = vpack.c.b16 %v1631, %v1631
      %v1768 = vpack.c.b16 %v1632, %v1632
      %v1769 = vpack.c.b16 %v1633, %v1633
      %v1770 = vpack.c.b16 %v1634, %v1634
      %v1771 = vpack.c.b16 %v1635, %v1635
      %v1772 = vpack.c.b16 %v1636, %v1636
      %v1773 = vpack.c.b16 %v1637, %v1637
      %v1774 = vpack.c.b16 %v1638, %v1638
      %v1775 = vpack.c.b16 %v1639, %v1639
      %v1776 = vpack.c.b16 %v1640, %v1640
      %v1777 = vpack.c.b16 %v1641, %v1641
      %v1778 = vpack.c.b16 %v1642, %v1642
      %v1779 = vpack.c.b16 %v1643, %v1643
      %v1780 = vpack.c.b16 %v1644, %v1644
      %v1781 = vpack.c.b16 %v1645, %v1645
      %v1782 = vpack.c.b16 %v1646, %v1646
      %v1783 = vpack.c.b16 %v1647, %v1647
      %v1784 = vpack.c.b16 %v1648, %v1648
      %v1785 = vpack.c.b16 %v1649, %v1649
      %v1786 = vpack.c.b16 %v1650, %v1650
      %v1787 = vpack.c.b16 %v1651, %v1651
      %v1788 = vpack.c.b16 %v1652, %v1652
      %v1789 = vpack.c.b16 %v1653, %v1653
      %v1790 = vpack.c.b16 %v1654, %v1654
      %v1791 = vpack.c.b16 %v1655, %v1655
      %v1792 = vpack.c.b16 %v1656, %v1656
      %v1793 = vpack.c.b16 %v1657, %v1657
      %v1794 = vpack.c.b16 %v1658, %v1658
      %v1795 = vpack.c.b16 %v1659, %v1659
      %v1796 = vpack.c.b16 %v1660, %v1660
      %v1797 = vpack.c.b16 %v1661, %v1661
      %v1798 = vpack.c.b16 %v1662, %v1662
      %v1799 = vpack.c.b16 %v1663, %v1663
      %v1800 = vpack.c.b16 %v1664, %v1664
      %v1801 = vpack.c.b16 %v1665, %v1665
      %v1802 = vpack.c.b16 %v1666, %v1666
      %v1803 = vpack.c.b16 %v1667, %v1667
      %v1804 = vpack.c.b16 %v1668, %v1668
      %v1805 = vpack.c.b16 %v1669, %v1669
      %v1806 = vpack.c.b16 %v1670, %v1670
      %v1807 = vpack.c.b16 %v1671, %v1671
      %v1808 = vpack.c.b16 %v1672, %v1672
      %v1809 = vpack.c.b16 %v1673, %v1673
      %v1810 = vpack.c.b16 %v1674, %v1674
      %v1811 = vpack.c.b16 %v1675, %v1675
      %v1812 = vpack.c.b16 %v1676, %v1676
      %v1813 = vpack.c.b16 %v1677, %v1677
      %v1814 = vpack.c.b16 %v1678, %v1678
      %v1815 = vpack.c.b16 %v1679, %v1679
      %v1816 = vpack.c.b16 %v1680, %v1680
      %v1817 = vpack.c.b16 %v1681, %v1681
      %v1818 = vpack.c.b16 %v1682, %v1682
      %v1819 = vpack.c.b16 %v1683, %v1683
      %v1820 = vpack.c.b16 %v1684, %v1684
      %v1821 = vpack.c.b16 %v1685, %v1685
      %v1822 = vpack.c.b16 %v1686, %v1686
      %v1823 = vpack.c.b16 %v1687, %v1687
      %v1824 = vpack.c.b16 %v1688, %v1688
      %v1825 = vpack.c.b16 %v1689, %v1689
      %v1826 = vpack.c.b16 %v1690, %v1690
      %v1827 = vpack.c.b16 %v1691, %v1691
      %v1828 = vpack.c.b16 %v1692, %v1692
      %v1829 = vpack.c.b16 %v1693, %v1693
      %v1830 = vpack.c.b16 %v1694, %v1694
      %v1831 = vpack.c.b16 %v1695, %v1695
      %v1832 = vpack.c.b16 %v1696, %v1696
      %v1833 = vpack.c.b16 %v1697, %v1697
      %v1834 = vpack.c.b16 %v1698, %v1698
      %v1835 = vpack.c.b16 %v1699, %v1699
      %v1836 = vpack.c.b16 %v1700, %v1700
      %v1837 = vpack.c.b16 %v1701, %v1701
      %v1838 = vpack.c.b16 %v1702, %v1702
      %v1839 = vpack.c.b16 %v1703, %v1703
      %v1840 = vpack.c.b16 %v1704, %v1704
      %v1841 = vpack.c.b16 %v1705, %v1705
      %v1842 = vpack.c.b16 %v1706, %v1706
      %v1843 = vpack.c.b16 %v1707, %v1707
      %v1844 = vpack.c.b16 %v1708, %v1708
      %v1845 = vpack.c.b16 %v1709, %v1709
      %v1846 = vpack.c.b16 %v1710, %v1710
      %v1847 = vpack.c.b16 %v1711, %v1711
      %v1848 = vpack.c.b16 %v1712, %v1712
      %v1849 = vpack.c.b16 %v1713, %v1713
      %v1850 = vpack.c.b16 %v1714, %v1714
      %v1851 = vpack.c.b16 %v1715, %v1715
      %v1852 = vpack.c.b16 %v1716, %v1716
      %v1853 = vpack.c.b16 %v1717, %v1717
      %v1854 = vpack.c.b16 %v1718, %v1718
      %v1855 = vpack.c.b16 %v1719, %v1719
      %v1856 = vpack.c.b16 %v1720, %v1720
      %v1857 = vpack.c.b16 %v1721, %v1721
      %v1858 = vpack.c.b16 %v1722, %v1722
      %v1859 = vpack.c.b16 %v1723, %v1723
      %v1860 = vpack.c.b16 %v1724, %v1724
      %v1861 = vpack.c.b16 %v1725, %v1725
      %v1862 = vpack.c.b16 %v1726, %v1726
      %v1863 = vpack.c.b16 %v1727, %v1727
      %v1864 = vpack.c.b16 %v1728, %v1728
      %v1865 = vpack.c.b16 %v1729, %v1729
      %v1866 = vpack.c.b16 %v1730, %v1730
      %v1867 = vpack.c.b16 %v1731, %v1731
      %v1868 = vpack.c.b16 %v1732, %v1732
      %v1869 = vpack.c.b16 %v1733, %v1733
      %v1870 = vpack.c.b16 %v1734, %v1734
      %v1871 = vpack.c.b16 %v1735, %v1735
      %v1872 = vpack.c.b16 %v1736, %v1736
      %v1873 = vpack.c.b16 %v1737, %v1737
      %v1874 = vpack.c.b16 %v1738, %v1738
      %v1875 = vpack.c.b16 %v1739, %v1739
      %v1876 = vpack.c.b16 %v1740, %v1740
      %v1877 = vpack.c.b16 %v1741, %v1741
      %v1878 = vpack.c.b16 %v1742, %v1742
      %v1879 = vpack.c.b16 %v1743, %v1743
      %v1880 = vpack.c.b16 %v1744, %v1744
      %v1881 = vpack.c.b16 %v1745, %v1745
      %v1882 = vpack.c.b16 %v1746, %v1746
      %v1883 = vpack.c.b16 %v1747, %v1747
      %v1884 = vpack.c.b16 %v1748, %v1748
      %v1885 = vpack.c.b16 %v1749, %v1749
      %v1886 = vpack.c.b16 %v1750, %v1750
      %v1887 = vpack.c.b16 %v1751, %v1751
      %v1888 = vpack.c.b16 %v1752, %v1752
      %v1889 = vpack.c.b16 %v1753, %v1753
      %v1890 = vpack.c.b16 %v1754, %v1754
      %2027 = vst [vmem:[%s206] sm:$0xf] %v1755
      %2028 = vst [vmem:[%s206 + $0x4] sm:$0xf] %v1756
      %2029 = vst [vmem:[%s206 + $0x8] sm:$0xf] %v1757
      %2030 = vst [vmem:[%s206 + $0xc] sm:$0xf] %v1758
      %2031 = vst [vmem:[%s206 + $0x10] sm:$0xf] %v1759
      %2032 = vst [vmem:[%s206 + $0x14] sm:$0xf] %v1760
      %2033 = vst [vmem:[%s206 + $0x18] sm:$0xf] %v1761
      %2034 = vst [vmem:[%s206 + $0x1c] sm:$0xf] %v1762
      %2035 = vst [vmem:[%s206 + $0x20] sm:$0xf] %v1763
      %2036 = vst [vmem:[%s206 + $0x24] sm:$0xf] %v1764
      %2037 = vst [vmem:[%s206 + $0x28] sm:$0xf] %v1765
      %2038 = vst [vmem:[%s206 + $0x2c] sm:$0xf] %v1766
      %2039 = vst [vmem:[%s206 + $0x30] sm:$0xf] %v1767
      %2040 = vst [vmem:[%s206 + $0x34] sm:$0xf] %v1768
      %2041 = vst [vmem:[%s206 + $0x38] sm:$0xf] %v1769
      %2042 = vst [vmem:[%s206 + $0x3c] sm:$0xf] %v1770
      %2043 = vst [vmem:[%s206 + $0x40] sm:$0xf] %v1771
      %2044 = vst [vmem:[%s206 + $0x44] sm:$0xf] %v1772
      %2045 = vst [vmem:[%s206 + $0x48] sm:$0xf] %v1773
      %2046 = vst [vmem:[%s206 + $0x4c] sm:$0xf] %v1774
      %2047 = vst [vmem:[%s206 + $0x50] sm:$0xf] %v1775
      %2048 = vst [vmem:[%s206 + $0x54] sm:$0xf] %v1776
      %2049 = vst [vmem:[%s206 + $0x58] sm:$0xf] %v1777
      %2050 = vst [vmem:[%s206 + $0x5c] sm:$0xf] %v1778
      %2051 = vst [vmem:[%s206 + $0x60] sm:$0xf] %v1779
      %2052 = vst [vmem:[%s206 + $0x64] sm:$0xf] %v1780
      %2053 = vst [vmem:[%s206 + $0x68] sm:$0xf] %v1781
      %2054 = vst [vmem:[%s206 + $0x6c] sm:$0xf] %v1782
      %2055 = vst [vmem:[%s206 + $0x70] sm:$0xf] %v1783
      %2056 = vst [vmem:[%s206 + $0x74] sm:$0xf] %v1784
      %2057 = vst [vmem:[%s206 + $0x78] sm:$0xf] %v1785
      %2058 = vst [vmem:[%s206 + $0x7c] sm:$0xf] %v1786
      %2059 = vst [vmem:[%s206 + $0x80] sm:$0xf] %v1787
      %2060 = vst [vmem:[%s206 + $0x84] sm:$0xf] %v1788
      %2061 = vst [vmem:[%s206 + $0x88] sm:$0xf] %v1789
      %2062 = vst [vmem:[%s206 + $0x8c] sm:$0xf] %v1790
      %2063 = vst [vmem:[%s206 + $0x90] sm:$0xf] %v1791
      %2064 = vst [vmem:[%s206 + $0x94] sm:$0xf] %v1792
      %2065 = vst [vmem:[%s206 + $0x98] sm:$0xf] %v1793
      %2066 = vst [vmem:[%s206 + $0x9c] sm:$0xf] %v1794
      %2067 = vst [vmem:[%s206 + $0xa0] sm:$0xf] %v1795
      %2068 = vst [vmem:[%s206 + $0xa4] sm:$0xf] %v1796
      %2069 = vst [vmem:[%s206 + $0xa8] sm:$0xf] %v1797
      %2070 = vst [vmem:[%s206 + $0xac] sm:$0xf] %v1798
      %2071 = vst [vmem:[%s206 + $0xb0] sm:$0xf] %v1799
      %2072 = vst [vmem:[%s206 + $0xb4] sm:$0xf] %v1800
      %2073 = vst [vmem:[%s206 + $0xb8] sm:$0xf] %v1801
      %2074 = vst [vmem:[%s206 + $0xbc] sm:$0xf] %v1802
      %2075 = vst [vmem:[%s206 + $0xc0] sm:$0xf] %v1803
      %2076 = vst [vmem:[%s206 + $0xc4] sm:$0xf] %v1804
      %2077 = vst [vmem:[%s206 + $0xc8] sm:$0xf] %v1805
      %2078 = vst [vmem:[%s206 + $0xcc] sm:$0xf] %v1806
      %2079 = vst [vmem:[%s206 + $0xd0] sm:$0xf] %v1807
      %2080 = vst [vmem:[%s206 + $0xd4] sm:$0xf] %v1808
      %2081 = vst [vmem:[%s206 + $0xd8] sm:$0xf] %v1809
      %2082 = vst [vmem:[%s206 + $0xdc] sm:$0xf] %v1810
      %2083 = vst [vmem:[%s206 + $0xe0] sm:$0xf] %v1811
      %2084 = vst [vmem:[%s206 + $0xe4] sm:$0xf] %v1812
      %2085 = vst [vmem:[%s206 + $0xe8] sm:$0xf] %v1813
      %2086 = vst [vmem:[%s206 + $0xec] sm:$0xf] %v1814
      %2087 = vst [vmem:[%s206 + $0xf0] sm:$0xf] %v1815
      %2088 = vst [vmem:[%s206 + $0xf4] sm:$0xf] %v1816
      %2089 = vst [vmem:[%s206 + $0xf8] sm:$0xf] %v1817
      %2090 = vst [vmem:[%s206 + $0xfc] sm:$0xf] %v1818
      %2091 = vst [vmem:[%s206 + $0x100] sm:$0xf] %v1819
      %2092 = vst [vmem:[%s206 + $0x104] sm:$0xf] %v1820
      %2093 = vst [vmem:[%s206 + $0x108] sm:$0xf] %v1821
      %2094 = vst [vmem:[%s206 + $0x10c] sm:$0xf] %v1822
      %2095 = vst [vmem:[%s206 + $0x110] sm:$0xf] %v1823
      %2096 = vst [vmem:[%s206 + $0x114] sm:$0xf] %v1824
      %2097 = vst [vmem:[%s206 + $0x118] sm:$0xf] %v1825
      %2098 = vst [vmem:[%s206 + $0x11c] sm:$0xf] %v1826
      %2099 = vst [vmem:[%s206 + $0x120] sm:$0xf] %v1827
      %2100 = vst [vmem:[%s206 + $0x124] sm:$0xf] %v1828
      %2101 = vst [vmem:[%s206 + $0x128] sm:$0xf] %v1829
      %2102 = vst [vmem:[%s206 + $0x12c] sm:$0xf] %v1830
      %2103 = vst [vmem:[%s206 + $0x130] sm:$0xf] %v1831
      %2104 = vst [vmem:[%s206 + $0x134] sm:$0xf] %v1832
      %2105 = vst [vmem:[%s206 + $0x138] sm:$0xf] %v1833
      %2106 = vst [vmem:[%s206 + $0x13c] sm:$0xf] %v1834
      %2107 = vst [vmem:[%s206 + $0x140] sm:$0xf] %v1835
      %2108 = vst [vmem:[%s206 + $0x144] sm:$0xf] %v1836
      %2109 = vst [vmem:[%s206 + $0x148] sm:$0xf] %v1837
      %2110 = vst [vmem:[%s206 + $0x14c] sm:$0xf] %v1838
      %2111 = vst [vmem:[%s206 + $0x150] sm:$0xf] %v1839
      %2112 = vst [vmem:[%s206 + $0x154] sm:$0xf] %v1840
      %2113 = vst [vmem:[%s206 + $0x158] sm:$0xf] %v1841
      %2114 = vst [vmem:[%s206 + $0x15c] sm:$0xf] %v1842
      %2115 = vst [vmem:[%s206 + $0x160] sm:$0xf] %v1843
      %2116 = vst [vmem:[%s206 + $0x164] sm:$0xf] %v1844
      %2117 = vst [vmem:[%s206 + $0x168] sm:$0xf] %v1845
      %2118 = vst [vmem:[%s206 + $0x16c] sm:$0xf] %v1846
      %2119 = vst [vmem:[%s206 + $0x170] sm:$0xf] %v1847
      %2120 = vst [vmem:[%s206 + $0x174] sm:$0xf] %v1848
      %2121 = vst [vmem:[%s206 + $0x178] sm:$0xf] %v1849
      %2122 = vst [vmem:[%s206 + $0x17c] sm:$0xf] %v1850
      %2123 = vst [vmem:[%s206 + $0x180] sm:$0xf] %v1851
      %2124 = vst [vmem:[%s206 + $0x184] sm:$0xf] %v1852
      %2125 = vst [vmem:[%s206 + $0x188] sm:$0xf] %v1853
      %2126 = vst [vmem:[%s206 + $0x18c] sm:$0xf] %v1854
      %2127 = vst [vmem:[%s206 + $0x190] sm:$0xf] %v1855
      %2128 = vst [vmem:[%s206 + $0x194] sm:$0xf] %v1856
      %2129 = vst [vmem:[%s206 + $0x198] sm:$0xf] %v1857
      %2130 = vst [vmem:[%s206 + $0x19c] sm:$0xf] %v1858
      %2131 = vst [vmem:[%s206 + $0x1a0] sm:$0xf] %v1859
      %2132 = vst [vmem:[%s206 + $0x1a4] sm:$0xf] %v1860
      %2133 = vst [vmem:[%s206 + $0x1a8] sm:$0xf] %v1861
      %2134 = vst [vmem:[%s206 + $0x1ac] sm:$0xf] %v1862
      %2135 = vst [vmem:[%s206 + $0x1b0] sm:$0xf] %v1863
      %2136 = vst [vmem:[%s206 + $0x1b4] sm:$0xf] %v1864
      %2137 = vst [vmem:[%s206 + $0x1b8] sm:$0xf] %v1865
      %2138 = vst [vmem:[%s206 + $0x1bc] sm:$0xf] %v1866
      %2139 = vst [vmem:[%s206 + $0x1c0] sm:$0xf] %v1867
      %2140 = vst [vmem:[%s206 + $0x1c4] sm:$0xf] %v1868
      %2141 = vst [vmem:[%s206 + $0x1c8] sm:$0xf] %v1869
      %2142 = vst [vmem:[%s206 + $0x1cc] sm:$0xf] %v1870
      %2143 = vst [vmem:[%s206 + $0x1d0] sm:$0xf] %v1871
      %2144 = vst [vmem:[%s206 + $0x1d4] sm:$0xf] %v1872
      %2145 = vst [vmem:[%s206 + $0x1d8] sm:$0xf] %v1873
      %2146 = vst [vmem:[%s206 + $0x1dc] sm:$0xf] %v1874
      %2147 = vst [vmem:[%s206 + $0x1e0] sm:$0xf] %v1875
      %2148 = vst [vmem:[%s206 + $0x1e4] sm:$0xf] %v1876
      %2149 = vst [vmem:[%s206 + $0x1e8] sm:$0xf] %v1877
      %2150 = vst [vmem:[%s206 + $0x1ec] sm:$0xf] %v1878
      %2151 = vst [vmem:[%s206 + $0x1f0] sm:$0xf] %v1879
      %2152 = vst [vmem:[%s206 + $0x1f4] sm:$0xf] %v1880
      %2153 = vst [vmem:[%s206 + $0x1f8] sm:$0xf] %v1881
      %2154 = vst [vmem:[%s206 + $0x1fc] sm:$0xf] %v1882
      %2155 = vst [vmem:[%s206 + $0x200] sm:$0xf] %v1883
      %2156 = vst [vmem:[%s206 + $0x204] sm:$0xf] %v1884
      %2157 = vst [vmem:[%s206 + $0x208] sm:$0xf] %v1885
      %2158 = vst [vmem:[%s206 + $0x20c] sm:$0xf] %v1886
      %2159 = vst [vmem:[%s206 + $0x210] sm:$0xf] %v1887
      %2160 = vst [vmem:[%s206 + $0x214] sm:$0xf] %v1888
      %2161 = vst [vmem:[%s206 + $0x218] sm:$0xf] %v1889
      %2162 = vst [vmem:[%s206 + $0x21c] sm:$0xf] %v1890
      %s2163 = scalar_lea.vmem %s190, 544
      %v2164 = vld [vmem:[%s2163] sm:$0xf]
      %v2165 = vld [vmem:[%s2163 + $0x4] sm:$0xf]
      %v2166 = vld [vmem:[%s2163 + $0x8] sm:$0xf]
      %v2167 = vld [vmem:[%s2163 + $0xc] sm:$0xf]
      %v2168 = vld [vmem:[%s2163 + $0x10] sm:$0xf]
      %v2169 = vld [vmem:[%s2163 + $0x14] sm:$0xf]
      %v2170 = vld [vmem:[%s2163 + $0x18] sm:$0xf]
      %v2171 = vld [vmem:[%s2163 + $0x1c] sm:$0xf]
      %v2172 = vld [vmem:[%s2163 + $0x20] sm:$0xf]
      %v2173 = vld [vmem:[%s2163 + $0x24] sm:$0xf]
      %v2174 = vld [vmem:[%s2163 + $0x28] sm:$0xf]
      %v2175 = vld [vmem:[%s2163 + $0x2c] sm:$0xf]
      %v2176 = vld [vmem:[%s2163 + $0x30] sm:$0xf]
      %v2177 = vld [vmem:[%s2163 + $0x34] sm:$0xf]
      %v2178 = vld [vmem:[%s2163 + $0x38] sm:$0xf]
      %v2179 = vld [vmem:[%s2163 + $0x3c] sm:$0xf]
      %v2180 = vld [vmem:[%s2163 + $0x40] sm:$0xf]
      %v2181 = vld [vmem:[%s2163 + $0x44] sm:$0xf]
      %v2182 = vld [vmem:[%s2163 + $0x48] sm:$0xf]
      %v2183 = vld [vmem:[%s2163 + $0x4c] sm:$0xf]
      %v2184 = vld [vmem:[%s2163 + $0x50] sm:$0xf]
      %v2185 = vld [vmem:[%s2163 + $0x54] sm:$0xf]
      %v2186 = vld [vmem:[%s2163 + $0x58] sm:$0xf]
      %v2187 = vld [vmem:[%s2163 + $0x5c] sm:$0xf]
      %v2188 = vld [vmem:[%s2163 + $0x60] sm:$0xf]
      %v2189 = vld [vmem:[%s2163 + $0x64] sm:$0xf]
      %v2190 = vld [vmem:[%s2163 + $0x68] sm:$0xf]
      %v2191 = vld [vmem:[%s2163 + $0x6c] sm:$0xf]
      %v2192 = vld [vmem:[%s2163 + $0x70] sm:$0xf]
      %v2193 = vld [vmem:[%s2163 + $0x74] sm:$0xf]
      %v2194 = vld [vmem:[%s2163 + $0x78] sm:$0xf]
      %v2195 = vld [vmem:[%s2163 + $0x7c] sm:$0xf]
      %v2196 = vld [vmem:[%s2163 + $0x80] sm:$0xf]
      %v2197 = vld [vmem:[%s2163 + $0x84] sm:$0xf]
      %v2198 = vld [vmem:[%s2163 + $0x88] sm:$0xf]
      %v2199 = vld [vmem:[%s2163 + $0x8c] sm:$0xf]
      %v2200 = vld [vmem:[%s2163 + $0x90] sm:$0xf]
      %v2201 = vld [vmem:[%s2163 + $0x94] sm:$0xf]
      %v2202 = vld [vmem:[%s2163 + $0x98] sm:$0xf]
      %v2203 = vld [vmem:[%s2163 + $0x9c] sm:$0xf]
      %v2204 = vld [vmem:[%s2163 + $0xa0] sm:$0xf]
      %v2205 = vld [vmem:[%s2163 + $0xa4] sm:$0xf]
      %v2206 = vld [vmem:[%s2163 + $0xa8] sm:$0xf]
      %v2207 = vld [vmem:[%s2163 + $0xac] sm:$0xf]
      %v2208 = vld [vmem:[%s2163 + $0xb0] sm:$0xf]
      %v2209 = vld [vmem:[%s2163 + $0xb4] sm:$0xf]
      %v2210 = vld [vmem:[%s2163 + $0xb8] sm:$0xf]
      %v2211 = vld [vmem:[%s2163 + $0xbc] sm:$0xf]
      %v2212 = vld [vmem:[%s2163 + $0xc0] sm:$0xf]
      %v2213 = vld [vmem:[%s2163 + $0xc4] sm:$0xf]
      %v2214 = vld [vmem:[%s2163 + $0xc8] sm:$0xf]
      %v2215 = vld [vmem:[%s2163 + $0xcc] sm:$0xf]
      %v2216 = vld [vmem:[%s2163 + $0xd0] sm:$0xf]
      %v2217 = vld [vmem:[%s2163 + $0xd4] sm:$0xf]
      %v2218 = vld [vmem:[%s2163 + $0xd8] sm:$0xf]
      %v2219 = vld [vmem:[%s2163 + $0xdc] sm:$0xf]
      %v2220 = vld [vmem:[%s2163 + $0xe0] sm:$0xf]
      %v2221 = vld [vmem:[%s2163 + $0xe4] sm:$0xf]
      %v2222 = vld [vmem:[%s2163 + $0xe8] sm:$0xf]
      %v2223 = vld [vmem:[%s2163 + $0xec] sm:$0xf]
      %v2224 = vld [vmem:[%s2163 + $0xf0] sm:$0xf]
      %v2225 = vld [vmem:[%s2163 + $0xf4] sm:$0xf]
      %v2226 = vld [vmem:[%s2163 + $0xf8] sm:$0xf]
      %v2227 = vld [vmem:[%s2163 + $0xfc] sm:$0xf]
      %v2228 = vld [vmem:[%s2163 + $0x100] sm:$0xf]
      %v2229 = vld [vmem:[%s2163 + $0x104] sm:$0xf]
      %v2230 = vld [vmem:[%s2163 + $0x108] sm:$0xf]
      %v2231 = vld [vmem:[%s2163 + $0x10c] sm:$0xf]
      %v2232 = vld [vmem:[%s2163 + $0x110] sm:$0xf]
      %v2233 = vld [vmem:[%s2163 + $0x114] sm:$0xf]
      %v2234 = vld [vmem:[%s2163 + $0x118] sm:$0xf]
      %v2235 = vld [vmem:[%s2163 + $0x11c] sm:$0xf]
      %v2236 = vld [vmem:[%s2163 + $0x120] sm:$0xf]
      %v2237 = vld [vmem:[%s2163 + $0x124] sm:$0xf]
      %v2238 = vld [vmem:[%s2163 + $0x128] sm:$0xf]
      %v2239 = vld [vmem:[%s2163 + $0x12c] sm:$0xf]
      %v2240 = vld [vmem:[%s2163 + $0x130] sm:$0xf]
      %v2241 = vld [vmem:[%s2163 + $0x134] sm:$0xf]
      %v2242 = vld [vmem:[%s2163 + $0x138] sm:$0xf]
      %v2243 = vld [vmem:[%s2163 + $0x13c] sm:$0xf]
      %v2244 = vld [vmem:[%s2163 + $0x140] sm:$0xf]
      %v2245 = vld [vmem:[%s2163 + $0x144] sm:$0xf]
      %v2246 = vld [vmem:[%s2163 + $0x148] sm:$0xf]
      %v2247 = vld [vmem:[%s2163 + $0x14c] sm:$0xf]
      %v2248 = vld [vmem:[%s2163 + $0x150] sm:$0xf]
      %v2249 = vld [vmem:[%s2163 + $0x154] sm:$0xf]
      %v2250 = vld [vmem:[%s2163 + $0x158] sm:$0xf]
      %v2251 = vld [vmem:[%s2163 + $0x15c] sm:$0xf]
      %v2252 = vld [vmem:[%s2163 + $0x160] sm:$0xf]
      %v2253 = vld [vmem:[%s2163 + $0x164] sm:$0xf]
      %v2254 = vld [vmem:[%s2163 + $0x168] sm:$0xf]
      %v2255 = vld [vmem:[%s2163 + $0x16c] sm:$0xf]
      %v2256 = vld [vmem:[%s2163 + $0x170] sm:$0xf]
      %v2257 = vld [vmem:[%s2163 + $0x174] sm:$0xf]
      %v2258 = vld [vmem:[%s2163 + $0x178] sm:$0xf]
      %v2259 = vld [vmem:[%s2163 + $0x17c] sm:$0xf]
      %v2260 = vld [vmem:[%s2163 + $0x180] sm:$0xf]
      %v2261 = vld [vmem:[%s2163 + $0x184] sm:$0xf]
      %v2262 = vld [vmem:[%s2163 + $0x188] sm:$0xf]
      %v2263 = vld [vmem:[%s2163 + $0x18c] sm:$0xf]
      %v2264 = vld [vmem:[%s2163 + $0x190] sm:$0xf]
      %v2265 = vld [vmem:[%s2163 + $0x194] sm:$0xf]
      %v2266 = vld [vmem:[%s2163 + $0x198] sm:$0xf]
      %v2267 = vld [vmem:[%s2163 + $0x19c] sm:$0xf]
      %v2268 = vld [vmem:[%s2163 + $0x1a0] sm:$0xf]
      %v2269 = vld [vmem:[%s2163 + $0x1a4] sm:$0xf]
      %v2270 = vld [vmem:[%s2163 + $0x1a8] sm:$0xf]
      %v2271 = vld [vmem:[%s2163 + $0x1ac] sm:$0xf]
      %v2272 = vld [vmem:[%s2163 + $0x1b0] sm:$0xf]
      %v2273 = vld [vmem:[%s2163 + $0x1b4] sm:$0xf]
      %v2274 = vld [vmem:[%s2163 + $0x1b8] sm:$0xf]
      %v2275 = vld [vmem:[%s2163 + $0x1bc] sm:$0xf]
      %v2276 = vld [vmem:[%s2163 + $0x1c0] sm:$0xf]
      %v2277 = vld [vmem:[%s2163 + $0x1c4] sm:$0xf]
      %v2278 = vld [vmem:[%s2163 + $0x1c8] sm:$0xf]
      %v2279 = vld [vmem:[%s2163 + $0x1cc] sm:$0xf]
      %v2280 = vld [vmem:[%s2163 + $0x1d0] sm:$0xf]
      %v2281 = vld [vmem:[%s2163 + $0x1d4] sm:$0xf]
      %v2282 = vld [vmem:[%s2163 + $0x1d8] sm:$0xf]
      %v2283 = vld [vmem:[%s2163 + $0x1dc] sm:$0xf]
      %v2284 = vld [vmem:[%s2163 + $0x1e0] sm:$0xf]
      %v2285 = vld [vmem:[%s2163 + $0x1e4] sm:$0xf]
      %v2286 = vld [vmem:[%s2163 + $0x1e8] sm:$0xf]
      %v2287 = vld [vmem:[%s2163 + $0x1ec] sm:$0xf]
      %v2288 = vld [vmem:[%s2163 + $0x1f0] sm:$0xf]
      %v2289 = vld [vmem:[%s2163 + $0x1f4] sm:$0xf]
      %v2290 = vld [vmem:[%s2163 + $0x1f8] sm:$0xf]
      %v2291 = vld [vmem:[%s2163 + $0x1fc] sm:$0xf]
      %v2292 = vld [vmem:[%s2163 + $0x200] sm:$0xf]
      %v2293 = vld [vmem:[%s2163 + $0x204] sm:$0xf]
      %v2294 = vld [vmem:[%s2163 + $0x208] sm:$0xf]
      %v2295 = vld [vmem:[%s2163 + $0x20c] sm:$0xf]
      %v2296 = vld [vmem:[%s2163 + $0x210] sm:$0xf]
      %v2297 = vld [vmem:[%s2163 + $0x214] sm:$0xf]
      %v2298 = vld [vmem:[%s2163 + $0x218] sm:$0xf]
      %v2299 = vld [vmem:[%s2163 + $0x21c] sm:$0xf]
      %v2300 = vld [vmem:[%s196] sm:$0xf]
      %v2301 = vld [vmem:[%s196 + $0x4] sm:$0xf]
      %v2302 = vld [vmem:[%s196 + $0x8] sm:$0xf]
      %v2303 = vld [vmem:[%s196 + $0xc] sm:$0xf]
      %v2440 = vunpack.c.l.b16 %v2164
      %v2441 = vunpack.c.l.b16 %v2165
      %v2442 = vunpack.c.l.b16 %v2166
      %v2443 = vunpack.c.l.b16 %v2167
      %v2444 = vunpack.c.l.b16 %v2168
      %v2445 = vunpack.c.l.b16 %v2169
      %v2446 = vunpack.c.l.b16 %v2170
      %v2447 = vunpack.c.l.b16 %v2171
      %v2448 = vunpack.c.l.b16 %v2172
      %v2449 = vunpack.c.l.b16 %v2173
      %v2450 = vunpack.c.l.b16 %v2174
      %v2451 = vunpack.c.l.b16 %v2175
      %v2452 = vunpack.c.l.b16 %v2176
      %v2453 = vunpack.c.l.b16 %v2177
      %v2454 = vunpack.c.l.b16 %v2178
      %v2455 = vunpack.c.l.b16 %v2179
      %v2456 = vunpack.c.l.b16 %v2180
      %v2457 = vunpack.c.l.b16 %v2181
      %v2458 = vunpack.c.l.b16 %v2182
      %v2459 = vunpack.c.l.b16 %v2183
      %v2460 = vunpack.c.l.b16 %v2184
      %v2461 = vunpack.c.l.b16 %v2185
      %v2462 = vunpack.c.l.b16 %v2186
      %v2463 = vunpack.c.l.b16 %v2187
      %v2464 = vunpack.c.l.b16 %v2188
      %v2465 = vunpack.c.l.b16 %v2189
      %v2466 = vunpack.c.l.b16 %v2190
      %v2467 = vunpack.c.l.b16 %v2191
      %v2468 = vunpack.c.l.b16 %v2192
      %v2469 = vunpack.c.l.b16 %v2193
      %v2470 = vunpack.c.l.b16 %v2194
      %v2471 = vunpack.c.l.b16 %v2195
      %v2472 = vunpack.c.l.b16 %v2196
      %v2473 = vunpack.c.l.b16 %v2197
      %v2474 = vunpack.c.l.b16 %v2198
      %v2475 = vunpack.c.l.b16 %v2199
      %v2476 = vunpack.c.l.b16 %v2200
      %v2477 = vunpack.c.l.b16 %v2201
      %v2478 = vunpack.c.l.b16 %v2202
      %v2479 = vunpack.c.l.b16 %v2203
      %v2480 = vunpack.c.l.b16 %v2204
      %v2481 = vunpack.c.l.b16 %v2205
      %v2482 = vunpack.c.l.b16 %v2206
      %v2483 = vunpack.c.l.b16 %v2207
      %v2484 = vunpack.c.l.b16 %v2208
      %v2485 = vunpack.c.l.b16 %v2209
      %v2486 = vunpack.c.l.b16 %v2210
      %v2487 = vunpack.c.l.b16 %v2211
      %v2488 = vunpack.c.l.b16 %v2212
      %v2489 = vunpack.c.l.b16 %v2213
      %v2490 = vunpack.c.l.b16 %v2214
      %v2491 = vunpack.c.l.b16 %v2215
      %v2492 = vunpack.c.l.b16 %v2216
      %v2493 = vunpack.c.l.b16 %v2217
      %v2494 = vunpack.c.l.b16 %v2218
      %v2495 = vunpack.c.l.b16 %v2219
      %v2496 = vunpack.c.l.b16 %v2220
      %v2497 = vunpack.c.l.b16 %v2221
      %v2498 = vunpack.c.l.b16 %v2222
      %v2499 = vunpack.c.l.b16 %v2223
      %v2500 = vunpack.c.l.b16 %v2224
      %v2501 = vunpack.c.l.b16 %v2225
      %v2502 = vunpack.c.l.b16 %v2226
      %v2503 = vunpack.c.l.b16 %v2227
      %v2504 = vunpack.c.l.b16 %v2228
      %v2505 = vunpack.c.l.b16 %v2229
      %v2506 = vunpack.c.l.b16 %v2230
      %v2507 = vunpack.c.l.b16 %v2231
      %v2508 = vunpack.c.l.b16 %v2232
      %v2509 = vunpack.c.l.b16 %v2233
      %v2510 = vunpack.c.l.b16 %v2234
      %v2511 = vunpack.c.l.b16 %v2235
      %v2512 = vunpack.c.l.b16 %v2236
      %v2513 = vunpack.c.l.b16 %v2237
      %v2514 = vunpack.c.l.b16 %v2238
      %v2515 = vunpack.c.l.b16 %v2239
      %v2516 = vunpack.c.l.b16 %v2240
      %v2517 = vunpack.c.l.b16 %v2241
      %v2518 = vunpack.c.l.b16 %v2242
      %v2519 = vunpack.c.l.b16 %v2243
      %v2520 = vunpack.c.l.b16 %v2244
      %v2521 = vunpack.c.l.b16 %v2245
      %v2522 = vunpack.c.l.b16 %v2246
      %v2523 = vunpack.c.l.b16 %v2247
      %v2524 = vunpack.c.l.b16 %v2248
      %v2525 = vunpack.c.l.b16 %v2249
      %v2526 = vunpack.c.l.b16 %v2250
      %v2527 = vunpack.c.l.b16 %v2251
      %v2528 = vunpack.c.l.b16 %v2252
      %v2529 = vunpack.c.l.b16 %v2253
      %v2530 = vunpack.c.l.b16 %v2254
      %v2531 = vunpack.c.l.b16 %v2255
      %v2532 = vunpack.c.l.b16 %v2256
      %v2533 = vunpack.c.l.b16 %v2257
      %v2534 = vunpack.c.l.b16 %v2258
      %v2535 = vunpack.c.l.b16 %v2259
      %v2536 = vunpack.c.l.b16 %v2260
      %v2537 = vunpack.c.l.b16 %v2261
      %v2538 = vunpack.c.l.b16 %v2262
      %v2539 = vunpack.c.l.b16 %v2263
      %v2540 = vunpack.c.l.b16 %v2264
      %v2541 = vunpack.c.l.b16 %v2265
      %v2542 = vunpack.c.l.b16 %v2266
      %v2543 = vunpack.c.l.b16 %v2267
      %v2544 = vunpack.c.l.b16 %v2268
      %v2545 = vunpack.c.l.b16 %v2269
      %v2546 = vunpack.c.l.b16 %v2270
      %v2547 = vunpack.c.l.b16 %v2271
      %v2548 = vunpack.c.l.b16 %v2272
      %v2549 = vunpack.c.l.b16 %v2273
      %v2550 = vunpack.c.l.b16 %v2274
      %v2551 = vunpack.c.l.b16 %v2275
      %v2552 = vunpack.c.l.b16 %v2276
      %v2553 = vunpack.c.l.b16 %v2277
      %v2554 = vunpack.c.l.b16 %v2278
      %v2555 = vunpack.c.l.b16 %v2279
      %v2556 = vunpack.c.l.b16 %v2280
      %v2557 = vunpack.c.l.b16 %v2281
      %v2558 = vunpack.c.l.b16 %v2282
      %v2559 = vunpack.c.l.b16 %v2283
      %v2560 = vunpack.c.l.b16 %v2284
      %v2561 = vunpack.c.l.b16 %v2285
      %v2562 = vunpack.c.l.b16 %v2286
      %v2563 = vunpack.c.l.b16 %v2287
      %v2564 = vunpack.c.l.b16 %v2288
      %v2565 = vunpack.c.l.b16 %v2289
      %v2566 = vunpack.c.l.b16 %v2290
      %v2567 = vunpack.c.l.b16 %v2291
      %v2568 = vunpack.c.l.b16 %v2292
      %v2569 = vunpack.c.l.b16 %v2293
      %v2570 = vunpack.c.l.b16 %v2294
      %v2571 = vunpack.c.l.b16 %v2295
      %v2572 = vunpack.c.l.b16 %v2296
      %v2573 = vunpack.c.l.b16 %v2297
      %v2574 = vunpack.c.l.b16 %v2298
      %v2575 = vunpack.c.l.b16 %v2299
      %v2576 = vpack.c.b16 %v2441, %v2440
      %v2577 = vpack.c.b16 %v2443, %v2442
      %v2578 = vpack.c.b16 %v2445, %v2444
      %v2579 = vpack.c.b16 %v2447, %v2446
      %v2580 = vpack.c.b16 %v2449, %v2448
      %v2581 = vpack.c.b16 %v2451, %v2450
      %v2582 = vpack.c.b16 %v2453, %v2452
      %v2583 = vpack.c.b16 %v2455, %v2454
      %v2584 = vpack.c.b16 %v2457, %v2456
      %v2585 = vpack.c.b16 %v2459, %v2458
      %v2586 = vpack.c.b16 %v2461, %v2460
      %v2587 = vpack.c.b16 %v2463, %v2462
      %v2588 = vpack.c.b16 %v2465, %v2464
      %v2589 = vpack.c.b16 %v2467, %v2466
      %v2590 = vpack.c.b16 %v2469, %v2468
      %v2591 = vpack.c.b16 %v2471, %v2470
      %v2592 = vpack.c.b16 %v2473, %v2472
      %v2593 = vpack.c.b16 %v2475, %v2474
      %v2594 = vpack.c.b16 %v2477, %v2476
      %v2595 = vpack.c.b16 %v2479, %v2478
      %v2596 = vpack.c.b16 %v2481, %v2480
      %v2597 = vpack.c.b16 %v2483, %v2482
      %v2598 = vpack.c.b16 %v2485, %v2484
      %v2599 = vpack.c.b16 %v2487, %v2486
      %v2600 = vpack.c.b16 %v2489, %v2488
      %v2601 = vpack.c.b16 %v2491, %v2490
      %v2602 = vpack.c.b16 %v2493, %v2492
      %v2603 = vpack.c.b16 %v2495, %v2494
      %v2604 = vpack.c.b16 %v2497, %v2496
      %v2605 = vpack.c.b16 %v2499, %v2498
      %v2606 = vpack.c.b16 %v2501, %v2500
      %v2607 = vpack.c.b16 %v2503, %v2502
      %v2608 = vpack.c.b16 %v2505, %v2504
      %v2609 = vpack.c.b16 %v2507, %v2506
      %v2610 = vpack.c.b16 %v2509, %v2508
      %v2611 = vpack.c.b16 %v2511, %v2510
      %v2612 = vpack.c.b16 %v2513, %v2512
      %v2613 = vpack.c.b16 %v2515, %v2514
      %v2614 = vpack.c.b16 %v2517, %v2516
      %v2615 = vpack.c.b16 %v2519, %v2518
      %v2616 = vpack.c.b16 %v2521, %v2520
      %v2617 = vpack.c.b16 %v2523, %v2522
      %v2618 = vpack.c.b16 %v2525, %v2524
      %v2619 = vpack.c.b16 %v2527, %v2526
      %v2620 = vpack.c.b16 %v2529, %v2528
      %v2621 = vpack.c.b16 %v2531, %v2530
      %v2622 = vpack.c.b16 %v2533, %v2532
      %v2623 = vpack.c.b16 %v2535, %v2534
      %v2624 = vpack.c.b16 %v2537, %v2536
      %v2625 = vpack.c.b16 %v2539, %v2538
      %v2626 = vpack.c.b16 %v2541, %v2540
      %v2627 = vpack.c.b16 %v2543, %v2542
      %v2628 = vpack.c.b16 %v2545, %v2544
      %v2629 = vpack.c.b16 %v2547, %v2546
      %v2630 = vpack.c.b16 %v2549, %v2548
      %v2631 = vpack.c.b16 %v2551, %v2550
      %v2632 = vpack.c.b16 %v2553, %v2552
      %v2633 = vpack.c.b16 %v2555, %v2554
      %v2634 = vpack.c.b16 %v2557, %v2556
      %v2635 = vpack.c.b16 %v2559, %v2558
      %v2636 = vpack.c.b16 %v2561, %v2560
      %v2637 = vpack.c.b16 %v2563, %v2562
      %v2638 = vpack.c.b16 %v2565, %v2564
      %v2639 = vpack.c.b16 %v2567, %v2566
      %v2640 = vpack.c.b16 %v2569, %v2568
      %v2641 = vpack.c.b16 %v2571, %v2570
      %v2642 = vpack.c.b16 %v2573, %v2572
      %v2643 = vpack.c.b16 %v2575, %v2574
      %v2648 = vunpack.c.l.b16 %v2300
      %v2649 = vunpack.c.l.b16 %v2301
      %v2650 = vunpack.c.l.b16 %v2302
      %v2651 = vunpack.c.l.b16 %v2303
      %v2652 = vpack.c.b16 %v2649, %v2648
      %v2653 = vpack.c.b16 %v2651, %v2650
      %v2657 = vsel %vm701, %v2576, 0
      %v2660 = vsel %vm701, %v2577, 0
      %v2663 = vsel %vm701, %v2578, 0
      %v2666 = vsel %vm701, %v2579, 0
      %v2669 = vsel %vm701, %v2580, 0
      %v2672 = vsel %vm701, %v2581, 0
      %v2675 = vsel %vm701, %v2582, 0
      %v2678 = vsel %vm701, %v2583, 0
      %v2681 = vsel %vm701, %v2584, 0
      %v2684 = vsel %vm701, %v2585, 0
      %v2687 = vsel %vm701, %v2586, 0
      %v2690 = vsel %vm701, %v2587, 0
      %v2693 = vsel %vm701, %v2588, 0
      %v2696 = vsel %vm701, %v2589, 0
      %v2699 = vsel %vm701, %v2590, 0
      %v2702 = vsel %vm701, %v2591, 0
      %v2705 = vsel %vm701, %v2592, 0
      %v2708 = vsel %vm701, %v2593, 0
      %v2711 = vsel %vm701, %v2594, 0
      %v2714 = vsel %vm701, %v2595, 0
      %v2717 = vsel %vm701, %v2596, 0
      %v2720 = vsel %vm701, %v2597, 0
      %v2723 = vsel %vm701, %v2598, 0
      %v2726 = vsel %vm701, %v2599, 0
      %v2729 = vsel %vm701, %v2600, 0
      %v2732 = vsel %vm701, %v2601, 0
      %v2735 = vsel %vm701, %v2602, 0
      %v2738 = vsel %vm701, %v2603, 0
      %v2741 = vsel %vm701, %v2604, 0
      %v2744 = vsel %vm701, %v2605, 0
      %v2747 = vsel %vm701, %v2606, 0
      %v2750 = vsel %vm701, %v2607, 0
      %v2753 = vsel %vm701, %v2608, 0
      %v2756 = vsel %vm701, %v2609, 0
      %v2759 = vsel %vm701, %v2610, 0
      %v2762 = vsel %vm701, %v2611, 0
      %v2765 = vsel %vm701, %v2612, 0
      %v2768 = vsel %vm701, %v2613, 0
      %v2771 = vsel %vm701, %v2614, 0
      %v2774 = vsel %vm701, %v2615, 0
      %v2777 = vsel %vm701, %v2616, 0
      %v2780 = vsel %vm701, %v2617, 0
      %v2783 = vsel %vm701, %v2618, 0
      %v2786 = vsel %vm701, %v2619, 0
      %v2789 = vsel %vm701, %v2620, 0
      %v2792 = vsel %vm701, %v2621, 0
      %v2795 = vsel %vm701, %v2622, 0
      %v2798 = vsel %vm701, %v2623, 0
      %v2801 = vsel %vm701, %v2624, 0
      %v2804 = vsel %vm701, %v2625, 0
      %v2807 = vsel %vm701, %v2626, 0
      %v2810 = vsel %vm701, %v2627, 0
      %v2813 = vsel %vm701, %v2628, 0
      %v2816 = vsel %vm701, %v2629, 0
      %v2819 = vsel %vm701, %v2630, 0
      %v2822 = vsel %vm701, %v2631, 0
      %v2825 = vsel %vm701, %v2632, 0
      %v2828 = vsel %vm701, %v2633, 0
      %v2831 = vsel %vm701, %v2634, 0
      %v2834 = vsel %vm701, %v2635, 0
      %v2837 = vsel %vm701, %v2636, 0
      %v2840 = vsel %vm701, %v2637, 0
      %v2843 = vsel %vm701, %v2638, 0
      %v2846 = vsel %vm701, %v2639, 0
      %v2849 = vsel %vm701, %v2640, 0
      %v2852 = vsel %vm701, %v2641, 0
      %v2855 = vsel %vm701, %v2642, 0
      %v2858 = vsel %vm701, %v2643, 0
      %2860 = vmatprep.subr.bf16.mxu0 0
      %2861 = vmatpush1.bf16.msra.mxu0 %v2652
      %2862 = vmatprep.subr.bf16.mxu0 0
      %2863 = vmatpush1.bf16.msra.mxu0 %v2653
      %2864 = vmatprep.subr.bf16.mxu0 0
      %2865 = vmatpush1.bf16.msra.mxu0 0
      %2866 = vmatprep.subr.bf16.mxu0 0
      %2867 = vmatpush1.bf16.msra.mxu0 0
      %2868 = vmatprep.subr.bf16.mxu0 0
      %2869 = vmatpush1.bf16.msra.mxu0 0
      %2870 = vmatprep.subr.bf16.mxu0 0
      %2871 = vmatpush1.bf16.msra.mxu0 0
      %2872 = vmatprep.subr.bf16.mxu0 0
      %2873 = vmatpush1.bf16.msra.mxu0 0
      %2874 = vmatprep.subr.bf16.mxu0 0
      %2875 = vmatpush1.bf16.msra.mxu0 0
      %2876 = vmatprep.subr.bf16.mxu0 0
      %2877 = vmatpush1.bf16.msra.mxu0 0
      %2878 = vmatprep.subr.bf16.mxu0 0
      %2879 = vmatpush1.bf16.msra.mxu0 0
      %2880 = vmatprep.subr.bf16.mxu0 0
      %2881 = vmatpush1.bf16.msra.mxu0 0
      %2882 = vmatprep.subr.bf16.mxu0 0
      %2883 = vmatpush1.bf16.msra.mxu0 0
      %2884 = vmatprep.subr.bf16.mxu0 0
      %2885 = vmatpush1.bf16.msra.mxu0 0
      %2886 = vmatprep.subr.bf16.mxu0 0
      %2887 = vmatpush1.bf16.msra.mxu0 0
      %2888 = vmatprep.subr.bf16.mxu0 0
      %2889 = vmatpush1.bf16.msra.mxu0 0
      %2890 = vmatprep.subr.bf16.mxu0 0
      %2891 = vmatpush1.bf16.msra.mxu0 0
      %2892 = vmatprep.mubr.bf16.mxu0 0
      %2893 = vmatmul.mubr.bf16.gmra.mrb[0].mxu0 %v2657
      %v2894 = vpop.f32.mrb[0].mxu0
      %v2895 = vadd.f32 0.0, %v2894
      %v2896 = vpop.f32.mrb[0].mxu0
      %v2897 = vpop.f32.mrb[0].mxu0
      %v2898 = vadd.f32 0.0, %v2897
      %v2899 = vpop.f32.mrb[0].mxu0
      %2900 = vmatprep.mubr.bf16.mxu0 0
      %2901 = vmatmul.mubr.bf16.gmra.mrb[0].mxu0 %v2660
      %v2902 = vpop.f32.mrb[0].mxu0
      %v2903 = vadd.f32 0.0, %v2902
      %v2904 = vpop.f32.mrb[0].mxu0
      %v2905 = vpop.f32.mrb[0].mxu0
      %v2906 = vadd.f32 0.0, %v2905
      %v2907 = vpop.f32.mrb[0].mxu0
      %2908 = vmatprep.mubr.bf16.mxu0 0
      %2909 = vmatmul.mubr.bf16.gmra.mrb[0].mxu0 %v2663
      %v2910 = vpop.f32.mrb[0].mxu0
      %v2911 = vadd.f32 0.0, %v2910
      %v2912 = vpop.f32.mrb[0].mxu0
      %v2913 = vpop.f32.mrb[0].mxu0
      %v2914 = vadd.f32 0.0, %v2913
      %v2915 = vpop.f32.mrb[0].mxu0
      %2916 = vmatprep.mubr.bf16.mxu0 0
      %2917 = vmatmul.mubr.bf16.gmra.mrb[0].mxu0 %v2666
      %v2918 = vpop.f32.mrb[0].mxu0
      %v2919 = vadd.f32 0.0, %v2918
      %v2920 = vpop.f32.mrb[0].mxu0
      %v2921 = vpop.f32.mrb[0].mxu0
      %v2922 = vadd.f32 0.0, %v2921
      %v2923 = vpop.f32.mrb[0].mxu0
      %2924 = vmatprep.mubr.bf16.mxu0 0
      %2925 = vmatmul.mubr.bf16.gmra.mrb[0].mxu0 %v2669
      %v2926 = vpop.f32.mrb[0].mxu0
      %v2927 = vadd.f32 0.0, %v2926
      %v2928 = vpop.f32.mrb[0].mxu0
      %v2929 = vpop.f32.mrb[0].mxu0
      %v2930 = vadd.f32 0.0, %v2929
      %v2931 = vpop.f32.mrb[0].mxu0
      %2932 = vmatprep.mubr.bf16.mxu0 0
      %2933 = vmatmul.mubr.bf16.gmra.mrb[0].mxu0 %v2672
      %v2934 = vpop.f32.mrb[0].mxu0
      %v2935 = vadd.f32 0.0, %v2934
      %v2936 = vpop.f32.mrb[0].mxu0
      %v2937 = vpop.f32.mrb[0].mxu0
      %v2938 = vadd.f32 0.0, %v2937
      %v2939 = vpop.f32.mrb[0].mxu0
      %2940 = vmatprep.mubr.bf16.mxu0 0
      %2941 = vmatmul.mubr.bf16.gmra.mrb[0].mxu0 %v2675
      %v2942 = vpop.f32.mrb[0].mxu0
      %v2943 = vadd.f32 0.0, %v2942
      %v2944 = vpop.f32.mrb[0].mxu0
      %v2945 = vpop.f32.mrb[0].mxu0
      %v2946 = vadd.f32 0.0, %v2945
      %v2947 = vpop.f32.mrb[0].mxu0
      %2948 = vmatprep.mubr.bf16.mxu0 0
      %2949 = vmatmul.mubr.bf16.gmra.mrb[0].mxu0 %v2678
      %v2950 = vpop.f32.mrb[0].mxu0
      %v2951 = vadd.f32 0.0, %v2950
      %v2952 = vpop.f32.mrb[0].mxu0
      %v2953 = vpop.f32.mrb[0].mxu0
      %v2954 = vadd.f32 0.0, %v2953
      %v2955 = vpop.f32.mrb[0].mxu0
      %2956 = vmatprep.mubr.bf16.mxu0 0
      %2957 = vmatmul.mubr.bf16.gmra.mrb[0].mxu0 %v2681
      %v2958 = vpop.f32.mrb[0].mxu0
      %v2959 = vadd.f32 0.0, %v2958
      %v2960 = vpop.f32.mrb[0].mxu0
      %v2961 = vpop.f32.mrb[0].mxu0
      %v2962 = vadd.f32 0.0, %v2961
      %v2963 = vpop.f32.mrb[0].mxu0
      %2964 = vmatprep.mubr.bf16.mxu0 0
      %2965 = vmatmul.mubr.bf16.gmra.mrb[0].mxu0 %v2684
      %v2966 = vpop.f32.mrb[0].mxu0
      %v2967 = vadd.f32 0.0, %v2966
      %v2968 = vpop.f32.mrb[0].mxu0
      %v2969 = vpop.f32.mrb[0].mxu0
      %v2970 = vadd.f32 0.0, %v2969
      %v2971 = vpop.f32.mrb[0].mxu0
      %2972 = vmatprep.mubr.bf16.mxu0 0
      %2973 = vmatmul.mubr.bf16.gmra.mrb[0].mxu0 %v2687
      %v2974 = vpop.f32.mrb[0].mxu0
      %v2975 = vadd.f32 0.0, %v2974
      %v2976 = vpop.f32.mrb[0].mxu0
      %v2977 = vpop.f32.mrb[0].mxu0
      %v2978 = vadd.f32 0.0, %v2977
      %v2979 = vpop.f32.mrb[0].mxu0
      %2980 = vmatprep.mubr.bf16.mxu0 0
      %2981 = vmatmul.mubr.bf16.gmra.mrb[0].mxu0 %v2690
      %v2982 = vpop.f32.mrb[0].mxu0
      %v2983 = vadd.f32 0.0, %v2982
      %v2984 = vpop.f32.mrb[0].mxu0
      %v2985 = vpop.f32.mrb[0].mxu0
      %v2986 = vadd.f32 0.0, %v2985
      %v2987 = vpop.f32.mrb[0].mxu0
      %2988 = vmatprep.mubr.bf16.mxu0 0
      %2989 = vmatmul.mubr.bf16.gmra.mrb[0].mxu0 %v2693
      %v2990 = vpop.f32.mrb[0].mxu0
      %v2991 = vadd.f32 0.0, %v2990
      %v2992 = vpop.f32.mrb[0].mxu0
      %v2993 = vpop.f32.mrb[0].mxu0
      %v2994 = vadd.f32 0.0, %v2993
      %v2995 = vpop.f32.mrb[0].mxu0
      %2996 = vmatprep.mubr.bf16.mxu0 0
      %2997 = vmatmul.mubr.bf16.gmra.mrb[0].mxu0 %v2696
      %v2998 = vpop.f32.mrb[0].mxu0
      %v2999 = vadd.f32 0.0, %v2998
      %v3000 = vpop.f32.mrb[0].mxu0
      %v3001 = vpop.f32.mrb[0].mxu0
      %v3002 = vadd.f32 0.0, %v3001
      %v3003 = vpop.f32.mrb[0].mxu0
      %3004 = vmatprep.mubr.bf16.mxu0 0
      %3005 = vmatmul.mubr.bf16.gmra.mrb[0].mxu0 %v2699
      %v3006 = vpop.f32.mrb[0].mxu0
      %v3007 = vadd.f32 0.0, %v3006
      %v3008 = vpop.f32.mrb[0].mxu0
      %v3009 = vpop.f32.mrb[0].mxu0
      %v3010 = vadd.f32 0.0, %v3009
      %v3011 = vpop.f32.mrb[0].mxu0
      %3012 = vmatprep.mubr.bf16.mxu0 0
      %3013 = vmatmul.mubr.bf16.gmra.mrb[0].mxu0 %v2702
      %v3014 = vpop.f32.mrb[0].mxu0
      %v3015 = vadd.f32 0.0, %v3014
      %v3016 = vpop.f32.mrb[0].mxu0
      %v3017 = vpop.f32.mrb[0].mxu0
      %v3018 = vadd.f32 0.0, %v3017
      %v3019 = vpop.f32.mrb[0].mxu0
      %3020 = vmatprep.mubr.bf16.mxu0 0
      %3021 = vmatmul.mubr.bf16.gmra.mrb[0].mxu0 %v2705
      %v3022 = vpop.f32.mrb[0].mxu0
      %v3023 = vadd.f32 0.0, %v3022
      %v3024 = vpop.f32.mrb[0].mxu0
      %v3025 = vpop.f32.mrb[0].mxu0
      %v3026 = vadd.f32 0.0, %v3025
      %v3027 = vpop.f32.mrb[0].mxu0
      %3028 = vmatprep.mubr.bf16.mxu0 0
      %3029 = vmatmul.mubr.bf16.gmra.mrb[0].mxu0 %v2708
      %v3030 = vpop.f32.mrb[0].mxu0
      %v3031 = vadd.f32 0.0, %v3030
      %v3032 = vpop.f32.mrb[0].mxu0
      %v3033 = vpop.f32.mrb[0].mxu0
      %v3034 = vadd.f32 0.0, %v3033
      %v3035 = vpop.f32.mrb[0].mxu0
      %3036 = vmatprep.mubr.bf16.mxu0 0
      %3037 = vmatmul.mubr.bf16.gmra.mrb[0].mxu0 %v2711
      %v3038 = vpop.f32.mrb[0].mxu0
      %v3039 = vadd.f32 0.0, %v3038
      %v3040 = vpop.f32.mrb[0].mxu0
      %v3041 = vpop.f32.mrb[0].mxu0
      %v3042 = vadd.f32 0.0, %v3041
      %v3043 = vpop.f32.mrb[0].mxu0
      %3044 = vmatprep.mubr.bf16.mxu0 0
      %3045 = vmatmul.mubr.bf16.gmra.mrb[0].mxu0 %v2714
      %v3046 = vpop.f32.mrb[0].mxu0
      %v3047 = vadd.f32 0.0, %v3046
      %v3048 = vpop.f32.mrb[0].mxu0
      %v3049 = vpop.f32.mrb[0].mxu0
      %v3050 = vadd.f32 0.0, %v3049
      %v3051 = vpop.f32.mrb[0].mxu0
      %3052 = vmatprep.mubr.bf16.mxu0 0
      %3053 = vmatmul.mubr.bf16.gmra.mrb[0].mxu0 %v2717
      %v3054 = vpop.f32.mrb[0].mxu0
      %v3055 = vadd.f32 0.0, %v3054
      %v3056 = vpop.f32.mrb[0].mxu0
      %v3057 = vpop.f32.mrb[0].mxu0
      %v3058 = vadd.f32 0.0, %v3057
      %v3059 = vpop.f32.mrb[0].mxu0
      %3060 = vmatprep.mubr.bf16.mxu0 0
      %3061 = vmatmul.mubr.bf16.gmra.mrb[0].mxu0 %v2720
      %v3062 = vpop.f32.mrb[0].mxu0
      %v3063 = vadd.f32 0.0, %v3062
      %v3064 = vpop.f32.mrb[0].mxu0
      %v3065 = vpop.f32.mrb[0].mxu0
      %v3066 = vadd.f32 0.0, %v3065
      %v3067 = vpop.f32.mrb[0].mxu0
      %3068 = vmatprep.mubr.bf16.mxu0 0
      %3069 = vmatmul.mubr.bf16.gmra.mrb[0].mxu0 %v2723
      %v3070 = vpop.f32.mrb[0].mxu0
      %v3071 = vadd.f32 0.0, %v3070
      %v3072 = vpop.f32.mrb[0].mxu0
      %v3073 = vpop.f32.mrb[0].mxu0
      %v3074 = vadd.f32 0.0, %v3073
      %v3075 = vpop.f32.mrb[0].mxu0
      %3076 = vmatprep.mubr.bf16.mxu0 0
      %3077 = vmatmul.mubr.bf16.gmra.mrb[0].mxu0 %v2726
      %v3078 = vpop.f32.mrb[0].mxu0
      %v3079 = vadd.f32 0.0, %v3078
      %v3080 = vpop.f32.mrb[0].mxu0
      %v3081 = vpop.f32.mrb[0].mxu0
      %v3082 = vadd.f32 0.0, %v3081
      %v3083 = vpop.f32.mrb[0].mxu0
      %3084 = vmatprep.mubr.bf16.mxu0 0
      %3085 = vmatmul.mubr.bf16.gmra.mrb[0].mxu0 %v2729
      %v3086 = vpop.f32.mrb[0].mxu0
      %v3087 = vadd.f32 0.0, %v3086
      %v3088 = vpop.f32.mrb[0].mxu0
      %v3089 = vpop.f32.mrb[0].mxu0
      %v3090 = vadd.f32 0.0, %v3089
      %v3091 = vpop.f32.mrb[0].mxu0
      %3092 = vmatprep.mubr.bf16.mxu0 0
      %3093 = vmatmul.mubr.bf16.gmra.mrb[0].mxu0 %v2732
      %v3094 = vpop.f32.mrb[0].mxu0
      %v3095 = vadd.f32 0.0, %v3094
      %v3096 = vpop.f32.mrb[0].mxu0
      %v3097 = vpop.f32.mrb[0].mxu0
      %v3098 = vadd.f32 0.0, %v3097
      %v3099 = vpop.f32.mrb[0].mxu0
      %3100 = vmatprep.mubr.bf16.mxu0 0
      %3101 = vmatmul.mubr.bf16.gmra.mrb[0].mxu0 %v2735
      %v3102 = vpop.f32.mrb[0].mxu0
      %v3103 = vadd.f32 0.0, %v3102
      %v3104 = vpop.f32.mrb[0].mxu0
      %v3105 = vpop.f32.mrb[0].mxu0
      %v3106 = vadd.f32 0.0, %v3105
      %v3107 = vpop.f32.mrb[0].mxu0
      %3108 = vmatprep.mubr.bf16.mxu0 0
      %3109 = vmatmul.mubr.bf16.gmra.mrb[0].mxu0 %v2738
      %v3110 = vpop.f32.mrb[0].mxu0
      %v3111 = vadd.f32 0.0, %v3110
      %v3112 = vpop.f32.mrb[0].mxu0
      %v3113 = vpop.f32.mrb[0].mxu0
      %v3114 = vadd.f32 0.0, %v3113
      %v3115 = vpop.f32.mrb[0].mxu0
      %3116 = vmatprep.mubr.bf16.mxu0 0
      %3117 = vmatmul.mubr.bf16.gmra.mrb[0].mxu0 %v2741
      %v3118 = vpop.f32.mrb[0].mxu0
      %v3119 = vadd.f32 0.0, %v3118
      %v3120 = vpop.f32.mrb[0].mxu0
      %v3121 = vpop.f32.mrb[0].mxu0
      %v3122 = vadd.f32 0.0, %v3121
      %v3123 = vpop.f32.mrb[0].mxu0
      %3124 = vmatprep.mubr.bf16.mxu0 0
      %3125 = vmatmul.mubr.bf16.gmra.mrb[0].mxu0 %v2744
      %v3126 = vpop.f32.mrb[0].mxu0
      %v3127 = vadd.f32 0.0, %v3126
      %v3128 = vpop.f32.mrb[0].mxu0
      %v3129 = vpop.f32.mrb[0].mxu0
      %v3130 = vadd.f32 0.0, %v3129
      %v3131 = vpop.f32.mrb[0].mxu0
      %3132 = vmatprep.mubr.bf16.mxu0 0
      %3133 = vmatmul.mubr.bf16.gmra.mrb[0].mxu0 %v2747
      %v3134 = vpop.f32.mrb[0].mxu0
      %v3135 = vadd.f32 0.0, %v3134
      %v3136 = vpop.f32.mrb[0].mxu0
      %v3137 = vpop.f32.mrb[0].mxu0
      %v3138 = vadd.f32 0.0, %v3137
      %v3139 = vpop.f32.mrb[0].mxu0
      %3140 = vmatprep.mubr.bf16.mxu0 0
      %3141 = vmatmul.mubr.bf16.gmra.mrb[0].mxu0 %v2750
      %v3142 = vpop.f32.mrb[0].mxu0
      %v3143 = vadd.f32 0.0, %v3142
      %v3144 = vpop.f32.mrb[0].mxu0
      %v3145 = vpop.f32.mrb[0].mxu0
      %v3146 = vadd.f32 0.0, %v3145
      %v3147 = vpop.f32.mrb[0].mxu0
      %3148 = vmatprep.mubr.bf16.mxu0 0
      %3149 = vmatmul.mubr.bf16.gmra.mrb[0].mxu0 %v2753
      %v3150 = vpop.f32.mrb[0].mxu0
      %v3151 = vadd.f32 0.0, %v3150
      %v3152 = vpop.f32.mrb[0].mxu0
      %v3153 = vpop.f32.mrb[0].mxu0
      %v3154 = vadd.f32 0.0, %v3153
      %v3155 = vpop.f32.mrb[0].mxu0
      %3156 = vmatprep.mubr.bf16.mxu0 0
      %3157 = vmatmul.mubr.bf16.gmra.mrb[0].mxu0 %v2756
      %v3158 = vpop.f32.mrb[0].mxu0
      %v3159 = vadd.f32 0.0, %v3158
      %v3160 = vpop.f32.mrb[0].mxu0
      %v3161 = vpop.f32.mrb[0].mxu0
      %v3162 = vadd.f32 0.0, %v3161
      %v3163 = vpop.f32.mrb[0].mxu0
      %3164 = vmatprep.mubr.bf16.mxu0 0
      %3165 = vmatmul.mubr.bf16.gmra.mrb[0].mxu0 %v2759
      %v3166 = vpop.f32.mrb[0].mxu0
      %v3167 = vadd.f32 0.0, %v3166
      %v3168 = vpop.f32.mrb[0].mxu0
      %v3169 = vpop.f32.mrb[0].mxu0
      %v3170 = vadd.f32 0.0, %v3169
      %v3171 = vpop.f32.mrb[0].mxu0
      %3172 = vmatprep.mubr.bf16.mxu0 0
      %3173 = vmatmul.mubr.bf16.gmra.mrb[0].mxu0 %v2762
      %v3174 = vpop.f32.mrb[0].mxu0
      %v3175 = vadd.f32 0.0, %v3174
      %v3176 = vpop.f32.mrb[0].mxu0
      %v3177 = vpop.f32.mrb[0].mxu0
      %v3178 = vadd.f32 0.0, %v3177
      %v3179 = vpop.f32.mrb[0].mxu0
      %3180 = vmatprep.mubr.bf16.mxu0 0
      %3181 = vmatmul.mubr.bf16.gmra.mrb[0].mxu0 %v2765
      %v3182 = vpop.f32.mrb[0].mxu0
      %v3183 = vadd.f32 0.0, %v3182
      %v3184 = vpop.f32.mrb[0].mxu0
      %v3185 = vpop.f32.mrb[0].mxu0
      %v3186 = vadd.f32 0.0, %v3185
      %v3187 = vpop.f32.mrb[0].mxu0
      %3188 = vmatprep.mubr.bf16.mxu0 0
      %3189 = vmatmul.mubr.bf16.gmra.mrb[0].mxu0 %v2768
      %v3190 = vpop.f32.mrb[0].mxu0
      %v3191 = vadd.f32 0.0, %v3190
      %v3192 = vpop.f32.mrb[0].mxu0
      %v3193 = vpop.f32.mrb[0].mxu0
      %v3194 = vadd.f32 0.0, %v3193
      %v3195 = vpop.f32.mrb[0].mxu0
      %3196 = vmatprep.mubr.bf16.mxu0 0
      %3197 = vmatmul.mubr.bf16.gmra.mrb[0].mxu0 %v2771
      %v3198 = vpop.f32.mrb[0].mxu0
      %v3199 = vadd.f32 0.0, %v3198
      %v3200 = vpop.f32.mrb[0].mxu0
      %v3201 = vpop.f32.mrb[0].mxu0
      %v3202 = vadd.f32 0.0, %v3201
      %v3203 = vpop.f32.mrb[0].mxu0
      %3204 = vmatprep.mubr.bf16.mxu0 0
      %3205 = vmatmul.mubr.bf16.gmra.mrb[0].mxu0 %v2774
      %v3206 = vpop.f32.mrb[0].mxu0
      %v3207 = vadd.f32 0.0, %v3206
      %v3208 = vpop.f32.mrb[0].mxu0
      %v3209 = vpop.f32.mrb[0].mxu0
      %v3210 = vadd.f32 0.0, %v3209
      %v3211 = vpop.f32.mrb[0].mxu0
      %3212 = vmatprep.mubr.bf16.mxu0 0
      %3213 = vmatmul.mubr.bf16.gmra.mrb[0].mxu0 %v2777
      %v3214 = vpop.f32.mrb[0].mxu0
      %v3215 = vadd.f32 0.0, %v3214
      %v3216 = vpop.f32.mrb[0].mxu0
      %v3217 = vpop.f32.mrb[0].mxu0
      %v3218 = vadd.f32 0.0, %v3217
      %v3219 = vpop.f32.mrb[0].mxu0
      %3220 = vmatprep.mubr.bf16.mxu0 0
      %3221 = vmatmul.mubr.bf16.gmra.mrb[0].mxu0 %v2780
      %v3222 = vpop.f32.mrb[0].mxu0
      %v3223 = vadd.f32 0.0, %v3222
      %v3224 = vpop.f32.mrb[0].mxu0
      %v3225 = vpop.f32.mrb[0].mxu0
      %v3226 = vadd.f32 0.0, %v3225
      %v3227 = vpop.f32.mrb[0].mxu0
      %3228 = vmatprep.mubr.bf16.mxu0 0
      %3229 = vmatmul.mubr.bf16.gmra.mrb[0].mxu0 %v2783
      %v3230 = vpop.f32.mrb[0].mxu0
      %v3231 = vadd.f32 0.0, %v3230
      %v3232 = vpop.f32.mrb[0].mxu0
      %v3233 = vpop.f32.mrb[0].mxu0
      %v3234 = vadd.f32 0.0, %v3233
      %v3235 = vpop.f32.mrb[0].mxu0
      %3236 = vmatprep.mubr.bf16.mxu0 0
      %3237 = vmatmul.mubr.bf16.gmra.mrb[0].mxu0 %v2786
      %v3238 = vpop.f32.mrb[0].mxu0
      %v3239 = vadd.f32 0.0, %v3238
      %v3240 = vpop.f32.mrb[0].mxu0
      %v3241 = vpop.f32.mrb[0].mxu0
      %v3242 = vadd.f32 0.0, %v3241
      %v3243 = vpop.f32.mrb[0].mxu0
      %3244 = vmatprep.mubr.bf16.mxu0 0
      %3245 = vmatmul.mubr.bf16.gmra.mrb[0].mxu0 %v2789
      %v3246 = vpop.f32.mrb[0].mxu0
      %v3247 = vadd.f32 0.0, %v3246
      %v3248 = vpop.f32.mrb[0].mxu0
      %v3249 = vpop.f32.mrb[0].mxu0
      %v3250 = vadd.f32 0.0, %v3249
      %v3251 = vpop.f32.mrb[0].mxu0
      %3252 = vmatprep.mubr.bf16.mxu0 0
      %3253 = vmatmul.mubr.bf16.gmra.mrb[0].mxu0 %v2792
      %v3254 = vpop.f32.mrb[0].mxu0
      %v3255 = vadd.f32 0.0, %v3254
      %v3256 = vpop.f32.mrb[0].mxu0
      %v3257 = vpop.f32.mrb[0].mxu0
      %v3258 = vadd.f32 0.0, %v3257
      %v3259 = vpop.f32.mrb[0].mxu0
      %3260 = vmatprep.mubr.bf16.mxu0 0
      %3261 = vmatmul.mubr.bf16.gmra.mrb[0].mxu0 %v2795
      %v3262 = vpop.f32.mrb[0].mxu0
      %v3263 = vadd.f32 0.0, %v3262
      %v3264 = vpop.f32.mrb[0].mxu0
      %v3265 = vpop.f32.mrb[0].mxu0
      %v3266 = vadd.f32 0.0, %v3265
      %v3267 = vpop.f32.mrb[0].mxu0
      %3268 = vmatprep.mubr.bf16.mxu0 0
      %3269 = vmatmul.mubr.bf16.gmra.mrb[0].mxu0 %v2798
      %v3270 = vpop.f32.mrb[0].mxu0
      %v3271 = vadd.f32 0.0, %v3270
      %v3272 = vpop.f32.mrb[0].mxu0
      %v3273 = vpop.f32.mrb[0].mxu0
      %v3274 = vadd.f32 0.0, %v3273
      %v3275 = vpop.f32.mrb[0].mxu0
      %3276 = vmatprep.mubr.bf16.mxu0 0
      %3277 = vmatmul.mubr.bf16.gmra.mrb[0].mxu0 %v2801
      %v3278 = vpop.f32.mrb[0].mxu0
      %v3279 = vadd.f32 0.0, %v3278
      %v3280 = vpop.f32.mrb[0].mxu0
      %v3281 = vpop.f32.mrb[0].mxu0
      %v3282 = vadd.f32 0.0, %v3281
      %v3283 = vpop.f32.mrb[0].mxu0
      %3284 = vmatprep.mubr.bf16.mxu0 0
      %3285 = vmatmul.mubr.bf16.gmra.mrb[0].mxu0 %v2804
      %v3286 = vpop.f32.mrb[0].mxu0
      %v3287 = vadd.f32 0.0, %v3286
      %v3288 = vpop.f32.mrb[0].mxu0
      %v3289 = vpop.f32.mrb[0].mxu0
      %v3290 = vadd.f32 0.0, %v3289
      %v3291 = vpop.f32.mrb[0].mxu0
      %3292 = vmatprep.mubr.bf16.mxu0 0
      %3293 = vmatmul.mubr.bf16.gmra.mrb[0].mxu0 %v2807
      %v3294 = vpop.f32.mrb[0].mxu0
      %v3295 = vadd.f32 0.0, %v3294
      %v3296 = vpop.f32.mrb[0].mxu0
      %v3297 = vpop.f32.mrb[0].mxu0
      %v3298 = vadd.f32 0.0, %v3297
      %v3299 = vpop.f32.mrb[0].mxu0
      %3300 = vmatprep.mubr.bf16.mxu0 0
      %3301 = vmatmul.mubr.bf16.gmra.mrb[0].mxu0 %v2810
      %v3302 = vpop.f32.mrb[0].mxu0
      %v3303 = vadd.f32 0.0, %v3302
      %v3304 = vpop.f32.mrb[0].mxu0
      %v3305 = vpop.f32.mrb[0].mxu0
      %v3306 = vadd.f32 0.0, %v3305
      %v3307 = vpop.f32.mrb[0].mxu0
      %3308 = vmatprep.mubr.bf16.mxu0 0
      %3309 = vmatmul.mubr.bf16.gmra.mrb[0].mxu0 %v2813
      %v3310 = vpop.f32.mrb[0].mxu0
      %v3311 = vadd.f32 0.0, %v3310
      %v3312 = vpop.f32.mrb[0].mxu0
      %v3313 = vpop.f32.mrb[0].mxu0
      %v3314 = vadd.f32 0.0, %v3313
      %v3315 = vpop.f32.mrb[0].mxu0
      %3316 = vmatprep.mubr.bf16.mxu0 0
      %3317 = vmatmul.mubr.bf16.gmra.mrb[0].mxu0 %v2816
      %v3318 = vpop.f32.mrb[0].mxu0
      %v3319 = vadd.f32 0.0, %v3318
      %v3320 = vpop.f32.mrb[0].mxu0
      %v3321 = vpop.f32.mrb[0].mxu0
      %v3322 = vadd.f32 0.0, %v3321
      %v3323 = vpop.f32.mrb[0].mxu0
      %3324 = vmatprep.mubr.bf16.mxu0 0
      %3325 = vmatmul.mubr.bf16.gmra.mrb[0].mxu0 %v2819
      %v3326 = vpop.f32.mrb[0].mxu0
      %v3327 = vadd.f32 0.0, %v3326
      %v3328 = vpop.f32.mrb[0].mxu0
      %v3329 = vpop.f32.mrb[0].mxu0
      %v3330 = vadd.f32 0.0, %v3329
      %v3331 = vpop.f32.mrb[0].mxu0
      %3332 = vmatprep.mubr.bf16.mxu0 0
      %3333 = vmatmul.mubr.bf16.gmra.mrb[0].mxu0 %v2822
      %v3334 = vpop.f32.mrb[0].mxu0
      %v3335 = vadd.f32 0.0, %v3334
      %v3336 = vpop.f32.mrb[0].mxu0
      %v3337 = vpop.f32.mrb[0].mxu0
      %v3338 = vadd.f32 0.0, %v3337
      %v3339 = vpop.f32.mrb[0].mxu0
      %3340 = vmatprep.mubr.bf16.mxu0 0
      %3341 = vmatmul.mubr.bf16.gmra.mrb[0].mxu0 %v2825
      %v3342 = vpop.f32.mrb[0].mxu0
      %v3343 = vadd.f32 0.0, %v3342
      %v3344 = vpop.f32.mrb[0].mxu0
      %v3345 = vpop.f32.mrb[0].mxu0
      %v3346 = vadd.f32 0.0, %v3345
      %v3347 = vpop.f32.mrb[0].mxu0
      %3348 = vmatprep.mubr.bf16.mxu0 0
      %3349 = vmatmul.mubr.bf16.gmra.mrb[0].mxu0 %v2828
      %v3350 = vpop.f32.mrb[0].mxu0
      %v3351 = vadd.f32 0.0, %v3350
      %v3352 = vpop.f32.mrb[0].mxu0
      %v3353 = vpop.f32.mrb[0].mxu0
      %v3354 = vadd.f32 0.0, %v3353
      %v3355 = vpop.f32.mrb[0].mxu0
      %3356 = vmatprep.mubr.bf16.mxu0 0
      %3357 = vmatmul.mubr.bf16.gmra.mrb[0].mxu0 %v2831
      %v3358 = vpop.f32.mrb[0].mxu0
      %v3359 = vadd.f32 0.0, %v3358
      %v3360 = vpop.f32.mrb[0].mxu0
      %v3361 = vpop.f32.mrb[0].mxu0
      %v3362 = vadd.f32 0.0, %v3361
      %v3363 = vpop.f32.mrb[0].mxu0
      %3364 = vmatprep.mubr.bf16.mxu0 0
      %3365 = vmatmul.mubr.bf16.gmra.mrb[0].mxu0 %v2834
      %v3366 = vpop.f32.mrb[0].mxu0
      %v3367 = vadd.f32 0.0, %v3366
      %v3368 = vpop.f32.mrb[0].mxu0
      %v3369 = vpop.f32.mrb[0].mxu0
      %v3370 = vadd.f32 0.0, %v3369
      %v3371 = vpop.f32.mrb[0].mxu0
      %3372 = vmatprep.mubr.bf16.mxu0 0
      %3373 = vmatmul.mubr.bf16.gmra.mrb[0].mxu0 %v2837
      %v3374 = vpop.f32.mrb[0].mxu0
      %v3375 = vadd.f32 0.0, %v3374
      %v3376 = vpop.f32.mrb[0].mxu0
      %v3377 = vpop.f32.mrb[0].mxu0
      %v3378 = vadd.f32 0.0, %v3377
      %v3379 = vpop.f32.mrb[0].mxu0
      %3380 = vmatprep.mubr.bf16.mxu0 0
      %3381 = vmatmul.mubr.bf16.gmra.mrb[0].mxu0 %v2840
      %v3382 = vpop.f32.mrb[0].mxu0
      %v3383 = vadd.f32 0.0, %v3382
      %v3384 = vpop.f32.mrb[0].mxu0
      %v3385 = vpop.f32.mrb[0].mxu0
      %v3386 = vadd.f32 0.0, %v3385
      %v3387 = vpop.f32.mrb[0].mxu0
      %3388 = vmatprep.mubr.bf16.mxu0 0
      %3389 = vmatmul.mubr.bf16.gmra.mrb[0].mxu0 %v2843
      %v3390 = vpop.f32.mrb[0].mxu0
      %v3391 = vadd.f32 0.0, %v3390
      %v3392 = vpop.f32.mrb[0].mxu0
      %v3393 = vpop.f32.mrb[0].mxu0
      %v3394 = vadd.f32 0.0, %v3393
      %v3395 = vpop.f32.mrb[0].mxu0
      %3396 = vmatprep.mubr.bf16.mxu0 0
      %3397 = vmatmul.mubr.bf16.gmra.mrb[0].mxu0 %v2846
      %v3398 = vpop.f32.mrb[0].mxu0
      %v3399 = vadd.f32 0.0, %v3398
      %v3400 = vpop.f32.mrb[0].mxu0
      %v3401 = vpop.f32.mrb[0].mxu0
      %v3402 = vadd.f32 0.0, %v3401
      %v3403 = vpop.f32.mrb[0].mxu0
      %3404 = vmatprep.mubr.bf16.mxu0 0
      %3405 = vmatmul.mubr.bf16.gmra.mrb[0].mxu0 %v2849
      %v3406 = vpop.f32.mrb[0].mxu0
      %v3407 = vadd.f32 0.0, %v3406
      %v3408 = vpop.f32.mrb[0].mxu0
      %v3409 = vpop.f32.mrb[0].mxu0
      %v3410 = vadd.f32 0.0, %v3409
      %v3411 = vpop.f32.mrb[0].mxu0
      %3412 = vmatprep.mubr.bf16.mxu0 0
      %3413 = vmatmul.mubr.bf16.gmra.mrb[0].mxu0 %v2852
      %v3414 = vpop.f32.mrb[0].mxu0
      %v3415 = vadd.f32 0.0, %v3414
      %v3416 = vpop.f32.mrb[0].mxu0
      %v3417 = vpop.f32.mrb[0].mxu0
      %v3418 = vadd.f32 0.0, %v3417
      %v3419 = vpop.f32.mrb[0].mxu0
      %3420 = vmatprep.mubr.bf16.mxu0 0
      %3421 = vmatmul.mubr.bf16.gmra.mrb[0].mxu0 %v2855
      %v3422 = vpop.f32.mrb[0].mxu0
      %v3423 = vadd.f32 0.0, %v3422
      %v3424 = vpop.f32.mrb[0].mxu0
      %v3425 = vpop.f32.mrb[0].mxu0
      %v3426 = vadd.f32 0.0, %v3425
      %v3427 = vpop.f32.mrb[0].mxu0
      %3428 = vmatprep.mubr.bf16.mxu0 0
      %3429 = vmatmul.mubr.bf16.gmra.mrb[0].mxu0 %v2858
      %v3430 = vpop.f32.mrb[0].mxu0
      %v3431 = vadd.f32 0.0, %v3430
      %v3432 = vpop.f32.mrb[0].mxu0
      %v3433 = vpop.f32.mrb[0].mxu0
      %v3434 = vadd.f32 0.0, %v3433
      %v3435 = vpop.f32.mrb[0].mxu0
      %3436 = vdwg.mxu0
      %v3437 = vpack.c.bf16 %v2898, %v2895
      %v3438 = vpack.c.bf16 %v2906, %v2903
      %v3439 = vpack.c.bf16 %v2914, %v2911
      %v3440 = vpack.c.bf16 %v2922, %v2919
      %v3441 = vpack.c.bf16 %v2930, %v2927
      %v3442 = vpack.c.bf16 %v2938, %v2935
      %v3443 = vpack.c.bf16 %v2946, %v2943
      %v3444 = vpack.c.bf16 %v2954, %v2951
      %v3445 = vpack.c.bf16 %v2962, %v2959
      %v3446 = vpack.c.bf16 %v2970, %v2967
      %v3447 = vpack.c.bf16 %v2978, %v2975
      %v3448 = vpack.c.bf16 %v2986, %v2983
      %v3449 = vpack.c.bf16 %v2994, %v2991
      %v3450 = vpack.c.bf16 %v3002, %v2999
      %v3451 = vpack.c.bf16 %v3010, %v3007
      %v3452 = vpack.c.bf16 %v3018, %v3015
      %v3453 = vpack.c.bf16 %v3026, %v3023
      %v3454 = vpack.c.bf16 %v3034, %v3031
      %v3455 = vpack.c.bf16 %v3042, %v3039
      %v3456 = vpack.c.bf16 %v3050, %v3047
      %v3457 = vpack.c.bf16 %v3058, %v3055
      %v3458 = vpack.c.bf16 %v3066, %v3063
      %v3459 = vpack.c.bf16 %v3074, %v3071
      %v3460 = vpack.c.bf16 %v3082, %v3079
      %v3461 = vpack.c.bf16 %v3090, %v3087
      %v3462 = vpack.c.bf16 %v3098, %v3095
      %v3463 = vpack.c.bf16 %v3106, %v3103
      %v3464 = vpack.c.bf16 %v3114, %v3111
      %v3465 = vpack.c.bf16 %v3122, %v3119
      %v3466 = vpack.c.bf16 %v3130, %v3127
      %v3467 = vpack.c.bf16 %v3138, %v3135
      %v3468 = vpack.c.bf16 %v3146, %v3143
      %v3469 = vpack.c.bf16 %v3154, %v3151
      %v3470 = vpack.c.bf16 %v3162, %v3159
      %v3471 = vpack.c.bf16 %v3170, %v3167
      %v3472 = vpack.c.bf16 %v3178, %v3175
      %v3473 = vpack.c.bf16 %v3186, %v3183
      %v3474 = vpack.c.bf16 %v3194, %v3191
      %v3475 = vpack.c.bf16 %v3202, %v3199
      %v3476 = vpack.c.bf16 %v3210, %v3207
      %v3477 = vpack.c.bf16 %v3218, %v3215
      %v3478 = vpack.c.bf16 %v3226, %v3223
      %v3479 = vpack.c.bf16 %v3234, %v3231
      %v3480 = vpack.c.bf16 %v3242, %v3239
      %v3481 = vpack.c.bf16 %v3250, %v3247
      %v3482 = vpack.c.bf16 %v3258, %v3255
      %v3483 = vpack.c.bf16 %v3266, %v3263
      %v3484 = vpack.c.bf16 %v3274, %v3271
      %v3485 = vpack.c.bf16 %v3282, %v3279
      %v3486 = vpack.c.bf16 %v3290, %v3287
      %v3487 = vpack.c.bf16 %v3298, %v3295
      %v3488 = vpack.c.bf16 %v3306, %v3303
      %v3489 = vpack.c.bf16 %v3314, %v3311
      %v3490 = vpack.c.bf16 %v3322, %v3319
      %v3491 = vpack.c.bf16 %v3330, %v3327
      %v3492 = vpack.c.bf16 %v3338, %v3335
      %v3493 = vpack.c.bf16 %v3346, %v3343
      %v3494 = vpack.c.bf16 %v3354, %v3351
      %v3495 = vpack.c.bf16 %v3362, %v3359
      %v3496 = vpack.c.bf16 %v3370, %v3367
      %v3497 = vpack.c.bf16 %v3378, %v3375
      %v3498 = vpack.c.bf16 %v3386, %v3383
      %v3499 = vpack.c.bf16 %v3394, %v3391
      %v3500 = vpack.c.bf16 %v3402, %v3399
      %v3501 = vpack.c.bf16 %v3410, %v3407
      %v3502 = vpack.c.bf16 %v3418, %v3415
      %v3503 = vpack.c.bf16 %v3426, %v3423
      %v3504 = vpack.c.bf16 %v3434, %v3431
      %v3573 = vunpack.c.l.b16 %v3437
      %v3574 = vunpack.c.h.b16 %v3437
      %v3575 = vunpack.c.l.b16 %v3438
      %v3576 = vunpack.c.h.b16 %v3438
      %v3577 = vunpack.c.l.b16 %v3439
      %v3578 = vunpack.c.h.b16 %v3439
      %v3579 = vunpack.c.l.b16 %v3440
      %v3580 = vunpack.c.h.b16 %v3440
      %v3581 = vunpack.c.l.b16 %v3441
      %v3582 = vunpack.c.h.b16 %v3441
      %v3583 = vunpack.c.l.b16 %v3442
      %v3584 = vunpack.c.h.b16 %v3442
      %v3585 = vunpack.c.l.b16 %v3443
      %v3586 = vunpack.c.h.b16 %v3443
      %v3587 = vunpack.c.l.b16 %v3444
      %v3588 = vunpack.c.h.b16 %v3444
      %v3589 = vunpack.c.l.b16 %v3445
      %v3590 = vunpack.c.h.b16 %v3445
      %v3591 = vunpack.c.l.b16 %v3446
      %v3592 = vunpack.c.h.b16 %v3446
      %v3593 = vunpack.c.l.b16 %v3447
      %v3594 = vunpack.c.h.b16 %v3447
      %v3595 = vunpack.c.l.b16 %v3448
      %v3596 = vunpack.c.h.b16 %v3448
      %v3597 = vunpack.c.l.b16 %v3449
      %v3598 = vunpack.c.h.b16 %v3449
      %v3599 = vunpack.c.l.b16 %v3450
      %v3600 = vunpack.c.h.b16 %v3450
      %v3601 = vunpack.c.l.b16 %v3451
      %v3602 = vunpack.c.h.b16 %v3451
      %v3603 = vunpack.c.l.b16 %v3452
      %v3604 = vunpack.c.h.b16 %v3452
      %v3605 = vunpack.c.l.b16 %v3453
      %v3606 = vunpack.c.h.b16 %v3453
      %v3607 = vunpack.c.l.b16 %v3454
      %v3608 = vunpack.c.h.b16 %v3454
      %v3609 = vunpack.c.l.b16 %v3455
      %v3610 = vunpack.c.h.b16 %v3455
      %v3611 = vunpack.c.l.b16 %v3456
      %v3612 = vunpack.c.h.b16 %v3456
      %v3613 = vunpack.c.l.b16 %v3457
      %v3614 = vunpack.c.h.b16 %v3457
      %v3615 = vunpack.c.l.b16 %v3458
      %v3616 = vunpack.c.h.b16 %v3458
      %v3617 = vunpack.c.l.b16 %v3459
      %v3618 = vunpack.c.h.b16 %v3459
      %v3619 = vunpack.c.l.b16 %v3460
      %v3620 = vunpack.c.h.b16 %v3460
      %v3621 = vunpack.c.l.b16 %v3461
      %v3622 = vunpack.c.h.b16 %v3461
      %v3623 = vunpack.c.l.b16 %v3462
      %v3624 = vunpack.c.h.b16 %v3462
      %v3625 = vunpack.c.l.b16 %v3463
      %v3626 = vunpack.c.h.b16 %v3463
      %v3627 = vunpack.c.l.b16 %v3464
      %v3628 = vunpack.c.h.b16 %v3464
      %v3629 = vunpack.c.l.b16 %v3465
      %v3630 = vunpack.c.h.b16 %v3465
      %v3631 = vunpack.c.l.b16 %v3466
      %v3632 = vunpack.c.h.b16 %v3466
      %v3633 = vunpack.c.l.b16 %v3467
      %v3634 = vunpack.c.h.b16 %v3467
      %v3635 = vunpack.c.l.b16 %v3468
      %v3636 = vunpack.c.h.b16 %v3468
      %v3637 = vunpack.c.l.b16 %v3469
      %v3638 = vunpack.c.h.b16 %v3469
      %v3639 = vunpack.c.l.b16 %v3470
      %v3640 = vunpack.c.h.b16 %v3470
      %v3641 = vunpack.c.l.b16 %v3471
      %v3642 = vunpack.c.h.b16 %v3471
      %v3643 = vunpack.c.l.b16 %v3472
      %v3644 = vunpack.c.h.b16 %v3472
      %v3645 = vunpack.c.l.b16 %v3473
      %v3646 = vunpack.c.h.b16 %v3473
      %v3647 = vunpack.c.l.b16 %v3474
      %v3648 = vunpack.c.h.b16 %v3474
      %v3649 = vunpack.c.l.b16 %v3475
      %v3650 = vunpack.c.h.b16 %v3475
      %v3651 = vunpack.c.l.b16 %v3476
      %v3652 = vunpack.c.h.b16 %v3476
      %v3653 = vunpack.c.l.b16 %v3477
      %v3654 = vunpack.c.h.b16 %v3477
      %v3655 = vunpack.c.l.b16 %v3478
      %v3656 = vunpack.c.h.b16 %v3478
      %v3657 = vunpack.c.l.b16 %v3479
      %v3658 = vunpack.c.h.b16 %v3479
      %v3659 = vunpack.c.l.b16 %v3480
      %v3660 = vunpack.c.h.b16 %v3480
      %v3661 = vunpack.c.l.b16 %v3481
      %v3662 = vunpack.c.h.b16 %v3481
      %v3663 = vunpack.c.l.b16 %v3482
      %v3664 = vunpack.c.h.b16 %v3482
      %v3665 = vunpack.c.l.b16 %v3483
      %v3666 = vunpack.c.h.b16 %v3483
      %v3667 = vunpack.c.l.b16 %v3484
      %v3668 = vunpack.c.h.b16 %v3484
      %v3669 = vunpack.c.l.b16 %v3485
      %v3670 = vunpack.c.h.b16 %v3485
      %v3671 = vunpack.c.l.b16 %v3486
      %v3672 = vunpack.c.h.b16 %v3486
      %v3673 = vunpack.c.l.b16 %v3487
      %v3674 = vunpack.c.h.b16 %v3487
      %v3675 = vunpack.c.l.b16 %v3488
      %v3676 = vunpack.c.h.b16 %v3488
      %v3677 = vunpack.c.l.b16 %v3489
      %v3678 = vunpack.c.h.b16 %v3489
      %v3679 = vunpack.c.l.b16 %v3490
      %v3680 = vunpack.c.h.b16 %v3490
      %v3681 = vunpack.c.l.b16 %v3491
      %v3682 = vunpack.c.h.b16 %v3491
      %v3683 = vunpack.c.l.b16 %v3492
      %v3684 = vunpack.c.h.b16 %v3492
      %v3685 = vunpack.c.l.b16 %v3493
      %v3686 = vunpack.c.h.b16 %v3493
      %v3687 = vunpack.c.l.b16 %v3494
      %v3688 = vunpack.c.h.b16 %v3494
      %v3689 = vunpack.c.l.b16 %v3495
      %v3690 = vunpack.c.h.b16 %v3495
      %v3691 = vunpack.c.l.b16 %v3496
      %v3692 = vunpack.c.h.b16 %v3496
      %v3693 = vunpack.c.l.b16 %v3497
      %v3694 = vunpack.c.h.b16 %v3497
      %v3695 = vunpack.c.l.b16 %v3498
      %v3696 = vunpack.c.h.b16 %v3498
      %v3697 = vunpack.c.l.b16 %v3499
      %v3698 = vunpack.c.h.b16 %v3499
      %v3699 = vunpack.c.l.b16 %v3500
      %v3700 = vunpack.c.h.b16 %v3500
      %v3701 = vunpack.c.l.b16 %v3501
      %v3702 = vunpack.c.h.b16 %v3501
      %v3703 = vunpack.c.l.b16 %v3502
      %v3704 = vunpack.c.h.b16 %v3502
      %v3705 = vunpack.c.l.b16 %v3503
      %v3706 = vunpack.c.h.b16 %v3503
      %v3707 = vunpack.c.l.b16 %v3504
      %v3708 = vunpack.c.h.b16 %v3504
      %v3709 = vpack.c.b16 %v3573, %v3573
      %v3710 = vpack.c.b16 %v3574, %v3574
      %v3711 = vpack.c.b16 %v3575, %v3575
      %v3712 = vpack.c.b16 %v3576, %v3576
      %v3713 = vpack.c.b16 %v3577, %v3577
      %v3714 = vpack.c.b16 %v3578, %v3578
      %v3715 = vpack.c.b16 %v3579, %v3579
      %v3716 = vpack.c.b16 %v3580, %v3580
      %v3717 = vpack.c.b16 %v3581, %v3581
      %v3718 = vpack.c.b16 %v3582, %v3582
      %v3719 = vpack.c.b16 %v3583, %v3583
      %v3720 = vpack.c.b16 %v3584, %v3584
      %v3721 = vpack.c.b16 %v3585, %v3585
      %v3722 = vpack.c.b16 %v3586, %v3586
      %v3723 = vpack.c.b16 %v3587, %v3587
      %v3724 = vpack.c.b16 %v3588, %v3588
      %v3725 = vpack.c.b16 %v3589, %v3589
      %v3726 = vpack.c.b16 %v3590, %v3590
      %v3727 = vpack.c.b16 %v3591, %v3591
      %v3728 = vpack.c.b16 %v3592, %v3592
      %v3729 = vpack.c.b16 %v3593, %v3593
      %v3730 = vpack.c.b16 %v3594, %v3594
      %v3731 = vpack.c.b16 %v3595, %v3595
      %v3732 = vpack.c.b16 %v3596, %v3596
      %v3733 = vpack.c.b16 %v3597, %v3597
      %v3734 = vpack.c.b16 %v3598, %v3598
      %v3735 = vpack.c.b16 %v3599, %v3599
      %v3736 = vpack.c.b16 %v3600, %v3600
      %v3737 = vpack.c.b16 %v3601, %v3601
      %v3738 = vpack.c.b16 %v3602, %v3602
      %v3739 = vpack.c.b16 %v3603, %v3603
      %v3740 = vpack.c.b16 %v3604, %v3604
      %v3741 = vpack.c.b16 %v3605, %v3605
      %v3742 = vpack.c.b16 %v3606, %v3606
      %v3743 = vpack.c.b16 %v3607, %v3607
      %v3744 = vpack.c.b16 %v3608, %v3608
      %v3745 = vpack.c.b16 %v3609, %v3609
      %v3746 = vpack.c.b16 %v3610, %v3610
      %v3747 = vpack.c.b16 %v3611, %v3611
      %v3748 = vpack.c.b16 %v3612, %v3612
      %v3749 = vpack.c.b16 %v3613, %v3613
      %v3750 = vpack.c.b16 %v3614, %v3614
      %v3751 = vpack.c.b16 %v3615, %v3615
      %v3752 = vpack.c.b16 %v3616, %v3616
      %v3753 = vpack.c.b16 %v3617, %v3617
      %v3754 = vpack.c.b16 %v3618, %v3618
      %v3755 = vpack.c.b16 %v3619, %v3619
      %v3756 = vpack.c.b16 %v3620, %v3620
      %v3757 = vpack.c.b16 %v3621, %v3621
      %v3758 = vpack.c.b16 %v3622, %v3622
      %v3759 = vpack.c.b16 %v3623, %v3623
      %v3760 = vpack.c.b16 %v3624, %v3624
      %v3761 = vpack.c.b16 %v3625, %v3625
      %v3762 = vpack.c.b16 %v3626, %v3626
      %v3763 = vpack.c.b16 %v3627, %v3627
      %v3764 = vpack.c.b16 %v3628, %v3628
      %v3765 = vpack.c.b16 %v3629, %v3629
      %v3766 = vpack.c.b16 %v3630, %v3630
      %v3767 = vpack.c.b16 %v3631, %v3631
      %v3768 = vpack.c.b16 %v3632, %v3632
      %v3769 = vpack.c.b16 %v3633, %v3633
      %v3770 = vpack.c.b16 %v3634, %v3634
      %v3771 = vpack.c.b16 %v3635, %v3635
      %v3772 = vpack.c.b16 %v3636, %v3636
      %v3773 = vpack.c.b16 %v3637, %v3637
      %v3774 = vpack.c.b16 %v3638, %v3638
      %v3775 = vpack.c.b16 %v3639, %v3639
      %v3776 = vpack.c.b16 %v3640, %v3640
      %v3777 = vpack.c.b16 %v3641, %v3641
      %v3778 = vpack.c.b16 %v3642, %v3642
      %v3779 = vpack.c.b16 %v3643, %v3643
      %v3780 = vpack.c.b16 %v3644, %v3644
      %v3781 = vpack.c.b16 %v3645, %v3645
      %v3782 = vpack.c.b16 %v3646, %v3646
      %v3783 = vpack.c.b16 %v3647, %v3647
      %v3784 = vpack.c.b16 %v3648, %v3648
      %v3785 = vpack.c.b16 %v3649, %v3649
      %v3786 = vpack.c.b16 %v3650, %v3650
      %v3787 = vpack.c.b16 %v3651, %v3651
      %v3788 = vpack.c.b16 %v3652, %v3652
      %v3789 = vpack.c.b16 %v3653, %v3653
      %v3790 = vpack.c.b16 %v3654, %v3654
      %v3791 = vpack.c.b16 %v3655, %v3655
      %v3792 = vpack.c.b16 %v3656, %v3656
      %v3793 = vpack.c.b16 %v3657, %v3657
      %v3794 = vpack.c.b16 %v3658, %v3658
      %v3795 = vpack.c.b16 %v3659, %v3659
      %v3796 = vpack.c.b16 %v3660, %v3660
      %v3797 = vpack.c.b16 %v3661, %v3661
      %v3798 = vpack.c.b16 %v3662, %v3662
      %v3799 = vpack.c.b16 %v3663, %v3663
      %v3800 = vpack.c.b16 %v3664, %v3664
      %v3801 = vpack.c.b16 %v3665, %v3665
      %v3802 = vpack.c.b16 %v3666, %v3666
      %v3803 = vpack.c.b16 %v3667, %v3667
      %v3804 = vpack.c.b16 %v3668, %v3668
      %v3805 = vpack.c.b16 %v3669, %v3669
      %v3806 = vpack.c.b16 %v3670, %v3670
      %v3807 = vpack.c.b16 %v3671, %v3671
      %v3808 = vpack.c.b16 %v3672, %v3672
      %v3809 = vpack.c.b16 %v3673, %v3673
      %v3810 = vpack.c.b16 %v3674, %v3674
      %v3811 = vpack.c.b16 %v3675, %v3675
      %v3812 = vpack.c.b16 %v3676, %v3676
      %v3813 = vpack.c.b16 %v3677, %v3677
      %v3814 = vpack.c.b16 %v3678, %v3678
      %v3815 = vpack.c.b16 %v3679, %v3679
      %v3816 = vpack.c.b16 %v3680, %v3680
      %v3817 = vpack.c.b16 %v3681, %v3681
      %v3818 = vpack.c.b16 %v3682, %v3682
      %v3819 = vpack.c.b16 %v3683, %v3683
      %v3820 = vpack.c.b16 %v3684, %v3684
      %v3821 = vpack.c.b16 %v3685, %v3685
      %v3822 = vpack.c.b16 %v3686, %v3686
      %v3823 = vpack.c.b16 %v3687, %v3687
      %v3824 = vpack.c.b16 %v3688, %v3688
      %v3825 = vpack.c.b16 %v3689, %v3689
      %v3826 = vpack.c.b16 %v3690, %v3690
      %v3827 = vpack.c.b16 %v3691, %v3691
      %v3828 = vpack.c.b16 %v3692, %v3692
      %v3829 = vpack.c.b16 %v3693, %v3693
      %v3830 = vpack.c.b16 %v3694, %v3694
      %v3831 = vpack.c.b16 %v3695, %v3695
      %v3832 = vpack.c.b16 %v3696, %v3696
      %v3833 = vpack.c.b16 %v3697, %v3697
      %v3834 = vpack.c.b16 %v3698, %v3698
      %v3835 = vpack.c.b16 %v3699, %v3699
      %v3836 = vpack.c.b16 %v3700, %v3700
      %v3837 = vpack.c.b16 %v3701, %v3701
      %v3838 = vpack.c.b16 %v3702, %v3702
      %v3839 = vpack.c.b16 %v3703, %v3703
      %v3840 = vpack.c.b16 %v3704, %v3704
      %v3841 = vpack.c.b16 %v3705, %v3705
      %v3842 = vpack.c.b16 %v3706, %v3706
      %v3843 = vpack.c.b16 %v3707, %v3707
      %v3844 = vpack.c.b16 %v3708, %v3708
      %s3981 = scalar_lea.vmem %s206, 544
      %3982 = vst [vmem:[%s3981] sm:$0xf] %v3709
      %3983 = vst [vmem:[%s3981 + $0x4] sm:$0xf] %v3710
      %3984 = vst [vmem:[%s3981 + $0x8] sm:$0xf] %v3711
      %3985 = vst [vmem:[%s3981 + $0xc] sm:$0xf] %v3712
      %3986 = vst [vmem:[%s3981 + $0x10] sm:$0xf] %v3713
      %3987 = vst [vmem:[%s3981 + $0x14] sm:$0xf] %v3714
      %3988 = vst [vmem:[%s3981 + $0x18] sm:$0xf] %v3715
      %3989 = vst [vmem:[%s3981 + $0x1c] sm:$0xf] %v3716
      %3990 = vst [vmem:[%s3981 + $0x20] sm:$0xf] %v3717
      %3991 = vst [vmem:[%s3981 + $0x24] sm:$0xf] %v3718
      %3992 = vst [vmem:[%s3981 + $0x28] sm:$0xf] %v3719
      %3993 = vst [vmem:[%s3981 + $0x2c] sm:$0xf] %v3720
      %3994 = vst [vmem:[%s3981 + $0x30] sm:$0xf] %v3721
      %3995 = vst [vmem:[%s3981 + $0x34] sm:$0xf] %v3722
      %3996 = vst [vmem:[%s3981 + $0x38] sm:$0xf] %v3723
      %3997 = vst [vmem:[%s3981 + $0x3c] sm:$0xf] %v3724
      %3998 = vst [vmem:[%s3981 + $0x40] sm:$0xf] %v3725
      %3999 = vst [vmem:[%s3981 + $0x44] sm:$0xf] %v3726
      %4000 = vst [vmem:[%s3981 + $0x48] sm:$0xf] %v3727
      %4001 = vst [vmem:[%s3981 + $0x4c] sm:$0xf] %v3728
      %4002 = vst [vmem:[%s3981 + $0x50] sm:$0xf] %v3729
      %4003 = vst [vmem:[%s3981 + $0x54] sm:$0xf] %v3730
      %4004 = vst [vmem:[%s3981 + $0x58] sm:$0xf] %v3731
      %4005 = vst [vmem:[%s3981 + $0x5c] sm:$0xf] %v3732
      %4006 = vst [vmem:[%s3981 + $0x60] sm:$0xf] %v3733
      %4007 = vst [vmem:[%s3981 + $0x64] sm:$0xf] %v3734
      %4008 = vst [vmem:[%s3981 + $0x68] sm:$0xf] %v3735
      %4009 = vst [vmem:[%s3981 + $0x6c] sm:$0xf] %v3736
      %4010 = vst [vmem:[%s3981 + $0x70] sm:$0xf] %v3737
      %4011 = vst [vmem:[%s3981 + $0x74] sm:$0xf] %v3738
      %4012 = vst [vmem:[%s3981 + $0x78] sm:$0xf] %v3739
      %4013 = vst [vmem:[%s3981 + $0x7c] sm:$0xf] %v3740
      %4014 = vst [vmem:[%s3981 + $0x80] sm:$0xf] %v3741
      %4015 = vst [vmem:[%s3981 + $0x84] sm:$0xf] %v3742
      %4016 = vst [vmem:[%s3981 + $0x88] sm:$0xf] %v3743
      %4017 = vst [vmem:[%s3981 + $0x8c] sm:$0xf] %v3744
      %4018 = vst [vmem:[%s3981 + $0x90] sm:$0xf] %v3745
      %4019 = vst [vmem:[%s3981 + $0x94] sm:$0xf] %v3746
      %4020 = vst [vmem:[%s3981 + $0x98] sm:$0xf] %v3747
      %4021 = vst [vmem:[%s3981 + $0x9c] sm:$0xf] %v3748
      %4022 = vst [vmem:[%s3981 + $0xa0] sm:$0xf] %v3749
      %4023 = vst [vmem:[%s3981 + $0xa4] sm:$0xf] %v3750
      %4024 = vst [vmem:[%s3981 + $0xa8] sm:$0xf] %v3751
      %4025 = vst [vmem:[%s3981 + $0xac] sm:$0xf] %v3752
      %4026 = vst [vmem:[%s3981 + $0xb0] sm:$0xf] %v3753
      %4027 = vst [vmem:[%s3981 + $0xb4] sm:$0xf] %v3754
      %4028 = vst [vmem:[%s3981 + $0xb8] sm:$0xf] %v3755
      %4029 = vst [vmem:[%s3981 + $0xbc] sm:$0xf] %v3756
      %4030 = vst [vmem:[%s3981 + $0xc0] sm:$0xf] %v3757
      %4031 = vst [vmem:[%s3981 + $0xc4] sm:$0xf] %v3758
      %4032 = vst [vmem:[%s3981 + $0xc8] sm:$0xf] %v3759
      %4033 = vst [vmem:[%s3981 + $0xcc] sm:$0xf] %v3760
      %4034 = vst [vmem:[%s3981 + $0xd0] sm:$0xf] %v3761
      %4035 = vst [vmem:[%s3981 + $0xd4] sm:$0xf] %v3762
      %4036 = vst [vmem:[%s3981 + $0xd8] sm:$0xf] %v3763
      %4037 = vst [vmem:[%s3981 + $0xdc] sm:$0xf] %v3764
      %4038 = vst [vmem:[%s3981 + $0xe0] sm:$0xf] %v3765
      %4039 = vst [vmem:[%s3981 + $0xe4] sm:$0xf] %v3766
      %4040 = vst [vmem:[%s3981 + $0xe8] sm:$0xf] %v3767
      %4041 = vst [vmem:[%s3981 + $0xec] sm:$0xf] %v3768
      %4042 = vst [vmem:[%s3981 + $0xf0] sm:$0xf] %v3769
      %4043 = vst [vmem:[%s3981 + $0xf4] sm:$0xf] %v3770
      %4044 = vst [vmem:[%s3981 + $0xf8] sm:$0xf] %v3771
      %4045 = vst [vmem:[%s3981 + $0xfc] sm:$0xf] %v3772
      %4046 = vst [vmem:[%s3981 + $0x100] sm:$0xf] %v3773
      %4047 = vst [vmem:[%s3981 + $0x104] sm:$0xf] %v3774
      %4048 = vst [vmem:[%s3981 + $0x108] sm:$0xf] %v3775
      %4049 = vst [vmem:[%s3981 + $0x10c] sm:$0xf] %v3776
      %4050 = vst [vmem:[%s3981 + $0x110] sm:$0xf] %v3777
      %4051 = vst [vmem:[%s3981 + $0x114] sm:$0xf] %v3778
      %4052 = vst [vmem:[%s3981 + $0x118] sm:$0xf] %v3779
      %4053 = vst [vmem:[%s3981 + $0x11c] sm:$0xf] %v3780
      %4054 = vst [vmem:[%s3981 + $0x120] sm:$0xf] %v3781
      %4055 = vst [vmem:[%s3981 + $0x124] sm:$0xf] %v3782
      %4056 = vst [vmem:[%s3981 + $0x128] sm:$0xf] %v3783
      %4057 = vst [vmem:[%s3981 + $0x12c] sm:$0xf] %v3784
      %4058 = vst [vmem:[%s3981 + $0x130] sm:$0xf] %v3785
      %4059 = vst [vmem:[%s3981 + $0x134] sm:$0xf] %v3786
      %4060 = vst [vmem:[%s3981 + $0x138] sm:$0xf] %v3787
      %4061 = vst [vmem:[%s3981 + $0x13c] sm:$0xf] %v3788
      %4062 = vst [vmem:[%s3981 + $0x140] sm:$0xf] %v3789
      %4063 = vst [vmem:[%s3981 + $0x144] sm:$0xf] %v3790
      %4064 = vst [vmem:[%s3981 + $0x148] sm:$0xf] %v3791
      %4065 = vst [vmem:[%s3981 + $0x14c] sm:$0xf] %v3792
      %4066 = vst [vmem:[%s3981 + $0x150] sm:$0xf] %v3793
      %4067 = vst [vmem:[%s3981 + $0x154] sm:$0xf] %v3794
      %4068 = vst [vmem:[%s3981 + $0x158] sm:$0xf] %v3795
      %4069 = vst [vmem:[%s3981 + $0x15c] sm:$0xf] %v3796
      %4070 = vst [vmem:[%s3981 + $0x160] sm:$0xf] %v3797
      %4071 = vst [vmem:[%s3981 + $0x164] sm:$0xf] %v3798
      %4072 = vst [vmem:[%s3981 + $0x168] sm:$0xf] %v3799
      %4073 = vst [vmem:[%s3981 + $0x16c] sm:$0xf] %v3800
      %4074 = vst [vmem:[%s3981 + $0x170] sm:$0xf] %v3801
      %4075 = vst [vmem:[%s3981 + $0x174] sm:$0xf] %v3802
      %4076 = vst [vmem:[%s3981 + $0x178] sm:$0xf] %v3803
      %4077 = vst [vmem:[%s3981 + $0x17c] sm:$0xf] %v3804
      %4078 = vst [vmem:[%s3981 + $0x180] sm:$0xf] %v3805
      %4079 = vst [vmem:[%s3981 + $0x184] sm:$0xf] %v3806
      %4080 = vst [vmem:[%s3981 + $0x188] sm:$0xf] %v3807
      %4081 = vst [vmem:[%s3981 + $0x18c] sm:$0xf] %v3808
      %4082 = vst [vmem:[%s3981 + $0x190] sm:$0xf] %v3809
      %4083 = vst [vmem:[%s3981 + $0x194] sm:$0xf] %v3810
      %4084 = vst [vmem:[%s3981 + $0x198] sm:$0xf] %v3811
      %4085 = vst [vmem:[%s3981 + $0x19c] sm:$0xf] %v3812
      %4086 = vst [vmem:[%s3981 + $0x1a0] sm:$0xf] %v3813
      %4087 = vst [vmem:[%s3981 + $0x1a4] sm:$0xf] %v3814
      %4088 = vst [vmem:[%s3981 + $0x1a8] sm:$0xf] %v3815
      %4089 = vst [vmem:[%s3981 + $0x1ac] sm:$0xf] %v3816
      %4090 = vst [vmem:[%s3981 + $0x1b0] sm:$0xf] %v3817
      %4091 = vst [vmem:[%s3981 + $0x1b4] sm:$0xf] %v3818
      %4092 = vst [vmem:[%s3981 + $0x1b8] sm:$0xf] %v3819
      %4093 = vst [vmem:[%s3981 + $0x1bc] sm:$0xf] %v3820
      %4094 = vst [vmem:[%s3981 + $0x1c0] sm:$0xf] %v3821
      %4095 = vst [vmem:[%s3981 + $0x1c4] sm:$0xf] %v3822
      %4096 = vst [vmem:[%s3981 + $0x1c8] sm:$0xf] %v3823
      %4097 = vst [vmem:[%s3981 + $0x1cc] sm:$0xf] %v3824
      %4098 = vst [vmem:[%s3981 + $0x1d0] sm:$0xf] %v3825
      %4099 = vst [vmem:[%s3981 + $0x1d4] sm:$0xf] %v3826
      %4100 = vst [vmem:[%s3981 + $0x1d8] sm:$0xf] %v3827
      %4101 = vst [vmem:[%s3981 + $0x1dc] sm:$0xf] %v3828
      %4102 = vst [vmem:[%s3981 + $0x1e0] sm:$0xf] %v3829
      %4103 = vst [vmem:[%s3981 + $0x1e4] sm:$0xf] %v3830
      %4104 = vst [vmem:[%s3981 + $0x1e8] sm:$0xf] %v3831
      %4105 = vst [vmem:[%s3981 + $0x1ec] sm:$0xf] %v3832
      %4106 = vst [vmem:[%s3981 + $0x1f0] sm:$0xf] %v3833
      %4107 = vst [vmem:[%s3981 + $0x1f4] sm:$0xf] %v3834
      %4108 = vst [vmem:[%s3981 + $0x1f8] sm:$0xf] %v3835
      %4109 = vst [vmem:[%s3981 + $0x1fc] sm:$0xf] %v3836
      %4110 = vst [vmem:[%s3981 + $0x200] sm:$0xf] %v3837
      %4111 = vst [vmem:[%s3981 + $0x204] sm:$0xf] %v3838
      %4112 = vst [vmem:[%s3981 + $0x208] sm:$0xf] %v3839
      %4113 = vst [vmem:[%s3981 + $0x20c] sm:$0xf] %v3840
      %4114 = vst [vmem:[%s3981 + $0x210] sm:$0xf] %v3841
      %4115 = vst [vmem:[%s3981 + $0x214] sm:$0xf] %v3842
      %4116 = vst [vmem:[%s3981 + $0x218] sm:$0xf] %v3843
      %4117 = vst [vmem:[%s3981 + $0x21c] sm:$0xf] %v3844
      %s4118 = smul.u32 2, %s18
      %p4119 = scmp.lt.s32.totalorder %s17, 3
      %s4120 = scalar_select %p4119, %s17, 3
      %p4121 = scmp.lt.s32.totalorder %s4118, 1
      %s4122 = scalar_select %p4121, %s4118, 1
      %s4123 = smul.addr %s4122, 136
      %s4124 = smul.addr %s4120, 272
      %s4125 = sadd.s32 %s4123, %s4124
      %s4126 = smul.addr %s4125, 4
      %s4127 = scalar_lea.vmem %s2, %s4126
      // Predicated region
      $region29: #{generator_forward.9} parent=27 // pred_check
        %p4128 = pneg %p99
      $region30: #{generator_forward.9} parent=27 // pred_check_branch
        %4130 = sbr.rel (%p4128) target = $region32
      $region31: #{generator_forward.9} parent=27 // pred_region
        %s4131 = smul.u32 2, %s18
      $region32: #{generator_forward.9} parent=27 // pred_fallthru
        _
    $region28: #{generator_forward.9} parent=5 // pred_fallthru
      _
    %p4132 = scmp.le.s32.totalorder 2, %s8
    // Predicated region
    $region33: #{generator_forward.9} parent=5 // pred_check
      %p4133 = pneg %p4132
    $region34: #{generator_forward.9} parent=5 // pred_check_branch
      %4135 = sbr.rel (%p4133) target = $region36
    $region35: #{generator_forward.9} parent=5 // pred_region
      %s4136 = ssub.s32 %s8, 2
      // Predicated region
      $region37: #{generator_forward.9} parent=35 // pred_check
        %p4137 = pneg %p105
      $region38: #{generator_forward.9} parent=35 // pred_check_branch
        %4139 = sbr.rel (%p4137) target = $region40
      $region39: #{generator_forward.9} parent=35 // pred_region
        %s4140 = smul.u32 2, %s20
        %p4141 = scmp.lt.s32.totalorder %s19, 3
        %s4142 = scalar_select %p4141, %s19, 3
        %p4143 = scmp.lt.s32.totalorder %s4140, 1
        %s4144 = scalar_select %p4143, %s4140, 1
        %s4145 = smul.addr %s4144, 136
        %s4146 = smul.addr %s4142, 272
        %s4147 = sadd.s32 %s4145, %s4146
        %s4148 = smul.addr %s4147, 4
        %s4149 = scalar_lea.vmem %s2, %s4148
      $region40: #{generator_forward.9} parent=35 // pred_fallthru
        _
    $region36: #{generator_forward.9} parent=5 // pred_fallthru
      _
  $region6: #{generator_forward.9} parent=0 // loop_footer
    %s12 = sadd.s32 1, %s8
  $region7: #{generator_forward.9} parent=0 // loop_footer_branch
    %7 = sbr.rel target = $region3
  $region8: #{generator_forward.9} parent=0 // loop_exit
    _

</llo_original>
